<compile_context>
chip_gen: v6e
topology: v6e:2x2x1
jax: 0.10.0
libtpu: 0.0.40
codegen_flags: <defaults>
</compile_context>

<pallas_src>
import functools

import jax
import jax.numpy as jnp
from jax import lax
from jax.experimental import pallas as pl
from jax.experimental.pallas import tpu as pltpu

LRELU_SLOPE = 0.2
BN_EPS = 1e-5
TM_MAX = 512  # activation-tile rows (multiple of 8); ~85% HBM roofline per measurements


def _round_up(a, b):
    return (a + b - 1) // b * b


# ----------------------------------------------------------------------------
# Pallas kernel:
#   [fold previous layer's BN + LeakyReLU]  ->  (matmul [-> lrelu -> matmul])
#   -> write pre-BN output tile (+ per-tile BN statistics side output)
# ----------------------------------------------------------------------------
def _layer_kernel(*refs, tm, m_true, fold_bn, fold_lrelu, fused_pre, want_stats):
    it = iter(refs)
    mean_ref = next(it) if fold_bn else None
    invstd_ref = next(it) if fold_bn else None
    x_ref = next(it)
    wpre_ref = next(it) if fused_pre else None
    w_ref = next(it)
    y_ref = next(it)
    stats_ref = next(it) if want_stats else None

    # Prologue: previous layer's BatchNorm (per-column scale/shift) + LeakyReLU.
    # Keep the element-wise math in f32 (v5e has no bf16 VPU/EUP path).
    if fold_bn or fold_lrelu:
        x = x_ref[...].astype(jnp.float32)
        if fold_bn:
            x = (x - mean_ref[...]) * invstd_ref[...]
        if fold_lrelu:
            x = jnp.where(x > 0, x, LRELU_SLOPE * x)
        lhs = x.astype(jnp.bfloat16)
    else:
        lhs = x_ref[...]

    # Optional fused first matmul (conv1) + LeakyReLU, then the main matmul.
    if fused_pre:
        h = jnp.dot(lhs, wpre_ref[...], preferred_element_type=jnp.float32)
        h = jnp.where(h > 0, h, LRELU_SLOPE * h)
        lhs = h.astype(jnp.bfloat16)
    y = jnp.dot(lhs, w_ref[...], preferred_element_type=jnp.float32)
    y_ref[...] = y.astype(y_ref.dtype)

    # Per-tile column sum / sum-of-squares of the pre-BN output.  Rows past the
    # true M (zero padding, possibly made non-zero by the prologue) are masked.
    if want_stats:
        n = y.shape[1]
        rows = lax.broadcasted_iota(jnp.int32, y.shape, 0) + pl.program_id(0) * tm
        ym = jnp.where(rows < m_true, y, 0.0)
        col_sum = jnp.sum(ym, axis=0, keepdims=True)
        col_sq = jnp.sum(ym * ym, axis=0, keepdims=True)
        stats_ref[...] = jnp.concatenate([col_sum, col_sq], axis=0).reshape(1, 2, n)


def conv_layer(x2d, w2d, *, w_pre=None, mean=None, invstd=None,
               fold_lrelu=False, want_stats=False, out_dtype=jnp.bfloat16):
    """M-tiled fused conv-as-matmul layer.  Returns (y[:M], per_tile_stats|None)."""
    M, K = x2d.shape
    N = w2d.shape[1]
    fold_bn = mean is not None
    fused_pre = w_pre is not None
    if fused_pre:
        assert w_pre.shape[0] == K and w_pre.shape[1] == w2d.shape[0]
    else:
        assert w2d.shape[0] == K

    tm = min(TM_MAX, _round_up(M, 8))
    m_pad = _round_up(M, tm)
    grid_m = m_pad // tm
    if m_pad != M:
        x2d = jnp.pad(x2d, ((0, m_pad - M), (0, 0)))

    in_specs, args = [], []
    if fold_bn:
        in_specs.append(pl.BlockSpec((1, K), lambda i: (0, 0)))
        in_specs.append(pl.BlockSpec((1, K), lambda i: (0, 0)))
        args.append(mean.reshape(1, K).astype(jnp.float32))
        args.append(invstd.reshape(1, K).astype(jnp.float32))
    in_specs.append(pl.BlockSpec((tm, K), lambda i: (i, 0)))
    args.append(x2d)
    if fused_pre:
        in_specs.append(pl.BlockSpec(w_pre.shape, lambda i: (0, 0)))
        args.append(w_pre)
    in_specs.append(pl.BlockSpec((w2d.shape[0], N), lambda i: (0, 0)))
    args.append(w2d)

    out_shape = [jax.ShapeDtypeStruct((m_pad, N), out_dtype)]
    out_specs = [pl.BlockSpec((tm, N), lambda i: (i, 0))]
    if want_stats:
        out_shape.append(jax.ShapeDtypeStruct((grid_m, 2, N), jnp.float32))
        out_specs.append(pl.BlockSpec((1, 2, N), lambda i: (i, 0, 0)))

    # VMEM budget derived from the tiles (BlockSpec double-buffers each operand);
    # generous headroom, clamped under the 32 MiB scoped limit (v6e default, v7x safe).
    bpe_x = jnp.dtype(x2d.dtype).itemsize
    bpe_o = jnp.dtype(out_dtype).itemsize
    vmem = 2 * tm * K * bpe_x
    vmem += 2 * int(w2d.size) * w2d.dtype.itemsize
    if fused_pre:
        vmem += 2 * int(w_pre.size) * w_pre.dtype.itemsize
        vmem += tm * w_pre.shape[1] * 4          # fused intermediate (f32)
    if fold_bn:
        vmem += 2 * 2 * K * 4
    vmem += 2 * tm * N * bpe_o
    if want_stats:
        vmem += 2 * 2 * N * 4
    vmem_limit = int(min(32 * 1024 * 1024, 2 * vmem + 8 * 1024 * 1024))

    k_main = w2d.shape[0]
    flops = 2 * m_pad * k_main * N
    bytes_acc = m_pad * K * bpe_x + int(w2d.size) * w2d.dtype.itemsize + m_pad * N * bpe_o
    if fused_pre:
        flops += 2 * m_pad * K * w_pre.shape[1]
        bytes_acc += int(w_pre.size) * w_pre.dtype.itemsize

    kernel = functools.partial(
        _layer_kernel, tm=tm, m_true=M, fold_bn=fold_bn, fold_lrelu=fold_lrelu,
        fused_pre=fused_pre, want_stats=want_stats)

    res = pl.pallas_call(
        kernel,
        grid=(grid_m,),
        in_specs=in_specs,
        out_specs=tuple(out_specs) if want_stats else out_specs[0],
        out_shape=tuple(out_shape) if want_stats else out_shape[0],
        compiler_params=pltpu.CompilerParams(
            dimension_semantics=("parallel",),
            vmem_limit_bytes=vmem_limit),
        cost_estimate=pl.CostEstimate(flops=int(flops), transcendentals=0,
                                      bytes_accessed=int(bytes_acc)),
    )(*args)

    if want_stats:
        y, stats = res
    else:
        y, stats = res, None
    if m_pad != M:
        y = y[:M]
    return y, stats


def _finish_stats(stats, m_rows):
    """Reduce per-tile (sum, sumsq) to BN (mean, invstd) -- tiny (grid_m, N) reduce."""
    col_sum = jnp.sum(stats[:, 0, :], axis=0)
    col_sq = jnp.sum(stats[:, 1, :], axis=0)
    mean = col_sum / m_rows
    var = jnp.maximum(col_sq / m_rows - mean * mean, 0.0)   # biased var, as BN training
    return mean, lax.rsqrt(var + BN_EPS)


# ----------------------------------------------------------------------------
# Glue: space-to-depth (im2col for 2x2 stride-2 valid conv) + weight reshapes
# ----------------------------------------------------------------------------
def space_to_depth(x):
    # (B, H, W, C) -> (B, H//2, W//2, 4*C), patch flattened as (kh, kw, c)
    B, H, W, C = x.shape
    x = x.reshape(B, H // 2, 2, W // 2, 2, C)
    x = x.transpose(0, 1, 3, 2, 4, 5)
    return x.reshape(B, H // 2, W // 2, 4 * C)


def conv2x2_weight_to_matrix(w):
    # (Cout, Cin, 2, 2) -> (4*Cin, Cout), flattened as (kh, kw, cin)
    cout, cin = w.shape[0], w.shape[1]
    return jnp.transpose(w, (2, 3, 1, 0)).reshape(4 * cin, cout)


def conv1x1_weight_to_matrix(w):
    # (Cout, Cin, 1, 1) -> (Cin, Cout)
    return jnp.transpose(w[:, :, 0, 0], (1, 0))


# ----------------------------------------------------------------------------
# Full forward pass
# ----------------------------------------------------------------------------
def netd_patch_forward(x_nchw, params):
    x = jnp.transpose(x_nchw, (0, 2, 3, 1)).astype(jnp.bfloat16)  # NCHW -> NHWC
    B, H, W, _ = x.shape

    # conv1 (3->64, 2x2 s2) + lrelu + conv2 (64->128, 1x1), fused; emit BN1 stats of y2.
    p = space_to_depth(x); H //= 2; W //= 2
    M = B * H * W
    y, st = conv_layer(p.reshape(M, 12), params["w2"], w_pre=params["w1"],
                       want_stats=True)
    mean, inv = _finish_stats(st, M)

    # conv3 (128->256, 2x2 s2): fold bn1 + lrelu into the prologue.
    p = space_to_depth(y.reshape(B, H, W, 128)); H //= 2; W //= 2
    M = B * H * W
    y, st = conv_layer(p.reshape(M, 4 * 128), params["w3"],
                       mean=jnp.tile(mean, 4), invstd=jnp.tile(inv, 4),
                       fold_lrelu=True, want_stats=True)
    mean, inv = _finish_stats(st, M)

    # conv4 (256->512, 2x2 s2): fold bn2 + lrelu.
    p = space_to_depth(y.reshape(B, H, W, 256)); H //= 2; W //= 2
    M = B * H * W
    y, st = conv_layer(p.reshape(M, 4 * 256), params["w4"],
                       mean=jnp.tile(mean, 4), invstd=jnp.tile(inv, 4),
                       fold_lrelu=True, want_stats=True)
    mean, inv = _finish_stats(st, M)

    # conv5 (512->512, 1x1): fold bn3 + lrelu.
    y, st = conv_layer(y, params["w5"], mean=mean, invstd=inv,
                       fold_lrelu=True, want_stats=True)
    mean, inv = _finish_stats(st, M)

    # conv6 (512->256, 2x2 s2): fold bn3 + lrelu.
    p = space_to_depth(y.reshape(B, H, W, 512)); H //= 2; W //= 2
    M = B * H * W
    y, st = conv_layer(p.reshape(M, 4 * 512), params["w6"],
                       mean=jnp.tile(mean, 4), invstd=jnp.tile(inv, 4),
                       fold_lrelu=True, want_stats=True)
    mean, inv = _finish_stats(st, M)

    # conv7 (256->1, 1x1, linear): fold bn2 + lrelu; weight padded to N=128 so the
    # output stores are lane-dense; take column 0.
    y, _ = conv_layer(y, params["w7"], mean=mean, invstd=inv,
                      fold_lrelu=True, want_stats=False, out_dtype=jnp.float32)
    # C_out == 1, so NHWC row-major flatten equals PyTorch's NCHW reshape(-1).
    return y[:, 0].reshape(-1)


# ----------------------------------------------------------------------------
# Deterministic parameter initialization (PyTorch weight shapes: OIHW)
# ----------------------------------------------------------------------------
def init_params(key):
    shapes = {
        "w1": (64, 3, 2, 2),
        "w2": (128, 64, 1, 1),
        "w3": (256, 128, 2, 2),
        "w4": (512, 256, 2, 2),
        "w5": (512, 512, 1, 1),
        "w6": (256, 512, 2, 2),
        "w7": (1, 256, 1, 1),
    }
    raw = {}
    for i, (name, shp) in enumerate(shapes.items()):
        k = jax.random.fold_in(key, i)
        fan_in = shp[1] * shp[2] * shp[3]
        raw[name] = jax.random.normal(k, shp, jnp.float32) / jnp.sqrt(float(fan_in))
    w7m = jnp.pad(conv1x1_weight_to_matrix(raw["w7"]), ((0, 0), (0, 127)))
    params = {
        "w1": conv2x2_weight_to_matrix(raw["w1"]).astype(jnp.bfloat16),
        "w2": conv1x1_weight_to_matrix(raw["w2"]).astype(jnp.bfloat16),
        "w3": conv2x2_weight_to_matrix(raw["w3"]).astype(jnp.bfloat16),
        "w4": conv2x2_weight_to_matrix(raw["w4"]).astype(jnp.bfloat16),
        "w5": conv1x1_weight_to_matrix(raw["w5"]).astype(jnp.bfloat16),
        "w6": conv2x2_weight_to_matrix(raw["w6"]).astype(jnp.bfloat16),
        "w7": w7m.astype(jnp.bfloat16),
    }
    return params, raw


# ----------------------------------------------------------------------------
# Pure-JAX f32 reference (lax.conv) for correctness check
# ----------------------------------------------------------------------------
def _conv_nchw(x, w, stride):
    return lax.conv_general_dilated(
        x, w, window_strides=(stride, stride), padding="VALID",
        dimension_numbers=("NCHW", "OIHW", "NCHW"))


def _bn_train(x):
    mean = jnp.mean(x, axis=(0, 2, 3), keepdims=True)
    var = jnp.mean(jnp.square(x - mean), axis=(0, 2, 3), keepdims=True)
    return (x - mean) * lax.rsqrt(var + BN_EPS)


def _lrelu(x):
    return jnp.where(x > 0, x, LRELU_SLOPE * x)


def reference_forward(x, raw):
    x = _lrelu(_conv_nchw(x, raw["w1"], 2))
    x = _lrelu(_bn_train(_conv_nchw(x, raw["w2"], 1)))
    x = _lrelu(_bn_train(_conv_nchw(x, raw["w3"], 2)))
    x = _lrelu(_bn_train(_conv_nchw(x, raw["w4"], 2)))
    x = _lrelu(_bn_train(_conv_nchw(x, raw["w5"], 1)))
    x = _lrelu(_bn_train(_conv_nchw(x, raw["w6"], 2)))
    x = _conv_nchw(x, raw["w7"], 1)
    return x.reshape(-1)


if __name__ == "__main__":
    key = jax.random.PRNGKey(0)
    params, raw = init_params(jax.random.fold_in(key, 1))
    # Input: batch=2, 3 channels, 16x16 spatial (NCHW like the PyTorch module).
    x = jax.random.normal(jax.random.fold_in(key, 2), (2, 3, 16, 16), jnp.float32)

    fwd = jax.jit(netd_patch_forward)
    out = jax.block_until_ready(fwd(x, params))
    ref = jax.block_until_ready(reference_forward(x, raw))

    assert out.shape == ref.shape == (2,), (out.shape, ref.shape)
    # bf16 activations/weights vs the f32 reference: allow a few percent.
    assert bool(jnp.allclose(out, ref, rtol=1e-1, atol=5e-2)), (out, ref)
    print("KERNEL_OK")
</pallas_src>

<mosaic_0001>
module attributes {stable_mosaic.version = 11 : i64} {
  func.func @_layer_kernel(%arg0: i32, %arg1: memref<128x12xbf16, #tpu.memory_space<vmem>>, %arg2: memref<12x64xbf16, #tpu.memory_space<vmem>>, %arg3: memref<64x128xbf16, #tpu.memory_space<vmem>>, %arg4: memref<128x128xbf16, #tpu.memory_space<vmem>>, %arg5: memref<1x2x128xf32, #tpu.memory_space<vmem>>) attributes {dimension_semantics = [#tpu.dimension_semantics<parallel>], iteration_bounds = array<i64: 1>, scalar_prefetch = 0 : i64, scratch_operands = 0 : i64, tpu.core_type = #tpu.core_type<tc>, window_params = [{transform_indices = @transform_0, window_bounds = array<i64: 128, 12>}, {pipeline_mode = #tpu.pipeline_mode<synchronous>, transform_indices = @transform_1, window_bounds = array<i64: 12, 64>}, {pipeline_mode = #tpu.pipeline_mode<synchronous>, transform_indices = @transform_2, window_bounds = array<i64: 64, 128>}, {transform_indices = @transform_3, window_bounds = array<i64: 128, 128>}, {transform_indices = @transform_4, window_bounds = array<i64: 1, 2, 128>}]} {
    %c0 = arith.constant 0 : index
    %c0_0 = arith.constant 0 : index
    %0 = vector.load %arg1[%c0, %c0_0] : memref<128x12xbf16, #tpu.memory_space<vmem>>, vector<128x12xbf16>
    %c0_1 = arith.constant 0 : index
    %c0_2 = arith.constant 0 : index
    %1 = vector.load %arg2[%c0_1, %c0_2] : memref<12x64xbf16, #tpu.memory_space<vmem>>, vector<12x64xbf16>
    %cst = arith.constant dense<0.000000e+00> : vector<128x64xf32>
    %2 = tpu.matmul %0, %1, %cst {dimension_numbers = #tpu.dot_dimension_numbers<[1], [0], [0], [1], [0, 0, 1, 1], [], []>} : vector<128x12xbf16>, vector<12x64xbf16>, vector<128x64xf32> -> vector<128x64xf32>
    %cst_3 = arith.constant 0.000000e+00 : f32
    %3 = vector.broadcast %cst_3 : f32 to vector<128x64xf32>
    %4 = arith.cmpf ogt, %2, %3 : vector<128x64xf32>
    %cst_4 = arith.constant 2.000000e-01 : f32
    %5 = vector.broadcast %cst_4 : f32 to vector<128x64xf32>
    %6 = arith.mulf %5, %2 : vector<128x64xf32>
    %7 = arith.select %4, %2, %6 : vector<128x64xi1>, vector<128x64xf32>
    %8 = arith.truncf %7 : vector<128x64xf32> to vector<128x64xbf16>
    %c0_5 = arith.constant 0 : index
    %c0_6 = arith.constant 0 : index
    %9 = vector.load %arg3[%c0_5, %c0_6] : memref<64x128xbf16, #tpu.memory_space<vmem>>, vector<64x128xbf16>
    %cst_7 = arith.constant dense<0.000000e+00> : vector<128x128xf32>
    %10 = tpu.matmul %8, %9, %cst_7 {dimension_numbers = #tpu.dot_dimension_numbers<[1], [0], [0], [1], [0, 0, 1, 1], [], []>} : vector<128x64xbf16>, vector<64x128xbf16>, vector<128x128xf32> -> vector<128x128xf32>
    %11 = arith.truncf %10 : vector<128x128xf32> to vector<128x128xbf16>
    %c0_8 = arith.constant 0 : index
    %c0_9 = arith.constant 0 : index
    %12 = vector.load %arg4[%c0_8, %c0_9] : memref<128x128xbf16, #tpu.memory_space<vmem>>, vector<128x128xbf16>
    tpu.vector_store %arg4[%c0_8, %c0_9], %11 {strides = array<i32>} : memref<128x128xbf16, #tpu.memory_space<vmem>>, vector<128x128xbf16>,
    %13 = tpu.iota {dimensions = array<i32: 0>} : vector<128x128xi32>
    %c128_i32 = arith.constant 128 : i32
    %14 = arith.muli %arg0, %c128_i32 : i32
    %15 = vector.broadcast %14 : i32 to vector<128x128xi32>
    %16 = arith.addi %13, %15 : vector<128x128xi32>
    %c128_i32_10 = arith.constant 128 : i32
    %17 = vector.broadcast %c128_i32_10 : i32 to vector<128x128xi32>
    %18 = arith.cmpi slt, %16, %17 : vector<128x128xi32>
    %cst_11 = arith.constant 0.000000e+00 : f32
    %19 = vector.broadcast %cst_11 : f32 to vector<128x128xf32>
    %20 = arith.select %18, %10, %19 : vector<128x128xi1>, vector<128x128xf32>
    %cst_12 = arith.constant dense<0.000000e+00> : vector<128xf32>
    %21 = vector.multi_reduction <add>, %20, %cst_12 [0] : vector<128x128xf32> to vector<128xf32>
    %22 = vector.shape_cast %21 : vector<128xf32> to vector<1x128xf32>
    %23 = arith.mulf %20, %20 : vector<128x128xf32>
    %cst_13 = arith.constant dense<0.000000e+00> : vector<128xf32>
    %24 = vector.multi_reduction <add>, %23, %cst_13 [0] : vector<128x128xf32> to vector<128xf32>
    %25 = vector.shape_cast %24 : vector<128xf32> to vector<1x128xf32>
    %26 = tpu.concatenate %22, %25 in 0 : vector<1x128xf32>, vector<1x128xf32> -> vector<2x128xf32>
    %27 = vector.shape_cast %26 : vector<2x128xf32> to vector<1x2x128xf32>
    %c0_14 = arith.constant 0 : index
    %c0_15 = arith.constant 0 : index
    %c0_16 = arith.constant 0 : index
    %28 = vector.load %arg5[%c0_14, %c0_15, %c0_16] : memref<1x2x128xf32, #tpu.memory_space<vmem>>, vector<1x2x128xf32>
    tpu.vector_store %arg5[%c0_14, %c0_15, %c0_16], %27 {strides = array<i32>} : memref<1x2x128xf32, #tpu.memory_space<vmem>>, vector<1x2x128xf32>,
    return
  }
  func.func @transform_0(%arg0: i32) -> (i32, i32) {
    %c0_i32 = arith.constant 0 : i32
    %c0_i32_0 = arith.constant 0 : i32
    return %arg0, %c0_i32 : i32, i32
  }
  func.func @transform_1(%arg0: i32) -> (i32, i32) {
    %c0_i32 = arith.constant 0 : i32
    %c0_i32_0 = arith.constant 0 : i32
    %c0_i32_1 = arith.constant 0 : i32
    return %c0_i32, %c0_i32_0 : i32, i32
  }
  func.func @transform_2(%arg0: i32) -> (i32, i32) {
    %c0_i32 = arith.constant 0 : i32
    %c0_i32_0 = arith.constant 0 : i32
    %c0_i32_1 = arith.constant 0 : i32
    return %c0_i32, %c0_i32_0 : i32, i32
  }
  func.func @transform_3(%arg0: i32) -> (i32, i32) {
    %c0_i32 = arith.constant 0 : i32
    %c0_i32_0 = arith.constant 0 : i32
    return %arg0, %c0_i32 : i32, i32
  }
  func.func @transform_4(%arg0: i32) -> (i32, i32, i32) {
    %c0_i32 = arith.constant 0 : i32
    %c0_i32_0 = arith.constant 0 : i32
    %c0_i32_1 = arith.constant 0 : i32
    return %arg0, %c0_i32, %c0_i32_0 : i32, i32, i32
  }
}

module attributes {stable_mosaic.version = 11 : i64} {
  func.func @_layer_kernel(%arg0: i32, %arg1: memref<1x512xf32, #tpu.memory_space<vmem>>, %arg2: memref<1x512xf32, #tpu.memory_space<vmem>>, %arg3: memref<32x512xbf16, #tpu.memory_space<vmem>>, %arg4: memref<512x256xbf16, #tpu.memory_space<vmem>>, %arg5: memref<32x256xbf16, #tpu.memory_space<vmem>>, %arg6: memref<1x2x256xf32, #tpu.memory_space<vmem>>) attributes {dimension_semantics = [#tpu.dimension_semantics<parallel>], iteration_bounds = array<i64: 1>, scalar_prefetch = 0 : i64, scratch_operands = 0 : i64, tpu.core_type = #tpu.core_type<tc>, window_params = [{pipeline_mode = #tpu.pipeline_mode<synchronous>, transform_indices = @transform_0, window_bounds = array<i64: 1, 512>}, {pipeline_mode = #tpu.pipeline_mode<synchronous>, transform_indices = @transform_1, window_bounds = array<i64: 1, 512>}, {transform_indices = @transform_2, window_bounds = array<i64: 32, 512>}, {pipeline_mode = #tpu.pipeline_mode<synchronous>, transform_indices = @transform_3, window_bounds = array<i64: 512, 256>}, {transform_indices = @transform_4, window_bounds = array<i64: 32, 256>}, {transform_indices = @transform_5, window_bounds = array<i64: 1, 2, 256>}]} {
    %c0 = arith.constant 0 : index
    %c0_0 = arith.constant 0 : index
    %0 = vector.load %arg3[%c0, %c0_0] : memref<32x512xbf16, #tpu.memory_space<vmem>>, vector<32x512xbf16>
    %1 = arith.extf %0 : vector<32x512xbf16> to vector<32x512xf32>
    %c0_1 = arith.constant 0 : index
    %c0_2 = arith.constant 0 : index
    %2 = vector.load %arg1[%c0_1, %c0_2] : memref<1x512xf32, #tpu.memory_space<vmem>>, vector<1x512xf32>
    %3 = vector.broadcast %2 : vector<1x512xf32> to vector<32x512xf32>
    %4 = arith.subf %1, %3 : vector<32x512xf32>
    %c0_3 = arith.constant 0 : index
    %c0_4 = arith.constant 0 : index
    %5 = vector.load %arg2[%c0_3, %c0_4] : memref<1x512xf32, #tpu.memory_space<vmem>>, vector<1x512xf32>
    %6 = vector.broadcast %5 : vector<1x512xf32> to vector<32x512xf32>
    %7 = arith.mulf %4, %6 : vector<32x512xf32>
    %cst = arith.constant 0.000000e+00 : f32
    %8 = vector.broadcast %cst : f32 to vector<32x512xf32>
    %9 = arith.cmpf ogt, %7, %8 : vector<32x512xf32>
    %cst_5 = arith.constant 2.000000e-01 : f32
    %10 = vector.broadcast %cst_5 : f32 to vector<32x512xf32>
    %11 = arith.mulf %10, %7 : vector<32x512xf32>
    %12 = arith.select %9, %7, %11 : vector<32x512xi1>, vector<32x512xf32>
    %13 = arith.truncf %12 : vector<32x512xf32> to vector<32x512xbf16>
    %c0_6 = arith.constant 0 : index
    %c0_7 = arith.constant 0 : index
    %14 = vector.load %arg4[%c0_6, %c0_7] : memref<512x256xbf16, #tpu.memory_space<vmem>>, vector<512x256xbf16>
    %cst_8 = arith.constant dense<0.000000e+00> : vector<32x256xf32>
    %15 = tpu.matmul %13, %14, %cst_8 {dimension_numbers = #tpu.dot_dimension_numbers<[1], [0], [0], [1], [0, 0, 1, 1], [], []>} : vector<32x512xbf16>, vector<512x256xbf16>, vector<32x256xf32> -> vector<32x256xf32>
    %16 = arith.truncf %15 : vector<32x256xf32> to vector<32x256xbf16>
    %c0_9 = arith.constant 0 : index
    %c0_10 = arith.constant 0 : index
    %17 = vector.load %arg5[%c0_9, %c0_10] : memref<32x256xbf16, #tpu.memory_space<vmem>>, vector<32x256xbf16>
    tpu.vector_store %arg5[%c0_9, %c0_10], %16 {strides = array<i32>} : memref<32x256xbf16, #tpu.memory_space<vmem>>, vector<32x256xbf16>,
    %18 = tpu.iota {dimensions = array<i32: 0>} : vector<32x256xi32>
    %c32_i32 = arith.constant 32 : i32
    %19 = arith.muli %arg0, %c32_i32 : i32
    %20 = vector.broadcast %19 : i32 to vector<32x256xi32>
    %21 = arith.addi %18, %20 : vector<32x256xi32>
    %c32_i32_11 = arith.constant 32 : i32
    %22 = vector.broadcast %c32_i32_11 : i32 to vector<32x256xi32>
    %23 = arith.cmpi slt, %21, %22 : vector<32x256xi32>
    %cst_12 = arith.constant 0.000000e+00 : f32
    %24 = vector.broadcast %cst_12 : f32 to vector<32x256xf32>
    %25 = arith.select %23, %15, %24 : vector<32x256xi1>, vector<32x256xf32>
    %cst_13 = arith.constant dense<0.000000e+00> : vector<256xf32>
    %26 = vector.multi_reduction <add>, %25, %cst_13 [0] : vector<32x256xf32> to vector<256xf32>
    %27 = vector.shape_cast %26 : vector<256xf32> to vector<1x256xf32>
    %28 = arith.mulf %25, %25 : vector<32x256xf32>
    %cst_14 = arith.constant dense<0.000000e+00> : vector<256xf32>
    %29 = vector.multi_reduction <add>, %28, %cst_14 [0] : vector<32x256xf32> to vector<256xf32>
    %30 = vector.shape_cast %29 : vector<256xf32> to vector<1x256xf32>
    %31 = tpu.concatenate %27, %30 in 0 : vector<1x256xf32>, vector<1x256xf32> -> vector<2x256xf32>
    %32 = vector.shape_cast %31 : vector<2x256xf32> to vector<1x2x256xf32>
    %c0_15 = arith.constant 0 : index
    %c0_16 = arith.constant 0 : index
    %c0_17 = arith.constant 0 : index
    %33 = vector.load %arg6[%c0_15, %c0_16, %c0_17] : memref<1x2x256xf32, #tpu.memory_space<vmem>>, vector<1x2x256xf32>
    tpu.vector_store %arg6[%c0_15, %c0_16, %c0_17], %32 {strides = array<i32>} : memref<1x2x256xf32, #tpu.memory_space<vmem>>, vector<1x2x256xf32>,
    return
  }
  func.func @transform_0(%arg0: i32) -> (i32, i32) {
    %c0_i32 = arith.constant 0 : i32
    %c0_i32_0 = arith.constant 0 : i32
    %c0_i32_1 = arith.constant 0 : i32
    return %c0_i32, %c0_i32_0 : i32, i32
  }
  func.func @transform_1(%arg0: i32) -> (i32, i32) {
    %c0_i32 = arith.constant 0 : i32
    %c0_i32_0 = arith.constant 0 : i32
    %c0_i32_1 = arith.constant 0 : i32
    return %c0_i32, %c0_i32_0 : i32, i32
  }
  func.func @transform_2(%arg0: i32) -> (i32, i32) {
    %c0_i32 = arith.constant 0 : i32
    %c0_i32_0 = arith.constant 0 : i32
    return %arg0, %c0_i32 : i32, i32
  }
  func.func @transform_3(%arg0: i32) -> (i32, i32) {
    %c0_i32 = arith.constant 0 : i32
    %c0_i32_0 = arith.constant 0 : i32
    %c0_i32_1 = arith.constant 0 : i32
    return %c0_i32, %c0_i32_0 : i32, i32
  }
  func.func @transform_4(%arg0: i32) -> (i32, i32) {
    %c0_i32 = arith.constant 0 : i32
    %c0_i32_0 = arith.constant 0 : i32
    return %arg0, %c0_i32 : i32, i32
  }
  func.func @transform_5(%arg0: i32) -> (i32, i32, i32) {
    %c0_i32 = arith.constant 0 : i32
    %c0_i32_0 = arith.constant 0 : i32
    %c0_i32_1 = arith.constant 0 : i32
    return %arg0, %c0_i32, %c0_i32_0 : i32, i32, i32
  }
}

module attributes {stable_mosaic.version = 11 : i64} {
  func.func @_layer_kernel(%arg0: i32, %arg1: memref<1x1024xf32, #tpu.memory_space<vmem>>, %arg2: memref<1x1024xf32, #tpu.memory_space<vmem>>, %arg3: memref<8x1024xbf16, #tpu.memory_space<vmem>>, %arg4: memref<1024x512xbf16, #tpu.memory_space<vmem>>, %arg5: memref<8x512xbf16, #tpu.memory_space<vmem>>, %arg6: memref<1x2x512xf32, #tpu.memory_space<vmem>>) attributes {dimension_semantics = [#tpu.dimension_semantics<parallel>], iteration_bounds = array<i64: 1>, scalar_prefetch = 0 : i64, scratch_operands = 0 : i64, tpu.core_type = #tpu.core_type<tc>, window_params = [{pipeline_mode = #tpu.pipeline_mode<synchronous>, transform_indices = @transform_0, window_bounds = array<i64: 1, 1024>}, {pipeline_mode = #tpu.pipeline_mode<synchronous>, transform_indices = @transform_1, window_bounds = array<i64: 1, 1024>}, {transform_indices = @transform_2, window_bounds = array<i64: 8, 1024>}, {pipeline_mode = #tpu.pipeline_mode<synchronous>, transform_indices = @transform_3, window_bounds = array<i64: 1024, 512>}, {transform_indices = @transform_4, window_bounds = array<i64: 8, 512>}, {transform_indices = @transform_5, window_bounds = array<i64: 1, 2, 512>}]} {
    %c0 = arith.constant 0 : index
    %c0_0 = arith.constant 0 : index
    %0 = vector.load %arg3[%c0, %c0_0] : memref<8x1024xbf16, #tpu.memory_space<vmem>>, vector<8x1024xbf16>
    %1 = arith.extf %0 : vector<8x1024xbf16> to vector<8x1024xf32>
    %c0_1 = arith.constant 0 : index
    %c0_2 = arith.constant 0 : index
    %2 = vector.load %arg1[%c0_1, %c0_2] : memref<1x1024xf32, #tpu.memory_space<vmem>>, vector<1x1024xf32>
    %3 = vector.broadcast %2 : vector<1x1024xf32> to vector<8x1024xf32>
    %4 = arith.subf %1, %3 : vector<8x1024xf32>
    %c0_3 = arith.constant 0 : index
    %c0_4 = arith.constant 0 : index
    %5 = vector.load %arg2[%c0_3, %c0_4] : memref<1x1024xf32, #tpu.memory_space<vmem>>, vector<1x1024xf32>
    %6 = vector.broadcast %5 : vector<1x1024xf32> to vector<8x1024xf32>
    %7 = arith.mulf %4, %6 : vector<8x1024xf32>
    %cst = arith.constant 0.000000e+00 : f32
    %8 = vector.broadcast %cst : f32 to vector<8x1024xf32>
    %9 = arith.cmpf ogt, %7, %8 : vector<8x1024xf32>
    %cst_5 = arith.constant 2.000000e-01 : f32
    %10 = vector.broadcast %cst_5 : f32 to vector<8x1024xf32>
    %11 = arith.mulf %10, %7 : vector<8x1024xf32>
    %12 = arith.select %9, %7, %11 : vector<8x1024xi1>, vector<8x1024xf32>
    %13 = arith.truncf %12 : vector<8x1024xf32> to vector<8x1024xbf16>
    %c0_6 = arith.constant 0 : index
    %c0_7 = arith.constant 0 : index
    %14 = vector.load %arg4[%c0_6, %c0_7] : memref<1024x512xbf16, #tpu.memory_space<vmem>>, vector<1024x512xbf16>
    %cst_8 = arith.constant dense<0.000000e+00> : vector<8x512xf32>
    %15 = tpu.matmul %13, %14, %cst_8 {dimension_numbers = #tpu.dot_dimension_numbers<[1], [0], [0], [1], [0, 0, 1, 1], [], []>} : vector<8x1024xbf16>, vector<1024x512xbf16>, vector<8x512xf32> -> vector<8x512xf32>
    %16 = arith.truncf %15 : vector<8x512xf32> to vector<8x512xbf16>
    %c0_9 = arith.constant 0 : index
    %c0_10 = arith.constant 0 : index
    %17 = vector.load %arg5[%c0_9, %c0_10] : memref<8x512xbf16, #tpu.memory_space<vmem>>, vector<8x512xbf16>
    tpu.vector_store %arg5[%c0_9, %c0_10], %16 {strides = array<i32>} : memref<8x512xbf16, #tpu.memory_space<vmem>>, vector<8x512xbf16>,
    %18 = tpu.iota {dimensions = array<i32: 0>} : vector<8x512xi32>
    %c8_i32 = arith.constant 8 : i32
    %19 = arith.muli %arg0, %c8_i32 : i32
    %20 = vector.broadcast %19 : i32 to vector<8x512xi32>
    %21 = arith.addi %18, %20 : vector<8x512xi32>
    %c8_i32_11 = arith.constant 8 : i32
    %22 = vector.broadcast %c8_i32_11 : i32 to vector<8x512xi32>
    %23 = arith.cmpi slt, %21, %22 : vector<8x512xi32>
    %cst_12 = arith.constant 0.000000e+00 : f32
    %24 = vector.broadcast %cst_12 : f32 to vector<8x512xf32>
    %25 = arith.select %23, %15, %24 : vector<8x512xi1>, vector<8x512xf32>
    %cst_13 = arith.constant dense<0.000000e+00> : vector<512xf32>
    %26 = vector.multi_reduction <add>, %25, %cst_13 [0] : vector<8x512xf32> to vector<512xf32>
    %27 = vector.shape_cast %26 : vector<512xf32> to vector<1x512xf32>
    %28 = arith.mulf %25, %25 : vector<8x512xf32>
    %cst_14 = arith.constant dense<0.000000e+00> : vector<512xf32>
    %29 = vector.multi_reduction <add>, %28, %cst_14 [0] : vector<8x512xf32> to vector<512xf32>
    %30 = vector.shape_cast %29 : vector<512xf32> to vector<1x512xf32>
    %31 = tpu.concatenate %27, %30 in 0 : vector<1x512xf32>, vector<1x512xf32> -> vector<2x512xf32>
    %32 = vector.shape_cast %31 : vector<2x512xf32> to vector<1x2x512xf32>
    %c0_15 = arith.constant 0 : index
    %c0_16 = arith.constant 0 : index
    %c0_17 = arith.constant 0 : index
    %33 = vector.load %arg6[%c0_15, %c0_16, %c0_17] : memref<1x2x512xf32, #tpu.memory_space<vmem>>, vector<1x2x512xf32>
    tpu.vector_store %arg6[%c0_15, %c0_16, %c0_17], %32 {strides = array<i32>} : memref<1x2x512xf32, #tpu.memory_space<vmem>>, vector<1x2x512xf32>,
    return
  }
  func.func @transform_0(%arg0: i32) -> (i32, i32) {
    %c0_i32 = arith.constant 0 : i32
    %c0_i32_0 = arith.constant 0 : i32
    %c0_i32_1 = arith.constant 0 : i32
    return %c0_i32, %c0_i32_0 : i32, i32
  }
  func.func @transform_1(%arg0: i32) -> (i32, i32) {
    %c0_i32 = arith.constant 0 : i32
    %c0_i32_0 = arith.constant 0 : i32
    %c0_i32_1 = arith.constant 0 : i32
    return %c0_i32, %c0_i32_0 : i32, i32
  }
  func.func @transform_2(%arg0: i32) -> (i32, i32) {
    %c0_i32 = arith.constant 0 : i32
    %c0_i32_0 = arith.constant 0 : i32
    return %arg0, %c0_i32 : i32, i32
  }
  func.func @transform_3(%arg0: i32) -> (i32, i32) {
    %c0_i32 = arith.constant 0 : i32
    %c0_i32_0 = arith.constant 0 : i32
    %c0_i32_1 = arith.constant 0 : i32
    return %c0_i32, %c0_i32_0 : i32, i32
  }
  func.func @transform_4(%arg0: i32) -> (i32, i32) {
    %c0_i32 = arith.constant 0 : i32
    %c0_i32_0 = arith.constant 0 : i32
    return %arg0, %c0_i32 : i32, i32
  }
  func.func @transform_5(%arg0: i32) -> (i32, i32, i32) {
    %c0_i32 = arith.constant 0 : i32
    %c0_i32_0 = arith.constant 0 : i32
    %c0_i32_1 = arith.constant 0 : i32
    return %arg0, %c0_i32, %c0_i32_0 : i32, i32, i32
  }
}

module attributes {stable_mosaic.version = 11 : i64} {
  func.func @_layer_kernel(%arg0: i32, %arg1: memref<1x512xf32, #tpu.memory_space<vmem>>, %arg2: memref<1x512xf32, #tpu.memory_space<vmem>>, %arg3: memref<8x512xbf16, #tpu.memory_space<vmem>>, %arg4: memref<512x512xbf16, #tpu.memory_space<vmem>>, %arg5: memref<8x512xbf16, #tpu.memory_space<vmem>>, %arg6: memref<1x2x512xf32, #tpu.memory_space<vmem>>) attributes {dimension_semantics = [#tpu.dimension_semantics<parallel>], iteration_bounds = array<i64: 1>, scalar_prefetch = 0 : i64, scratch_operands = 0 : i64, tpu.core_type = #tpu.core_type<tc>, window_params = [{pipeline_mode = #tpu.pipeline_mode<synchronous>, transform_indices = @transform_0, window_bounds = array<i64: 1, 512>}, {pipeline_mode = #tpu.pipeline_mode<synchronous>, transform_indices = @transform_1, window_bounds = array<i64: 1, 512>}, {transform_indices = @transform_2, window_bounds = array<i64: 8, 512>}, {pipeline_mode = #tpu.pipeline_mode<synchronous>, transform_indices = @transform_3, window_bounds = array<i64: 512, 512>}, {transform_indices = @transform_4, window_bounds = array<i64: 8, 512>}, {transform_indices = @transform_5, window_bounds = array<i64: 1, 2, 512>}]} {
    %c0 = arith.constant 0 : index
    %c0_0 = arith.constant 0 : index
    %0 = vector.load %arg3[%c0, %c0_0] : memref<8x512xbf16, #tpu.memory_space<vmem>>, vector<8x512xbf16>
    %1 = arith.extf %0 : vector<8x512xbf16> to vector<8x512xf32>
    %c0_1 = arith.constant 0 : index
    %c0_2 = arith.constant 0 : index
    %2 = vector.load %arg1[%c0_1, %c0_2] : memref<1x512xf32, #tpu.memory_space<vmem>>, vector<1x512xf32>
    %3 = vector.broadcast %2 : vector<1x512xf32> to vector<8x512xf32>
    %4 = arith.subf %1, %3 : vector<8x512xf32>
    %c0_3 = arith.constant 0 : index
    %c0_4 = arith.constant 0 : index
    %5 = vector.load %arg2[%c0_3, %c0_4] : memref<1x512xf32, #tpu.memory_space<vmem>>, vector<1x512xf32>
    %6 = vector.broadcast %5 : vector<1x512xf32> to vector<8x512xf32>
    %7 = arith.mulf %4, %6 : vector<8x512xf32>
    %cst = arith.constant 0.000000e+00 : f32
    %8 = vector.broadcast %cst : f32 to vector<8x512xf32>
    %9 = arith.cmpf ogt, %7, %8 : vector<8x512xf32>
    %cst_5 = arith.constant 2.000000e-01 : f32
    %10 = vector.broadcast %cst_5 : f32 to vector<8x512xf32>
    %11 = arith.mulf %10, %7 : vector<8x512xf32>
    %12 = arith.select %9, %7, %11 : vector<8x512xi1>, vector<8x512xf32>
    %13 = arith.truncf %12 : vector<8x512xf32> to vector<8x512xbf16>
    %c0_6 = arith.constant 0 : index
    %c0_7 = arith.constant 0 : index
    %14 = vector.load %arg4[%c0_6, %c0_7] : memref<512x512xbf16, #tpu.memory_space<vmem>>, vector<512x512xbf16>
    %cst_8 = arith.constant dense<0.000000e+00> : vector<8x512xf32>
    %15 = tpu.matmul %13, %14, %cst_8 {dimension_numbers = #tpu.dot_dimension_numbers<[1], [0], [0], [1], [0, 0, 1, 1], [], []>} : vector<8x512xbf16>, vector<512x512xbf16>, vector<8x512xf32> -> vector<8x512xf32>
    %16 = arith.truncf %15 : vector<8x512xf32> to vector<8x512xbf16>
    %c0_9 = arith.constant 0 : index
    %c0_10 = arith.constant 0 : index
    %17 = vector.load %arg5[%c0_9, %c0_10] : memref<8x512xbf16, #tpu.memory_space<vmem>>, vector<8x512xbf16>
    tpu.vector_store %arg5[%c0_9, %c0_10], %16 {strides = array<i32>} : memref<8x512xbf16, #tpu.memory_space<vmem>>, vector<8x512xbf16>,
    %18 = tpu.iota {dimensions = array<i32: 0>} : vector<8x512xi32>
    %c8_i32 = arith.constant 8 : i32
    %19 = arith.muli %arg0, %c8_i32 : i32
    %20 = vector.broadcast %19 : i32 to vector<8x512xi32>
    %21 = arith.addi %18, %20 : vector<8x512xi32>
    %c8_i32_11 = arith.constant 8 : i32
    %22 = vector.broadcast %c8_i32_11 : i32 to vector<8x512xi32>
    %23 = arith.cmpi slt, %21, %22 : vector<8x512xi32>
    %cst_12 = arith.constant 0.000000e+00 : f32
    %24 = vector.broadcast %cst_12 : f32 to vector<8x512xf32>
    %25 = arith.select %23, %15, %24 : vector<8x512xi1>, vector<8x512xf32>
    %cst_13 = arith.constant dense<0.000000e+00> : vector<512xf32>
    %26 = vector.multi_reduction <add>, %25, %cst_13 [0] : vector<8x512xf32> to vector<512xf32>
    %27 = vector.shape_cast %26 : vector<512xf32> to vector<1x512xf32>
    %28 = arith.mulf %25, %25 : vector<8x512xf32>
    %cst_14 = arith.constant dense<0.000000e+00> : vector<512xf32>
    %29 = vector.multi_reduction <add>, %28, %cst_14 [0] : vector<8x512xf32> to vector<512xf32>
    %30 = vector.shape_cast %29 : vector<512xf32> to vector<1x512xf32>
    %31 = tpu.concatenate %27, %30 in 0 : vector<1x512xf32>, vector<1x512xf32> -> vector<2x512xf32>
    %32 = vector.shape_cast %31 : vector<2x512xf32> to vector<1x2x512xf32>
    %c0_15 = arith.constant 0 : index
    %c0_16 = arith.constant 0 : index
    %c0_17 = arith.constant 0 : index
    %33 = vector.load %arg6[%c0_15, %c0_16, %c0_17] : memref<1x2x512xf32, #tpu.memory_space<vmem>>, vector<1x2x512xf32>
    tpu.vector_store %arg6[%c0_15, %c0_16, %c0_17], %32 {strides = array<i32>} : memref<1x2x512xf32, #tpu.memory_space<vmem>>, vector<1x2x512xf32>,
    return
  }
  func.func @transform_0(%arg0: i32) -> (i32, i32) {
    %c0_i32 = arith.constant 0 : i32
    %c0_i32_0 = arith.constant 0 : i32
    %c0_i32_1 = arith.constant 0 : i32
    return %c0_i32, %c0_i32_0 : i32, i32
  }
  func.func @transform_1(%arg0: i32) -> (i32, i32) {
    %c0_i32 = arith.constant 0 : i32
    %c0_i32_0 = arith.constant 0 : i32
    %c0_i32_1 = arith.constant 0 : i32
    return %c0_i32, %c0_i32_0 : i32, i32
  }
  func.func @transform_2(%arg0: i32) -> (i32, i32) {
    %c0_i32 = arith.constant 0 : i32
    %c0_i32_0 = arith.constant 0 : i32
    return %arg0, %c0_i32 : i32, i32
  }
  func.func @transform_3(%arg0: i32) -> (i32, i32) {
    %c0_i32 = arith.constant 0 : i32
    %c0_i32_0 = arith.constant 0 : i32
    %c0_i32_1 = arith.constant 0 : i32
    return %c0_i32, %c0_i32_0 : i32, i32
  }
  func.func @transform_4(%arg0: i32) -> (i32, i32) {
    %c0_i32 = arith.constant 0 : i32
    %c0_i32_0 = arith.constant 0 : i32
    return %arg0, %c0_i32 : i32, i32
  }
  func.func @transform_5(%arg0: i32) -> (i32, i32, i32) {
    %c0_i32 = arith.constant 0 : i32
    %c0_i32_0 = arith.constant 0 : i32
    %c0_i32_1 = arith.constant 0 : i32
    return %arg0, %c0_i32, %c0_i32_0 : i32, i32, i32
  }
}

module attributes {stable_mosaic.version = 11 : i64} {
  func.func @_layer_kernel(%arg0: i32, %arg1: memref<1x2048xf32, #tpu.memory_space<vmem>>, %arg2: memref<1x2048xf32, #tpu.memory_space<vmem>>, %arg3: memref<8x2048xbf16, #tpu.memory_space<vmem>>, %arg4: memref<2048x256xbf16, #tpu.memory_space<vmem>>, %arg5: memref<8x256xbf16, #tpu.memory_space<vmem>>, %arg6: memref<1x2x256xf32, #tpu.memory_space<vmem>>) attributes {dimension_semantics = [#tpu.dimension_semantics<parallel>], iteration_bounds = array<i64: 1>, scalar_prefetch = 0 : i64, scratch_operands = 0 : i64, tpu.core_type = #tpu.core_type<tc>, window_params = [{pipeline_mode = #tpu.pipeline_mode<synchronous>, transform_indices = @transform_0, window_bounds = array<i64: 1, 2048>}, {pipeline_mode = #tpu.pipeline_mode<synchronous>, transform_indices = @transform_1, window_bounds = array<i64: 1, 2048>}, {transform_indices = @transform_2, window_bounds = array<i64: 8, 2048>}, {pipeline_mode = #tpu.pipeline_mode<synchronous>, transform_indices = @transform_3, window_bounds = array<i64: 2048, 256>}, {transform_indices = @transform_4, window_bounds = array<i64: 8, 256>}, {transform_indices = @transform_5, window_bounds = array<i64: 1, 2, 256>}]} {
    %c0 = arith.constant 0 : index
    %c0_0 = arith.constant 0 : index
    %0 = vector.load %arg3[%c0, %c0_0] : memref<8x2048xbf16, #tpu.memory_space<vmem>>, vector<8x2048xbf16>
    %1 = arith.extf %0 : vector<8x2048xbf16> to vector<8x2048xf32>
    %c0_1 = arith.constant 0 : index
    %c0_2 = arith.constant 0 : index
    %2 = vector.load %arg1[%c0_1, %c0_2] : memref<1x2048xf32, #tpu.memory_space<vmem>>, vector<1x2048xf32>
    %3 = vector.broadcast %2 : vector<1x2048xf32> to vector<8x2048xf32>
    %4 = arith.subf %1, %3 : vector<8x2048xf32>
    %c0_3 = arith.constant 0 : index
    %c0_4 = arith.constant 0 : index
    %5 = vector.load %arg2[%c0_3, %c0_4] : memref<1x2048xf32, #tpu.memory_space<vmem>>, vector<1x2048xf32>
    %6 = vector.broadcast %5 : vector<1x2048xf32> to vector<8x2048xf32>
    %7 = arith.mulf %4, %6 : vector<8x2048xf32>
    %cst = arith.constant 0.000000e+00 : f32
    %8 = vector.broadcast %cst : f32 to vector<8x2048xf32>
    %9 = arith.cmpf ogt, %7, %8 : vector<8x2048xf32>
    %cst_5 = arith.constant 2.000000e-01 : f32
    %10 = vector.broadcast %cst_5 : f32 to vector<8x2048xf32>
    %11 = arith.mulf %10, %7 : vector<8x2048xf32>
    %12 = arith.select %9, %7, %11 : vector<8x2048xi1>, vector<8x2048xf32>
    %13 = arith.truncf %12 : vector<8x2048xf32> to vector<8x2048xbf16>
    %c0_6 = arith.constant 0 : index
    %c0_7 = arith.constant 0 : index
    %14 = vector.load %arg4[%c0_6, %c0_7] : memref<2048x256xbf16, #tpu.memory_space<vmem>>, vector<2048x256xbf16>
    %cst_8 = arith.constant dense<0.000000e+00> : vector<8x256xf32>
    %15 = tpu.matmul %13, %14, %cst_8 {dimension_numbers = #tpu.dot_dimension_numbers<[1], [0], [0], [1], [0, 0, 1, 1], [], []>} : vector<8x2048xbf16>, vector<2048x256xbf16>, vector<8x256xf32> -> vector<8x256xf32>
    %16 = arith.truncf %15 : vector<8x256xf32> to vector<8x256xbf16>
    %c0_9 = arith.constant 0 : index
    %c0_10 = arith.constant 0 : index
    %17 = vector.load %arg5[%c0_9, %c0_10] : memref<8x256xbf16, #tpu.memory_space<vmem>>, vector<8x256xbf16>
    tpu.vector_store %arg5[%c0_9, %c0_10], %16 {strides = array<i32>} : memref<8x256xbf16, #tpu.memory_space<vmem>>, vector<8x256xbf16>,
    %18 = tpu.iota {dimensions = array<i32: 0>} : vector<8x256xi32>
    %c8_i32 = arith.constant 8 : i32
    %19 = arith.muli %arg0, %c8_i32 : i32
    %20 = vector.broadcast %19 : i32 to vector<8x256xi32>
    %21 = arith.addi %18, %20 : vector<8x256xi32>
    %c2_i32 = arith.constant 2 : i32
    %22 = vector.broadcast %c2_i32 : i32 to vector<8x256xi32>
    %23 = arith.cmpi slt, %21, %22 : vector<8x256xi32>
    %cst_11 = arith.constant 0.000000e+00 : f32
    %24 = vector.broadcast %cst_11 : f32 to vector<8x256xf32>
    %25 = arith.select %23, %15, %24 : vector<8x256xi1>, vector<8x256xf32>
    %cst_12 = arith.constant dense<0.000000e+00> : vector<256xf32>
    %26 = vector.multi_reduction <add>, %25, %cst_12 [0] : vector<8x256xf32> to vector<256xf32>
    %27 = vector.shape_cast %26 : vector<256xf32> to vector<1x256xf32>
    %28 = arith.mulf %25, %25 : vector<8x256xf32>
    %cst_13 = arith.constant dense<0.000000e+00> : vector<256xf32>
    %29 = vector.multi_reduction <add>, %28, %cst_13 [0] : vector<8x256xf32> to vector<256xf32>
    %30 = vector.shape_cast %29 : vector<256xf32> to vector<1x256xf32>
    %31 = tpu.concatenate %27, %30 in 0 : vector<1x256xf32>, vector<1x256xf32> -> vector<2x256xf32>
    %32 = vector.shape_cast %31 : vector<2x256xf32> to vector<1x2x256xf32>
    %c0_14 = arith.constant 0 : index
    %c0_15 = arith.constant 0 : index
    %c0_16 = arith.constant 0 : index
    %33 = vector.load %arg6[%c0_14, %c0_15, %c0_16] : memref<1x2x256xf32, #tpu.memory_space<vmem>>, vector<1x2x256xf32>
    tpu.vector_store %arg6[%c0_14, %c0_15, %c0_16], %32 {strides = array<i32>} : memref<1x2x256xf32, #tpu.memory_space<vmem>>, vector<1x2x256xf32>,
    return
  }
  func.func @transform_0(%arg0: i32) -> (i32, i32) {
    %c0_i32 = arith.constant 0 : i32
    %c0_i32_0 = arith.constant 0 : i32
    %c0_i32_1 = arith.constant 0 : i32
    return %c0_i32, %c0_i32_0 : i32, i32
  }
  func.func @transform_1(%arg0: i32) -> (i32, i32) {
    %c0_i32 = arith.constant 0 : i32
    %c0_i32_0 = arith.constant 0 : i32
    %c0_i32_1 = arith.constant 0 : i32
    return %c0_i32, %c0_i32_0 : i32, i32
  }
  func.func @transform_2(%arg0: i32) -> (i32, i32) {
    %c0_i32 = arith.constant 0 : i32
    %c0_i32_0 = arith.constant 0 : i32
    return %arg0, %c0_i32 : i32, i32
  }
  func.func @transform_3(%arg0: i32) -> (i32, i32) {
    %c0_i32 = arith.constant 0 : i32
    %c0_i32_0 = arith.constant 0 : i32
    %c0_i32_1 = arith.constant 0 : i32
    return %c0_i32, %c0_i32_0 : i32, i32
  }
  func.func @transform_4(%arg0: i32) -> (i32, i32) {
    %c0_i32 = arith.constant 0 : i32
    %c0_i32_0 = arith.constant 0 : i32
    return %arg0, %c0_i32 : i32, i32
  }
  func.func @transform_5(%arg0: i32) -> (i32, i32, i32) {
    %c0_i32 = arith.constant 0 : i32
    %c0_i32_0 = arith.constant 0 : i32
    %c0_i32_1 = arith.constant 0 : i32
    return %arg0, %c0_i32, %c0_i32_0 : i32, i32, i32
  }
}

module attributes {stable_mosaic.version = 11 : i64} {
  func.func @_layer_kernel(%arg0: i32, %arg1: memref<1x256xf32, #tpu.memory_space<vmem>>, %arg2: memref<1x256xf32, #tpu.memory_space<vmem>>, %arg3: memref<8x256xbf16, #tpu.memory_space<vmem>>, %arg4: memref<256x128xbf16, #tpu.memory_space<vmem>>, %arg5: memref<8x128xf32, #tpu.memory_space<vmem>>) attributes {dimension_semantics = [#tpu.dimension_semantics<parallel>], iteration_bounds = array<i64: 1>, scalar_prefetch = 0 : i64, scratch_operands = 0 : i64, tpu.core_type = #tpu.core_type<tc>, window_params = [{pipeline_mode = #tpu.pipeline_mode<synchronous>, transform_indices = @transform_0, window_bounds = array<i64: 1, 256>}, {pipeline_mode = #tpu.pipeline_mode<synchronous>, transform_indices = @transform_1, window_bounds = array<i64: 1, 256>}, {transform_indices = @transform_2, window_bounds = array<i64: 8, 256>}, {pipeline_mode = #tpu.pipeline_mode<synchronous>, transform_indices = @transform_3, window_bounds = array<i64: 256, 128>}, {transform_indices = @transform_4, window_bounds = array<i64: 8, 128>}]} {
    %c0 = arith.constant 0 : index
    %c0_0 = arith.constant 0 : index
    %0 = vector.load %arg3[%c0, %c0_0] : memref<8x256xbf16, #tpu.memory_space<vmem>>, vector<8x256xbf16>
    %1 = arith.extf %0 : vector<8x256xbf16> to vector<8x256xf32>
    %c0_1 = arith.constant 0 : index
    %c0_2 = arith.constant 0 : index
    %2 = vector.load %arg1[%c0_1, %c0_2] : memref<1x256xf32, #tpu.memory_space<vmem>>, vector<1x256xf32>
    %3 = vector.broadcast %2 : vector<1x256xf32> to vector<8x256xf32>
    %4 = arith.subf %1, %3 : vector<8x256xf32>
    %c0_3 = arith.constant 0 : index
    %c0_4 = arith.constant 0 : index
    %5 = vector.load %arg2[%c0_3, %c0_4] : memref<1x256xf32, #tpu.memory_space<vmem>>, vector<1x256xf32>
    %6 = vector.broadcast %5 : vector<1x256xf32> to vector<8x256xf32>
    %7 = arith.mulf %4, %6 : vector<8x256xf32>
    %cst = arith.constant 0.000000e+00 : f32
    %8 = vector.broadcast %cst : f32 to vector<8x256xf32>
    %9 = arith.cmpf ogt, %7, %8 : vector<8x256xf32>
    %cst_5 = arith.constant 2.000000e-01 : f32
    %10 = vector.broadcast %cst_5 : f32 to vector<8x256xf32>
    %11 = arith.mulf %10, %7 : vector<8x256xf32>
    %12 = arith.select %9, %7, %11 : vector<8x256xi1>, vector<8x256xf32>
    %13 = arith.truncf %12 : vector<8x256xf32> to vector<8x256xbf16>
    %c0_6 = arith.constant 0 : index
    %c0_7 = arith.constant 0 : index
    %14 = vector.load %arg4[%c0_6, %c0_7] : memref<256x128xbf16, #tpu.memory_space<vmem>>, vector<256x128xbf16>
    %cst_8 = arith.constant dense<0.000000e+00> : vector<8x128xf32>
    %15 = tpu.matmul %13, %14, %cst_8 {dimension_numbers = #tpu.dot_dimension_numbers<[1], [0], [0], [1], [0, 0, 1, 1], [], []>} : vector<8x256xbf16>, vector<256x128xbf16>, vector<8x128xf32> -> vector<8x128xf32>
    %c0_9 = arith.constant 0 : index
    %c0_10 = arith.constant 0 : index
    %16 = vector.load %arg5[%c0_9, %c0_10] : memref<8x128xf32, #tpu.memory_space<vmem>>, vector<8x128xf32>
    tpu.vector_store %arg5[%c0_9, %c0_10], %15 {strides = array<i32>} : memref<8x128xf32, #tpu.memory_space<vmem>>, vector<8x128xf32>,
    return
  }
  func.func @transform_0(%arg0: i32) -> (i32, i32) {
    %c0_i32 = arith.constant 0 : i32
    %c0_i32_0 = arith.constant 0 : i32
    %c0_i32_1 = arith.constant 0 : i32
    return %c0_i32, %c0_i32_0 : i32, i32
  }
  func.func @transform_1(%arg0: i32) -> (i32, i32) {
    %c0_i32 = arith.constant 0 : i32
    %c0_i32_0 = arith.constant 0 : i32
    %c0_i32_1 = arith.constant 0 : i32
    return %c0_i32, %c0_i32_0 : i32, i32
  }
  func.func @transform_2(%arg0: i32) -> (i32, i32) {
    %c0_i32 = arith.constant 0 : i32
    %c0_i32_0 = arith.constant 0 : i32
    return %arg0, %c0_i32 : i32, i32
  }
  func.func @transform_3(%arg0: i32) -> (i32, i32) {
    %c0_i32 = arith.constant 0 : i32
    %c0_i32_0 = arith.constant 0 : i32
    %c0_i32_1 = arith.constant 0 : i32
    return %c0_i32, %c0_i32_0 : i32, i32
  }
  func.func @transform_4(%arg0: i32) -> (i32, i32) {
    %c0_i32 = arith.constant 0 : i32
    %c0_i32_0 = arith.constant 0 : i32
    return %arg0, %c0_i32 : i32, i32
  }
}

</mosaic_0001>

<llo_original>
// kernel: tile.33
$region0: #{tile.33}
  #allocation0 [shape = 's32[1]{0}', space=sflag, size = 0x4, scoped, tag = 'scoped memory for tile.33']
  %s0 = inlined_call_operand.vmem [shape: f32[128], index: 0, kind: input, shape index: {}]
  %s1 = inlined_call_operand.vmem [shape: f32[4,128], index: 1, kind: output, shape index: {}]
  // Predicated region
  $region2: #{tile.33} parent=0 // pred_check
    _
  $region3: #{tile.33} parent=0 // pred_check_branch
    %3 = sbr.rel (0) target = $region5
  $region4: #{tile.33} parent=0 // pred_region
    _
  $region5: #{tile.33} parent=0 // pred_fallthru
    _
  %v4 = vld [vmem:[%s0] ss:$0 sm:$0xff]
  %5 = vst [vmem:[%s1] sm:$0xf] %v4

// kernel: netd_patch_forward.6
$region0: #{netd_patch_forward.6}
  #allocation0 [shape = 'u32[]', space=smem, size = 0x4, offset = 0x4, fixed_abs, tag = 'smem constant byte address 0x4 - core index']
  #allocation1 [shape = 'u32[144,128]{1,0:T(1,128)}', space=vmem, size = 0x12000, scoped, tag = 'internal scratch']
  %s0 = inlined_call_operand.vmem [shape: bf16[128,12], index: 0, kind: input, shape index: {}]
  %s1 = inlined_call_operand.hbm [shape: bf16[12,64], index: 1, kind: input, shape index: {}]
  %s2 = inlined_call_operand.hbm [shape: bf16[64,128], index: 2, kind: input, shape index: {}]
  %s3 = inlined_call_operand.vmem [shape: bf16[128,128], index: 3, kind: output, shape index: {0}]
  %s4 = inlined_call_operand.vmem [shape: f32[1,2,128], index: 4, kind: output, shape index: {1}]
  %5 = xla_tuple %s3, %s4
  %s6 = sld [smem:[#allocation0]]
  $region38: #{netd_patch_forward.6} parent=0
    _
  %s8 = ssub.s32 1, %s6
  %s9 = scalar_select 0, %s8, %s6
  $region1: #{netd_patch_forward.6} parent=0
    #allocation2 [shape = 'u8[4096]{0}', space=vmem, size = 0x1000, scoped, tag = 'input window, operand 1, single buffered']
    #allocation3 [shape = 's32[1]{0}', space=sflag, size = 0x4, scoped, tag = 'scoped memory for netd_patch_forward.6']
    #allocation4 [shape = 'u8[16384]{0}', space=vmem, size = 0x4000, scoped, tag = 'input window, operand 2, single buffered']
    #allocation5 [shape = 's32[1]{0}', space=sflag, size = 0x4, scoped, tag = 'scoped memory for netd_patch_forward.6']
    %10 = vsyncpa [#allocation3], 0
    %11 = vsyncpa [#allocation5], 0
    // Predicated region
    $region2: #{netd_patch_forward.6} parent=1 // pred_check
      _
    $region3: #{netd_patch_forward.6} parent=1 // pred_check_branch
      %13 = sbr.rel (0) target = $region5
    $region4: #{netd_patch_forward.6} parent=1 // pred_region
      _
    $region5: #{netd_patch_forward.6} parent=1 // pred_fallthru
      _
    // Predicated region
    $region6: #{netd_patch_forward.6} parent=1 // pred_check
      _
    $region7: #{netd_patch_forward.6} parent=1 // pred_check_branch
      %15 = sbr.rel (0) target = $region9
    $region8: #{netd_patch_forward.6} parent=1 // pred_region
      %s17 = ssub.s32 128, 128
      %18 = vsyncadd [#allocation3], %s17
      %s19 = sshll.u32 [#allocation2], 4
      %s20 = int_to_ptr.vmem [resolvable:$true] %s19
      %25 = dma.hbm_to_vmem [thread:$0]  %s1, 128, %s20, [#allocation3], 64, 64, 4
    $region9: #{netd_patch_forward.6} parent=1 // pred_fallthru
      _
    // Predicated region
    $region10: #{netd_patch_forward.6} parent=1 // pred_check
      _
    $region11: #{netd_patch_forward.6} parent=1 // pred_check_branch
      %27 = sbr.rel (0) target = $region13
    $region12: #{netd_patch_forward.6} parent=1 // pred_region
      %s29 = ssub.s32 512, 512
      %30 = vsyncadd [#allocation5], %s29
      %s31 = sshll.u32 [#allocation4], 4
      %s32 = int_to_ptr.vmem [resolvable:$true] %s31
      %37 = dma.hbm_to_vmem [thread:$0]  %s2, 512, %s32, [#allocation5], 64, 64, 4
    $region13: #{netd_patch_forward.6} parent=1 // pred_fallthru
      _
    // Predicated region
    $region14: #{netd_patch_forward.6} parent=1 // pred_check
      _
    $region15: #{netd_patch_forward.6} parent=1 // pred_check_branch
      %39 = sbr.rel (0) target = $region17
    $region16: #{netd_patch_forward.6} parent=1 // pred_region
      %40 = dma.done [#allocation3], 128
    $region17: #{netd_patch_forward.6} parent=1 // pred_fallthru
      _
    // Predicated region
    $region18: #{netd_patch_forward.6} parent=1 // pred_check
      _
    $region19: #{netd_patch_forward.6} parent=1 // pred_check_branch
      %42 = sbr.rel (0) target = $region21
    $region20: #{netd_patch_forward.6} parent=1 // pred_region
      %43 = dma.done [#allocation5], 512
    $region21: #{netd_patch_forward.6} parent=1 // pred_fallthru
      _
    %v45 = vld [vmem:[%s0] sm:$0xf]
    %v46 = vld [vmem:[%s0 + $0x4] sm:$0xf]
    %v47 = vld [vmem:[%s0 + $0x8] sm:$0xf]
    %v48 = vld [vmem:[%s0 + $0xc] sm:$0xf]
    %v49 = vld [vmem:[%s0 + $0x10] sm:$0xf]
    %v50 = vld [vmem:[%s0 + $0x14] sm:$0xf]
    %v51 = vld [vmem:[%s0 + $0x18] sm:$0xf]
    %v52 = vld [vmem:[%s0 + $0x1c] sm:$0xf]
    %v53 = vld [vmem:[%s0 + $0x20] sm:$0xf]
    %v54 = vld [vmem:[%s0 + $0x24] sm:$0xf]
    %v55 = vld [vmem:[%s0 + $0x28] sm:$0xf]
    %v56 = vld [vmem:[%s0 + $0x2c] sm:$0xf]
    %v57 = vld [vmem:[%s0 + $0x30] sm:$0xf]
    %v58 = vld [vmem:[%s0 + $0x34] sm:$0xf]
    %v59 = vld [vmem:[%s0 + $0x38] sm:$0xf]
    %v60 = vld [vmem:[%s0 + $0x3c] sm:$0xf]
    %v61 = vld [vmem:[#allocation2] sm:$0xf]
    %v62 = vld [vmem:[#allocation2 + $0x4] sm:$0x3]
    %v79 = vunpack.c.l.b16 %v45
    %v80 = vunpack.c.l.b16 %v46
    %v81 = vunpack.c.l.b16 %v47
    %v82 = vunpack.c.l.b16 %v48
    %v83 = vunpack.c.l.b16 %v49
    %v84 = vunpack.c.l.b16 %v50
    %v85 = vunpack.c.l.b16 %v51
    %v86 = vunpack.c.l.b16 %v52
    %v87 = vunpack.c.l.b16 %v53
    %v88 = vunpack.c.l.b16 %v54
    %v89 = vunpack.c.l.b16 %v55
    %v90 = vunpack.c.l.b16 %v56
    %v91 = vunpack.c.l.b16 %v57
    %v92 = vunpack.c.l.b16 %v58
    %v93 = vunpack.c.l.b16 %v59
    %v94 = vunpack.c.l.b16 %v60
    %v95 = vpack.c.b16 %v80, %v79
    %v96 = vpack.c.b16 %v82, %v81
    %v97 = vpack.c.b16 %v84, %v83
    %v98 = vpack.c.b16 %v86, %v85
    %v99 = vpack.c.b16 %v88, %v87
    %v100 = vpack.c.b16 %v90, %v89
    %v101 = vpack.c.b16 %v92, %v91
    %v102 = vpack.c.b16 %v94, %v93
    %v105 = vunpack.c.l.b16 %v61
    %v106 = vunpack.c.l.b16 %v62
    %v107 = vpack.c.b16 %v106, %v105
    %vm108 = vcmask 97280
    %v110 = vsel %vm108, %v95, 0
    %v113 = vsel %vm108, %v96, 0
    %v116 = vsel %vm108, %v97, 0
    %v119 = vsel %vm108, %v98, 0
    %v122 = vsel %vm108, %v99, 0
    %v125 = vsel %vm108, %v100, 0
    %v128 = vsel %vm108, %v101, 0
    %v131 = vsel %vm108, %v102, 0
    %vm133 = vcmask 1045504
    %v135 = vsel %vm133, %v107, 0
    %137 = vmatprep.subr.bf16.mxu0 0
    %138 = vmatpush1.bf16.msra.mxu0 0
    %139 = vmatprep.subr.bf16.mxu0 0
    %140 = vmatpush1.bf16.msra.mxu0 0
    %141 = vmatprep.subr.bf16.mxu0 0
    %142 = vmatpush1.bf16.msra.mxu0 0
    %143 = vmatprep.subr.bf16.mxu0 0
    %144 = vmatpush1.bf16.msra.mxu0 0
    %145 = vmatprep.subr.bf16.mxu0 0
    %146 = vmatpush1.bf16.msra.mxu0 0
    %147 = vmatprep.subr.bf16.mxu0 0
    %148 = vmatpush1.bf16.msra.mxu0 0
    %149 = vmatprep.subr.bf16.mxu0 0
    %150 = vmatpush1.bf16.msra.mxu0 0
    %151 = vmatprep.subr.bf16.mxu0 0
    %152 = vmatpush1.bf16.msra.mxu0 %v135
    %153 = vmatprep.subr.bf16.mxu0 0
    %154 = vmatpush2.bf16.msra.mxu0 0
    %155 = vmatprep.subr.bf16.mxu0 0
    %156 = vmatpush2.bf16.msra.mxu0 0
    %157 = vmatprep.subr.bf16.mxu0 0
    %158 = vmatpush2.bf16.msra.mxu0 0
    %159 = vmatprep.subr.bf16.mxu0 0
    %160 = vmatpush2.bf16.msra.mxu0 0
    %161 = vmatprep.subr.bf16.mxu0 0
    %162 = vmatpush2.bf16.msra.mxu0 0
    %163 = vmatprep.subr.bf16.mxu0 0
    %164 = vmatpush2.bf16.msra.mxu0 0
    %165 = vmatprep.subr.bf16.mxu0 0
    %166 = vmatpush2.bf16.msra.mxu0 0
    %167 = vmatprep.subr.bf16.mxu0 0
    %168 = vmatpush2.bf16.msra.mxu0 0
    %169 = vmatprep.mubr.bf16.mxu0 0
    %170 = vmatmul.mubr.bf16.gmra.mxu0 %v110
    %v171 = vpop.f32.mrf.mxu0
    %v172 = vadd.f32 0.0, %v171
    %v173 = vpop.f32.mrf.mxu0
    %v174 = vpop.f32.mrf.mxu0
    %v175 = vadd.f32 0.0, %v174
    %v176 = vpop.f32.mrf.mxu0
    %177 = vmatprep.mubr.bf16.mxu0 0
    %178 = vmatmul.mubr.bf16.gmra.mxu0 %v113
    %v179 = vpop.f32.mrf.mxu0
    %v180 = vadd.f32 0.0, %v179
    %v181 = vpop.f32.mrf.mxu0
    %v182 = vpop.f32.mrf.mxu0
    %v183 = vadd.f32 0.0, %v182
    %v184 = vpop.f32.mrf.mxu0
    %185 = vmatprep.mubr.bf16.mxu0 0
    %186 = vmatmul.mubr.bf16.gmra.mxu0 %v116
    %v187 = vpop.f32.mrf.mxu0
    %v188 = vadd.f32 0.0, %v187
    %v189 = vpop.f32.mrf.mxu0
    %v190 = vpop.f32.mrf.mxu0
    %v191 = vadd.f32 0.0, %v190
    %v192 = vpop.f32.mrf.mxu0
    %193 = vmatprep.mubr.bf16.mxu0 0
    %194 = vmatmul.mubr.bf16.gmra.mxu0 %v119
    %v195 = vpop.f32.mrf.mxu0
    %v196 = vadd.f32 0.0, %v195
    %v197 = vpop.f32.mrf.mxu0
    %v198 = vpop.f32.mrf.mxu0
    %v199 = vadd.f32 0.0, %v198
    %v200 = vpop.f32.mrf.mxu0
    %201 = vmatprep.mubr.bf16.mxu0 0
    %202 = vmatmul.mubr.bf16.gmra.mxu0 %v122
    %v203 = vpop.f32.mrf.mxu0
    %v204 = vadd.f32 0.0, %v203
    %v205 = vpop.f32.mrf.mxu0
    %v206 = vpop.f32.mrf.mxu0
    %v207 = vadd.f32 0.0, %v206
    %v208 = vpop.f32.mrf.mxu0
    %209 = vmatprep.mubr.bf16.mxu0 0
    %210 = vmatmul.mubr.bf16.gmra.mxu0 %v125
    %v211 = vpop.f32.mrf.mxu0
    %v212 = vadd.f32 0.0, %v211
    %v213 = vpop.f32.mrf.mxu0
    %v214 = vpop.f32.mrf.mxu0
    %v215 = vadd.f32 0.0, %v214
    %v216 = vpop.f32.mrf.mxu0
    %217 = vmatprep.mubr.bf16.mxu0 0
    %218 = vmatmul.mubr.bf16.gmra.mxu0 %v128
    %v219 = vpop.f32.mrf.mxu0
    %v220 = vadd.f32 0.0, %v219
    %v221 = vpop.f32.mrf.mxu0
    %v222 = vpop.f32.mrf.mxu0
    %v223 = vadd.f32 0.0, %v222
    %v224 = vpop.f32.mrf.mxu0
    %225 = vmatprep.mubr.bf16.mxu0 0
    %226 = vmatmul.mubr.bf16.gmra.mxu0 %v131
    %v227 = vpop.f32.mrf.mxu0
    %v228 = vadd.f32 0.0, %v227
    %v229 = vpop.f32.mrf.mxu0
    %v230 = vpop.f32.mrf.mxu0
    %v231 = vadd.f32 0.0, %v230
    %v232 = vpop.f32.mrf.mxu0
    %233 = vdwg.mxu0
    %vm234 = vcmp.gt.f32.partialorder %v172, 0.0
    %vm235 = vcmp.gt.f32.partialorder %v175, 0.0
    %vm236 = vcmp.gt.f32.partialorder %v180, 0.0
    %vm237 = vcmp.gt.f32.partialorder %v183, 0.0
    %vm238 = vcmp.gt.f32.partialorder %v188, 0.0
    %vm239 = vcmp.gt.f32.partialorder %v191, 0.0
    %vm240 = vcmp.gt.f32.partialorder %v196, 0.0
    %vm241 = vcmp.gt.f32.partialorder %v199, 0.0
    %vm242 = vcmp.gt.f32.partialorder %v204, 0.0
    %vm243 = vcmp.gt.f32.partialorder %v207, 0.0
    %vm244 = vcmp.gt.f32.partialorder %v212, 0.0
    %vm245 = vcmp.gt.f32.partialorder %v215, 0.0
    %vm246 = vcmp.gt.f32.partialorder %v220, 0.0
    %vm247 = vcmp.gt.f32.partialorder %v223, 0.0
    %vm248 = vcmp.gt.f32.partialorder %v228, 0.0
    %vm249 = vcmp.gt.f32.partialorder %v231, 0.0
    %v250 = vmul.f32 %v172, 0.2
    %v251 = vmul.f32 %v175, 0.2
    %v252 = vmul.f32 %v180, 0.2
    %v253 = vmul.f32 %v183, 0.2
    %v254 = vmul.f32 %v188, 0.2
    %v255 = vmul.f32 %v191, 0.2
    %v256 = vmul.f32 %v196, 0.2
    %v257 = vmul.f32 %v199, 0.2
    %v258 = vmul.f32 %v204, 0.2
    %v259 = vmul.f32 %v207, 0.2
    %v260 = vmul.f32 %v212, 0.2
    %v261 = vmul.f32 %v215, 0.2
    %v262 = vmul.f32 %v220, 0.2
    %v263 = vmul.f32 %v223, 0.2
    %v264 = vmul.f32 %v228, 0.2
    %v265 = vmul.f32 %v231, 0.2
    %v266 = vsel %vm234, %v172, %v250
    %v267 = vsel %vm235, %v175, %v251
    %v268 = vsel %vm236, %v180, %v252
    %v269 = vsel %vm237, %v183, %v253
    %v270 = vsel %vm238, %v188, %v254
    %v271 = vsel %vm239, %v191, %v255
    %v272 = vsel %vm240, %v196, %v256
    %v273 = vsel %vm241, %v199, %v257
    %v274 = vsel %vm242, %v204, %v258
    %v275 = vsel %vm243, %v207, %v259
    %v276 = vsel %vm244, %v212, %v260
    %v277 = vsel %vm245, %v215, %v261
    %v278 = vsel %vm246, %v220, %v262
    %v279 = vsel %vm247, %v223, %v263
    %v280 = vsel %vm248, %v228, %v264
    %v281 = vsel %vm249, %v231, %v265
    %v282 = vpack.c.bf16 %v267, %v266
    %v283 = vpack.c.bf16 %v269, %v268
    %v284 = vpack.c.bf16 %v271, %v270
    %v285 = vpack.c.bf16 %v273, %v272
    %v286 = vpack.c.bf16 %v275, %v274
    %v287 = vpack.c.bf16 %v277, %v276
    %v288 = vpack.c.bf16 %v279, %v278
    %v289 = vpack.c.bf16 %v281, %v280
    %v290 = vld [vmem:[#allocation4] sm:$0xf]
    %v291 = vld [vmem:[#allocation4 + $0x4] sm:$0xf]
    %v292 = vld [vmem:[#allocation4 + $0x8] sm:$0xf]
    %v293 = vld [vmem:[#allocation4 + $0xc] sm:$0xf]
    %v294 = vld [vmem:[#allocation4 + $0x10] sm:$0xf]
    %v295 = vld [vmem:[#allocation4 + $0x14] sm:$0xf]
    %v296 = vld [vmem:[#allocation4 + $0x18] sm:$0xf]
    %v297 = vld [vmem:[#allocation4 + $0x1c] sm:$0xf]
    %v306 = vunpack.c.l.b16 %v290
    %v307 = vunpack.c.l.b16 %v291
    %v308 = vunpack.c.l.b16 %v292
    %v309 = vunpack.c.l.b16 %v293
    %v310 = vunpack.c.l.b16 %v294
    %v311 = vunpack.c.l.b16 %v295
    %v312 = vunpack.c.l.b16 %v296
    %v313 = vunpack.c.l.b16 %v297
    %v314 = vpack.c.b16 %v307, %v306
    %v315 = vpack.c.b16 %v309, %v308
    %v316 = vpack.c.b16 %v311, %v310
    %v317 = vpack.c.b16 %v313, %v312
    %vm322 = vcmask 523264
    %v324 = vsel %vm322, %v282, 0
    %v327 = vsel %vm322, %v283, 0
    %v330 = vsel %vm322, %v284, 0
    %v333 = vsel %vm322, %v285, 0
    %v336 = vsel %vm322, %v286, 0
    %v339 = vsel %vm322, %v287, 0
    %v342 = vsel %vm322, %v288, 0
    %v345 = vsel %vm322, %v289, 0
    %347 = vmatprep.subr.bf16.mxu0 0
    %348 = vmatpush1.bf16.msra.mxu0 0
    %349 = vmatprep.subr.bf16.mxu0 0
    %350 = vmatpush1.bf16.msra.mxu0 0
    %351 = vmatprep.subr.bf16.mxu0 0
    %352 = vmatpush1.bf16.msra.mxu0 0
    %353 = vmatprep.subr.bf16.mxu0 0
    %354 = vmatpush1.bf16.msra.mxu0 0
    %355 = vmatprep.subr.bf16.mxu0 0
    %356 = vmatpush1.bf16.msra.mxu0 %v317
    %357 = vmatprep.subr.bf16.mxu0 0
    %358 = vmatpush1.bf16.msra.mxu0 %v316
    %359 = vmatprep.subr.bf16.mxu0 0
    %360 = vmatpush1.bf16.msra.mxu0 %v315
    %361 = vmatprep.subr.bf16.mxu0 0
    %362 = vmatpush1.bf16.msra.mxu0 %v314
    %363 = vmatprep.subr.bf16.mxu0 0
    %364 = vmatpush2.bf16.msra.mxu0 0
    %365 = vmatprep.subr.bf16.mxu0 0
    %366 = vmatpush2.bf16.msra.mxu0 0
    %367 = vmatprep.subr.bf16.mxu0 0
    %368 = vmatpush2.bf16.msra.mxu0 0
    %369 = vmatprep.subr.bf16.mxu0 0
    %370 = vmatpush2.bf16.msra.mxu0 0
    %371 = vmatprep.subr.bf16.mxu0 0
    %372 = vmatpush2.bf16.msra.mxu0 0
    %373 = vmatprep.subr.bf16.mxu0 0
    %374 = vmatpush2.bf16.msra.mxu0 0
    %375 = vmatprep.subr.bf16.mxu0 0
    %376 = vmatpush2.bf16.msra.mxu0 0
    %377 = vmatprep.subr.bf16.mxu0 0
    %378 = vmatpush2.bf16.msra.mxu0 0
    %379 = vmatprep.mubr.bf16.mxu0 0
    %380 = vmatmul.mubr.bf16.gmra.mxu0 %v324
    %v381 = vpop.f32.mrf.mxu0
    %v382 = vadd.f32 0.0, %v381
    %v383 = vpop.f32.mrf.mxu0
    %v384 = vpop.f32.mrf.mxu0
    %v385 = vadd.f32 0.0, %v384
    %v386 = vpop.f32.mrf.mxu0
    %387 = vmatprep.mubr.bf16.mxu0 0
    %388 = vmatmul.mubr.bf16.gmra.mxu0 %v327
    %v389 = vpop.f32.mrf.mxu0
    %v390 = vadd.f32 0.0, %v389
    %v391 = vpop.f32.mrf.mxu0
    %v392 = vpop.f32.mrf.mxu0
    %v393 = vadd.f32 0.0, %v392
    %v394 = vpop.f32.mrf.mxu0
    %395 = vmatprep.mubr.bf16.mxu0 0
    %396 = vmatmul.mubr.bf16.gmra.mxu0 %v330
    %v397 = vpop.f32.mrf.mxu0
    %v398 = vadd.f32 0.0, %v397
    %v399 = vpop.f32.mrf.mxu0
    %v400 = vpop.f32.mrf.mxu0
    %v401 = vadd.f32 0.0, %v400
    %v402 = vpop.f32.mrf.mxu0
    %403 = vmatprep.mubr.bf16.mxu0 0
    %404 = vmatmul.mubr.bf16.gmra.mxu0 %v333
    %v405 = vpop.f32.mrf.mxu0
    %v406 = vadd.f32 0.0, %v405
    %v407 = vpop.f32.mrf.mxu0
    %v408 = vpop.f32.mrf.mxu0
    %v409 = vadd.f32 0.0, %v408
    %v410 = vpop.f32.mrf.mxu0
    %411 = vmatprep.mubr.bf16.mxu0 0
    %412 = vmatmul.mubr.bf16.gmra.mxu0 %v336
    %v413 = vpop.f32.mrf.mxu0
    %v414 = vadd.f32 0.0, %v413
    %v415 = vpop.f32.mrf.mxu0
    %v416 = vpop.f32.mrf.mxu0
    %v417 = vadd.f32 0.0, %v416
    %v418 = vpop.f32.mrf.mxu0
    %419 = vmatprep.mubr.bf16.mxu0 0
    %420 = vmatmul.mubr.bf16.gmra.mxu0 %v339
    %v421 = vpop.f32.mrf.mxu0
    %v422 = vadd.f32 0.0, %v421
    %v423 = vpop.f32.mrf.mxu0
    %v424 = vpop.f32.mrf.mxu0
    %v425 = vadd.f32 0.0, %v424
    %v426 = vpop.f32.mrf.mxu0
    %427 = vmatprep.mubr.bf16.mxu0 0
    %428 = vmatmul.mubr.bf16.gmra.mxu0 %v342
    %v429 = vpop.f32.mrf.mxu0
    %v430 = vadd.f32 0.0, %v429
    %v431 = vpop.f32.mrf.mxu0
    %v432 = vpop.f32.mrf.mxu0
    %v433 = vadd.f32 0.0, %v432
    %v434 = vpop.f32.mrf.mxu0
    %435 = vmatprep.mubr.bf16.mxu0 0
    %436 = vmatmul.mubr.bf16.gmra.mxu0 %v345
    %v437 = vpop.f32.mrf.mxu0
    %v438 = vadd.f32 0.0, %v437
    %v439 = vpop.f32.mrf.mxu0
    %v440 = vpop.f32.mrf.mxu0
    %v441 = vadd.f32 0.0, %v440
    %v442 = vpop.f32.mrf.mxu0
    %443 = vdwg.mxu0
    %v444 = vpack.c.bf16 %v385, %v382
    %v445 = vpack.c.bf16 %v393, %v390
    %v446 = vpack.c.bf16 %v401, %v398
    %v447 = vpack.c.bf16 %v409, %v406
    %v448 = vpack.c.bf16 %v417, %v414
    %v449 = vpack.c.bf16 %v425, %v422
    %v450 = vpack.c.bf16 %v433, %v430
    %v451 = vpack.c.bf16 %v441, %v438
    %v460 = vunpack.c.l.b16 %v444
    %v461 = vunpack.c.h.b16 %v444
    %v462 = vunpack.c.l.b16 %v445
    %v463 = vunpack.c.h.b16 %v445
    %v464 = vunpack.c.l.b16 %v446
    %v465 = vunpack.c.h.b16 %v446
    %v466 = vunpack.c.l.b16 %v447
    %v467 = vunpack.c.h.b16 %v447
    %v468 = vunpack.c.l.b16 %v448
    %v469 = vunpack.c.h.b16 %v448
    %v470 = vunpack.c.l.b16 %v449
    %v471 = vunpack.c.h.b16 %v449
    %v472 = vunpack.c.l.b16 %v450
    %v473 = vunpack.c.h.b16 %v450
    %v474 = vunpack.c.l.b16 %v451
    %v475 = vunpack.c.h.b16 %v451
    %v476 = vpack.c.b16 %v460, %v460
    %v477 = vpack.c.b16 %v461, %v461
    %v478 = vpack.c.b16 %v462, %v462
    %v479 = vpack.c.b16 %v463, %v463
    %v480 = vpack.c.b16 %v464, %v464
    %v481 = vpack.c.b16 %v465, %v465
    %v482 = vpack.c.b16 %v466, %v466
    %v483 = vpack.c.b16 %v467, %v467
    %v484 = vpack.c.b16 %v468, %v468
    %v485 = vpack.c.b16 %v469, %v469
    %v486 = vpack.c.b16 %v470, %v470
    %v487 = vpack.c.b16 %v471, %v471
    %v488 = vpack.c.b16 %v472, %v472
    %v489 = vpack.c.b16 %v473, %v473
    %v490 = vpack.c.b16 %v474, %v474
    %v491 = vpack.c.b16 %v475, %v475
    %508 = vst [vmem:[%s3] sm:$0xf] %v476
    %509 = vst [vmem:[%s3 + $0x4] sm:$0xf] %v477
    %510 = vst [vmem:[%s3 + $0x8] sm:$0xf] %v478
    %511 = vst [vmem:[%s3 + $0xc] sm:$0xf] %v479
    %512 = vst [vmem:[%s3 + $0x10] sm:$0xf] %v480
    %513 = vst [vmem:[%s3 + $0x14] sm:$0xf] %v481
    %514 = vst [vmem:[%s3 + $0x18] sm:$0xf] %v482
    %515 = vst [vmem:[%s3 + $0x1c] sm:$0xf] %v483
    %516 = vst [vmem:[%s3 + $0x20] sm:$0xf] %v484
    %517 = vst [vmem:[%s3 + $0x24] sm:$0xf] %v485
    %518 = vst [vmem:[%s3 + $0x28] sm:$0xf] %v486
    %519 = vst [vmem:[%s3 + $0x2c] sm:$0xf] %v487
    %520 = vst [vmem:[%s3 + $0x30] sm:$0xf] %v488
    %521 = vst [vmem:[%s3 + $0x34] sm:$0xf] %v489
    %522 = vst [vmem:[%s3 + $0x38] sm:$0xf] %v490
    %523 = vst [vmem:[%s3 + $0x3c] sm:$0xf] %v491
    %v524 = vlaneseq
    %v525 = vshrl.u32 %v524, 7
    %v526 = vadd.s32 %v525, 8
    %v527 = vadd.s32 %v525, 16
    %v528 = vadd.s32 %v525, 24
    %v529 = vadd.s32 %v525, 32
    %v530 = vadd.s32 %v525, 40
    %v531 = vadd.s32 %v525, 48
    %v532 = vadd.s32 %v525, 56
    %v533 = vadd.s32 %v525, 64
    %v534 = vadd.s32 %v525, 72
    %v535 = vadd.s32 %v525, 80
    %v536 = vadd.s32 %v525, 88
    %v537 = vadd.s32 %v525, 96
    %v538 = vadd.s32 %v525, 104
    %v539 = vadd.s32 %v525, 112
    %v540 = vadd.s32 %v525, 120
    %s541 = smul.u32 0, 128
    %v542 = vstv %s541
    %v543 = vadd.s32 %v525, %v542
    %v544 = vadd.s32 %v526, %v542
    %v545 = vadd.s32 %v527, %v542
    %v546 = vadd.s32 %v528, %v542
    %v547 = vadd.s32 %v529, %v542
    %v548 = vadd.s32 %v530, %v542
    %v549 = vadd.s32 %v531, %v542
    %v550 = vadd.s32 %v532, %v542
    %v551 = vadd.s32 %v533, %v542
    %v552 = vadd.s32 %v534, %v542
    %v553 = vadd.s32 %v535, %v542
    %v554 = vadd.s32 %v536, %v542
    %v555 = vadd.s32 %v537, %v542
    %v556 = vadd.s32 %v538, %v542
    %v557 = vadd.s32 %v539, %v542
    %v558 = vadd.s32 %v540, %v542
    %vm559 = vcmp.lt.s32.totalorder %v543, 128
    %vm560 = vcmp.lt.s32.totalorder %v544, 128
    %vm561 = vcmp.lt.s32.totalorder %v545, 128
    %vm562 = vcmp.lt.s32.totalorder %v546, 128
    %vm563 = vcmp.lt.s32.totalorder %v547, 128
    %vm564 = vcmp.lt.s32.totalorder %v548, 128
    %vm565 = vcmp.lt.s32.totalorder %v549, 128
    %vm566 = vcmp.lt.s32.totalorder %v550, 128
    %vm567 = vcmp.lt.s32.totalorder %v551, 128
    %vm568 = vcmp.lt.s32.totalorder %v552, 128
    %vm569 = vcmp.lt.s32.totalorder %v553, 128
    %vm570 = vcmp.lt.s32.totalorder %v554, 128
    %vm571 = vcmp.lt.s32.totalorder %v555, 128
    %vm572 = vcmp.lt.s32.totalorder %v556, 128
    %vm573 = vcmp.lt.s32.totalorder %v557, 128
    %vm574 = vcmp.lt.s32.totalorder %v558, 128
    %v575 = vsel %vm559, %v382, 0.0
    %v576 = vsel %vm560, %v385, 0.0
    %v577 = vsel %vm561, %v390, 0.0
    %v578 = vsel %vm562, %v393, 0.0
    %v579 = vsel %vm563, %v398, 0.0
    %v580 = vsel %vm564, %v401, 0.0
    %v581 = vsel %vm565, %v406, 0.0
    %v582 = vsel %vm566, %v409, 0.0
    %v583 = vsel %vm567, %v414, 0.0
    %v584 = vsel %vm568, %v417, 0.0
    %v585 = vsel %vm569, %v422, 0.0
    %v586 = vsel %vm570, %v425, 0.0
    %v587 = vsel %vm571, %v430, 0.0
    %v588 = vsel %vm572, %v433, 0.0
    %v589 = vsel %vm573, %v438, 0.0
    %v590 = vsel %vm574, %v441, 0.0
    %v591 = vadd.f32 %v575, %v576
    %v592 = vadd.f32 %v591, %v577
    %v593 = vadd.f32 %v592, %v578
    %v594 = vadd.f32 %v593, %v579
    %v595 = vadd.f32 %v594, %v580
    %v596 = vadd.f32 %v595, %v581
    %v597 = vadd.f32 %v596, %v582
    %v598 = vadd.f32 %v597, %v583
    %v599 = vadd.f32 %v598, %v584
    %v600 = vadd.f32 %v599, %v585
    %v601 = vadd.f32 %v600, %v586
    %v602 = vadd.f32 %v601, %v587
    %v603 = vadd.f32 %v602, %v588
    %v604 = vadd.f32 %v603, %v589
    %v605 = vadd.f32 %v604, %v590
    %v606 = vrot.slane %v605, 4
    %v607 = vadd.f32 %v605, %v606
    %v608 = vrot.slane %v607, 2
    %v609 = vadd.f32 %v607, %v608
    %v610 = vrot.slane %v609, 1
    %v611 = vadd.f32 %v609, %v610
    %v612 = vmul.f32 %v575, %v575
    %v613 = vmul.f32 %v576, %v576
    %v614 = vmul.f32 %v577, %v577
    %v615 = vmul.f32 %v578, %v578
    %v616 = vmul.f32 %v579, %v579
    %v617 = vmul.f32 %v580, %v580
    %v618 = vmul.f32 %v581, %v581
    %v619 = vmul.f32 %v582, %v582
    %v620 = vmul.f32 %v583, %v583
    %v621 = vmul.f32 %v584, %v584
    %v622 = vmul.f32 %v585, %v585
    %v623 = vmul.f32 %v586, %v586
    %v624 = vmul.f32 %v587, %v587
    %v625 = vmul.f32 %v588, %v588
    %v626 = vmul.f32 %v589, %v589
    %v627 = vmul.f32 %v590, %v590
    %v628 = vadd.f32 %v612, %v613
    %v629 = vadd.f32 %v628, %v614
    %v630 = vadd.f32 %v629, %v615
    %v631 = vadd.f32 %v630, %v616
    %v632 = vadd.f32 %v631, %v617
    %v633 = vadd.f32 %v632, %v618
    %v634 = vadd.f32 %v633, %v619
    %v635 = vadd.f32 %v634, %v620
    %v636 = vadd.f32 %v635, %v621
    %v637 = vadd.f32 %v636, %v622
    %v638 = vadd.f32 %v637, %v623
    %v639 = vadd.f32 %v638, %v624
    %v640 = vadd.f32 %v639, %v625
    %v641 = vadd.f32 %v640, %v626
    %v642 = vadd.f32 %v641, %v627
    %v643 = vrot.slane %v642, 4
    %v644 = vadd.f32 %v642, %v643
    %v645 = vrot.slane %v644, 2
    %v646 = vadd.f32 %v644, %v645
    %v647 = vrot.slane %v646, 1
    %v648 = vadd.f32 %v646, %v647
    %vm649 = vcmask 1040384
    %v650 = vsel %vm649, %v611, %v648
    %651 = vst [vmem:[%s4] sm:$0x3] %v650
    // Predicated region
    $region22: #{netd_patch_forward.6} parent=1 // pred_check
      _
    $region23: #{netd_patch_forward.6} parent=1 // pred_check_branch
      %653 = sbr.rel (0) target = $region25
    $region24: #{netd_patch_forward.6} parent=1 // pred_region
      _
    $region25: #{netd_patch_forward.6} parent=1 // pred_fallthru
      _
    // Predicated region
    $region26: #{netd_patch_forward.6} parent=1 // pred_check
      _
    $region27: #{netd_patch_forward.6} parent=1 // pred_check_branch
      %655 = sbr.rel (0) target = $region29
    $region28: #{netd_patch_forward.6} parent=1 // pred_region
      _
    $region29: #{netd_patch_forward.6} parent=1 // pred_fallthru
      _
    // Predicated region
    $region30: #{netd_patch_forward.6} parent=1 // pred_check
      _
    $region31: #{netd_patch_forward.6} parent=1 // pred_check_branch
      %657 = sbr.rel (0) target = $region33
    $region32: #{netd_patch_forward.6} parent=1 // pred_region
      _
    $region33: #{netd_patch_forward.6} parent=1 // pred_fallthru
      _
    // Predicated region
    $region34: #{netd_patch_forward.6} parent=1 // pred_check
      _
    $region35: #{netd_patch_forward.6} parent=1 // pred_check_branch
      %659 = sbr.rel (0) target = $region37
    $region36: #{netd_patch_forward.6} parent=1 // pred_region
      _
    $region37: #{netd_patch_forward.6} parent=1 // pred_fallthru
      _
    %660 = vsyncpa [#allocation3], 1
    %661 = vsyncpa [#allocation5], 1

// kernel: netd_patch_forward.7
$region0: #{netd_patch_forward.7}
  #allocation0 [shape = 'u32[]', space=smem, size = 0x4, offset = 0x4, fixed_abs, tag = 'smem constant byte address 0x4 - core index']
  #allocation1 [shape = 'u32[144,128]{1,0:T(1,128)}', space=vmem, size = 0x12000, scoped, tag = 'internal scratch']
  %s0 = inlined_call_operand.vmem [shape: f32[1,512], index: 0, kind: input, shape index: {}]
  %s1 = inlined_call_operand.vmem [shape: f32[1,512], index: 1, kind: input, shape index: {}]
  %s2 = inlined_call_operand.vmem [shape: bf16[32,512], index: 2, kind: input, shape index: {}]
  %s3 = inlined_call_operand.hbm [shape: bf16[512,256], index: 3, kind: input, shape index: {}]
  %s4 = inlined_call_operand.vmem [shape: bf16[32,256], index: 4, kind: output, shape index: {0}]
  %s5 = inlined_call_operand.vmem [shape: f32[1,2,256], index: 5, kind: output, shape index: {1}]
  %6 = xla_tuple %s4, %s5
  %s7 = sld [smem:[#allocation0]]
  $region38: #{netd_patch_forward.7} parent=0
    _
  %s9 = ssub.s32 1, %s7
  %s10 = scalar_select 0, %s9, %s7
  $region1: #{netd_patch_forward.7} parent=0
    #allocation2 [shape = 'u8[262144]{0}', space=vmem, size = 0x40000, scoped, tag = 'input window, operand 3, single buffered']
    #allocation3 [shape = 's32[1]{0}', space=sflag, size = 0x4, scoped, tag = 'scoped memory for netd_patch_forward.7']
    %11 = vsyncpa [#allocation3], 0
    // Predicated region
    $region2: #{netd_patch_forward.7} parent=1 // pred_check
      _
    $region3: #{netd_patch_forward.7} parent=1 // pred_check_branch
      %13 = sbr.rel (0) target = $region5
    $region4: #{netd_patch_forward.7} parent=1 // pred_region
      _
    $region5: #{netd_patch_forward.7} parent=1 // pred_fallthru
      _
    // Predicated region
    $region6: #{netd_patch_forward.7} parent=1 // pred_check
      _
    $region7: #{netd_patch_forward.7} parent=1 // pred_check_branch
      %15 = sbr.rel (0) target = $region9
    $region8: #{netd_patch_forward.7} parent=1 // pred_region
      _
    $region9: #{netd_patch_forward.7} parent=1 // pred_fallthru
      _
    // Predicated region
    $region10: #{netd_patch_forward.7} parent=1 // pred_check
      _
    $region11: #{netd_patch_forward.7} parent=1 // pred_check_branch
      %17 = sbr.rel (0) target = $region13
    $region12: #{netd_patch_forward.7} parent=1 // pred_region
      _
    $region13: #{netd_patch_forward.7} parent=1 // pred_fallthru
      _
    // Predicated region
    $region14: #{netd_patch_forward.7} parent=1 // pred_check
      _
    $region15: #{netd_patch_forward.7} parent=1 // pred_check_branch
      %19 = sbr.rel (0) target = $region17
    $region16: #{netd_patch_forward.7} parent=1 // pred_region
      %s21 = ssub.s32 8192, 8192
      %22 = vsyncadd [#allocation3], %s21
      %s23 = sshll.u32 [#allocation2], 4
      %s24 = int_to_ptr.vmem [resolvable:$true] %s23
      %29 = dma.hbm_to_vmem [thread:$0]  %s3, 8192, %s24, [#allocation3], 128, 128, 8
    $region17: #{netd_patch_forward.7} parent=1 // pred_fallthru
      _
    // Predicated region
    $region18: #{netd_patch_forward.7} parent=1 // pred_check
      _
    $region19: #{netd_patch_forward.7} parent=1 // pred_check_branch
      %31 = sbr.rel (0) target = $region21
    $region20: #{netd_patch_forward.7} parent=1 // pred_region
      %32 = dma.done [#allocation3], 8192
    $region21: #{netd_patch_forward.7} parent=1 // pred_fallthru
      _
    %v33 = vld [vmem:[%s2] sm:$0xff]
    %v34 = vld [vmem:[%s2 + $0x8] sm:$0xff]
    %v35 = vld [vmem:[%s2 + $0x10] sm:$0xff]
    %v36 = vld [vmem:[%s2 + $0x18] sm:$0xff]
    %v37 = vld [vmem:[%s2 + $0x20] sm:$0xff]
    %v38 = vld [vmem:[%s2 + $0x28] sm:$0xff]
    %v39 = vld [vmem:[%s2 + $0x30] sm:$0xff]
    %v40 = vld [vmem:[%s2 + $0x38] sm:$0xff]
    %v41 = vunpack.c.l.bf16 %v33
    %v42 = vunpack.c.h.bf16 %v33
    %v43 = vunpack.c.l.bf16 %v34
    %v44 = vunpack.c.h.bf16 %v34
    %v45 = vunpack.c.l.bf16 %v35
    %v46 = vunpack.c.h.bf16 %v35
    %v47 = vunpack.c.l.bf16 %v36
    %v48 = vunpack.c.h.bf16 %v36
    %v49 = vunpack.c.l.bf16 %v37
    %v50 = vunpack.c.h.bf16 %v37
    %v51 = vunpack.c.l.bf16 %v38
    %v52 = vunpack.c.h.bf16 %v38
    %v53 = vunpack.c.l.bf16 %v39
    %v54 = vunpack.c.h.bf16 %v39
    %v55 = vunpack.c.l.bf16 %v40
    %v56 = vunpack.c.h.bf16 %v40
    %v57 = vld [vmem:[%s0] sm:$0xf]
    %v59 = vlaneseq
    %v60 = vshrl.u32 %v59, 7
    %v61 = vsub.s32 0, %v60
    %v62 = vrot.slane %v57, %v61
    %v63 = vlaneseq
    %v64 = vshrl.u32 %v63, 7
    %v65 = vsub.s32 1, %v64
    %v66 = vrot.slane %v57, %v65
    %v67 = vlaneseq
    %v68 = vshrl.u32 %v67, 7
    %v69 = vsub.s32 2, %v68
    %v70 = vrot.slane %v57, %v69
    %v71 = vlaneseq
    %v72 = vshrl.u32 %v71, 7
    %v73 = vsub.s32 3, %v72
    %v74 = vrot.slane %v57, %v73
    %v79 = vsub.f32 %v41, %v62
    %v80 = vsub.f32 %v42, %v66
    %v81 = vsub.f32 %v43, %v70
    %v82 = vsub.f32 %v44, %v74
    %v83 = vsub.f32 %v45, %v62
    %v84 = vsub.f32 %v46, %v66
    %v85 = vsub.f32 %v47, %v70
    %v86 = vsub.f32 %v48, %v74
    %v87 = vsub.f32 %v49, %v62
    %v88 = vsub.f32 %v50, %v66
    %v89 = vsub.f32 %v51, %v70
    %v90 = vsub.f32 %v52, %v74
    %v91 = vsub.f32 %v53, %v62
    %v92 = vsub.f32 %v54, %v66
    %v93 = vsub.f32 %v55, %v70
    %v94 = vsub.f32 %v56, %v74
    %v95 = vld [vmem:[%s1] sm:$0xf]
    %v97 = vlaneseq
    %v98 = vshrl.u32 %v97, 7
    %v99 = vsub.s32 0, %v98
    %v100 = vrot.slane %v95, %v99
    %v101 = vlaneseq
    %v102 = vshrl.u32 %v101, 7
    %v103 = vsub.s32 1, %v102
    %v104 = vrot.slane %v95, %v103
    %v105 = vlaneseq
    %v106 = vshrl.u32 %v105, 7
    %v107 = vsub.s32 2, %v106
    %v108 = vrot.slane %v95, %v107
    %v109 = vlaneseq
    %v110 = vshrl.u32 %v109, 7
    %v111 = vsub.s32 3, %v110
    %v112 = vrot.slane %v95, %v111
    %v117 = vmul.f32 %v79, %v100
    %v118 = vmul.f32 %v80, %v104
    %v119 = vmul.f32 %v81, %v108
    %v120 = vmul.f32 %v82, %v112
    %v121 = vmul.f32 %v83, %v100
    %v122 = vmul.f32 %v84, %v104
    %v123 = vmul.f32 %v85, %v108
    %v124 = vmul.f32 %v86, %v112
    %v125 = vmul.f32 %v87, %v100
    %v126 = vmul.f32 %v88, %v104
    %v127 = vmul.f32 %v89, %v108
    %v128 = vmul.f32 %v90, %v112
    %v129 = vmul.f32 %v91, %v100
    %v130 = vmul.f32 %v92, %v104
    %v131 = vmul.f32 %v93, %v108
    %v132 = vmul.f32 %v94, %v112
    %vm133 = vcmp.gt.f32.partialorder %v117, 0.0
    %vm134 = vcmp.gt.f32.partialorder %v118, 0.0
    %vm135 = vcmp.gt.f32.partialorder %v119, 0.0
    %vm136 = vcmp.gt.f32.partialorder %v120, 0.0
    %vm137 = vcmp.gt.f32.partialorder %v121, 0.0
    %vm138 = vcmp.gt.f32.partialorder %v122, 0.0
    %vm139 = vcmp.gt.f32.partialorder %v123, 0.0
    %vm140 = vcmp.gt.f32.partialorder %v124, 0.0
    %vm141 = vcmp.gt.f32.partialorder %v125, 0.0
    %vm142 = vcmp.gt.f32.partialorder %v126, 0.0
    %vm143 = vcmp.gt.f32.partialorder %v127, 0.0
    %vm144 = vcmp.gt.f32.partialorder %v128, 0.0
    %vm145 = vcmp.gt.f32.partialorder %v129, 0.0
    %vm146 = vcmp.gt.f32.partialorder %v130, 0.0
    %vm147 = vcmp.gt.f32.partialorder %v131, 0.0
    %vm148 = vcmp.gt.f32.partialorder %v132, 0.0
    %v149 = vmul.f32 %v117, 0.2
    %v150 = vmul.f32 %v118, 0.2
    %v151 = vmul.f32 %v119, 0.2
    %v152 = vmul.f32 %v120, 0.2
    %v153 = vmul.f32 %v121, 0.2
    %v154 = vmul.f32 %v122, 0.2
    %v155 = vmul.f32 %v123, 0.2
    %v156 = vmul.f32 %v124, 0.2
    %v157 = vmul.f32 %v125, 0.2
    %v158 = vmul.f32 %v126, 0.2
    %v159 = vmul.f32 %v127, 0.2
    %v160 = vmul.f32 %v128, 0.2
    %v161 = vmul.f32 %v129, 0.2
    %v162 = vmul.f32 %v130, 0.2
    %v163 = vmul.f32 %v131, 0.2
    %v164 = vmul.f32 %v132, 0.2
    %v165 = vsel %vm133, %v117, %v149
    %v166 = vsel %vm134, %v118, %v150
    %v167 = vsel %vm135, %v119, %v151
    %v168 = vsel %vm136, %v120, %v152
    %v169 = vsel %vm137, %v121, %v153
    %v170 = vsel %vm138, %v122, %v154
    %v171 = vsel %vm139, %v123, %v155
    %v172 = vsel %vm140, %v124, %v156
    %v173 = vsel %vm141, %v125, %v157
    %v174 = vsel %vm142, %v126, %v158
    %v175 = vsel %vm143, %v127, %v159
    %v176 = vsel %vm144, %v128, %v160
    %v177 = vsel %vm145, %v129, %v161
    %v178 = vsel %vm146, %v130, %v162
    %v179 = vsel %vm147, %v131, %v163
    %v180 = vsel %vm148, %v132, %v164
    %v181 = vpack.c.bf16 %v169, %v165
    %v182 = vpack.c.bf16 %v170, %v166
    %v183 = vpack.c.bf16 %v171, %v167
    %v184 = vpack.c.bf16 %v172, %v168
    %v185 = vpack.c.bf16 %v177, %v173
    %v186 = vpack.c.bf16 %v178, %v174
    %v187 = vpack.c.bf16 %v179, %v175
    %v188 = vpack.c.bf16 %v180, %v176
    %v189 = vld [vmem:[#allocation2] sm:$0xff]
    %v190 = vld [vmem:[#allocation2 + $0x8] sm:$0xff]
    %v191 = vld [vmem:[#allocation2 + $0x10] sm:$0xff]
    %v192 = vld [vmem:[#allocation2 + $0x18] sm:$0xff]
    %v193 = vld [vmem:[#allocation2 + $0x20] sm:$0xff]
    %v194 = vld [vmem:[#allocation2 + $0x28] sm:$0xff]
    %v195 = vld [vmem:[#allocation2 + $0x30] sm:$0xff]
    %v196 = vld [vmem:[#allocation2 + $0x38] sm:$0xff]
    %v197 = vld [vmem:[#allocation2 + $0x40] sm:$0xff]
    %v198 = vld [vmem:[#allocation2 + $0x48] sm:$0xff]
    %v199 = vld [vmem:[#allocation2 + $0x50] sm:$0xff]
    %v200 = vld [vmem:[#allocation2 + $0x58] sm:$0xff]
    %v201 = vld [vmem:[#allocation2 + $0x60] sm:$0xff]
    %v202 = vld [vmem:[#allocation2 + $0x68] sm:$0xff]
    %v203 = vld [vmem:[#allocation2 + $0x70] sm:$0xff]
    %v204 = vld [vmem:[#allocation2 + $0x78] sm:$0xff]
    %v205 = vld [vmem:[#allocation2 + $0x80] sm:$0xff]
    %v206 = vld [vmem:[#allocation2 + $0x88] sm:$0xff]
    %v207 = vld [vmem:[#allocation2 + $0x90] sm:$0xff]
    %v208 = vld [vmem:[#allocation2 + $0x98] sm:$0xff]
    %v209 = vld [vmem:[#allocation2 + $0xa0] sm:$0xff]
    %v210 = vld [vmem:[#allocation2 + $0xa8] sm:$0xff]
    %v211 = vld [vmem:[#allocation2 + $0xb0] sm:$0xff]
    %v212 = vld [vmem:[#allocation2 + $0xb8] sm:$0xff]
    %v213 = vld [vmem:[#allocation2 + $0xc0] sm:$0xff]
    %v214 = vld [vmem:[#allocation2 + $0xc8] sm:$0xff]
    %v215 = vld [vmem:[#allocation2 + $0xd0] sm:$0xff]
    %v216 = vld [vmem:[#allocation2 + $0xd8] sm:$0xff]
    %v217 = vld [vmem:[#allocation2 + $0xe0] sm:$0xff]
    %v218 = vld [vmem:[#allocation2 + $0xe8] sm:$0xff]
    %v219 = vld [vmem:[#allocation2 + $0xf0] sm:$0xff]
    %v220 = vld [vmem:[#allocation2 + $0xf8] sm:$0xff]
    %v221 = vld [vmem:[#allocation2 + $0x100] sm:$0xff]
    %v222 = vld [vmem:[#allocation2 + $0x108] sm:$0xff]
    %v223 = vld [vmem:[#allocation2 + $0x110] sm:$0xff]
    %v224 = vld [vmem:[#allocation2 + $0x118] sm:$0xff]
    %v225 = vld [vmem:[#allocation2 + $0x120] sm:$0xff]
    %v226 = vld [vmem:[#allocation2 + $0x128] sm:$0xff]
    %v227 = vld [vmem:[#allocation2 + $0x130] sm:$0xff]
    %v228 = vld [vmem:[#allocation2 + $0x138] sm:$0xff]
    %v229 = vld [vmem:[#allocation2 + $0x140] sm:$0xff]
    %v230 = vld [vmem:[#allocation2 + $0x148] sm:$0xff]
    %v231 = vld [vmem:[#allocation2 + $0x150] sm:$0xff]
    %v232 = vld [vmem:[#allocation2 + $0x158] sm:$0xff]
    %v233 = vld [vmem:[#allocation2 + $0x160] sm:$0xff]
    %v234 = vld [vmem:[#allocation2 + $0x168] sm:$0xff]
    %v235 = vld [vmem:[#allocation2 + $0x170] sm:$0xff]
    %v236 = vld [vmem:[#allocation2 + $0x178] sm:$0xff]
    %v237 = vld [vmem:[#allocation2 + $0x180] sm:$0xff]
    %v238 = vld [vmem:[#allocation2 + $0x188] sm:$0xff]
    %v239 = vld [vmem:[#allocation2 + $0x190] sm:$0xff]
    %v240 = vld [vmem:[#allocation2 + $0x198] sm:$0xff]
    %v241 = vld [vmem:[#allocation2 + $0x1a0] sm:$0xff]
    %v242 = vld [vmem:[#allocation2 + $0x1a8] sm:$0xff]
    %v243 = vld [vmem:[#allocation2 + $0x1b0] sm:$0xff]
    %v244 = vld [vmem:[#allocation2 + $0x1b8] sm:$0xff]
    %v245 = vld [vmem:[#allocation2 + $0x1c0] sm:$0xff]
    %v246 = vld [vmem:[#allocation2 + $0x1c8] sm:$0xff]
    %v247 = vld [vmem:[#allocation2 + $0x1d0] sm:$0xff]
    %v248 = vld [vmem:[#allocation2 + $0x1d8] sm:$0xff]
    %v249 = vld [vmem:[#allocation2 + $0x1e0] sm:$0xff]
    %v250 = vld [vmem:[#allocation2 + $0x1e8] sm:$0xff]
    %v251 = vld [vmem:[#allocation2 + $0x1f0] sm:$0xff]
    %v252 = vld [vmem:[#allocation2 + $0x1f8] sm:$0xff]
    %v317 = vunpack.c.l.b16 %v189
    %v318 = vunpack.c.h.b16 %v189
    %v319 = vunpack.c.l.b16 %v190
    %v320 = vunpack.c.h.b16 %v190
    %v321 = vunpack.c.l.b16 %v191
    %v322 = vunpack.c.h.b16 %v191
    %v323 = vunpack.c.l.b16 %v192
    %v324 = vunpack.c.h.b16 %v192
    %v325 = vunpack.c.l.b16 %v193
    %v326 = vunpack.c.h.b16 %v193
    %v327 = vunpack.c.l.b16 %v194
    %v328 = vunpack.c.h.b16 %v194
    %v329 = vunpack.c.l.b16 %v195
    %v330 = vunpack.c.h.b16 %v195
    %v331 = vunpack.c.l.b16 %v196
    %v332 = vunpack.c.h.b16 %v196
    %v333 = vunpack.c.l.b16 %v197
    %v334 = vunpack.c.h.b16 %v197
    %v335 = vunpack.c.l.b16 %v198
    %v336 = vunpack.c.h.b16 %v198
    %v337 = vunpack.c.l.b16 %v199
    %v338 = vunpack.c.h.b16 %v199
    %v339 = vunpack.c.l.b16 %v200
    %v340 = vunpack.c.h.b16 %v200
    %v341 = vunpack.c.l.b16 %v201
    %v342 = vunpack.c.h.b16 %v201
    %v343 = vunpack.c.l.b16 %v202
    %v344 = vunpack.c.h.b16 %v202
    %v345 = vunpack.c.l.b16 %v203
    %v346 = vunpack.c.h.b16 %v203
    %v347 = vunpack.c.l.b16 %v204
    %v348 = vunpack.c.h.b16 %v204
    %v349 = vunpack.c.l.b16 %v205
    %v350 = vunpack.c.h.b16 %v205
    %v351 = vunpack.c.l.b16 %v206
    %v352 = vunpack.c.h.b16 %v206
    %v353 = vunpack.c.l.b16 %v207
    %v354 = vunpack.c.h.b16 %v207
    %v355 = vunpack.c.l.b16 %v208
    %v356 = vunpack.c.h.b16 %v208
    %v357 = vunpack.c.l.b16 %v209
    %v358 = vunpack.c.h.b16 %v209
    %v359 = vunpack.c.l.b16 %v210
    %v360 = vunpack.c.h.b16 %v210
    %v361 = vunpack.c.l.b16 %v211
    %v362 = vunpack.c.h.b16 %v211
    %v363 = vunpack.c.l.b16 %v212
    %v364 = vunpack.c.h.b16 %v212
    %v365 = vunpack.c.l.b16 %v213
    %v366 = vunpack.c.h.b16 %v213
    %v367 = vunpack.c.l.b16 %v214
    %v368 = vunpack.c.h.b16 %v214
    %v369 = vunpack.c.l.b16 %v215
    %v370 = vunpack.c.h.b16 %v215
    %v371 = vunpack.c.l.b16 %v216
    %v372 = vunpack.c.h.b16 %v216
    %v373 = vunpack.c.l.b16 %v217
    %v374 = vunpack.c.h.b16 %v217
    %v375 = vunpack.c.l.b16 %v218
    %v376 = vunpack.c.h.b16 %v218
    %v377 = vunpack.c.l.b16 %v219
    %v378 = vunpack.c.h.b16 %v219
    %v379 = vunpack.c.l.b16 %v220
    %v380 = vunpack.c.h.b16 %v220
    %v381 = vunpack.c.l.b16 %v221
    %v382 = vunpack.c.h.b16 %v221
    %v383 = vunpack.c.l.b16 %v222
    %v384 = vunpack.c.h.b16 %v222
    %v385 = vunpack.c.l.b16 %v223
    %v386 = vunpack.c.h.b16 %v223
    %v387 = vunpack.c.l.b16 %v224
    %v388 = vunpack.c.h.b16 %v224
    %v389 = vunpack.c.l.b16 %v225
    %v390 = vunpack.c.h.b16 %v225
    %v391 = vunpack.c.l.b16 %v226
    %v392 = vunpack.c.h.b16 %v226
    %v393 = vunpack.c.l.b16 %v227
    %v394 = vunpack.c.h.b16 %v227
    %v395 = vunpack.c.l.b16 %v228
    %v396 = vunpack.c.h.b16 %v228
    %v397 = vunpack.c.l.b16 %v229
    %v398 = vunpack.c.h.b16 %v229
    %v399 = vunpack.c.l.b16 %v230
    %v400 = vunpack.c.h.b16 %v230
    %v401 = vunpack.c.l.b16 %v231
    %v402 = vunpack.c.h.b16 %v231
    %v403 = vunpack.c.l.b16 %v232
    %v404 = vunpack.c.h.b16 %v232
    %v405 = vunpack.c.l.b16 %v233
    %v406 = vunpack.c.h.b16 %v233
    %v407 = vunpack.c.l.b16 %v234
    %v408 = vunpack.c.h.b16 %v234
    %v409 = vunpack.c.l.b16 %v235
    %v410 = vunpack.c.h.b16 %v235
    %v411 = vunpack.c.l.b16 %v236
    %v412 = vunpack.c.h.b16 %v236
    %v413 = vunpack.c.l.b16 %v237
    %v414 = vunpack.c.h.b16 %v237
    %v415 = vunpack.c.l.b16 %v238
    %v416 = vunpack.c.h.b16 %v238
    %v417 = vunpack.c.l.b16 %v239
    %v418 = vunpack.c.h.b16 %v239
    %v419 = vunpack.c.l.b16 %v240
    %v420 = vunpack.c.h.b16 %v240
    %v421 = vunpack.c.l.b16 %v241
    %v422 = vunpack.c.h.b16 %v241
    %v423 = vunpack.c.l.b16 %v242
    %v424 = vunpack.c.h.b16 %v242
    %v425 = vunpack.c.l.b16 %v243
    %v426 = vunpack.c.h.b16 %v243
    %v427 = vunpack.c.l.b16 %v244
    %v428 = vunpack.c.h.b16 %v244
    %v429 = vunpack.c.l.b16 %v245
    %v430 = vunpack.c.h.b16 %v245
    %v431 = vunpack.c.l.b16 %v246
    %v432 = vunpack.c.h.b16 %v246
    %v433 = vunpack.c.l.b16 %v247
    %v434 = vunpack.c.h.b16 %v247
    %v435 = vunpack.c.l.b16 %v248
    %v436 = vunpack.c.h.b16 %v248
    %v437 = vunpack.c.l.b16 %v249
    %v438 = vunpack.c.h.b16 %v249
    %v439 = vunpack.c.l.b16 %v250
    %v440 = vunpack.c.h.b16 %v250
    %v441 = vunpack.c.l.b16 %v251
    %v442 = vunpack.c.h.b16 %v251
    %v443 = vunpack.c.l.b16 %v252
    %v444 = vunpack.c.h.b16 %v252
    %v445 = vpack.c.b16 %v319, %v317
    %v446 = vpack.c.b16 %v320, %v318
    %v447 = vpack.c.b16 %v323, %v321
    %v448 = vpack.c.b16 %v324, %v322
    %v449 = vpack.c.b16 %v327, %v325
    %v450 = vpack.c.b16 %v328, %v326
    %v451 = vpack.c.b16 %v331, %v329
    %v452 = vpack.c.b16 %v332, %v330
    %v453 = vpack.c.b16 %v335, %v333
    %v454 = vpack.c.b16 %v336, %v334
    %v455 = vpack.c.b16 %v339, %v337
    %v456 = vpack.c.b16 %v340, %v338
    %v457 = vpack.c.b16 %v343, %v341
    %v458 = vpack.c.b16 %v344, %v342
    %v459 = vpack.c.b16 %v347, %v345
    %v460 = vpack.c.b16 %v348, %v346
    %v461 = vpack.c.b16 %v351, %v349
    %v462 = vpack.c.b16 %v352, %v350
    %v463 = vpack.c.b16 %v355, %v353
    %v464 = vpack.c.b16 %v356, %v354
    %v465 = vpack.c.b16 %v359, %v357
    %v466 = vpack.c.b16 %v360, %v358
    %v467 = vpack.c.b16 %v363, %v361
    %v468 = vpack.c.b16 %v364, %v362
    %v469 = vpack.c.b16 %v367, %v365
    %v470 = vpack.c.b16 %v368, %v366
    %v471 = vpack.c.b16 %v371, %v369
    %v472 = vpack.c.b16 %v372, %v370
    %v473 = vpack.c.b16 %v375, %v373
    %v474 = vpack.c.b16 %v376, %v374
    %v475 = vpack.c.b16 %v379, %v377
    %v476 = vpack.c.b16 %v380, %v378
    %v477 = vpack.c.b16 %v383, %v381
    %v478 = vpack.c.b16 %v384, %v382
    %v479 = vpack.c.b16 %v387, %v385
    %v480 = vpack.c.b16 %v388, %v386
    %v481 = vpack.c.b16 %v391, %v389
    %v482 = vpack.c.b16 %v392, %v390
    %v483 = vpack.c.b16 %v395, %v393
    %v484 = vpack.c.b16 %v396, %v394
    %v485 = vpack.c.b16 %v399, %v397
    %v486 = vpack.c.b16 %v400, %v398
    %v487 = vpack.c.b16 %v403, %v401
    %v488 = vpack.c.b16 %v404, %v402
    %v489 = vpack.c.b16 %v407, %v405
    %v490 = vpack.c.b16 %v408, %v406
    %v491 = vpack.c.b16 %v411, %v409
    %v492 = vpack.c.b16 %v412, %v410
    %v493 = vpack.c.b16 %v415, %v413
    %v494 = vpack.c.b16 %v416, %v414
    %v495 = vpack.c.b16 %v419, %v417
    %v496 = vpack.c.b16 %v420, %v418
    %v497 = vpack.c.b16 %v423, %v421
    %v498 = vpack.c.b16 %v424, %v422
    %v499 = vpack.c.b16 %v427, %v425
    %v500 = vpack.c.b16 %v428, %v426
    %v501 = vpack.c.b16 %v431, %v429
    %v502 = vpack.c.b16 %v432, %v430
    %v503 = vpack.c.b16 %v435, %v433
    %v504 = vpack.c.b16 %v436, %v434
    %v505 = vpack.c.b16 %v439, %v437
    %v506 = vpack.c.b16 %v440, %v438
    %v507 = vpack.c.b16 %v443, %v441
    %v508 = vpack.c.b16 %v444, %v442
    %573 = vmatprep.subr.bf16.mxu0 %v460
    %574 = vmatpush1.bf16.msra.mxu0 %v459
    %575 = vmatprep.subr.bf16.mxu0 %v458
    %576 = vmatpush1.bf16.msra.mxu0 %v457
    %577 = vmatprep.subr.bf16.mxu0 %v456
    %578 = vmatpush1.bf16.msra.mxu0 %v455
    %579 = vmatprep.subr.bf16.mxu0 %v454
    %580 = vmatpush1.bf16.msra.mxu0 %v453
    %581 = vmatprep.subr.bf16.mxu0 %v452
    %582 = vmatpush1.bf16.msra.mxu0 %v451
    %583 = vmatprep.subr.bf16.mxu0 %v450
    %584 = vmatpush1.bf16.msra.mxu0 %v449
    %585 = vmatprep.subr.bf16.mxu0 %v448
    %586 = vmatpush1.bf16.msra.mxu0 %v447
    %587 = vmatprep.subr.bf16.mxu0 %v446
    %588 = vmatpush1.bf16.msra.mxu0 %v445
    %589 = vmatprep.subr.bf16.mxu0 %v476
    %590 = vmatpush2.bf16.msra.mxu0 %v475
    %591 = vmatprep.subr.bf16.mxu0 %v474
    %592 = vmatpush2.bf16.msra.mxu0 %v473
    %593 = vmatprep.subr.bf16.mxu0 %v472
    %594 = vmatpush2.bf16.msra.mxu0 %v471
    %595 = vmatprep.subr.bf16.mxu0 %v470
    %596 = vmatpush2.bf16.msra.mxu0 %v469
    %597 = vmatprep.subr.bf16.mxu0 %v468
    %598 = vmatpush2.bf16.msra.mxu0 %v467
    %599 = vmatprep.subr.bf16.mxu0 %v466
    %600 = vmatpush2.bf16.msra.mxu0 %v465
    %601 = vmatprep.subr.bf16.mxu0 %v464
    %602 = vmatpush2.bf16.msra.mxu0 %v463
    %603 = vmatprep.subr.bf16.mxu0 %v462
    %604 = vmatpush2.bf16.msra.mxu0 %v461
    %605 = vmatprep.mubr.bf16.mxu0 %v182
    %606 = vmatmul.mubr.bf16.gmra.mxu0 %v181
    %v607 = vpop.f32.mrf.mxu0
    %v608 = vadd.f32 0.0, %v607
    %v609 = vpop.f32.mrf.mxu0
    %v610 = vadd.f32 0.0, %v609
    %v611 = vpop.f32.mrf.mxu0
    %v612 = vadd.f32 0.0, %v611
    %v613 = vpop.f32.mrf.mxu0
    %v614 = vadd.f32 0.0, %v613
    %615 = vmatprep.mubr.bf16.mxu0 %v186
    %616 = vmatmul.mubr.bf16.gmra.mxu0 %v185
    %v617 = vpop.f32.mrf.mxu0
    %v618 = vadd.f32 0.0, %v617
    %v619 = vpop.f32.mrf.mxu0
    %v620 = vadd.f32 0.0, %v619
    %v621 = vpop.f32.mrf.mxu0
    %v622 = vadd.f32 0.0, %v621
    %v623 = vpop.f32.mrf.mxu0
    %v624 = vadd.f32 0.0, %v623
    %625 = vdwg.mxu0
    %626 = vmatprep.subr.bf16.mxu0 %v492
    %627 = vmatpush1.bf16.msra.mxu0 %v491
    %628 = vmatprep.subr.bf16.mxu0 %v490
    %629 = vmatpush1.bf16.msra.mxu0 %v489
    %630 = vmatprep.subr.bf16.mxu0 %v488
    %631 = vmatpush1.bf16.msra.mxu0 %v487
    %632 = vmatprep.subr.bf16.mxu0 %v486
    %633 = vmatpush1.bf16.msra.mxu0 %v485
    %634 = vmatprep.subr.bf16.mxu0 %v484
    %635 = vmatpush1.bf16.msra.mxu0 %v483
    %636 = vmatprep.subr.bf16.mxu0 %v482
    %637 = vmatpush1.bf16.msra.mxu0 %v481
    %638 = vmatprep.subr.bf16.mxu0 %v480
    %639 = vmatpush1.bf16.msra.mxu0 %v479
    %640 = vmatprep.subr.bf16.mxu0 %v478
    %641 = vmatpush1.bf16.msra.mxu0 %v477
    %642 = vmatprep.subr.bf16.mxu0 %v508
    %643 = vmatpush2.bf16.msra.mxu0 %v507
    %644 = vmatprep.subr.bf16.mxu0 %v506
    %645 = vmatpush2.bf16.msra.mxu0 %v505
    %646 = vmatprep.subr.bf16.mxu0 %v504
    %647 = vmatpush2.bf16.msra.mxu0 %v503
    %648 = vmatprep.subr.bf16.mxu0 %v502
    %649 = vmatpush2.bf16.msra.mxu0 %v501
    %650 = vmatprep.subr.bf16.mxu0 %v500
    %651 = vmatpush2.bf16.msra.mxu0 %v499
    %652 = vmatprep.subr.bf16.mxu0 %v498
    %653 = vmatpush2.bf16.msra.mxu0 %v497
    %654 = vmatprep.subr.bf16.mxu0 %v496
    %655 = vmatpush2.bf16.msra.mxu0 %v495
    %656 = vmatprep.subr.bf16.mxu0 %v494
    %657 = vmatpush2.bf16.msra.mxu0 %v493
    %658 = vmatprep.mubr.bf16.mxu0 %v184
    %659 = vmatmul.mubr.bf16.gmra.mxu0 %v183
    %v660 = vpop.f32.mrf.mxu0
    %v661 = vadd.f32 %v608, %v660
    %v662 = vpop.f32.mrf.mxu0
    %v663 = vadd.f32 %v610, %v662
    %v664 = vpop.f32.mrf.mxu0
    %v665 = vadd.f32 %v612, %v664
    %v666 = vpop.f32.mrf.mxu0
    %v667 = vadd.f32 %v614, %v666
    %668 = vmatprep.mubr.bf16.mxu0 %v188
    %669 = vmatmul.mubr.bf16.gmra.mxu0 %v187
    %v670 = vpop.f32.mrf.mxu0
    %v671 = vadd.f32 %v618, %v670
    %v672 = vpop.f32.mrf.mxu0
    %v673 = vadd.f32 %v620, %v672
    %v674 = vpop.f32.mrf.mxu0
    %v675 = vadd.f32 %v622, %v674
    %v676 = vpop.f32.mrf.mxu0
    %v677 = vadd.f32 %v624, %v676
    %678 = vdwg.mxu0
    %v679 = vpack.c.bf16 %v665, %v661
    %v680 = vpack.c.bf16 %v667, %v663
    %v681 = vpack.c.bf16 %v675, %v671
    %v682 = vpack.c.bf16 %v677, %v673
    %v687 = vunpack.c.l.b16 %v679
    %v688 = vunpack.c.l.b16 %v680
    %v689 = vunpack.c.h.b16 %v679
    %v690 = vunpack.c.h.b16 %v680
    %v691 = vunpack.c.l.b16 %v681
    %v692 = vunpack.c.l.b16 %v682
    %v693 = vunpack.c.h.b16 %v681
    %v694 = vunpack.c.h.b16 %v682
    %v695 = vpack.c.b16 %v688, %v687
    %v696 = vpack.c.b16 %v690, %v689
    %v697 = vpack.c.b16 %v692, %v691
    %v698 = vpack.c.b16 %v694, %v693
    %703 = vst [vmem:[%s4] sm:$0xff] %v695
    %704 = vst [vmem:[%s4 + $0x8] sm:$0xff] %v696
    %705 = vst [vmem:[%s4 + $0x10] sm:$0xff] %v697
    %706 = vst [vmem:[%s4 + $0x18] sm:$0xff] %v698
    %v707 = vlaneseq
    %v708 = vshrl.u32 %v707, 7
    %v709 = vadd.s32 %v708, 8
    %v710 = vadd.s32 %v708, 16
    %v711 = vadd.s32 %v708, 24
    %s712 = smul.u32 0, 32
    %v713 = vstv %s712
    %v714 = vadd.s32 %v708, %v713
    %v715 = vadd.s32 %v709, %v713
    %v716 = vadd.s32 %v710, %v713
    %v717 = vadd.s32 %v711, %v713
    %vm718 = vcmp.lt.s32.totalorder %v714, 32
    %vm719 = vcmp.lt.s32.totalorder %v715, 32
    %vm720 = vcmp.lt.s32.totalorder %v716, 32
    %vm721 = vcmp.lt.s32.totalorder %v717, 32
    %v722 = vsel %vm718, %v661, 0.0
    %v723 = vsel %vm718, %v663, 0.0
    %v724 = vsel %vm719, %v665, 0.0
    %v725 = vsel %vm719, %v667, 0.0
    %v726 = vsel %vm720, %v671, 0.0
    %v727 = vsel %vm720, %v673, 0.0
    %v728 = vsel %vm721, %v675, 0.0
    %v729 = vsel %vm721, %v677, 0.0
    %v730 = vadd.f32 %v722, %v724
    %v731 = vadd.f32 %v730, %v726
    %v732 = vadd.f32 %v731, %v728
    %v733 = vrot.slane %v732, 4
    %v734 = vadd.f32 %v732, %v733
    %v735 = vrot.slane %v734, 2
    %v736 = vadd.f32 %v734, %v735
    %v737 = vrot.slane %v736, 1
    %v738 = vadd.f32 %v736, %v737
    %v739 = vadd.f32 %v723, %v725
    %v740 = vadd.f32 %v739, %v727
    %v741 = vadd.f32 %v740, %v729
    %v742 = vrot.slane %v741, 4
    %v743 = vadd.f32 %v741, %v742
    %v744 = vrot.slane %v743, 2
    %v745 = vadd.f32 %v743, %v744
    %v746 = vrot.slane %v745, 1
    %v747 = vadd.f32 %v745, %v746
    %v748 = vmul.f32 %v722, %v722
    %v749 = vmul.f32 %v723, %v723
    %v750 = vmul.f32 %v724, %v724
    %v751 = vmul.f32 %v725, %v725
    %v752 = vmul.f32 %v726, %v726
    %v753 = vmul.f32 %v727, %v727
    %v754 = vmul.f32 %v728, %v728
    %v755 = vmul.f32 %v729, %v729
    %v756 = vadd.f32 %v748, %v750
    %v757 = vadd.f32 %v756, %v752
    %v758 = vadd.f32 %v757, %v754
    %v759 = vrot.slane %v758, 4
    %v760 = vadd.f32 %v758, %v759
    %v761 = vrot.slane %v760, 2
    %v762 = vadd.f32 %v760, %v761
    %v763 = vrot.slane %v762, 1
    %v764 = vadd.f32 %v762, %v763
    %v765 = vadd.f32 %v749, %v751
    %v766 = vadd.f32 %v765, %v753
    %v767 = vadd.f32 %v766, %v755
    %v768 = vrot.slane %v767, 4
    %v769 = vadd.f32 %v767, %v768
    %v770 = vrot.slane %v769, 2
    %v771 = vadd.f32 %v769, %v770
    %v772 = vrot.slane %v771, 1
    %v773 = vadd.f32 %v771, %v772
    %vm774 = vcmask 1040384
    %v775 = vsel %vm774, %v738, %v764
    %v776 = vsel %vm774, %v747, %v773
    %v779 = vcombine.low %v775, %v776
    %v781 = vunpack.c.l.s4 1983009808
    %v782 = vunpack.c.0.s8 %v781
    %v783 = vlaneseq
    %v784 = vshrl.u32 %v783, 7
    %v785 = vsub.s32 %v782, %v784
    %v786 = vrot.slane %v779, %v785
    %788 = vst [vmem:[%s5] sm:$0xf] %v786
    // Predicated region
    $region22: #{netd_patch_forward.7} parent=1 // pred_check
      _
    $region23: #{netd_patch_forward.7} parent=1 // pred_check_branch
      %790 = sbr.rel (0) target = $region25
    $region24: #{netd_patch_forward.7} parent=1 // pred_region
      _
    $region25: #{netd_patch_forward.7} parent=1 // pred_fallthru
      _
    // Predicated region
    $region26: #{netd_patch_forward.7} parent=1 // pred_check
      _
    $region27: #{netd_patch_forward.7} parent=1 // pred_check_branch
      %792 = sbr.rel (0) target = $region29
    $region28: #{netd_patch_forward.7} parent=1 // pred_region
      _
    $region29: #{netd_patch_forward.7} parent=1 // pred_fallthru
      _
    // Predicated region
    $region30: #{netd_patch_forward.7} parent=1 // pred_check
      _
    $region31: #{netd_patch_forward.7} parent=1 // pred_check_branch
      %794 = sbr.rel (0) target = $region33
    $region32: #{netd_patch_forward.7} parent=1 // pred_region
      _
    $region33: #{netd_patch_forward.7} parent=1 // pred_fallthru
      _
    // Predicated region
    $region34: #{netd_patch_forward.7} parent=1 // pred_check
      _
    $region35: #{netd_patch_forward.7} parent=1 // pred_check_branch
      %796 = sbr.rel (0) target = $region37
    $region36: #{netd_patch_forward.7} parent=1 // pred_region
      _
    $region37: #{netd_patch_forward.7} parent=1 // pred_fallthru
      _
    %797 = vsyncpa [#allocation3], 1

// kernel: netd_patch_forward.9
$region0: #{netd_patch_forward.9}
  #allocation0 [shape = 'u32[]', space=smem, size = 0x4, offset = 0x4, fixed_abs, tag = 'smem constant byte address 0x4 - core index']
  #allocation1 [shape = 'u32[144,128]{1,0:T(1,128)}', space=vmem, size = 0x12000, scoped, tag = 'internal scratch']
  %s0 = inlined_call_operand.vmem [shape: f32[1,512], index: 0, kind: input, shape index: {}]
  %s1 = inlined_call_operand.vmem [shape: f32[1,512], index: 1, kind: input, shape index: {}]
  %s2 = inlined_call_operand.vmem [shape: bf16[8,512], index: 2, kind: input, shape index: {}]
  %s3 = inlined_call_operand.vmem [shape: bf16[512,512], index: 3, kind: input, shape index: {}]
  %s4 = inlined_call_operand.vmem [shape: bf16[8,512], index: 4, kind: output, shape index: {0}]
  %s5 = inlined_call_operand.vmem [shape: f32[1,2,512], index: 5, kind: output, shape index: {1}]
  %6 = xla_tuple %s4, %s5
  %s7 = sld [smem:[#allocation0]]
  $region34: #{netd_patch_forward.9} parent=0
    _
  %s9 = ssub.s32 1, %s7
  %s10 = scalar_select 0, %s9, %s7
  // Predicated region
  $region2: #{netd_patch_forward.9} parent=0 // pred_check
    _
  $region3: #{netd_patch_forward.9} parent=0 // pred_check_branch
    %12 = sbr.rel (0) target = $region5
  $region4: #{netd_patch_forward.9} parent=0 // pred_region
    _
  $region5: #{netd_patch_forward.9} parent=0 // pred_fallthru
    _
  // Predicated region
  $region6: #{netd_patch_forward.9} parent=0 // pred_check
    _
  $region7: #{netd_patch_forward.9} parent=0 // pred_check_branch
    %14 = sbr.rel (0) target = $region9
  $region8: #{netd_patch_forward.9} parent=0 // pred_region
    _
  $region9: #{netd_patch_forward.9} parent=0 // pred_fallthru
    _
  // Predicated region
  $region10: #{netd_patch_forward.9} parent=0 // pred_check
    _
  $region11: #{netd_patch_forward.9} parent=0 // pred_check_branch
    %16 = sbr.rel (0) target = $region13
  $region12: #{netd_patch_forward.9} parent=0 // pred_region
    _
  $region13: #{netd_patch_forward.9} parent=0 // pred_fallthru
    _
  // Predicated region
  $region14: #{netd_patch_forward.9} parent=0 // pred_check
    _
  $region15: #{netd_patch_forward.9} parent=0 // pred_check_branch
    %18 = sbr.rel (0) target = $region17
  $region16: #{netd_patch_forward.9} parent=0 // pred_region
    _
  $region17: #{netd_patch_forward.9} parent=0 // pred_fallthru
    _
  %v19 = vld [vmem:[%s2] sm:$0xff]
  %v20 = vld [vmem:[%s2 + $0x8] sm:$0xff]
  %v21 = vunpack.c.l.bf16 %v19
  %v22 = vunpack.c.h.bf16 %v19
  %v23 = vunpack.c.l.bf16 %v20
  %v24 = vunpack.c.h.bf16 %v20
  %v25 = vld [vmem:[%s0] sm:$0xf]
  %v27 = vlaneseq
  %v28 = vshrl.u32 %v27, 7
  %v29 = vsub.s32 0, %v28
  %v30 = vrot.slane %v25, %v29
  %v31 = vlaneseq
  %v32 = vshrl.u32 %v31, 7
  %v33 = vsub.s32 1, %v32
  %v34 = vrot.slane %v25, %v33
  %v35 = vlaneseq
  %v36 = vshrl.u32 %v35, 7
  %v37 = vsub.s32 2, %v36
  %v38 = vrot.slane %v25, %v37
  %v39 = vlaneseq
  %v40 = vshrl.u32 %v39, 7
  %v41 = vsub.s32 3, %v40
  %v42 = vrot.slane %v25, %v41
  %v47 = vsub.f32 %v21, %v30
  %v48 = vsub.f32 %v22, %v34
  %v49 = vsub.f32 %v23, %v38
  %v50 = vsub.f32 %v24, %v42
  %v51 = vld [vmem:[%s1] sm:$0xf]
  %v53 = vlaneseq
  %v54 = vshrl.u32 %v53, 7
  %v55 = vsub.s32 0, %v54
  %v56 = vrot.slane %v51, %v55
  %v57 = vlaneseq
  %v58 = vshrl.u32 %v57, 7
  %v59 = vsub.s32 1, %v58
  %v60 = vrot.slane %v51, %v59
  %v61 = vlaneseq
  %v62 = vshrl.u32 %v61, 7
  %v63 = vsub.s32 2, %v62
  %v64 = vrot.slane %v51, %v63
  %v65 = vlaneseq
  %v66 = vshrl.u32 %v65, 7
  %v67 = vsub.s32 3, %v66
  %v68 = vrot.slane %v51, %v67
  %v73 = vmul.f32 %v47, %v56
  %v74 = vmul.f32 %v48, %v60
  %v75 = vmul.f32 %v49, %v64
  %v76 = vmul.f32 %v50, %v68
  %vm77 = vcmp.gt.f32.partialorder %v73, 0.0
  %vm78 = vcmp.gt.f32.partialorder %v74, 0.0
  %vm79 = vcmp.gt.f32.partialorder %v75, 0.0
  %vm80 = vcmp.gt.f32.partialorder %v76, 0.0
  %v81 = vmul.f32 %v73, 0.2
  %v82 = vmul.f32 %v74, 0.2
  %v83 = vmul.f32 %v75, 0.2
  %v84 = vmul.f32 %v76, 0.2
  %v85 = vsel %vm77, %v73, %v81
  %v86 = vsel %vm78, %v74, %v82
  %v87 = vsel %vm79, %v75, %v83
  %v88 = vsel %vm80, %v76, %v84
  %v89 = vpack.c.bf16 %v85, %v85
  %v90 = vpack.c.bf16 %v86, %v86
  %v91 = vpack.c.bf16 %v87, %v87
  %v92 = vpack.c.bf16 %v88, %v88
  %v93 = vld [vmem:[%s3] sm:$0xff]
  %v94 = vld [vmem:[%s3 + $0x8] sm:$0xff]
  %v95 = vld [vmem:[%s3 + $0x10] sm:$0xff]
  %v96 = vld [vmem:[%s3 + $0x18] sm:$0xff]
  %v97 = vld [vmem:[%s3 + $0x20] sm:$0xff]
  %v98 = vld [vmem:[%s3 + $0x28] sm:$0xff]
  %v99 = vld [vmem:[%s3 + $0x30] sm:$0xff]
  %v100 = vld [vmem:[%s3 + $0x38] sm:$0xff]
  %v101 = vld [vmem:[%s3 + $0x40] sm:$0xff]
  %v102 = vld [vmem:[%s3 + $0x48] sm:$0xff]
  %v103 = vld [vmem:[%s3 + $0x50] sm:$0xff]
  %v104 = vld [vmem:[%s3 + $0x58] sm:$0xff]
  %v105 = vld [vmem:[%s3 + $0x60] sm:$0xff]
  %v106 = vld [vmem:[%s3 + $0x68] sm:$0xff]
  %v107 = vld [vmem:[%s3 + $0x70] sm:$0xff]
  %v108 = vld [vmem:[%s3 + $0x78] sm:$0xff]
  %v109 = vld [vmem:[%s3 + $0x80] sm:$0xff]
  %v110 = vld [vmem:[%s3 + $0x88] sm:$0xff]
  %v111 = vld [vmem:[%s3 + $0x90] sm:$0xff]
  %v112 = vld [vmem:[%s3 + $0x98] sm:$0xff]
  %v113 = vld [vmem:[%s3 + $0xa0] sm:$0xff]
  %v114 = vld [vmem:[%s3 + $0xa8] sm:$0xff]
  %v115 = vld [vmem:[%s3 + $0xb0] sm:$0xff]
  %v116 = vld [vmem:[%s3 + $0xb8] sm:$0xff]
  %v117 = vld [vmem:[%s3 + $0xc0] sm:$0xff]
  %v118 = vld [vmem:[%s3 + $0xc8] sm:$0xff]
  %v119 = vld [vmem:[%s3 + $0xd0] sm:$0xff]
  %v120 = vld [vmem:[%s3 + $0xd8] sm:$0xff]
  %v121 = vld [vmem:[%s3 + $0xe0] sm:$0xff]
  %v122 = vld [vmem:[%s3 + $0xe8] sm:$0xff]
  %v123 = vld [vmem:[%s3 + $0xf0] sm:$0xff]
  %v124 = vld [vmem:[%s3 + $0xf8] sm:$0xff]
  %v125 = vld [vmem:[%s3 + $0x100] sm:$0xff]
  %v126 = vld [vmem:[%s3 + $0x108] sm:$0xff]
  %v127 = vld [vmem:[%s3 + $0x110] sm:$0xff]
  %v128 = vld [vmem:[%s3 + $0x118] sm:$0xff]
  %v129 = vld [vmem:[%s3 + $0x120] sm:$0xff]
  %v130 = vld [vmem:[%s3 + $0x128] sm:$0xff]
  %v131 = vld [vmem:[%s3 + $0x130] sm:$0xff]
  %v132 = vld [vmem:[%s3 + $0x138] sm:$0xff]
  %v133 = vld [vmem:[%s3 + $0x140] sm:$0xff]
  %v134 = vld [vmem:[%s3 + $0x148] sm:$0xff]
  %v135 = vld [vmem:[%s3 + $0x150] sm:$0xff]
  %v136 = vld [vmem:[%s3 + $0x158] sm:$0xff]
  %v137 = vld [vmem:[%s3 + $0x160] sm:$0xff]
  %v138 = vld [vmem:[%s3 + $0x168] sm:$0xff]
  %v139 = vld [vmem:[%s3 + $0x170] sm:$0xff]
  %v140 = vld [vmem:[%s3 + $0x178] sm:$0xff]
  %v141 = vld [vmem:[%s3 + $0x180] sm:$0xff]
  %v142 = vld [vmem:[%s3 + $0x188] sm:$0xff]
  %v143 = vld [vmem:[%s3 + $0x190] sm:$0xff]
  %v144 = vld [vmem:[%s3 + $0x198] sm:$0xff]
  %v145 = vld [vmem:[%s3 + $0x1a0] sm:$0xff]
  %v146 = vld [vmem:[%s3 + $0x1a8] sm:$0xff]
  %v147 = vld [vmem:[%s3 + $0x1b0] sm:$0xff]
  %v148 = vld [vmem:[%s3 + $0x1b8] sm:$0xff]
  %v149 = vld [vmem:[%s3 + $0x1c0] sm:$0xff]
  %v150 = vld [vmem:[%s3 + $0x1c8] sm:$0xff]
  %v151 = vld [vmem:[%s3 + $0x1d0] sm:$0xff]
  %v152 = vld [vmem:[%s3 + $0x1d8] sm:$0xff]
  %v153 = vld [vmem:[%s3 + $0x1e0] sm:$0xff]
  %v154 = vld [vmem:[%s3 + $0x1e8] sm:$0xff]
  %v155 = vld [vmem:[%s3 + $0x1f0] sm:$0xff]
  %v156 = vld [vmem:[%s3 + $0x1f8] sm:$0xff]
  %v157 = vld [vmem:[%s3 + $0x200] sm:$0xff]
  %v158 = vld [vmem:[%s3 + $0x208] sm:$0xff]
  %v159 = vld [vmem:[%s3 + $0x210] sm:$0xff]
  %v160 = vld [vmem:[%s3 + $0x218] sm:$0xff]
  %v161 = vld [vmem:[%s3 + $0x220] sm:$0xff]
  %v162 = vld [vmem:[%s3 + $0x228] sm:$0xff]
  %v163 = vld [vmem:[%s3 + $0x230] sm:$0xff]
  %v164 = vld [vmem:[%s3 + $0x238] sm:$0xff]
  %v165 = vld [vmem:[%s3 + $0x240] sm:$0xff]
  %v166 = vld [vmem:[%s3 + $0x248] sm:$0xff]
  %v167 = vld [vmem:[%s3 + $0x250] sm:$0xff]
  %v168 = vld [vmem:[%s3 + $0x258] sm:$0xff]
  %v169 = vld [vmem:[%s3 + $0x260] sm:$0xff]
  %v170 = vld [vmem:[%s3 + $0x268] sm:$0xff]
  %v171 = vld [vmem:[%s3 + $0x270] sm:$0xff]
  %v172 = vld [vmem:[%s3 + $0x278] sm:$0xff]
  %v173 = vld [vmem:[%s3 + $0x280] sm:$0xff]
  %v174 = vld [vmem:[%s3 + $0x288] sm:$0xff]
  %v175 = vld [vmem:[%s3 + $0x290] sm:$0xff]
  %v176 = vld [vmem:[%s3 + $0x298] sm:$0xff]
  %v177 = vld [vmem:[%s3 + $0x2a0] sm:$0xff]
  %v178 = vld [vmem:[%s3 + $0x2a8] sm:$0xff]
  %v179 = vld [vmem:[%s3 + $0x2b0] sm:$0xff]
  %v180 = vld [vmem:[%s3 + $0x2b8] sm:$0xff]
  %v181 = vld [vmem:[%s3 + $0x2c0] sm:$0xff]
  %v182 = vld [vmem:[%s3 + $0x2c8] sm:$0xff]
  %v183 = vld [vmem:[%s3 + $0x2d0] sm:$0xff]
  %v184 = vld [vmem:[%s3 + $0x2d8] sm:$0xff]
  %v185 = vld [vmem:[%s3 + $0x2e0] sm:$0xff]
  %v186 = vld [vmem:[%s3 + $0x2e8] sm:$0xff]
  %v187 = vld [vmem:[%s3 + $0x2f0] sm:$0xff]
  %v188 = vld [vmem:[%s3 + $0x2f8] sm:$0xff]
  %v189 = vld [vmem:[%s3 + $0x300] sm:$0xff]
  %v190 = vld [vmem:[%s3 + $0x308] sm:$0xff]
  %v191 = vld [vmem:[%s3 + $0x310] sm:$0xff]
  %v192 = vld [vmem:[%s3 + $0x318] sm:$0xff]
  %v193 = vld [vmem:[%s3 + $0x320] sm:$0xff]
  %v194 = vld [vmem:[%s3 + $0x328] sm:$0xff]
  %v195 = vld [vmem:[%s3 + $0x330] sm:$0xff]
  %v196 = vld [vmem:[%s3 + $0x338] sm:$0xff]
  %v197 = vld [vmem:[%s3 + $0x340] sm:$0xff]
  %v198 = vld [vmem:[%s3 + $0x348] sm:$0xff]
  %v199 = vld [vmem:[%s3 + $0x350] sm:$0xff]
  %v200 = vld [vmem:[%s3 + $0x358] sm:$0xff]
  %v201 = vld [vmem:[%s3 + $0x360] sm:$0xff]
  %v202 = vld [vmem:[%s3 + $0x368] sm:$0xff]
  %v203 = vld [vmem:[%s3 + $0x370] sm:$0xff]
  %v204 = vld [vmem:[%s3 + $0x378] sm:$0xff]
  %v205 = vld [vmem:[%s3 + $0x380] sm:$0xff]
  %v206 = vld [vmem:[%s3 + $0x388] sm:$0xff]
  %v207 = vld [vmem:[%s3 + $0x390] sm:$0xff]
  %v208 = vld [vmem:[%s3 + $0x398] sm:$0xff]
  %v209 = vld [vmem:[%s3 + $0x3a0] sm:$0xff]
  %v210 = vld [vmem:[%s3 + $0x3a8] sm:$0xff]
  %v211 = vld [vmem:[%s3 + $0x3b0] sm:$0xff]
  %v212 = vld [vmem:[%s3 + $0x3b8] sm:$0xff]
  %v213 = vld [vmem:[%s3 + $0x3c0] sm:$0xff]
  %v214 = vld [vmem:[%s3 + $0x3c8] sm:$0xff]
  %v215 = vld [vmem:[%s3 + $0x3d0] sm:$0xff]
  %v216 = vld [vmem:[%s3 + $0x3d8] sm:$0xff]
  %v217 = vld [vmem:[%s3 + $0x3e0] sm:$0xff]
  %v218 = vld [vmem:[%s3 + $0x3e8] sm:$0xff]
  %v219 = vld [vmem:[%s3 + $0x3f0] sm:$0xff]
  %v220 = vld [vmem:[%s3 + $0x3f8] sm:$0xff]
  %v349 = vunpack.c.l.b16 %v93
  %v350 = vunpack.c.h.b16 %v93
  %v351 = vunpack.c.l.b16 %v94
  %v352 = vunpack.c.h.b16 %v94
  %v353 = vunpack.c.l.b16 %v95
  %v354 = vunpack.c.h.b16 %v95
  %v355 = vunpack.c.l.b16 %v96
  %v356 = vunpack.c.h.b16 %v96
  %v357 = vunpack.c.l.b16 %v97
  %v358 = vunpack.c.h.b16 %v97
  %v359 = vunpack.c.l.b16 %v98
  %v360 = vunpack.c.h.b16 %v98
  %v361 = vunpack.c.l.b16 %v99
  %v362 = vunpack.c.h.b16 %v99
  %v363 = vunpack.c.l.b16 %v100
  %v364 = vunpack.c.h.b16 %v100
  %v365 = vunpack.c.l.b16 %v101
  %v366 = vunpack.c.h.b16 %v101
  %v367 = vunpack.c.l.b16 %v102
  %v368 = vunpack.c.h.b16 %v102
  %v369 = vunpack.c.l.b16 %v103
  %v370 = vunpack.c.h.b16 %v103
  %v371 = vunpack.c.l.b16 %v104
  %v372 = vunpack.c.h.b16 %v104
  %v373 = vunpack.c.l.b16 %v105
  %v374 = vunpack.c.h.b16 %v105
  %v375 = vunpack.c.l.b16 %v106
  %v376 = vunpack.c.h.b16 %v106
  %v377 = vunpack.c.l.b16 %v107
  %v378 = vunpack.c.h.b16 %v107
  %v379 = vunpack.c.l.b16 %v108
  %v380 = vunpack.c.h.b16 %v108
  %v381 = vunpack.c.l.b16 %v109
  %v382 = vunpack.c.h.b16 %v109
  %v383 = vunpack.c.l.b16 %v110
  %v384 = vunpack.c.h.b16 %v110
  %v385 = vunpack.c.l.b16 %v111
  %v386 = vunpack.c.h.b16 %v111
  %v387 = vunpack.c.l.b16 %v112
  %v388 = vunpack.c.h.b16 %v112
  %v389 = vunpack.c.l.b16 %v113
  %v390 = vunpack.c.h.b16 %v113
  %v391 = vunpack.c.l.b16 %v114
  %v392 = vunpack.c.h.b16 %v114
  %v393 = vunpack.c.l.b16 %v115
  %v394 = vunpack.c.h.b16 %v115
  %v395 = vunpack.c.l.b16 %v116
  %v396 = vunpack.c.h.b16 %v116
  %v397 = vunpack.c.l.b16 %v117
  %v398 = vunpack.c.h.b16 %v117
  %v399 = vunpack.c.l.b16 %v118
  %v400 = vunpack.c.h.b16 %v118
  %v401 = vunpack.c.l.b16 %v119
  %v402 = vunpack.c.h.b16 %v119
  %v403 = vunpack.c.l.b16 %v120
  %v404 = vunpack.c.h.b16 %v120
  %v405 = vunpack.c.l.b16 %v121
  %v406 = vunpack.c.h.b16 %v121
  %v407 = vunpack.c.l.b16 %v122
  %v408 = vunpack.c.h.b16 %v122
  %v409 = vunpack.c.l.b16 %v123
  %v410 = vunpack.c.h.b16 %v123
  %v411 = vunpack.c.l.b16 %v124
  %v412 = vunpack.c.h.b16 %v124
  %v413 = vunpack.c.l.b16 %v125
  %v414 = vunpack.c.h.b16 %v125
  %v415 = vunpack.c.l.b16 %v126
  %v416 = vunpack.c.h.b16 %v126
  %v417 = vunpack.c.l.b16 %v127
  %v418 = vunpack.c.h.b16 %v127
  %v419 = vunpack.c.l.b16 %v128
  %v420 = vunpack.c.h.b16 %v128
  %v421 = vunpack.c.l.b16 %v129
  %v422 = vunpack.c.h.b16 %v129
  %v423 = vunpack.c.l.b16 %v130
  %v424 = vunpack.c.h.b16 %v130
  %v425 = vunpack.c.l.b16 %v131
  %v426 = vunpack.c.h.b16 %v131
  %v427 = vunpack.c.l.b16 %v132
  %v428 = vunpack.c.h.b16 %v132
  %v429 = vunpack.c.l.b16 %v133
  %v430 = vunpack.c.h.b16 %v133
  %v431 = vunpack.c.l.b16 %v134
  %v432 = vunpack.c.h.b16 %v134
  %v433 = vunpack.c.l.b16 %v135
  %v434 = vunpack.c.h.b16 %v135
  %v435 = vunpack.c.l.b16 %v136
  %v436 = vunpack.c.h.b16 %v136
  %v437 = vunpack.c.l.b16 %v137
  %v438 = vunpack.c.h.b16 %v137
  %v439 = vunpack.c.l.b16 %v138
  %v440 = vunpack.c.h.b16 %v138
  %v441 = vunpack.c.l.b16 %v139
  %v442 = vunpack.c.h.b16 %v139
  %v443 = vunpack.c.l.b16 %v140
  %v444 = vunpack.c.h.b16 %v140
  %v445 = vunpack.c.l.b16 %v141
  %v446 = vunpack.c.h.b16 %v141
  %v447 = vunpack.c.l.b16 %v142
  %v448 = vunpack.c.h.b16 %v142
  %v449 = vunpack.c.l.b16 %v143
  %v450 = vunpack.c.h.b16 %v143
  %v451 = vunpack.c.l.b16 %v144
  %v452 = vunpack.c.h.b16 %v144
  %v453 = vunpack.c.l.b16 %v145
  %v454 = vunpack.c.h.b16 %v145
  %v455 = vunpack.c.l.b16 %v146
  %v456 = vunpack.c.h.b16 %v146
  %v457 = vunpack.c.l.b16 %v147
  %v458 = vunpack.c.h.b16 %v147
  %v459 = vunpack.c.l.b16 %v148
  %v460 = vunpack.c.h.b16 %v148
  %v461 = vunpack.c.l.b16 %v149
  %v462 = vunpack.c.h.b16 %v149
  %v463 = vunpack.c.l.b16 %v150
  %v464 = vunpack.c.h.b16 %v150
  %v465 = vunpack.c.l.b16 %v151
  %v466 = vunpack.c.h.b16 %v151
  %v467 = vunpack.c.l.b16 %v152
  %v468 = vunpack.c.h.b16 %v152
  %v469 = vunpack.c.l.b16 %v153
  %v470 = vunpack.c.h.b16 %v153
  %v471 = vunpack.c.l.b16 %v154
  %v472 = vunpack.c.h.b16 %v154
  %v473 = vunpack.c.l.b16 %v155
  %v474 = vunpack.c.h.b16 %v155
  %v475 = vunpack.c.l.b16 %v156
  %v476 = vunpack.c.h.b16 %v156
  %v477 = vunpack.c.l.b16 %v157
  %v478 = vunpack.c.h.b16 %v157
  %v479 = vunpack.c.l.b16 %v158
  %v480 = vunpack.c.h.b16 %v158
  %v481 = vunpack.c.l.b16 %v159
  %v482 = vunpack.c.h.b16 %v159
  %v483 = vunpack.c.l.b16 %v160
  %v484 = vunpack.c.h.b16 %v160
  %v485 = vunpack.c.l.b16 %v161
  %v486 = vunpack.c.h.b16 %v161
  %v487 = vunpack.c.l.b16 %v162
  %v488 = vunpack.c.h.b16 %v162
  %v489 = vunpack.c.l.b16 %v163
  %v490 = vunpack.c.h.b16 %v163
  %v491 = vunpack.c.l.b16 %v164
  %v492 = vunpack.c.h.b16 %v164
  %v493 = vunpack.c.l.b16 %v165
  %v494 = vunpack.c.h.b16 %v165
  %v495 = vunpack.c.l.b16 %v166
  %v496 = vunpack.c.h.b16 %v166
  %v497 = vunpack.c.l.b16 %v167
  %v498 = vunpack.c.h.b16 %v167
  %v499 = vunpack.c.l.b16 %v168
  %v500 = vunpack.c.h.b16 %v168
  %v501 = vunpack.c.l.b16 %v169
  %v502 = vunpack.c.h.b16 %v169
  %v503 = vunpack.c.l.b16 %v170
  %v504 = vunpack.c.h.b16 %v170
  %v505 = vunpack.c.l.b16 %v171
  %v506 = vunpack.c.h.b16 %v171
  %v507 = vunpack.c.l.b16 %v172
  %v508 = vunpack.c.h.b16 %v172
  %v509 = vunpack.c.l.b16 %v173
  %v510 = vunpack.c.h.b16 %v173
  %v511 = vunpack.c.l.b16 %v174
  %v512 = vunpack.c.h.b16 %v174
  %v513 = vunpack.c.l.b16 %v175
  %v514 = vunpack.c.h.b16 %v175
  %v515 = vunpack.c.l.b16 %v176
  %v516 = vunpack.c.h.b16 %v176
  %v517 = vunpack.c.l.b16 %v177
  %v518 = vunpack.c.h.b16 %v177
  %v519 = vunpack.c.l.b16 %v178
  %v520 = vunpack.c.h.b16 %v178
  %v521 = vunpack.c.l.b16 %v179
  %v522 = vunpack.c.h.b16 %v179
  %v523 = vunpack.c.l.b16 %v180
  %v524 = vunpack.c.h.b16 %v180
  %v525 = vunpack.c.l.b16 %v181
  %v526 = vunpack.c.h.b16 %v181
  %v527 = vunpack.c.l.b16 %v182
  %v528 = vunpack.c.h.b16 %v182
  %v529 = vunpack.c.l.b16 %v183
  %v530 = vunpack.c.h.b16 %v183
  %v531 = vunpack.c.l.b16 %v184
  %v532 = vunpack.c.h.b16 %v184
  %v533 = vunpack.c.l.b16 %v185
  %v534 = vunpack.c.h.b16 %v185
  %v535 = vunpack.c.l.b16 %v186
  %v536 = vunpack.c.h.b16 %v186
  %v537 = vunpack.c.l.b16 %v187
  %v538 = vunpack.c.h.b16 %v187
  %v539 = vunpack.c.l.b16 %v188
  %v540 = vunpack.c.h.b16 %v188
  %v541 = vunpack.c.l.b16 %v189
  %v542 = vunpack.c.h.b16 %v189
  %v543 = vunpack.c.l.b16 %v190
  %v544 = vunpack.c.h.b16 %v190
  %v545 = vunpack.c.l.b16 %v191
  %v546 = vunpack.c.h.b16 %v191
  %v547 = vunpack.c.l.b16 %v192
  %v548 = vunpack.c.h.b16 %v192
  %v549 = vunpack.c.l.b16 %v193
  %v550 = vunpack.c.h.b16 %v193
  %v551 = vunpack.c.l.b16 %v194
  %v552 = vunpack.c.h.b16 %v194
  %v553 = vunpack.c.l.b16 %v195
  %v554 = vunpack.c.h.b16 %v195
  %v555 = vunpack.c.l.b16 %v196
  %v556 = vunpack.c.h.b16 %v196
  %v557 = vunpack.c.l.b16 %v197
  %v558 = vunpack.c.h.b16 %v197
  %v559 = vunpack.c.l.b16 %v198
  %v560 = vunpack.c.h.b16 %v198
  %v561 = vunpack.c.l.b16 %v199
  %v562 = vunpack.c.h.b16 %v199
  %v563 = vunpack.c.l.b16 %v200
  %v564 = vunpack.c.h.b16 %v200
  %v565 = vunpack.c.l.b16 %v201
  %v566 = vunpack.c.h.b16 %v201
  %v567 = vunpack.c.l.b16 %v202
  %v568 = vunpack.c.h.b16 %v202
  %v569 = vunpack.c.l.b16 %v203
  %v570 = vunpack.c.h.b16 %v203
  %v571 = vunpack.c.l.b16 %v204
  %v572 = vunpack.c.h.b16 %v204
  %v573 = vunpack.c.l.b16 %v205
  %v574 = vunpack.c.h.b16 %v205
  %v575 = vunpack.c.l.b16 %v206
  %v576 = vunpack.c.h.b16 %v206
  %v577 = vunpack.c.l.b16 %v207
  %v578 = vunpack.c.h.b16 %v207
  %v579 = vunpack.c.l.b16 %v208
  %v580 = vunpack.c.h.b16 %v208
  %v581 = vunpack.c.l.b16 %v209
  %v582 = vunpack.c.h.b16 %v209
  %v583 = vunpack.c.l.b16 %v210
  %v584 = vunpack.c.h.b16 %v210
  %v585 = vunpack.c.l.b16 %v211
  %v586 = vunpack.c.h.b16 %v211
  %v587 = vunpack.c.l.b16 %v212
  %v588 = vunpack.c.h.b16 %v212
  %v589 = vunpack.c.l.b16 %v213
  %v590 = vunpack.c.h.b16 %v213
  %v591 = vunpack.c.l.b16 %v214
  %v592 = vunpack.c.h.b16 %v214
  %v593 = vunpack.c.l.b16 %v215
  %v594 = vunpack.c.h.b16 %v215
  %v595 = vunpack.c.l.b16 %v216
  %v596 = vunpack.c.h.b16 %v216
  %v597 = vunpack.c.l.b16 %v217
  %v598 = vunpack.c.h.b16 %v217
  %v599 = vunpack.c.l.b16 %v218
  %v600 = vunpack.c.h.b16 %v218
  %v601 = vunpack.c.l.b16 %v219
  %v602 = vunpack.c.h.b16 %v219
  %v603 = vunpack.c.l.b16 %v220
  %v604 = vunpack.c.h.b16 %v220
  %v605 = vpack.c.b16 %v353, %v349
  %v606 = vpack.c.b16 %v354, %v350
  %v607 = vpack.c.b16 %v355, %v351
  %v608 = vpack.c.b16 %v356, %v352
  %v609 = vpack.c.b16 %v361, %v357
  %v610 = vpack.c.b16 %v362, %v358
  %v611 = vpack.c.b16 %v363, %v359
  %v612 = vpack.c.b16 %v364, %v360
  %v613 = vpack.c.b16 %v369, %v365
  %v614 = vpack.c.b16 %v370, %v366
  %v615 = vpack.c.b16 %v371, %v367
  %v616 = vpack.c.b16 %v372, %v368
  %v617 = vpack.c.b16 %v377, %v373
  %v618 = vpack.c.b16 %v378, %v374
  %v619 = vpack.c.b16 %v379, %v375
  %v620 = vpack.c.b16 %v380, %v376
  %v621 = vpack.c.b16 %v385, %v381
  %v622 = vpack.c.b16 %v386, %v382
  %v623 = vpack.c.b16 %v387, %v383
  %v624 = vpack.c.b16 %v388, %v384
  %v625 = vpack.c.b16 %v393, %v389
  %v626 = vpack.c.b16 %v394, %v390
  %v627 = vpack.c.b16 %v395, %v391
  %v628 = vpack.c.b16 %v396, %v392
  %v629 = vpack.c.b16 %v401, %v397
  %v630 = vpack.c.b16 %v402, %v398
  %v631 = vpack.c.b16 %v403, %v399
  %v632 = vpack.c.b16 %v404, %v400
  %v633 = vpack.c.b16 %v409, %v405
  %v634 = vpack.c.b16 %v410, %v406
  %v635 = vpack.c.b16 %v411, %v407
  %v636 = vpack.c.b16 %v412, %v408
  %v637 = vpack.c.b16 %v417, %v413
  %v638 = vpack.c.b16 %v418, %v414
  %v639 = vpack.c.b16 %v419, %v415
  %v640 = vpack.c.b16 %v420, %v416
  %v641 = vpack.c.b16 %v425, %v421
  %v642 = vpack.c.b16 %v426, %v422
  %v643 = vpack.c.b16 %v427, %v423
  %v644 = vpack.c.b16 %v428, %v424
  %v645 = vpack.c.b16 %v433, %v429
  %v646 = vpack.c.b16 %v434, %v430
  %v647 = vpack.c.b16 %v435, %v431
  %v648 = vpack.c.b16 %v436, %v432
  %v649 = vpack.c.b16 %v441, %v437
  %v650 = vpack.c.b16 %v442, %v438
  %v651 = vpack.c.b16 %v443, %v439
  %v652 = vpack.c.b16 %v444, %v440
  %v653 = vpack.c.b16 %v449, %v445
  %v654 = vpack.c.b16 %v450, %v446
  %v655 = vpack.c.b16 %v451, %v447
  %v656 = vpack.c.b16 %v452, %v448
  %v657 = vpack.c.b16 %v457, %v453
  %v658 = vpack.c.b16 %v458, %v454
  %v659 = vpack.c.b16 %v459, %v455
  %v660 = vpack.c.b16 %v460, %v456
  %v661 = vpack.c.b16 %v465, %v461
  %v662 = vpack.c.b16 %v466, %v462
  %v663 = vpack.c.b16 %v467, %v463
  %v664 = vpack.c.b16 %v468, %v464
  %v665 = vpack.c.b16 %v473, %v469
  %v666 = vpack.c.b16 %v474, %v470
  %v667 = vpack.c.b16 %v475, %v471
  %v668 = vpack.c.b16 %v476, %v472
  %v669 = vpack.c.b16 %v481, %v477
  %v670 = vpack.c.b16 %v482, %v478
  %v671 = vpack.c.b16 %v483, %v479
  %v672 = vpack.c.b16 %v484, %v480
  %v673 = vpack.c.b16 %v489, %v485
  %v674 = vpack.c.b16 %v490, %v486
  %v675 = vpack.c.b16 %v491, %v487
  %v676 = vpack.c.b16 %v492, %v488
  %v677 = vpack.c.b16 %v497, %v493
  %v678 = vpack.c.b16 %v498, %v494
  %v679 = vpack.c.b16 %v499, %v495
  %v680 = vpack.c.b16 %v500, %v496
  %v681 = vpack.c.b16 %v505, %v501
  %v682 = vpack.c.b16 %v506, %v502
  %v683 = vpack.c.b16 %v507, %v503
  %v684 = vpack.c.b16 %v508, %v504
  %v685 = vpack.c.b16 %v513, %v509
  %v686 = vpack.c.b16 %v514, %v510
  %v687 = vpack.c.b16 %v515, %v511
  %v688 = vpack.c.b16 %v516, %v512
  %v689 = vpack.c.b16 %v521, %v517
  %v690 = vpack.c.b16 %v522, %v518
  %v691 = vpack.c.b16 %v523, %v519
  %v692 = vpack.c.b16 %v524, %v520
  %v693 = vpack.c.b16 %v529, %v525
  %v694 = vpack.c.b16 %v530, %v526
  %v695 = vpack.c.b16 %v531, %v527
  %v696 = vpack.c.b16 %v532, %v528
  %v697 = vpack.c.b16 %v537, %v533
  %v698 = vpack.c.b16 %v538, %v534
  %v699 = vpack.c.b16 %v539, %v535
  %v700 = vpack.c.b16 %v540, %v536
  %v701 = vpack.c.b16 %v545, %v541
  %v702 = vpack.c.b16 %v546, %v542
  %v703 = vpack.c.b16 %v547, %v543
  %v704 = vpack.c.b16 %v548, %v544
  %v705 = vpack.c.b16 %v553, %v549
  %v706 = vpack.c.b16 %v554, %v550
  %v707 = vpack.c.b16 %v555, %v551
  %v708 = vpack.c.b16 %v556, %v552
  %v709 = vpack.c.b16 %v561, %v557
  %v710 = vpack.c.b16 %v562, %v558
  %v711 = vpack.c.b16 %v563, %v559
  %v712 = vpack.c.b16 %v564, %v560
  %v713 = vpack.c.b16 %v569, %v565
  %v714 = vpack.c.b16 %v570, %v566
  %v715 = vpack.c.b16 %v571, %v567
  %v716 = vpack.c.b16 %v572, %v568
  %v717 = vpack.c.b16 %v577, %v573
  %v718 = vpack.c.b16 %v578, %v574
  %v719 = vpack.c.b16 %v579, %v575
  %v720 = vpack.c.b16 %v580, %v576
  %v721 = vpack.c.b16 %v585, %v581
  %v722 = vpack.c.b16 %v586, %v582
  %v723 = vpack.c.b16 %v587, %v583
  %v724 = vpack.c.b16 %v588, %v584
  %v725 = vpack.c.b16 %v593, %v589
  %v726 = vpack.c.b16 %v594, %v590
  %v727 = vpack.c.b16 %v595, %v591
  %v728 = vpack.c.b16 %v596, %v592
  %v729 = vpack.c.b16 %v601, %v597
  %v730 = vpack.c.b16 %v602, %v598
  %v731 = vpack.c.b16 %v603, %v599
  %v732 = vpack.c.b16 %v604, %v600
  %861 = vmatprep.subr.bf16.mxu0 %v634
  %862 = vmatpush1.bf16.msra.mxu0 %v633
  %863 = vmatprep.subr.bf16.mxu0 %v630
  %864 = vmatpush1.bf16.msra.mxu0 %v629
  %865 = vmatprep.subr.bf16.mxu0 %v626
  %866 = vmatpush1.bf16.msra.mxu0 %v625
  %867 = vmatprep.subr.bf16.mxu0 %v622
  %868 = vmatpush1.bf16.msra.mxu0 %v621
  %869 = vmatprep.subr.bf16.mxu0 %v618
  %870 = vmatpush1.bf16.msra.mxu0 %v617
  %871 = vmatprep.subr.bf16.mxu0 %v614
  %872 = vmatpush1.bf16.msra.mxu0 %v613
  %873 = vmatprep.subr.bf16.mxu0 %v610
  %874 = vmatpush1.bf16.msra.mxu0 %v609
  %875 = vmatprep.subr.bf16.mxu0 %v606
  %876 = vmatpush1.bf16.msra.mxu0 %v605
  %877 = vmatprep.subr.bf16.mxu0 %v666
  %878 = vmatpush2.bf16.msra.mxu0 %v665
  %879 = vmatprep.subr.bf16.mxu0 %v662
  %880 = vmatpush2.bf16.msra.mxu0 %v661
  %881 = vmatprep.subr.bf16.mxu0 %v658
  %882 = vmatpush2.bf16.msra.mxu0 %v657
  %883 = vmatprep.subr.bf16.mxu0 %v654
  %884 = vmatpush2.bf16.msra.mxu0 %v653
  %885 = vmatprep.subr.bf16.mxu0 %v650
  %886 = vmatpush2.bf16.msra.mxu0 %v649
  %887 = vmatprep.subr.bf16.mxu0 %v646
  %888 = vmatpush2.bf16.msra.mxu0 %v645
  %889 = vmatprep.subr.bf16.mxu0 %v642
  %890 = vmatpush2.bf16.msra.mxu0 %v641
  %891 = vmatprep.subr.bf16.mxu0 %v638
  %892 = vmatpush2.bf16.msra.mxu0 %v637
  %893 = vmatprep.mubr.bf16.mxu0 %v90
  %894 = vmatmul.mubr.bf16.gmra.mxu0 %v89
  %v895 = vpop.f32.mrf.mxu0
  %v896 = vadd.f32 0.0, %v895
  %v897 = vpop.f32.mrf.mxu0
  %v898 = vadd.f32 0.0, %v897
  %v899 = vpop.f32.mrf.mxu0
  %v900 = vpop.f32.mrf.mxu0
  %901 = vdwg.mxu0
  %902 = vmatprep.subr.bf16.mxu0 %v698
  %903 = vmatpush1.bf16.msra.mxu0 %v697
  %904 = vmatprep.subr.bf16.mxu0 %v694
  %905 = vmatpush1.bf16.msra.mxu0 %v693
  %906 = vmatprep.subr.bf16.mxu0 %v690
  %907 = vmatpush1.bf16.msra.mxu0 %v689
  %908 = vmatprep.subr.bf16.mxu0 %v686
  %909 = vmatpush1.bf16.msra.mxu0 %v685
  %910 = vmatprep.subr.bf16.mxu0 %v682
  %911 = vmatpush1.bf16.msra.mxu0 %v681
  %912 = vmatprep.subr.bf16.mxu0 %v678
  %913 = vmatpush1.bf16.msra.mxu0 %v677
  %914 = vmatprep.subr.bf16.mxu0 %v674
  %915 = vmatpush1.bf16.msra.mxu0 %v673
  %916 = vmatprep.subr.bf16.mxu0 %v670
  %917 = vmatpush1.bf16.msra.mxu0 %v669
  %918 = vmatprep.subr.bf16.mxu0 %v730
  %919 = vmatpush2.bf16.msra.mxu0 %v729
  %920 = vmatprep.subr.bf16.mxu0 %v726
  %921 = vmatpush2.bf16.msra.mxu0 %v725
  %922 = vmatprep.subr.bf16.mxu0 %v722
  %923 = vmatpush2.bf16.msra.mxu0 %v721
  %924 = vmatprep.subr.bf16.mxu0 %v718
  %925 = vmatpush2.bf16.msra.mxu0 %v717
  %926 = vmatprep.subr.bf16.mxu0 %v714
  %927 = vmatpush2.bf16.msra.mxu0 %v713
  %928 = vmatprep.subr.bf16.mxu0 %v710
  %929 = vmatpush2.bf16.msra.mxu0 %v709
  %930 = vmatprep.subr.bf16.mxu0 %v706
  %931 = vmatpush2.bf16.msra.mxu0 %v705
  %932 = vmatprep.subr.bf16.mxu0 %v702
  %933 = vmatpush2.bf16.msra.mxu0 %v701
  %934 = vmatprep.mubr.bf16.mxu0 %v92
  %935 = vmatmul.mubr.bf16.gmra.mxu0 %v91
  %v936 = vpop.f32.mrf.mxu0
  %v937 = vadd.f32 %v896, %v936
  %v938 = vpop.f32.mrf.mxu0
  %v939 = vadd.f32 %v898, %v938
  %v940 = vpop.f32.mrf.mxu0
  %v941 = vpop.f32.mrf.mxu0
  %942 = vdwg.mxu0
  %943 = vmatprep.subr.bf16.mxu0 %v636
  %944 = vmatpush1.bf16.msra.mxu0 %v635
  %945 = vmatprep.subr.bf16.mxu0 %v632
  %946 = vmatpush1.bf16.msra.mxu0 %v631
  %947 = vmatprep.subr.bf16.mxu0 %v628
  %948 = vmatpush1.bf16.msra.mxu0 %v627
  %949 = vmatprep.subr.bf16.mxu0 %v624
  %950 = vmatpush1.bf16.msra.mxu0 %v623
  %951 = vmatprep.subr.bf16.mxu0 %v620
  %952 = vmatpush1.bf16.msra.mxu0 %v619
  %953 = vmatprep.subr.bf16.mxu0 %v616
  %954 = vmatpush1.bf16.msra.mxu0 %v615
  %955 = vmatprep.subr.bf16.mxu0 %v612
  %956 = vmatpush1.bf16.msra.mxu0 %v611
  %957 = vmatprep.subr.bf16.mxu0 %v608
  %958 = vmatpush1.bf16.msra.mxu0 %v607
  %959 = vmatprep.subr.bf16.mxu0 %v668
  %960 = vmatpush2.bf16.msra.mxu0 %v667
  %961 = vmatprep.subr.bf16.mxu0 %v664
  %962 = vmatpush2.bf16.msra.mxu0 %v663
  %963 = vmatprep.subr.bf16.mxu0 %v660
  %964 = vmatpush2.bf16.msra.mxu0 %v659
  %965 = vmatprep.subr.bf16.mxu0 %v656
  %966 = vmatpush2.bf16.msra.mxu0 %v655
  %967 = vmatprep.subr.bf16.mxu0 %v652
  %968 = vmatpush2.bf16.msra.mxu0 %v651
  %969 = vmatprep.subr.bf16.mxu0 %v648
  %970 = vmatpush2.bf16.msra.mxu0 %v647
  %971 = vmatprep.subr.bf16.mxu0 %v644
  %972 = vmatpush2.bf16.msra.mxu0 %v643
  %973 = vmatprep.subr.bf16.mxu0 %v640
  %974 = vmatpush2.bf16.msra.mxu0 %v639
  %975 = vmatprep.mubr.bf16.mxu0 %v90
  %976 = vmatmul.mubr.bf16.gmra.mxu0 %v89
  %v977 = vpop.f32.mrf.mxu0
  %v978 = vadd.f32 0.0, %v977
  %v979 = vpop.f32.mrf.mxu0
  %v980 = vadd.f32 0.0, %v979
  %v981 = vpop.f32.mrf.mxu0
  %v982 = vpop.f32.mrf.mxu0
  %983 = vdwg.mxu0
  %984 = vmatprep.subr.bf16.mxu0 %v700
  %985 = vmatpush1.bf16.msra.mxu0 %v699
  %986 = vmatprep.subr.bf16.mxu0 %v696
  %987 = vmatpush1.bf16.msra.mxu0 %v695
  %988 = vmatprep.subr.bf16.mxu0 %v692
  %989 = vmatpush1.bf16.msra.mxu0 %v691
  %990 = vmatprep.subr.bf16.mxu0 %v688
  %991 = vmatpush1.bf16.msra.mxu0 %v687
  %992 = vmatprep.subr.bf16.mxu0 %v684
  %993 = vmatpush1.bf16.msra.mxu0 %v683
  %994 = vmatprep.subr.bf16.mxu0 %v680
  %995 = vmatpush1.bf16.msra.mxu0 %v679
  %996 = vmatprep.subr.bf16.mxu0 %v676
  %997 = vmatpush1.bf16.msra.mxu0 %v675
  %998 = vmatprep.subr.bf16.mxu0 %v672
  %999 = vmatpush1.bf16.msra.mxu0 %v671
  %1000 = vmatprep.subr.bf16.mxu0 %v732
  %1001 = vmatpush2.bf16.msra.mxu0 %v731
  %1002 = vmatprep.subr.bf16.mxu0 %v728
  %1003 = vmatpush2.bf16.msra.mxu0 %v727
  %1004 = vmatprep.subr.bf16.mxu0 %v724
  %1005 = vmatpush2.bf16.msra.mxu0 %v723
  %1006 = vmatprep.subr.bf16.mxu0 %v720
  %1007 = vmatpush2.bf16.msra.mxu0 %v719
  %1008 = vmatprep.subr.bf16.mxu0 %v716
  %1009 = vmatpush2.bf16.msra.mxu0 %v715
  %1010 = vmatprep.subr.bf16.mxu0 %v712
  %1011 = vmatpush2.bf16.msra.mxu0 %v711
  %1012 = vmatprep.subr.bf16.mxu0 %v708
  %1013 = vmatpush2.bf16.msra.mxu0 %v707
  %1014 = vmatprep.subr.bf16.mxu0 %v704
  %1015 = vmatpush2.bf16.msra.mxu0 %v703
  %1016 = vmatprep.mubr.bf16.mxu0 %v92
  %1017 = vmatmul.mubr.bf16.gmra.mxu0 %v91
  %v1018 = vpop.f32.mrf.mxu0
  %v1019 = vadd.f32 %v978, %v1018
  %v1020 = vpop.f32.mrf.mxu0
  %v1021 = vadd.f32 %v980, %v1020
  %v1022 = vpop.f32.mrf.mxu0
  %v1023 = vpop.f32.mrf.mxu0
  %1024 = vdwg.mxu0
  %v1025 = vpack.c.bf16 %v937, %v937
  %v1026 = vpack.c.bf16 %v939, %v939
  %v1027 = vpack.c.bf16 %v1019, %v1019
  %v1028 = vpack.c.bf16 %v1021, %v1021
  %v1033 = vunpack.c.l.b16 %v1025
  %v1034 = vunpack.c.l.b16 %v1026
  %v1035 = vunpack.c.l.b16 %v1027
  %v1036 = vunpack.c.l.b16 %v1028
  %v1037 = vpack.c.b16 %v1034, %v1033
  %v1038 = vpack.c.b16 %v1036, %v1035
  %1041 = vst [vmem:[%s4] sm:$0xff] %v1037
  %1042 = vst [vmem:[%s4 + $0x8] sm:$0xff] %v1038
  %v1043 = vlaneseq
  %v1044 = vshrl.u32 %v1043, 7
  %s1045 = smul.u32 0, 8
  %v1046 = vstv %s1045
  %v1047 = vadd.s32 %v1044, %v1046
  %vm1048 = vcmp.lt.s32.totalorder %v1047, 8
  %v1049 = vsel %vm1048, %v937, 0.0
  %v1050 = vsel %vm1048, %v939, 0.0
  %v1051 = vsel %vm1048, %v1019, 0.0
  %v1052 = vsel %vm1048, %v1021, 0.0
  %v1053 = vrot.slane %v1049, 4
  %v1054 = vadd.f32 %v1049, %v1053
  %v1055 = vrot.slane %v1054, 2
  %v1056 = vadd.f32 %v1054, %v1055
  %v1057 = vrot.slane %v1056, 1
  %v1058 = vadd.f32 %v1056, %v1057
  %v1059 = vrot.slane %v1050, 4
  %v1060 = vadd.f32 %v1050, %v1059
  %v1061 = vrot.slane %v1060, 2
  %v1062 = vadd.f32 %v1060, %v1061
  %v1063 = vrot.slane %v1062, 1
  %v1064 = vadd.f32 %v1062, %v1063
  %v1065 = vrot.slane %v1051, 4
  %v1066 = vadd.f32 %v1051, %v1065
  %v1067 = vrot.slane %v1066, 2
  %v1068 = vadd.f32 %v1066, %v1067
  %v1069 = vrot.slane %v1068, 1
  %v1070 = vadd.f32 %v1068, %v1069
  %v1071 = vrot.slane %v1052, 4
  %v1072 = vadd.f32 %v1052, %v1071
  %v1073 = vrot.slane %v1072, 2
  %v1074 = vadd.f32 %v1072, %v1073
  %v1075 = vrot.slane %v1074, 1
  %v1076 = vadd.f32 %v1074, %v1075
  %v1077 = vmul.f32 %v1049, %v1049
  %v1078 = vmul.f32 %v1050, %v1050
  %v1079 = vmul.f32 %v1051, %v1051
  %v1080 = vmul.f32 %v1052, %v1052
  %v1081 = vrot.slane %v1077, 4
  %v1082 = vadd.f32 %v1077, %v1081
  %v1083 = vrot.slane %v1082, 2
  %v1084 = vadd.f32 %v1082, %v1083
  %v1085 = vrot.slane %v1084, 1
  %v1086 = vadd.f32 %v1084, %v1085
  %v1087 = vrot.slane %v1078, 4
  %v1088 = vadd.f32 %v1078, %v1087
  %v1089 = vrot.slane %v1088, 2
  %v1090 = vadd.f32 %v1088, %v1089
  %v1091 = vrot.slane %v1090, 1
  %v1092 = vadd.f32 %v1090, %v1091
  %v1093 = vrot.slane %v1079, 4
  %v1094 = vadd.f32 %v1079, %v1093
  %v1095 = vrot.slane %v1094, 2
  %v1096 = vadd.f32 %v1094, %v1095
  %v1097 = vrot.slane %v1096, 1
  %v1098 = vadd.f32 %v1096, %v1097
  %v1099 = vrot.slane %v1080, 4
  %v1100 = vadd.f32 %v1080, %v1099
  %v1101 = vrot.slane %v1100, 2
  %v1102 = vadd.f32 %v1100, %v1101
  %v1103 = vrot.slane %v1102, 1
  %v1104 = vadd.f32 %v1102, %v1103
  %vm1105 = vcmask 1040384
  %v1106 = vsel %vm1105, %v1058, %v1086
  %v1107 = vsel %vm1105, %v1064, %v1092
  %v1108 = vsel %vm1105, %v1070, %v1098
  %v1109 = vsel %vm1105, %v1076, %v1104
  %v1114 = vcombine.low %v1106, %v1107
  %v1115 = vcombine.low %v1108, %v1109
  %v1117 = vunpack.c.l.s4 1983009808
  %v1118 = vunpack.c.0.s8 %v1117
  %v1119 = vlaneseq
  %v1120 = vshrl.u32 %v1119, 7
  %v1121 = vsub.s32 %v1118, %v1120
  %v1122 = vrot.slane %v1114, %v1121
  %v1124 = vunpack.c.l.s4 1983009808
  %v1125 = vunpack.c.0.s8 %v1124
  %v1126 = vlaneseq
  %v1127 = vshrl.u32 %v1126, 7
  %v1128 = vsub.s32 %v1125, %v1127
  %v1129 = vrot.slane %v1115, %v1128
  %v1130 = vcombine.low %v1122, %v1129
  %1132 = vst [vmem:[%s5] sm:$0xff] %v1130
  // Predicated region
  $region18: #{netd_patch_forward.9} parent=0 // pred_check
    _
  $region19: #{netd_patch_forward.9} parent=0 // pred_check_branch
    %1134 = sbr.rel (0) target = $region21
  $region20: #{netd_patch_forward.9} parent=0 // pred_region
    _
  $region21: #{netd_patch_forward.9} parent=0 // pred_fallthru
    _
  // Predicated region
  $region22: #{netd_patch_forward.9} parent=0 // pred_check
    _
  $region23: #{netd_patch_forward.9} parent=0 // pred_check_branch
    %1136 = sbr.rel (0) target = $region25
  $region24: #{netd_patch_forward.9} parent=0 // pred_region
    _
  $region25: #{netd_patch_forward.9} parent=0 // pred_fallthru
    _
  // Predicated region
  $region26: #{netd_patch_forward.9} parent=0 // pred_check
    _
  $region27: #{netd_patch_forward.9} parent=0 // pred_check_branch
    %1138 = sbr.rel (0) target = $region29
  $region28: #{netd_patch_forward.9} parent=0 // pred_region
    _
  $region29: #{netd_patch_forward.9} parent=0 // pred_fallthru
    _
  // Predicated region
  $region30: #{netd_patch_forward.9} parent=0 // pred_check
    _
  $region31: #{netd_patch_forward.9} parent=0 // pred_check_branch
    %1140 = sbr.rel (0) target = $region33
  $region32: #{netd_patch_forward.9} parent=0 // pred_region
    _
  $region33: #{netd_patch_forward.9} parent=0 // pred_fallthru
    _

// kernel: netd_patch_forward.11
$region0: #{netd_patch_forward.11}
  #allocation0 [shape = 'u32[]', space=smem, size = 0x4, offset = 0x4, fixed_abs, tag = 'smem constant byte address 0x4 - core index']
  #allocation1 [shape = 'u32[144,128]{1,0:T(1,128)}', space=vmem, size = 0x12000, scoped, tag = 'internal scratch']
  %s0 = inlined_call_operand.vmem [shape: f32[1,256], index: 0, kind: input, shape index: {}]
  %s1 = inlined_call_operand.vmem [shape: f32[1,256], index: 1, kind: input, shape index: {}]
  %s2 = inlined_call_operand.vmem [shape: bf16[8,256], index: 2, kind: input, shape index: {}]
  %s3 = inlined_call_operand.vmem [shape: bf16[256,128], index: 3, kind: input, shape index: {}]
  %s4 = inlined_call_operand.vmem [shape: f32[8,128], index: 4, kind: output, shape index: {}]
  %s5 = sld [smem:[#allocation0]]
  $region26: #{netd_patch_forward.11} parent=0
    _
  %s7 = ssub.s32 1, %s5
  %s8 = scalar_select 0, %s7, %s5
  // Predicated region
  $region2: #{netd_patch_forward.11} parent=0 // pred_check
    _
  $region3: #{netd_patch_forward.11} parent=0 // pred_check_branch
    %10 = sbr.rel (0) target = $region5
  $region4: #{netd_patch_forward.11} parent=0 // pred_region
    _
  $region5: #{netd_patch_forward.11} parent=0 // pred_fallthru
    _
  // Predicated region
  $region6: #{netd_patch_forward.11} parent=0 // pred_check
    _
  $region7: #{netd_patch_forward.11} parent=0 // pred_check_branch
    %12 = sbr.rel (0) target = $region9
  $region8: #{netd_patch_forward.11} parent=0 // pred_region
    _
  $region9: #{netd_patch_forward.11} parent=0 // pred_fallthru
    _
  // Predicated region
  $region10: #{netd_patch_forward.11} parent=0 // pred_check
    _
  $region11: #{netd_patch_forward.11} parent=0 // pred_check_branch
    %14 = sbr.rel (0) target = $region13
  $region12: #{netd_patch_forward.11} parent=0 // pred_region
    _
  $region13: #{netd_patch_forward.11} parent=0 // pred_fallthru
    _
  // Predicated region
  $region14: #{netd_patch_forward.11} parent=0 // pred_check
    _
  $region15: #{netd_patch_forward.11} parent=0 // pred_check_branch
    %16 = sbr.rel (0) target = $region17
  $region16: #{netd_patch_forward.11} parent=0 // pred_region
    _
  $region17: #{netd_patch_forward.11} parent=0 // pred_fallthru
    _
  %v18 = vld [vmem:[%s2] sm:$0xff]
  %v19 = vunpack.c.l.bf16 %v18
  %v20 = vunpack.c.h.bf16 %v18
  %v21 = vld [vmem:[%s0] sm:$0x3]
  %v23 = vlaneseq
  %v24 = vshrl.u32 %v23, 7
  %v25 = vsub.s32 0, %v24
  %v26 = vrot.slane %v21, %v25
  %v27 = vlaneseq
  %v28 = vshrl.u32 %v27, 7
  %v29 = vsub.s32 1, %v28
  %v30 = vrot.slane %v21, %v29
  %v33 = vsub.f32 %v19, %v26
  %v34 = vsub.f32 %v20, %v30
  %v35 = vld [vmem:[%s1] sm:$0x3]
  %v37 = vlaneseq
  %v38 = vshrl.u32 %v37, 7
  %v39 = vsub.s32 0, %v38
  %v40 = vrot.slane %v35, %v39
  %v41 = vlaneseq
  %v42 = vshrl.u32 %v41, 7
  %v43 = vsub.s32 1, %v42
  %v44 = vrot.slane %v35, %v43
  %v47 = vmul.f32 %v33, %v40
  %v48 = vmul.f32 %v34, %v44
  %vm49 = vcmp.gt.f32.partialorder %v47, 0.0
  %vm50 = vcmp.gt.f32.partialorder %v48, 0.0
  %v51 = vmul.f32 %v47, 0.2
  %v52 = vmul.f32 %v48, 0.2
  %v53 = vsel %vm49, %v47, %v51
  %v54 = vsel %vm50, %v48, %v52
  %v55 = vpack.c.bf16 %v53, %v53
  %v56 = vpack.c.bf16 %v54, %v54
  %v57 = vld [vmem:[%s3] sm:$0xf]
  %v58 = vld [vmem:[%s3 + $0x4] sm:$0xf]
  %v59 = vld [vmem:[%s3 + $0x8] sm:$0xf]
  %v60 = vld [vmem:[%s3 + $0xc] sm:$0xf]
  %v61 = vld [vmem:[%s3 + $0x10] sm:$0xf]
  %v62 = vld [vmem:[%s3 + $0x14] sm:$0xf]
  %v63 = vld [vmem:[%s3 + $0x18] sm:$0xf]
  %v64 = vld [vmem:[%s3 + $0x1c] sm:$0xf]
  %v65 = vld [vmem:[%s3 + $0x20] sm:$0xf]
  %v66 = vld [vmem:[%s3 + $0x24] sm:$0xf]
  %v67 = vld [vmem:[%s3 + $0x28] sm:$0xf]
  %v68 = vld [vmem:[%s3 + $0x2c] sm:$0xf]
  %v69 = vld [vmem:[%s3 + $0x30] sm:$0xf]
  %v70 = vld [vmem:[%s3 + $0x34] sm:$0xf]
  %v71 = vld [vmem:[%s3 + $0x38] sm:$0xf]
  %v72 = vld [vmem:[%s3 + $0x3c] sm:$0xf]
  %v73 = vld [vmem:[%s3 + $0x40] sm:$0xf]
  %v74 = vld [vmem:[%s3 + $0x44] sm:$0xf]
  %v75 = vld [vmem:[%s3 + $0x48] sm:$0xf]
  %v76 = vld [vmem:[%s3 + $0x4c] sm:$0xf]
  %v77 = vld [vmem:[%s3 + $0x50] sm:$0xf]
  %v78 = vld [vmem:[%s3 + $0x54] sm:$0xf]
  %v79 = vld [vmem:[%s3 + $0x58] sm:$0xf]
  %v80 = vld [vmem:[%s3 + $0x5c] sm:$0xf]
  %v81 = vld [vmem:[%s3 + $0x60] sm:$0xf]
  %v82 = vld [vmem:[%s3 + $0x64] sm:$0xf]
  %v83 = vld [vmem:[%s3 + $0x68] sm:$0xf]
  %v84 = vld [vmem:[%s3 + $0x6c] sm:$0xf]
  %v85 = vld [vmem:[%s3 + $0x70] sm:$0xf]
  %v86 = vld [vmem:[%s3 + $0x74] sm:$0xf]
  %v87 = vld [vmem:[%s3 + $0x78] sm:$0xf]
  %v88 = vld [vmem:[%s3 + $0x7c] sm:$0xf]
  %v121 = vunpack.c.l.b16 %v57
  %v122 = vunpack.c.l.b16 %v58
  %v123 = vunpack.c.l.b16 %v59
  %v124 = vunpack.c.l.b16 %v60
  %v125 = vunpack.c.l.b16 %v61
  %v126 = vunpack.c.l.b16 %v62
  %v127 = vunpack.c.l.b16 %v63
  %v128 = vunpack.c.l.b16 %v64
  %v129 = vunpack.c.l.b16 %v65
  %v130 = vunpack.c.l.b16 %v66
  %v131 = vunpack.c.l.b16 %v67
  %v132 = vunpack.c.l.b16 %v68
  %v133 = vunpack.c.l.b16 %v69
  %v134 = vunpack.c.l.b16 %v70
  %v135 = vunpack.c.l.b16 %v71
  %v136 = vunpack.c.l.b16 %v72
  %v137 = vunpack.c.l.b16 %v73
  %v138 = vunpack.c.l.b16 %v74
  %v139 = vunpack.c.l.b16 %v75
  %v140 = vunpack.c.l.b16 %v76
  %v141 = vunpack.c.l.b16 %v77
  %v142 = vunpack.c.l.b16 %v78
  %v143 = vunpack.c.l.b16 %v79
  %v144 = vunpack.c.l.b16 %v80
  %v145 = vunpack.c.l.b16 %v81
  %v146 = vunpack.c.l.b16 %v82
  %v147 = vunpack.c.l.b16 %v83
  %v148 = vunpack.c.l.b16 %v84
  %v149 = vunpack.c.l.b16 %v85
  %v150 = vunpack.c.l.b16 %v86
  %v151 = vunpack.c.l.b16 %v87
  %v152 = vunpack.c.l.b16 %v88
  %v153 = vpack.c.b16 %v122, %v121
  %v154 = vpack.c.b16 %v124, %v123
  %v155 = vpack.c.b16 %v126, %v125
  %v156 = vpack.c.b16 %v128, %v127
  %v157 = vpack.c.b16 %v130, %v129
  %v158 = vpack.c.b16 %v132, %v131
  %v159 = vpack.c.b16 %v134, %v133
  %v160 = vpack.c.b16 %v136, %v135
  %v161 = vpack.c.b16 %v138, %v137
  %v162 = vpack.c.b16 %v140, %v139
  %v163 = vpack.c.b16 %v142, %v141
  %v164 = vpack.c.b16 %v144, %v143
  %v165 = vpack.c.b16 %v146, %v145
  %v166 = vpack.c.b16 %v148, %v147
  %v167 = vpack.c.b16 %v150, %v149
  %v168 = vpack.c.b16 %v152, %v151
  %185 = vmatprep.subr.bf16.mxu0 0
  %186 = vmatpush1.bf16.msra.mxu0 %v160
  %187 = vmatprep.subr.bf16.mxu0 0
  %188 = vmatpush1.bf16.msra.mxu0 %v159
  %189 = vmatprep.subr.bf16.mxu0 0
  %190 = vmatpush1.bf16.msra.mxu0 %v158
  %191 = vmatprep.subr.bf16.mxu0 0
  %192 = vmatpush1.bf16.msra.mxu0 %v157
  %193 = vmatprep.subr.bf16.mxu0 0
  %194 = vmatpush1.bf16.msra.mxu0 %v156
  %195 = vmatprep.subr.bf16.mxu0 0
  %196 = vmatpush1.bf16.msra.mxu0 %v155
  %197 = vmatprep.subr.bf16.mxu0 0
  %198 = vmatpush1.bf16.msra.mxu0 %v154
  %199 = vmatprep.subr.bf16.mxu0 0
  %200 = vmatpush1.bf16.msra.mxu0 %v153
  %201 = vmatprep.subr.bf16.mxu0 0
  %202 = vmatpush2.bf16.msra.mxu0 %v168
  %203 = vmatprep.subr.bf16.mxu0 0
  %204 = vmatpush2.bf16.msra.mxu0 %v167
  %205 = vmatprep.subr.bf16.mxu0 0
  %206 = vmatpush2.bf16.msra.mxu0 %v166
  %207 = vmatprep.subr.bf16.mxu0 0
  %208 = vmatpush2.bf16.msra.mxu0 %v165
  %209 = vmatprep.subr.bf16.mxu0 0
  %210 = vmatpush2.bf16.msra.mxu0 %v164
  %211 = vmatprep.subr.bf16.mxu0 0
  %212 = vmatpush2.bf16.msra.mxu0 %v163
  %213 = vmatprep.subr.bf16.mxu0 0
  %214 = vmatpush2.bf16.msra.mxu0 %v162
  %215 = vmatprep.subr.bf16.mxu0 0
  %216 = vmatpush2.bf16.msra.mxu0 %v161
  %217 = vmatprep.mubr.bf16.mxu0 %v56
  %218 = vmatmul.mubr.bf16.gmra.mxu0 %v55
  %v219 = vpop.f32.mrf.mxu0
  %v220 = vadd.f32 0.0, %v219
  %v221 = vpop.f32.mrf.mxu0
  %v222 = vpop.f32.mrf.mxu0
  %v223 = vpop.f32.mrf.mxu0
  %224 = vdwg.mxu0
  %225 = vst [vmem:[%s4] sm:$0xff] %v220
  // Predicated region
  $region18: #{netd_patch_forward.11} parent=0 // pred_check
    _
  $region19: #{netd_patch_forward.11} parent=0 // pred_check_branch
    %227 = sbr.rel (0) target = $region21
  $region20: #{netd_patch_forward.11} parent=0 // pred_region
    _
  $region21: #{netd_patch_forward.11} parent=0 // pred_fallthru
    _
  // Predicated region
  $region22: #{netd_patch_forward.11} parent=0 // pred_check
    _
  $region23: #{netd_patch_forward.11} parent=0 // pred_check_branch
    %229 = sbr.rel (0) target = $region25
  $region24: #{netd_patch_forward.11} parent=0 // pred_region
    _
  $region25: #{netd_patch_forward.11} parent=0 // pred_fallthru
    _

// kernel: netd_patch_forward.8
$region0: #{netd_patch_forward.8}
  #allocation0 [shape = 'u32[]', space=smem, size = 0x4, offset = 0x4, fixed_abs, tag = 'smem constant byte address 0x4 - core index']
  #allocation1 [shape = 'u32[144,128]{1,0:T(1,128)}', space=vmem, size = 0x12000, scoped, tag = 'internal scratch']
  %s0 = inlined_call_operand.vmem [shape: f32[1,1024], index: 0, kind: input, shape index: {}]
  %s1 = inlined_call_operand.vmem [shape: f32[1,1024], index: 1, kind: input, shape index: {}]
  %s2 = inlined_call_operand.vmem [shape: bf16[8,1024], index: 2, kind: input, shape index: {}]
  %s3 = inlined_call_operand.vmem [shape: bf16[1024,512], index: 3, kind: input, shape index: {}]
  %s4 = inlined_call_operand.vmem [shape: bf16[8,512], index: 4, kind: output, shape index: {0}]
  %s5 = inlined_call_operand.vmem [shape: f32[1,2,512], index: 5, kind: output, shape index: {1}]
  %6 = xla_tuple %s4, %s5
  %s7 = sld [smem:[#allocation0]]
  $region34: #{netd_patch_forward.8} parent=0
    _
  %s9 = ssub.s32 1, %s7
  %s10 = scalar_select 0, %s9, %s7
  // Predicated region
  $region2: #{netd_patch_forward.8} parent=0 // pred_check
    _
  $region3: #{netd_patch_forward.8} parent=0 // pred_check_branch
    %12 = sbr.rel (0) target = $region5
  $region4: #{netd_patch_forward.8} parent=0 // pred_region
    _
  $region5: #{netd_patch_forward.8} parent=0 // pred_fallthru
    _
  // Predicated region
  $region6: #{netd_patch_forward.8} parent=0 // pred_check
    _
  $region7: #{netd_patch_forward.8} parent=0 // pred_check_branch
    %14 = sbr.rel (0) target = $region9
  $region8: #{netd_patch_forward.8} parent=0 // pred_region
    _
  $region9: #{netd_patch_forward.8} parent=0 // pred_fallthru
    _
  // Predicated region
  $region10: #{netd_patch_forward.8} parent=0 // pred_check
    _
  $region11: #{netd_patch_forward.8} parent=0 // pred_check_branch
    %16 = sbr.rel (0) target = $region13
  $region12: #{netd_patch_forward.8} parent=0 // pred_region
    _
  $region13: #{netd_patch_forward.8} parent=0 // pred_fallthru
    _
  // Predicated region
  $region14: #{netd_patch_forward.8} parent=0 // pred_check
    _
  $region15: #{netd_patch_forward.8} parent=0 // pred_check_branch
    %18 = sbr.rel (0) target = $region17
  $region16: #{netd_patch_forward.8} parent=0 // pred_region
    _
  $region17: #{netd_patch_forward.8} parent=0 // pred_fallthru
    _
  %v19 = vld [vmem:[%s2] sm:$0xff]
  %v20 = vld [vmem:[%s2 + $0x8] sm:$0xff]
  %v21 = vld [vmem:[%s2 + $0x10] sm:$0xff]
  %v22 = vld [vmem:[%s2 + $0x18] sm:$0xff]
  %v23 = vunpack.c.l.bf16 %v19
  %v24 = vunpack.c.h.bf16 %v19
  %v25 = vunpack.c.l.bf16 %v20
  %v26 = vunpack.c.h.bf16 %v20
  %v27 = vunpack.c.l.bf16 %v21
  %v28 = vunpack.c.h.bf16 %v21
  %v29 = vunpack.c.l.bf16 %v22
  %v30 = vunpack.c.h.bf16 %v22
  %v31 = vld [vmem:[%s0] sm:$0xff]
  %v33 = vlaneseq
  %v34 = vshrl.u32 %v33, 7
  %v35 = vsub.s32 0, %v34
  %v36 = vrot.slane %v31, %v35
  %v37 = vlaneseq
  %v38 = vshrl.u32 %v37, 7
  %v39 = vsub.s32 1, %v38
  %v40 = vrot.slane %v31, %v39
  %v41 = vlaneseq
  %v42 = vshrl.u32 %v41, 7
  %v43 = vsub.s32 2, %v42
  %v44 = vrot.slane %v31, %v43
  %v45 = vlaneseq
  %v46 = vshrl.u32 %v45, 7
  %v47 = vsub.s32 3, %v46
  %v48 = vrot.slane %v31, %v47
  %v49 = vlaneseq
  %v50 = vshrl.u32 %v49, 7
  %v51 = vsub.s32 4, %v50
  %v52 = vrot.slane %v31, %v51
  %v53 = vlaneseq
  %v54 = vshrl.u32 %v53, 7
  %v55 = vsub.s32 5, %v54
  %v56 = vrot.slane %v31, %v55
  %v57 = vlaneseq
  %v58 = vshrl.u32 %v57, 7
  %v59 = vsub.s32 6, %v58
  %v60 = vrot.slane %v31, %v59
  %v61 = vlaneseq
  %v62 = vshrl.u32 %v61, 7
  %v63 = vsub.s32 7, %v62
  %v64 = vrot.slane %v31, %v63
  %v73 = vsub.f32 %v23, %v36
  %v74 = vsub.f32 %v24, %v40
  %v75 = vsub.f32 %v25, %v44
  %v76 = vsub.f32 %v26, %v48
  %v77 = vsub.f32 %v27, %v52
  %v78 = vsub.f32 %v28, %v56
  %v79 = vsub.f32 %v29, %v60
  %v80 = vsub.f32 %v30, %v64
  %v81 = vld [vmem:[%s1] sm:$0xff]
  %v83 = vlaneseq
  %v84 = vshrl.u32 %v83, 7
  %v85 = vsub.s32 0, %v84
  %v86 = vrot.slane %v81, %v85
  %v87 = vlaneseq
  %v88 = vshrl.u32 %v87, 7
  %v89 = vsub.s32 1, %v88
  %v90 = vrot.slane %v81, %v89
  %v91 = vlaneseq
  %v92 = vshrl.u32 %v91, 7
  %v93 = vsub.s32 2, %v92
  %v94 = vrot.slane %v81, %v93
  %v95 = vlaneseq
  %v96 = vshrl.u32 %v95, 7
  %v97 = vsub.s32 3, %v96
  %v98 = vrot.slane %v81, %v97
  %v99 = vlaneseq
  %v100 = vshrl.u32 %v99, 7
  %v101 = vsub.s32 4, %v100
  %v102 = vrot.slane %v81, %v101
  %v103 = vlaneseq
  %v104 = vshrl.u32 %v103, 7
  %v105 = vsub.s32 5, %v104
  %v106 = vrot.slane %v81, %v105
  %v107 = vlaneseq
  %v108 = vshrl.u32 %v107, 7
  %v109 = vsub.s32 6, %v108
  %v110 = vrot.slane %v81, %v109
  %v111 = vlaneseq
  %v112 = vshrl.u32 %v111, 7
  %v113 = vsub.s32 7, %v112
  %v114 = vrot.slane %v81, %v113
  %v123 = vmul.f32 %v73, %v86
  %v124 = vmul.f32 %v74, %v90
  %v125 = vmul.f32 %v75, %v94
  %v126 = vmul.f32 %v76, %v98
  %v127 = vmul.f32 %v77, %v102
  %v128 = vmul.f32 %v78, %v106
  %v129 = vmul.f32 %v79, %v110
  %v130 = vmul.f32 %v80, %v114
  %vm131 = vcmp.gt.f32.partialorder %v123, 0.0
  %vm132 = vcmp.gt.f32.partialorder %v124, 0.0
  %vm133 = vcmp.gt.f32.partialorder %v125, 0.0
  %vm134 = vcmp.gt.f32.partialorder %v126, 0.0
  %vm135 = vcmp.gt.f32.partialorder %v127, 0.0
  %vm136 = vcmp.gt.f32.partialorder %v128, 0.0
  %vm137 = vcmp.gt.f32.partialorder %v129, 0.0
  %vm138 = vcmp.gt.f32.partialorder %v130, 0.0
  %v139 = vmul.f32 %v123, 0.2
  %v140 = vmul.f32 %v124, 0.2
  %v141 = vmul.f32 %v125, 0.2
  %v142 = vmul.f32 %v126, 0.2
  %v143 = vmul.f32 %v127, 0.2
  %v144 = vmul.f32 %v128, 0.2
  %v145 = vmul.f32 %v129, 0.2
  %v146 = vmul.f32 %v130, 0.2
  %v147 = vsel %vm131, %v123, %v139
  %v148 = vsel %vm132, %v124, %v140
  %v149 = vsel %vm133, %v125, %v141
  %v150 = vsel %vm134, %v126, %v142
  %v151 = vsel %vm135, %v127, %v143
  %v152 = vsel %vm136, %v128, %v144
  %v153 = vsel %vm137, %v129, %v145
  %v154 = vsel %vm138, %v130, %v146
  %v155 = vpack.c.bf16 %v147, %v147
  %v156 = vpack.c.bf16 %v148, %v148
  %v157 = vpack.c.bf16 %v149, %v149
  %v158 = vpack.c.bf16 %v150, %v150
  %v159 = vpack.c.bf16 %v151, %v151
  %v160 = vpack.c.bf16 %v152, %v152
  %v161 = vpack.c.bf16 %v153, %v153
  %v162 = vpack.c.bf16 %v154, %v154
  %v163 = vld [vmem:[%s3] sm:$0xff]
  %v164 = vld [vmem:[%s3 + $0x8] sm:$0xff]
  %v165 = vld [vmem:[%s3 + $0x10] sm:$0xff]
  %v166 = vld [vmem:[%s3 + $0x18] sm:$0xff]
  %v167 = vld [vmem:[%s3 + $0x20] sm:$0xff]
  %v168 = vld [vmem:[%s3 + $0x28] sm:$0xff]
  %v169 = vld [vmem:[%s3 + $0x30] sm:$0xff]
  %v170 = vld [vmem:[%s3 + $0x38] sm:$0xff]
  %v171 = vld [vmem:[%s3 + $0x40] sm:$0xff]
  %v172 = vld [vmem:[%s3 + $0x48] sm:$0xff]
  %v173 = vld [vmem:[%s3 + $0x50] sm:$0xff]
  %v174 = vld [vmem:[%s3 + $0x58] sm:$0xff]
  %v175 = vld [vmem:[%s3 + $0x60] sm:$0xff]
  %v176 = vld [vmem:[%s3 + $0x68] sm:$0xff]
  %v177 = vld [vmem:[%s3 + $0x70] sm:$0xff]
  %v178 = vld [vmem:[%s3 + $0x78] sm:$0xff]
  %v179 = vld [vmem:[%s3 + $0x80] sm:$0xff]
  %v180 = vld [vmem:[%s3 + $0x88] sm:$0xff]
  %v181 = vld [vmem:[%s3 + $0x90] sm:$0xff]
  %v182 = vld [vmem:[%s3 + $0x98] sm:$0xff]
  %v183 = vld [vmem:[%s3 + $0xa0] sm:$0xff]
  %v184 = vld [vmem:[%s3 + $0xa8] sm:$0xff]
  %v185 = vld [vmem:[%s3 + $0xb0] sm:$0xff]
  %v186 = vld [vmem:[%s3 + $0xb8] sm:$0xff]
  %v187 = vld [vmem:[%s3 + $0xc0] sm:$0xff]
  %v188 = vld [vmem:[%s3 + $0xc8] sm:$0xff]
  %v189 = vld [vmem:[%s3 + $0xd0] sm:$0xff]
  %v190 = vld [vmem:[%s3 + $0xd8] sm:$0xff]
  %v191 = vld [vmem:[%s3 + $0xe0] sm:$0xff]
  %v192 = vld [vmem:[%s3 + $0xe8] sm:$0xff]
  %v193 = vld [vmem:[%s3 + $0xf0] sm:$0xff]
  %v194 = vld [vmem:[%s3 + $0xf8] sm:$0xff]
  %v195 = vld [vmem:[%s3 + $0x100] sm:$0xff]
  %v196 = vld [vmem:[%s3 + $0x108] sm:$0xff]
  %v197 = vld [vmem:[%s3 + $0x110] sm:$0xff]
  %v198 = vld [vmem:[%s3 + $0x118] sm:$0xff]
  %v199 = vld [vmem:[%s3 + $0x120] sm:$0xff]
  %v200 = vld [vmem:[%s3 + $0x128] sm:$0xff]
  %v201 = vld [vmem:[%s3 + $0x130] sm:$0xff]
  %v202 = vld [vmem:[%s3 + $0x138] sm:$0xff]
  %v203 = vld [vmem:[%s3 + $0x140] sm:$0xff]
  %v204 = vld [vmem:[%s3 + $0x148] sm:$0xff]
  %v205 = vld [vmem:[%s3 + $0x150] sm:$0xff]
  %v206 = vld [vmem:[%s3 + $0x158] sm:$0xff]
  %v207 = vld [vmem:[%s3 + $0x160] sm:$0xff]
  %v208 = vld [vmem:[%s3 + $0x168] sm:$0xff]
  %v209 = vld [vmem:[%s3 + $0x170] sm:$0xff]
  %v210 = vld [vmem:[%s3 + $0x178] sm:$0xff]
  %v211 = vld [vmem:[%s3 + $0x180] sm:$0xff]
  %v212 = vld [vmem:[%s3 + $0x188] sm:$0xff]
  %v213 = vld [vmem:[%s3 + $0x190] sm:$0xff]
  %v214 = vld [vmem:[%s3 + $0x198] sm:$0xff]
  %v215 = vld [vmem:[%s3 + $0x1a0] sm:$0xff]
  %v216 = vld [vmem:[%s3 + $0x1a8] sm:$0xff]
  %v217 = vld [vmem:[%s3 + $0x1b0] sm:$0xff]
  %v218 = vld [vmem:[%s3 + $0x1b8] sm:$0xff]
  %v219 = vld [vmem:[%s3 + $0x1c0] sm:$0xff]
  %v220 = vld [vmem:[%s3 + $0x1c8] sm:$0xff]
  %v221 = vld [vmem:[%s3 + $0x1d0] sm:$0xff]
  %v222 = vld [vmem:[%s3 + $0x1d8] sm:$0xff]
  %v223 = vld [vmem:[%s3 + $0x1e0] sm:$0xff]
  %v224 = vld [vmem:[%s3 + $0x1e8] sm:$0xff]
  %v225 = vld [vmem:[%s3 + $0x1f0] sm:$0xff]
  %v226 = vld [vmem:[%s3 + $0x1f8] sm:$0xff]
  %v227 = vld [vmem:[%s3 + $0x200] sm:$0xff]
  %v228 = vld [vmem:[%s3 + $0x208] sm:$0xff]
  %v229 = vld [vmem:[%s3 + $0x210] sm:$0xff]
  %v230 = vld [vmem:[%s3 + $0x218] sm:$0xff]
  %v231 = vld [vmem:[%s3 + $0x220] sm:$0xff]
  %v232 = vld [vmem:[%s3 + $0x228] sm:$0xff]
  %v233 = vld [vmem:[%s3 + $0x230] sm:$0xff]
  %v234 = vld [vmem:[%s3 + $0x238] sm:$0xff]
  %v235 = vld [vmem:[%s3 + $0x240] sm:$0xff]
  %v236 = vld [vmem:[%s3 + $0x248] sm:$0xff]
  %v237 = vld [vmem:[%s3 + $0x250] sm:$0xff]
  %v238 = vld [vmem:[%s3 + $0x258] sm:$0xff]
  %v239 = vld [vmem:[%s3 + $0x260] sm:$0xff]
  %v240 = vld [vmem:[%s3 + $0x268] sm:$0xff]
  %v241 = vld [vmem:[%s3 + $0x270] sm:$0xff]
  %v242 = vld [vmem:[%s3 + $0x278] sm:$0xff]
  %v243 = vld [vmem:[%s3 + $0x280] sm:$0xff]
  %v244 = vld [vmem:[%s3 + $0x288] sm:$0xff]
  %v245 = vld [vmem:[%s3 + $0x290] sm:$0xff]
  %v246 = vld [vmem:[%s3 + $0x298] sm:$0xff]
  %v247 = vld [vmem:[%s3 + $0x2a0] sm:$0xff]
  %v248 = vld [vmem:[%s3 + $0x2a8] sm:$0xff]
  %v249 = vld [vmem:[%s3 + $0x2b0] sm:$0xff]
  %v250 = vld [vmem:[%s3 + $0x2b8] sm:$0xff]
  %v251 = vld [vmem:[%s3 + $0x2c0] sm:$0xff]
  %v252 = vld [vmem:[%s3 + $0x2c8] sm:$0xff]
  %v253 = vld [vmem:[%s3 + $0x2d0] sm:$0xff]
  %v254 = vld [vmem:[%s3 + $0x2d8] sm:$0xff]
  %v255 = vld [vmem:[%s3 + $0x2e0] sm:$0xff]
  %v256 = vld [vmem:[%s3 + $0x2e8] sm:$0xff]
  %v257 = vld [vmem:[%s3 + $0x2f0] sm:$0xff]
  %v258 = vld [vmem:[%s3 + $0x2f8] sm:$0xff]
  %v259 = vld [vmem:[%s3 + $0x300] sm:$0xff]
  %v260 = vld [vmem:[%s3 + $0x308] sm:$0xff]
  %v261 = vld [vmem:[%s3 + $0x310] sm:$0xff]
  %v262 = vld [vmem:[%s3 + $0x318] sm:$0xff]
  %v263 = vld [vmem:[%s3 + $0x320] sm:$0xff]
  %v264 = vld [vmem:[%s3 + $0x328] sm:$0xff]
  %v265 = vld [vmem:[%s3 + $0x330] sm:$0xff]
  %v266 = vld [vmem:[%s3 + $0x338] sm:$0xff]
  %v267 = vld [vmem:[%s3 + $0x340] sm:$0xff]
  %v268 = vld [vmem:[%s3 + $0x348] sm:$0xff]
  %v269 = vld [vmem:[%s3 + $0x350] sm:$0xff]
  %v270 = vld [vmem:[%s3 + $0x358] sm:$0xff]
  %v271 = vld [vmem:[%s3 + $0x360] sm:$0xff]
  %v272 = vld [vmem:[%s3 + $0x368] sm:$0xff]
  %v273 = vld [vmem:[%s3 + $0x370] sm:$0xff]
  %v274 = vld [vmem:[%s3 + $0x378] sm:$0xff]
  %v275 = vld [vmem:[%s3 + $0x380] sm:$0xff]
  %v276 = vld [vmem:[%s3 + $0x388] sm:$0xff]
  %v277 = vld [vmem:[%s3 + $0x390] sm:$0xff]
  %v278 = vld [vmem:[%s3 + $0x398] sm:$0xff]
  %v279 = vld [vmem:[%s3 + $0x3a0] sm:$0xff]
  %v280 = vld [vmem:[%s3 + $0x3a8] sm:$0xff]
  %v281 = vld [vmem:[%s3 + $0x3b0] sm:$0xff]
  %v282 = vld [vmem:[%s3 + $0x3b8] sm:$0xff]
  %v283 = vld [vmem:[%s3 + $0x3c0] sm:$0xff]
  %v284 = vld [vmem:[%s3 + $0x3c8] sm:$0xff]
  %v285 = vld [vmem:[%s3 + $0x3d0] sm:$0xff]
  %v286 = vld [vmem:[%s3 + $0x3d8] sm:$0xff]
  %v287 = vld [vmem:[%s3 + $0x3e0] sm:$0xff]
  %v288 = vld [vmem:[%s3 + $0x3e8] sm:$0xff]
  %v289 = vld [vmem:[%s3 + $0x3f0] sm:$0xff]
  %v290 = vld [vmem:[%s3 + $0x3f8] sm:$0xff]
  %v291 = vld [vmem:[%s3 + $0x400] sm:$0xff]
  %v292 = vld [vmem:[%s3 + $0x408] sm:$0xff]
  %v293 = vld [vmem:[%s3 + $0x410] sm:$0xff]
  %v294 = vld [vmem:[%s3 + $0x418] sm:$0xff]
  %v295 = vld [vmem:[%s3 + $0x420] sm:$0xff]
  %v296 = vld [vmem:[%s3 + $0x428] sm:$0xff]
  %v297 = vld [vmem:[%s3 + $0x430] sm:$0xff]
  %v298 = vld [vmem:[%s3 + $0x438] sm:$0xff]
  %v299 = vld [vmem:[%s3 + $0x440] sm:$0xff]
  %v300 = vld [vmem:[%s3 + $0x448] sm:$0xff]
  %v301 = vld [vmem:[%s3 + $0x450] sm:$0xff]
  %v302 = vld [vmem:[%s3 + $0x458] sm:$0xff]
  %v303 = vld [vmem:[%s3 + $0x460] sm:$0xff]
  %v304 = vld [vmem:[%s3 + $0x468] sm:$0xff]
  %v305 = vld [vmem:[%s3 + $0x470] sm:$0xff]
  %v306 = vld [vmem:[%s3 + $0x478] sm:$0xff]
  %v307 = vld [vmem:[%s3 + $0x480] sm:$0xff]
  %v308 = vld [vmem:[%s3 + $0x488] sm:$0xff]
  %v309 = vld [vmem:[%s3 + $0x490] sm:$0xff]
  %v310 = vld [vmem:[%s3 + $0x498] sm:$0xff]
  %v311 = vld [vmem:[%s3 + $0x4a0] sm:$0xff]
  %v312 = vld [vmem:[%s3 + $0x4a8] sm:$0xff]
  %v313 = vld [vmem:[%s3 + $0x4b0] sm:$0xff]
  %v314 = vld [vmem:[%s3 + $0x4b8] sm:$0xff]
  %v315 = vld [vmem:[%s3 + $0x4c0] sm:$0xff]
  %v316 = vld [vmem:[%s3 + $0x4c8] sm:$0xff]
  %v317 = vld [vmem:[%s3 + $0x4d0] sm:$0xff]
  %v318 = vld [vmem:[%s3 + $0x4d8] sm:$0xff]
  %v319 = vld [vmem:[%s3 + $0x4e0] sm:$0xff]
  %v320 = vld [vmem:[%s3 + $0x4e8] sm:$0xff]
  %v321 = vld [vmem:[%s3 + $0x4f0] sm:$0xff]
  %v322 = vld [vmem:[%s3 + $0x4f8] sm:$0xff]
  %v323 = vld [vmem:[%s3 + $0x500] sm:$0xff]
  %v324 = vld [vmem:[%s3 + $0x508] sm:$0xff]
  %v325 = vld [vmem:[%s3 + $0x510] sm:$0xff]
  %v326 = vld [vmem:[%s3 + $0x518] sm:$0xff]
  %v327 = vld [vmem:[%s3 + $0x520] sm:$0xff]
  %v328 = vld [vmem:[%s3 + $0x528] sm:$0xff]
  %v329 = vld [vmem:[%s3 + $0x530] sm:$0xff]
  %v330 = vld [vmem:[%s3 + $0x538] sm:$0xff]
  %v331 = vld [vmem:[%s3 + $0x540] sm:$0xff]
  %v332 = vld [vmem:[%s3 + $0x548] sm:$0xff]
  %v333 = vld [vmem:[%s3 + $0x550] sm:$0xff]
  %v334 = vld [vmem:[%s3 + $0x558] sm:$0xff]
  %v335 = vld [vmem:[%s3 + $0x560] sm:$0xff]
  %v336 = vld [vmem:[%s3 + $0x568] sm:$0xff]
  %v337 = vld [vmem:[%s3 + $0x570] sm:$0xff]
  %v338 = vld [vmem:[%s3 + $0x578] sm:$0xff]
  %v339 = vld [vmem:[%s3 + $0x580] sm:$0xff]
  %v340 = vld [vmem:[%s3 + $0x588] sm:$0xff]
  %v341 = vld [vmem:[%s3 + $0x590] sm:$0xff]
  %v342 = vld [vmem:[%s3 + $0x598] sm:$0xff]
  %v343 = vld [vmem:[%s3 + $0x5a0] sm:$0xff]
  %v344 = vld [vmem:[%s3 + $0x5a8] sm:$0xff]
  %v345 = vld [vmem:[%s3 + $0x5b0] sm:$0xff]
  %v346 = vld [vmem:[%s3 + $0x5b8] sm:$0xff]
  %v347 = vld [vmem:[%s3 + $0x5c0] sm:$0xff]
  %v348 = vld [vmem:[%s3 + $0x5c8] sm:$0xff]
  %v349 = vld [vmem:[%s3 + $0x5d0] sm:$0xff]
  %v350 = vld [vmem:[%s3 + $0x5d8] sm:$0xff]
  %v351 = vld [vmem:[%s3 + $0x5e0] sm:$0xff]
  %v352 = vld [vmem:[%s3 + $0x5e8] sm:$0xff]
  %v353 = vld [vmem:[%s3 + $0x5f0] sm:$0xff]
  %v354 = vld [vmem:[%s3 + $0x5f8] sm:$0xff]
  %v355 = vld [vmem:[%s3 + $0x600] sm:$0xff]
  %v356 = vld [vmem:[%s3 + $0x608] sm:$0xff]
  %v357 = vld [vmem:[%s3 + $0x610] sm:$0xff]
  %v358 = vld [vmem:[%s3 + $0x618] sm:$0xff]
  %v359 = vld [vmem:[%s3 + $0x620] sm:$0xff]
  %v360 = vld [vmem:[%s3 + $0x628] sm:$0xff]
  %v361 = vld [vmem:[%s3 + $0x630] sm:$0xff]
  %v362 = vld [vmem:[%s3 + $0x638] sm:$0xff]
  %v363 = vld [vmem:[%s3 + $0x640] sm:$0xff]
  %v364 = vld [vmem:[%s3 + $0x648] sm:$0xff]
  %v365 = vld [vmem:[%s3 + $0x650] sm:$0xff]
  %v366 = vld [vmem:[%s3 + $0x658] sm:$0xff]
  %v367 = vld [vmem:[%s3 + $0x660] sm:$0xff]
  %v368 = vld [vmem:[%s3 + $0x668] sm:$0xff]
  %v369 = vld [vmem:[%s3 + $0x670] sm:$0xff]
  %v370 = vld [vmem:[%s3 + $0x678] sm:$0xff]
  %v371 = vld [vmem:[%s3 + $0x680] sm:$0xff]
  %v372 = vld [vmem:[%s3 + $0x688] sm:$0xff]
  %v373 = vld [vmem:[%s3 + $0x690] sm:$0xff]
  %v374 = vld [vmem:[%s3 + $0x698] sm:$0xff]
  %v375 = vld [vmem:[%s3 + $0x6a0] sm:$0xff]
  %v376 = vld [vmem:[%s3 + $0x6a8] sm:$0xff]
  %v377 = vld [vmem:[%s3 + $0x6b0] sm:$0xff]
  %v378 = vld [vmem:[%s3 + $0x6b8] sm:$0xff]
  %v379 = vld [vmem:[%s3 + $0x6c0] sm:$0xff]
  %v380 = vld [vmem:[%s3 + $0x6c8] sm:$0xff]
  %v381 = vld [vmem:[%s3 + $0x6d0] sm:$0xff]
  %v382 = vld [vmem:[%s3 + $0x6d8] sm:$0xff]
  %v383 = vld [vmem:[%s3 + $0x6e0] sm:$0xff]
  %v384 = vld [vmem:[%s3 + $0x6e8] sm:$0xff]
  %v385 = vld [vmem:[%s3 + $0x6f0] sm:$0xff]
  %v386 = vld [vmem:[%s3 + $0x6f8] sm:$0xff]
  %v387 = vld [vmem:[%s3 + $0x700] sm:$0xff]
  %v388 = vld [vmem:[%s3 + $0x708] sm:$0xff]
  %v389 = vld [vmem:[%s3 + $0x710] sm:$0xff]
  %v390 = vld [vmem:[%s3 + $0x718] sm:$0xff]
  %v391 = vld [vmem:[%s3 + $0x720] sm:$0xff]
  %v392 = vld [vmem:[%s3 + $0x728] sm:$0xff]
  %v393 = vld [vmem:[%s3 + $0x730] sm:$0xff]
  %v394 = vld [vmem:[%s3 + $0x738] sm:$0xff]
  %v395 = vld [vmem:[%s3 + $0x740] sm:$0xff]
  %v396 = vld [vmem:[%s3 + $0x748] sm:$0xff]
  %v397 = vld [vmem:[%s3 + $0x750] sm:$0xff]
  %v398 = vld [vmem:[%s3 + $0x758] sm:$0xff]
  %v399 = vld [vmem:[%s3 + $0x760] sm:$0xff]
  %v400 = vld [vmem:[%s3 + $0x768] sm:$0xff]
  %v401 = vld [vmem:[%s3 + $0x770] sm:$0xff]
  %v402 = vld [vmem:[%s3 + $0x778] sm:$0xff]
  %v403 = vld [vmem:[%s3 + $0x780] sm:$0xff]
  %v404 = vld [vmem:[%s3 + $0x788] sm:$0xff]
  %v405 = vld [vmem:[%s3 + $0x790] sm:$0xff]
  %v406 = vld [vmem:[%s3 + $0x798] sm:$0xff]
  %v407 = vld [vmem:[%s3 + $0x7a0] sm:$0xff]
  %v408 = vld [vmem:[%s3 + $0x7a8] sm:$0xff]
  %v409 = vld [vmem:[%s3 + $0x7b0] sm:$0xff]
  %v410 = vld [vmem:[%s3 + $0x7b8] sm:$0xff]
  %v411 = vld [vmem:[%s3 + $0x7c0] sm:$0xff]
  %v412 = vld [vmem:[%s3 + $0x7c8] sm:$0xff]
  %v413 = vld [vmem:[%s3 + $0x7d0] sm:$0xff]
  %v414 = vld [vmem:[%s3 + $0x7d8] sm:$0xff]
  %v415 = vld [vmem:[%s3 + $0x7e0] sm:$0xff]
  %v416 = vld [vmem:[%s3 + $0x7e8] sm:$0xff]
  %v417 = vld [vmem:[%s3 + $0x7f0] sm:$0xff]
  %v418 = vld [vmem:[%s3 + $0x7f8] sm:$0xff]
  %v675 = vunpack.c.l.b16 %v163
  %v676 = vunpack.c.h.b16 %v163
  %v677 = vunpack.c.l.b16 %v164
  %v678 = vunpack.c.h.b16 %v164
  %v679 = vunpack.c.l.b16 %v165
  %v680 = vunpack.c.h.b16 %v165
  %v681 = vunpack.c.l.b16 %v166
  %v682 = vunpack.c.h.b16 %v166
  %v683 = vunpack.c.l.b16 %v167
  %v684 = vunpack.c.h.b16 %v167
  %v685 = vunpack.c.l.b16 %v168
  %v686 = vunpack.c.h.b16 %v168
  %v687 = vunpack.c.l.b16 %v169
  %v688 = vunpack.c.h.b16 %v169
  %v689 = vunpack.c.l.b16 %v170
  %v690 = vunpack.c.h.b16 %v170
  %v691 = vunpack.c.l.b16 %v171
  %v692 = vunpack.c.h.b16 %v171
  %v693 = vunpack.c.l.b16 %v172
  %v694 = vunpack.c.h.b16 %v172
  %v695 = vunpack.c.l.b16 %v173
  %v696 = vunpack.c.h.b16 %v173
  %v697 = vunpack.c.l.b16 %v174
  %v698 = vunpack.c.h.b16 %v174
  %v699 = vunpack.c.l.b16 %v175
  %v700 = vunpack.c.h.b16 %v175
  %v701 = vunpack.c.l.b16 %v176
  %v702 = vunpack.c.h.b16 %v176
  %v703 = vunpack.c.l.b16 %v177
  %v704 = vunpack.c.h.b16 %v177
  %v705 = vunpack.c.l.b16 %v178
  %v706 = vunpack.c.h.b16 %v178
  %v707 = vunpack.c.l.b16 %v179
  %v708 = vunpack.c.h.b16 %v179
  %v709 = vunpack.c.l.b16 %v180
  %v710 = vunpack.c.h.b16 %v180
  %v711 = vunpack.c.l.b16 %v181
  %v712 = vunpack.c.h.b16 %v181
  %v713 = vunpack.c.l.b16 %v182
  %v714 = vunpack.c.h.b16 %v182
  %v715 = vunpack.c.l.b16 %v183
  %v716 = vunpack.c.h.b16 %v183
  %v717 = vunpack.c.l.b16 %v184
  %v718 = vunpack.c.h.b16 %v184
  %v719 = vunpack.c.l.b16 %v185
  %v720 = vunpack.c.h.b16 %v185
  %v721 = vunpack.c.l.b16 %v186
  %v722 = vunpack.c.h.b16 %v186
  %v723 = vunpack.c.l.b16 %v187
  %v724 = vunpack.c.h.b16 %v187
  %v725 = vunpack.c.l.b16 %v188
  %v726 = vunpack.c.h.b16 %v188
  %v727 = vunpack.c.l.b16 %v189
  %v728 = vunpack.c.h.b16 %v189
  %v729 = vunpack.c.l.b16 %v190
  %v730 = vunpack.c.h.b16 %v190
  %v731 = vunpack.c.l.b16 %v191
  %v732 = vunpack.c.h.b16 %v191
  %v733 = vunpack.c.l.b16 %v192
  %v734 = vunpack.c.h.b16 %v192
  %v735 = vunpack.c.l.b16 %v193
  %v736 = vunpack.c.h.b16 %v193
  %v737 = vunpack.c.l.b16 %v194
  %v738 = vunpack.c.h.b16 %v194
  %v739 = vunpack.c.l.b16 %v195
  %v740 = vunpack.c.h.b16 %v195
  %v741 = vunpack.c.l.b16 %v196
  %v742 = vunpack.c.h.b16 %v196
  %v743 = vunpack.c.l.b16 %v197
  %v744 = vunpack.c.h.b16 %v197
  %v745 = vunpack.c.l.b16 %v198
  %v746 = vunpack.c.h.b16 %v198
  %v747 = vunpack.c.l.b16 %v199
  %v748 = vunpack.c.h.b16 %v199
  %v749 = vunpack.c.l.b16 %v200
  %v750 = vunpack.c.h.b16 %v200
  %v751 = vunpack.c.l.b16 %v201
  %v752 = vunpack.c.h.b16 %v201
  %v753 = vunpack.c.l.b16 %v202
  %v754 = vunpack.c.h.b16 %v202
  %v755 = vunpack.c.l.b16 %v203
  %v756 = vunpack.c.h.b16 %v203
  %v757 = vunpack.c.l.b16 %v204
  %v758 = vunpack.c.h.b16 %v204
  %v759 = vunpack.c.l.b16 %v205
  %v760 = vunpack.c.h.b16 %v205
  %v761 = vunpack.c.l.b16 %v206
  %v762 = vunpack.c.h.b16 %v206
  %v763 = vunpack.c.l.b16 %v207
  %v764 = vunpack.c.h.b16 %v207
  %v765 = vunpack.c.l.b16 %v208
  %v766 = vunpack.c.h.b16 %v208
  %v767 = vunpack.c.l.b16 %v209
  %v768 = vunpack.c.h.b16 %v209
  %v769 = vunpack.c.l.b16 %v210
  %v770 = vunpack.c.h.b16 %v210
  %v771 = vunpack.c.l.b16 %v211
  %v772 = vunpack.c.h.b16 %v211
  %v773 = vunpack.c.l.b16 %v212
  %v774 = vunpack.c.h.b16 %v212
  %v775 = vunpack.c.l.b16 %v213
  %v776 = vunpack.c.h.b16 %v213
  %v777 = vunpack.c.l.b16 %v214
  %v778 = vunpack.c.h.b16 %v214
  %v779 = vunpack.c.l.b16 %v215
  %v780 = vunpack.c.h.b16 %v215
  %v781 = vunpack.c.l.b16 %v216
  %v782 = vunpack.c.h.b16 %v216
  %v783 = vunpack.c.l.b16 %v217
  %v784 = vunpack.c.h.b16 %v217
  %v785 = vunpack.c.l.b16 %v218
  %v786 = vunpack.c.h.b16 %v218
  %v787 = vunpack.c.l.b16 %v219
  %v788 = vunpack.c.h.b16 %v219
  %v789 = vunpack.c.l.b16 %v220
  %v790 = vunpack.c.h.b16 %v220
  %v791 = vunpack.c.l.b16 %v221
  %v792 = vunpack.c.h.b16 %v221
  %v793 = vunpack.c.l.b16 %v222
  %v794 = vunpack.c.h.b16 %v222
  %v795 = vunpack.c.l.b16 %v223
  %v796 = vunpack.c.h.b16 %v223
  %v797 = vunpack.c.l.b16 %v224
  %v798 = vunpack.c.h.b16 %v224
  %v799 = vunpack.c.l.b16 %v225
  %v800 = vunpack.c.h.b16 %v225
  %v801 = vunpack.c.l.b16 %v226
  %v802 = vunpack.c.h.b16 %v226
  %v803 = vunpack.c.l.b16 %v227
  %v804 = vunpack.c.h.b16 %v227
  %v805 = vunpack.c.l.b16 %v228
  %v806 = vunpack.c.h.b16 %v228
  %v807 = vunpack.c.l.b16 %v229
  %v808 = vunpack.c.h.b16 %v229
  %v809 = vunpack.c.l.b16 %v230
  %v810 = vunpack.c.h.b16 %v230
  %v811 = vunpack.c.l.b16 %v231
  %v812 = vunpack.c.h.b16 %v231
  %v813 = vunpack.c.l.b16 %v232
  %v814 = vunpack.c.h.b16 %v232
  %v815 = vunpack.c.l.b16 %v233
  %v816 = vunpack.c.h.b16 %v233
  %v817 = vunpack.c.l.b16 %v234
  %v818 = vunpack.c.h.b16 %v234
  %v819 = vunpack.c.l.b16 %v235
  %v820 = vunpack.c.h.b16 %v235
  %v821 = vunpack.c.l.b16 %v236
  %v822 = vunpack.c.h.b16 %v236
  %v823 = vunpack.c.l.b16 %v237
  %v824 = vunpack.c.h.b16 %v237
  %v825 = vunpack.c.l.b16 %v238
  %v826 = vunpack.c.h.b16 %v238
  %v827 = vunpack.c.l.b16 %v239
  %v828 = vunpack.c.h.b16 %v239
  %v829 = vunpack.c.l.b16 %v240
  %v830 = vunpack.c.h.b16 %v240
  %v831 = vunpack.c.l.b16 %v241
  %v832 = vunpack.c.h.b16 %v241
  %v833 = vunpack.c.l.b16 %v242
  %v834 = vunpack.c.h.b16 %v242
  %v835 = vunpack.c.l.b16 %v243
  %v836 = vunpack.c.h.b16 %v243
  %v837 = vunpack.c.l.b16 %v244
  %v838 = vunpack.c.h.b16 %v244
  %v839 = vunpack.c.l.b16 %v245
  %v840 = vunpack.c.h.b16 %v245
  %v841 = vunpack.c.l.b16 %v246
  %v842 = vunpack.c.h.b16 %v246
  %v843 = vunpack.c.l.b16 %v247
  %v844 = vunpack.c.h.b16 %v247
  %v845 = vunpack.c.l.b16 %v248
  %v846 = vunpack.c.h.b16 %v248
  %v847 = vunpack.c.l.b16 %v249
  %v848 = vunpack.c.h.b16 %v249
  %v849 = vunpack.c.l.b16 %v250
  %v850 = vunpack.c.h.b16 %v250
  %v851 = vunpack.c.l.b16 %v251
  %v852 = vunpack.c.h.b16 %v251
  %v853 = vunpack.c.l.b16 %v252
  %v854 = vunpack.c.h.b16 %v252
  %v855 = vunpack.c.l.b16 %v253
  %v856 = vunpack.c.h.b16 %v253
  %v857 = vunpack.c.l.b16 %v254
  %v858 = vunpack.c.h.b16 %v254
  %v859 = vunpack.c.l.b16 %v255
  %v860 = vunpack.c.h.b16 %v255
  %v861 = vunpack.c.l.b16 %v256
  %v862 = vunpack.c.h.b16 %v256
  %v863 = vunpack.c.l.b16 %v257
  %v864 = vunpack.c.h.b16 %v257
  %v865 = vunpack.c.l.b16 %v258
  %v866 = vunpack.c.h.b16 %v258
  %v867 = vunpack.c.l.b16 %v259
  %v868 = vunpack.c.h.b16 %v259
  %v869 = vunpack.c.l.b16 %v260
  %v870 = vunpack.c.h.b16 %v260
  %v871 = vunpack.c.l.b16 %v261
  %v872 = vunpack.c.h.b16 %v261
  %v873 = vunpack.c.l.b16 %v262
  %v874 = vunpack.c.h.b16 %v262
  %v875 = vunpack.c.l.b16 %v263
  %v876 = vunpack.c.h.b16 %v263
  %v877 = vunpack.c.l.b16 %v264
  %v878 = vunpack.c.h.b16 %v264
  %v879 = vunpack.c.l.b16 %v265
  %v880 = vunpack.c.h.b16 %v265
  %v881 = vunpack.c.l.b16 %v266
  %v882 = vunpack.c.h.b16 %v266
  %v883 = vunpack.c.l.b16 %v267
  %v884 = vunpack.c.h.b16 %v267
  %v885 = vunpack.c.l.b16 %v268
  %v886 = vunpack.c.h.b16 %v268
  %v887 = vunpack.c.l.b16 %v269
  %v888 = vunpack.c.h.b16 %v269
  %v889 = vunpack.c.l.b16 %v270
  %v890 = vunpack.c.h.b16 %v270
  %v891 = vunpack.c.l.b16 %v271
  %v892 = vunpack.c.h.b16 %v271
  %v893 = vunpack.c.l.b16 %v272
  %v894 = vunpack.c.h.b16 %v272
  %v895 = vunpack.c.l.b16 %v273
  %v896 = vunpack.c.h.b16 %v273
  %v897 = vunpack.c.l.b16 %v274
  %v898 = vunpack.c.h.b16 %v274
  %v899 = vunpack.c.l.b16 %v275
  %v900 = vunpack.c.h.b16 %v275
  %v901 = vunpack.c.l.b16 %v276
  %v902 = vunpack.c.h.b16 %v276
  %v903 = vunpack.c.l.b16 %v277
  %v904 = vunpack.c.h.b16 %v277
  %v905 = vunpack.c.l.b16 %v278
  %v906 = vunpack.c.h.b16 %v278
  %v907 = vunpack.c.l.b16 %v279
  %v908 = vunpack.c.h.b16 %v279
  %v909 = vunpack.c.l.b16 %v280
  %v910 = vunpack.c.h.b16 %v280
  %v911 = vunpack.c.l.b16 %v281
  %v912 = vunpack.c.h.b16 %v281
  %v913 = vunpack.c.l.b16 %v282
  %v914 = vunpack.c.h.b16 %v282
  %v915 = vunpack.c.l.b16 %v283
  %v916 = vunpack.c.h.b16 %v283
  %v917 = vunpack.c.l.b16 %v284
  %v918 = vunpack.c.h.b16 %v284
  %v919 = vunpack.c.l.b16 %v285
  %v920 = vunpack.c.h.b16 %v285
  %v921 = vunpack.c.l.b16 %v286
  %v922 = vunpack.c.h.b16 %v286
  %v923 = vunpack.c.l.b16 %v287
  %v924 = vunpack.c.h.b16 %v287
  %v925 = vunpack.c.l.b16 %v288
  %v926 = vunpack.c.h.b16 %v288
  %v927 = vunpack.c.l.b16 %v289
  %v928 = vunpack.c.h.b16 %v289
  %v929 = vunpack.c.l.b16 %v290
  %v930 = vunpack.c.h.b16 %v290
  %v931 = vunpack.c.l.b16 %v291
  %v932 = vunpack.c.h.b16 %v291
  %v933 = vunpack.c.l.b16 %v292
  %v934 = vunpack.c.h.b16 %v292
  %v935 = vunpack.c.l.b16 %v293
  %v936 = vunpack.c.h.b16 %v293
  %v937 = vunpack.c.l.b16 %v294
  %v938 = vunpack.c.h.b16 %v294
  %v939 = vunpack.c.l.b16 %v295
  %v940 = vunpack.c.h.b16 %v295
  %v941 = vunpack.c.l.b16 %v296
  %v942 = vunpack.c.h.b16 %v296
  %v943 = vunpack.c.l.b16 %v297
  %v944 = vunpack.c.h.b16 %v297
  %v945 = vunpack.c.l.b16 %v298
  %v946 = vunpack.c.h.b16 %v298
  %v947 = vunpack.c.l.b16 %v299
  %v948 = vunpack.c.h.b16 %v299
  %v949 = vunpack.c.l.b16 %v300
  %v950 = vunpack.c.h.b16 %v300
  %v951 = vunpack.c.l.b16 %v301
  %v952 = vunpack.c.h.b16 %v301
  %v953 = vunpack.c.l.b16 %v302
  %v954 = vunpack.c.h.b16 %v302
  %v955 = vunpack.c.l.b16 %v303
  %v956 = vunpack.c.h.b16 %v303
  %v957 = vunpack.c.l.b16 %v304
  %v958 = vunpack.c.h.b16 %v304
  %v959 = vunpack.c.l.b16 %v305
  %v960 = vunpack.c.h.b16 %v305
  %v961 = vunpack.c.l.b16 %v306
  %v962 = vunpack.c.h.b16 %v306
  %v963 = vunpack.c.l.b16 %v307
  %v964 = vunpack.c.h.b16 %v307
  %v965 = vunpack.c.l.b16 %v308
  %v966 = vunpack.c.h.b16 %v308
  %v967 = vunpack.c.l.b16 %v309
  %v968 = vunpack.c.h.b16 %v309
  %v969 = vunpack.c.l.b16 %v310
  %v970 = vunpack.c.h.b16 %v310
  %v971 = vunpack.c.l.b16 %v311
  %v972 = vunpack.c.h.b16 %v311
  %v973 = vunpack.c.l.b16 %v312
  %v974 = vunpack.c.h.b16 %v312
  %v975 = vunpack.c.l.b16 %v313
  %v976 = vunpack.c.h.b16 %v313
  %v977 = vunpack.c.l.b16 %v314
  %v978 = vunpack.c.h.b16 %v314
  %v979 = vunpack.c.l.b16 %v315
  %v980 = vunpack.c.h.b16 %v315
  %v981 = vunpack.c.l.b16 %v316
  %v982 = vunpack.c.h.b16 %v316
  %v983 = vunpack.c.l.b16 %v317
  %v984 = vunpack.c.h.b16 %v317
  %v985 = vunpack.c.l.b16 %v318
  %v986 = vunpack.c.h.b16 %v318
  %v987 = vunpack.c.l.b16 %v319
  %v988 = vunpack.c.h.b16 %v319
  %v989 = vunpack.c.l.b16 %v320
  %v990 = vunpack.c.h.b16 %v320
  %v991 = vunpack.c.l.b16 %v321
  %v992 = vunpack.c.h.b16 %v321
  %v993 = vunpack.c.l.b16 %v322
  %v994 = vunpack.c.h.b16 %v322
  %v995 = vunpack.c.l.b16 %v323
  %v996 = vunpack.c.h.b16 %v323
  %v997 = vunpack.c.l.b16 %v324
  %v998 = vunpack.c.h.b16 %v324
  %v999 = vunpack.c.l.b16 %v325
  %v1000 = vunpack.c.h.b16 %v325
  %v1001 = vunpack.c.l.b16 %v326
  %v1002 = vunpack.c.h.b16 %v326
  %v1003 = vunpack.c.l.b16 %v327
  %v1004 = vunpack.c.h.b16 %v327
  %v1005 = vunpack.c.l.b16 %v328
  %v1006 = vunpack.c.h.b16 %v328
  %v1007 = vunpack.c.l.b16 %v329
  %v1008 = vunpack.c.h.b16 %v329
  %v1009 = vunpack.c.l.b16 %v330
  %v1010 = vunpack.c.h.b16 %v330
  %v1011 = vunpack.c.l.b16 %v331
  %v1012 = vunpack.c.h.b16 %v331
  %v1013 = vunpack.c.l.b16 %v332
  %v1014 = vunpack.c.h.b16 %v332
  %v1015 = vunpack.c.l.b16 %v333
  %v1016 = vunpack.c.h.b16 %v333
  %v1017 = vunpack.c.l.b16 %v334
  %v1018 = vunpack.c.h.b16 %v334
  %v1019 = vunpack.c.l.b16 %v335
  %v1020 = vunpack.c.h.b16 %v335
  %v1021 = vunpack.c.l.b16 %v336
  %v1022 = vunpack.c.h.b16 %v336
  %v1023 = vunpack.c.l.b16 %v337
  %v1024 = vunpack.c.h.b16 %v337
  %v1025 = vunpack.c.l.b16 %v338
  %v1026 = vunpack.c.h.b16 %v338
  %v1027 = vunpack.c.l.b16 %v339
  %v1028 = vunpack.c.h.b16 %v339
  %v1029 = vunpack.c.l.b16 %v340
  %v1030 = vunpack.c.h.b16 %v340
  %v1031 = vunpack.c.l.b16 %v341
  %v1032 = vunpack.c.h.b16 %v341
  %v1033 = vunpack.c.l.b16 %v342
  %v1034 = vunpack.c.h.b16 %v342
  %v1035 = vunpack.c.l.b16 %v343
  %v1036 = vunpack.c.h.b16 %v343
  %v1037 = vunpack.c.l.b16 %v344
  %v1038 = vunpack.c.h.b16 %v344
  %v1039 = vunpack.c.l.b16 %v345
  %v1040 = vunpack.c.h.b16 %v345
  %v1041 = vunpack.c.l.b16 %v346
  %v1042 = vunpack.c.h.b16 %v346
  %v1043 = vunpack.c.l.b16 %v347
  %v1044 = vunpack.c.h.b16 %v347
  %v1045 = vunpack.c.l.b16 %v348
  %v1046 = vunpack.c.h.b16 %v348
  %v1047 = vunpack.c.l.b16 %v349
  %v1048 = vunpack.c.h.b16 %v349
  %v1049 = vunpack.c.l.b16 %v350
  %v1050 = vunpack.c.h.b16 %v350
  %v1051 = vunpack.c.l.b16 %v351
  %v1052 = vunpack.c.h.b16 %v351
  %v1053 = vunpack.c.l.b16 %v352
  %v1054 = vunpack.c.h.b16 %v352
  %v1055 = vunpack.c.l.b16 %v353
  %v1056 = vunpack.c.h.b16 %v353
  %v1057 = vunpack.c.l.b16 %v354
  %v1058 = vunpack.c.h.b16 %v354
  %v1059 = vunpack.c.l.b16 %v355
  %v1060 = vunpack.c.h.b16 %v355
  %v1061 = vunpack.c.l.b16 %v356
  %v1062 = vunpack.c.h.b16 %v356
  %v1063 = vunpack.c.l.b16 %v357
  %v1064 = vunpack.c.h.b16 %v357
  %v1065 = vunpack.c.l.b16 %v358
  %v1066 = vunpack.c.h.b16 %v358
  %v1067 = vunpack.c.l.b16 %v359
  %v1068 = vunpack.c.h.b16 %v359
  %v1069 = vunpack.c.l.b16 %v360
  %v1070 = vunpack.c.h.b16 %v360
  %v1071 = vunpack.c.l.b16 %v361
  %v1072 = vunpack.c.h.b16 %v361
  %v1073 = vunpack.c.l.b16 %v362
  %v1074 = vunpack.c.h.b16 %v362
  %v1075 = vunpack.c.l.b16 %v363
  %v1076 = vunpack.c.h.b16 %v363
  %v1077 = vunpack.c.l.b16 %v364
  %v1078 = vunpack.c.h.b16 %v364
  %v1079 = vunpack.c.l.b16 %v365
  %v1080 = vunpack.c.h.b16 %v365
  %v1081 = vunpack.c.l.b16 %v366
  %v1082 = vunpack.c.h.b16 %v366
  %v1083 = vunpack.c.l.b16 %v367
  %v1084 = vunpack.c.h.b16 %v367
  %v1085 = vunpack.c.l.b16 %v368
  %v1086 = vunpack.c.h.b16 %v368
  %v1087 = vunpack.c.l.b16 %v369
  %v1088 = vunpack.c.h.b16 %v369
  %v1089 = vunpack.c.l.b16 %v370
  %v1090 = vunpack.c.h.b16 %v370
  %v1091 = vunpack.c.l.b16 %v371
  %v1092 = vunpack.c.h.b16 %v371
  %v1093 = vunpack.c.l.b16 %v372
  %v1094 = vunpack.c.h.b16 %v372
  %v1095 = vunpack.c.l.b16 %v373
  %v1096 = vunpack.c.h.b16 %v373
  %v1097 = vunpack.c.l.b16 %v374
  %v1098 = vunpack.c.h.b16 %v374
  %v1099 = vunpack.c.l.b16 %v375
  %v1100 = vunpack.c.h.b16 %v375
  %v1101 = vunpack.c.l.b16 %v376
  %v1102 = vunpack.c.h.b16 %v376
  %v1103 = vunpack.c.l.b16 %v377
  %v1104 = vunpack.c.h.b16 %v377
  %v1105 = vunpack.c.l.b16 %v378
  %v1106 = vunpack.c.h.b16 %v378
  %v1107 = vunpack.c.l.b16 %v379
  %v1108 = vunpack.c.h.b16 %v379
  %v1109 = vunpack.c.l.b16 %v380
  %v1110 = vunpack.c.h.b16 %v380
  %v1111 = vunpack.c.l.b16 %v381
  %v1112 = vunpack.c.h.b16 %v381
  %v1113 = vunpack.c.l.b16 %v382
  %v1114 = vunpack.c.h.b16 %v382
  %v1115 = vunpack.c.l.b16 %v383
  %v1116 = vunpack.c.h.b16 %v383
  %v1117 = vunpack.c.l.b16 %v384
  %v1118 = vunpack.c.h.b16 %v384
  %v1119 = vunpack.c.l.b16 %v385
  %v1120 = vunpack.c.h.b16 %v385
  %v1121 = vunpack.c.l.b16 %v386
  %v1122 = vunpack.c.h.b16 %v386
  %v1123 = vunpack.c.l.b16 %v387
  %v1124 = vunpack.c.h.b16 %v387
  %v1125 = vunpack.c.l.b16 %v388
  %v1126 = vunpack.c.h.b16 %v388
  %v1127 = vunpack.c.l.b16 %v389
  %v1128 = vunpack.c.h.b16 %v389
  %v1129 = vunpack.c.l.b16 %v390
  %v1130 = vunpack.c.h.b16 %v390
  %v1131 = vunpack.c.l.b16 %v391
  %v1132 = vunpack.c.h.b16 %v391
  %v1133 = vunpack.c.l.b16 %v392
  %v1134 = vunpack.c.h.b16 %v392
  %v1135 = vunpack.c.l.b16 %v393
  %v1136 = vunpack.c.h.b16 %v393
  %v1137 = vunpack.c.l.b16 %v394
  %v1138 = vunpack.c.h.b16 %v394
  %v1139 = vunpack.c.l.b16 %v395
  %v1140 = vunpack.c.h.b16 %v395
  %v1141 = vunpack.c.l.b16 %v396
  %v1142 = vunpack.c.h.b16 %v396
  %v1143 = vunpack.c.l.b16 %v397
  %v1144 = vunpack.c.h.b16 %v397
  %v1145 = vunpack.c.l.b16 %v398
  %v1146 = vunpack.c.h.b16 %v398
  %v1147 = vunpack.c.l.b16 %v399
  %v1148 = vunpack.c.h.b16 %v399
  %v1149 = vunpack.c.l.b16 %v400
  %v1150 = vunpack.c.h.b16 %v400
  %v1151 = vunpack.c.l.b16 %v401
  %v1152 = vunpack.c.h.b16 %v401
  %v1153 = vunpack.c.l.b16 %v402
  %v1154 = vunpack.c.h.b16 %v402
  %v1155 = vunpack.c.l.b16 %v403
  %v1156 = vunpack.c.h.b16 %v403
  %v1157 = vunpack.c.l.b16 %v404
  %v1158 = vunpack.c.h.b16 %v404
  %v1159 = vunpack.c.l.b16 %v405
  %v1160 = vunpack.c.h.b16 %v405
  %v1161 = vunpack.c.l.b16 %v406
  %v1162 = vunpack.c.h.b16 %v406
  %v1163 = vunpack.c.l.b16 %v407
  %v1164 = vunpack.c.h.b16 %v407
  %v1165 = vunpack.c.l.b16 %v408
  %v1166 = vunpack.c.h.b16 %v408
  %v1167 = vunpack.c.l.b16 %v409
  %v1168 = vunpack.c.h.b16 %v409
  %v1169 = vunpack.c.l.b16 %v410
  %v1170 = vunpack.c.h.b16 %v410
  %v1171 = vunpack.c.l.b16 %v411
  %v1172 = vunpack.c.h.b16 %v411
  %v1173 = vunpack.c.l.b16 %v412
  %v1174 = vunpack.c.h.b16 %v412
  %v1175 = vunpack.c.l.b16 %v413
  %v1176 = vunpack.c.h.b16 %v413
  %v1177 = vunpack.c.l.b16 %v414
  %v1178 = vunpack.c.h.b16 %v414
  %v1179 = vunpack.c.l.b16 %v415
  %v1180 = vunpack.c.h.b16 %v415
  %v1181 = vunpack.c.l.b16 %v416
  %v1182 = vunpack.c.h.b16 %v416
  %v1183 = vunpack.c.l.b16 %v417
  %v1184 = vunpack.c.h.b16 %v417
  %v1185 = vunpack.c.l.b16 %v418
  %v1186 = vunpack.c.h.b16 %v418
  %v1187 = vpack.c.b16 %v679, %v675
  %v1188 = vpack.c.b16 %v680, %v676
  %v1189 = vpack.c.b16 %v681, %v677
  %v1190 = vpack.c.b16 %v682, %v678
  %v1191 = vpack.c.b16 %v687, %v683
  %v1192 = vpack.c.b16 %v688, %v684
  %v1193 = vpack.c.b16 %v689, %v685
  %v1194 = vpack.c.b16 %v690, %v686
  %v1195 = vpack.c.b16 %v695, %v691
  %v1196 = vpack.c.b16 %v696, %v692
  %v1197 = vpack.c.b16 %v697, %v693
  %v1198 = vpack.c.b16 %v698, %v694
  %v1199 = vpack.c.b16 %v703, %v699
  %v1200 = vpack.c.b16 %v704, %v700
  %v1201 = vpack.c.b16 %v705, %v701
  %v1202 = vpack.c.b16 %v706, %v702
  %v1203 = vpack.c.b16 %v711, %v707
  %v1204 = vpack.c.b16 %v712, %v708
  %v1205 = vpack.c.b16 %v713, %v709
  %v1206 = vpack.c.b16 %v714, %v710
  %v1207 = vpack.c.b16 %v719, %v715
  %v1208 = vpack.c.b16 %v720, %v716
  %v1209 = vpack.c.b16 %v721, %v717
  %v1210 = vpack.c.b16 %v722, %v718
  %v1211 = vpack.c.b16 %v727, %v723
  %v1212 = vpack.c.b16 %v728, %v724
  %v1213 = vpack.c.b16 %v729, %v725
  %v1214 = vpack.c.b16 %v730, %v726
  %v1215 = vpack.c.b16 %v735, %v731
  %v1216 = vpack.c.b16 %v736, %v732
  %v1217 = vpack.c.b16 %v737, %v733
  %v1218 = vpack.c.b16 %v738, %v734
  %v1219 = vpack.c.b16 %v743, %v739
  %v1220 = vpack.c.b16 %v744, %v740
  %v1221 = vpack.c.b16 %v745, %v741
  %v1222 = vpack.c.b16 %v746, %v742
  %v1223 = vpack.c.b16 %v751, %v747
  %v1224 = vpack.c.b16 %v752, %v748
  %v1225 = vpack.c.b16 %v753, %v749
  %v1226 = vpack.c.b16 %v754, %v750
  %v1227 = vpack.c.b16 %v759, %v755
  %v1228 = vpack.c.b16 %v760, %v756
  %v1229 = vpack.c.b16 %v761, %v757
  %v1230 = vpack.c.b16 %v762, %v758
  %v1231 = vpack.c.b16 %v767, %v763
  %v1232 = vpack.c.b16 %v768, %v764
  %v1233 = vpack.c.b16 %v769, %v765
  %v1234 = vpack.c.b16 %v770, %v766
  %v1235 = vpack.c.b16 %v775, %v771
  %v1236 = vpack.c.b16 %v776, %v772
  %v1237 = vpack.c.b16 %v777, %v773
  %v1238 = vpack.c.b16 %v778, %v774
  %v1239 = vpack.c.b16 %v783, %v779
  %v1240 = vpack.c.b16 %v784, %v780
  %v1241 = vpack.c.b16 %v785, %v781
  %v1242 = vpack.c.b16 %v786, %v782
  %v1243 = vpack.c.b16 %v791, %v787
  %v1244 = vpack.c.b16 %v792, %v788
  %v1245 = vpack.c.b16 %v793, %v789
  %v1246 = vpack.c.b16 %v794, %v790
  %v1247 = vpack.c.b16 %v799, %v795
  %v1248 = vpack.c.b16 %v800, %v796
  %v1249 = vpack.c.b16 %v801, %v797
  %v1250 = vpack.c.b16 %v802, %v798
  %v1251 = vpack.c.b16 %v807, %v803
  %v1252 = vpack.c.b16 %v808, %v804
  %v1253 = vpack.c.b16 %v809, %v805
  %v1254 = vpack.c.b16 %v810, %v806
  %v1255 = vpack.c.b16 %v815, %v811
  %v1256 = vpack.c.b16 %v816, %v812
  %v1257 = vpack.c.b16 %v817, %v813
  %v1258 = vpack.c.b16 %v818, %v814
  %v1259 = vpack.c.b16 %v823, %v819
  %v1260 = vpack.c.b16 %v824, %v820
  %v1261 = vpack.c.b16 %v825, %v821
  %v1262 = vpack.c.b16 %v826, %v822
  %v1263 = vpack.c.b16 %v831, %v827
  %v1264 = vpack.c.b16 %v832, %v828
  %v1265 = vpack.c.b16 %v833, %v829
  %v1266 = vpack.c.b16 %v834, %v830
  %v1267 = vpack.c.b16 %v839, %v835
  %v1268 = vpack.c.b16 %v840, %v836
  %v1269 = vpack.c.b16 %v841, %v837
  %v1270 = vpack.c.b16 %v842, %v838
  %v1271 = vpack.c.b16 %v847, %v843
  %v1272 = vpack.c.b16 %v848, %v844
  %v1273 = vpack.c.b16 %v849, %v845
  %v1274 = vpack.c.b16 %v850, %v846
  %v1275 = vpack.c.b16 %v855, %v851
  %v1276 = vpack.c.b16 %v856, %v852
  %v1277 = vpack.c.b16 %v857, %v853
  %v1278 = vpack.c.b16 %v858, %v854
  %v1279 = vpack.c.b16 %v863, %v859
  %v1280 = vpack.c.b16 %v864, %v860
  %v1281 = vpack.c.b16 %v865, %v861
  %v1282 = vpack.c.b16 %v866, %v862
  %v1283 = vpack.c.b16 %v871, %v867
  %v1284 = vpack.c.b16 %v872, %v868
  %v1285 = vpack.c.b16 %v873, %v869
  %v1286 = vpack.c.b16 %v874, %v870
  %v1287 = vpack.c.b16 %v879, %v875
  %v1288 = vpack.c.b16 %v880, %v876
  %v1289 = vpack.c.b16 %v881, %v877
  %v1290 = vpack.c.b16 %v882, %v878
  %v1291 = vpack.c.b16 %v887, %v883
  %v1292 = vpack.c.b16 %v888, %v884
  %v1293 = vpack.c.b16 %v889, %v885
  %v1294 = vpack.c.b16 %v890, %v886
  %v1295 = vpack.c.b16 %v895, %v891
  %v1296 = vpack.c.b16 %v896, %v892
  %v1297 = vpack.c.b16 %v897, %v893
  %v1298 = vpack.c.b16 %v898, %v894
  %v1299 = vpack.c.b16 %v903, %v899
  %v1300 = vpack.c.b16 %v904, %v900
  %v1301 = vpack.c.b16 %v905, %v901
  %v1302 = vpack.c.b16 %v906, %v902
  %v1303 = vpack.c.b16 %v911, %v907
  %v1304 = vpack.c.b16 %v912, %v908
  %v1305 = vpack.c.b16 %v913, %v909
  %v1306 = vpack.c.b16 %v914, %v910
  %v1307 = vpack.c.b16 %v919, %v915
  %v1308 = vpack.c.b16 %v920, %v916
  %v1309 = vpack.c.b16 %v921, %v917
  %v1310 = vpack.c.b16 %v922, %v918
  %v1311 = vpack.c.b16 %v927, %v923
  %v1312 = vpack.c.b16 %v928, %v924
  %v1313 = vpack.c.b16 %v929, %v925
  %v1314 = vpack.c.b16 %v930, %v926
  %v1315 = vpack.c.b16 %v935, %v931
  %v1316 = vpack.c.b16 %v936, %v932
  %v1317 = vpack.c.b16 %v937, %v933
  %v1318 = vpack.c.b16 %v938, %v934
  %v1319 = vpack.c.b16 %v943, %v939
  %v1320 = vpack.c.b16 %v944, %v940
  %v1321 = vpack.c.b16 %v945, %v941
  %v1322 = vpack.c.b16 %v946, %v942
  %v1323 = vpack.c.b16 %v951, %v947
  %v1324 = vpack.c.b16 %v952, %v948
  %v1325 = vpack.c.b16 %v953, %v949
  %v1326 = vpack.c.b16 %v954, %v950
  %v1327 = vpack.c.b16 %v959, %v955
  %v1328 = vpack.c.b16 %v960, %v956
  %v1329 = vpack.c.b16 %v961, %v957
  %v1330 = vpack.c.b16 %v962, %v958
  %v1331 = vpack.c.b16 %v967, %v963
  %v1332 = vpack.c.b16 %v968, %v964
  %v1333 = vpack.c.b16 %v969, %v965
  %v1334 = vpack.c.b16 %v970, %v966
  %v1335 = vpack.c.b16 %v975, %v971
  %v1336 = vpack.c.b16 %v976, %v972
  %v1337 = vpack.c.b16 %v977, %v973
  %v1338 = vpack.c.b16 %v978, %v974
  %v1339 = vpack.c.b16 %v983, %v979
  %v1340 = vpack.c.b16 %v984, %v980
  %v1341 = vpack.c.b16 %v985, %v981
  %v1342 = vpack.c.b16 %v986, %v982
  %v1343 = vpack.c.b16 %v991, %v987
  %v1344 = vpack.c.b16 %v992, %v988
  %v1345 = vpack.c.b16 %v993, %v989
  %v1346 = vpack.c.b16 %v994, %v990
  %v1347 = vpack.c.b16 %v999, %v995
  %v1348 = vpack.c.b16 %v1000, %v996
  %v1349 = vpack.c.b16 %v1001, %v997
  %v1350 = vpack.c.b16 %v1002, %v998
  %v1351 = vpack.c.b16 %v1007, %v1003
  %v1352 = vpack.c.b16 %v1008, %v1004
  %v1353 = vpack.c.b16 %v1009, %v1005
  %v1354 = vpack.c.b16 %v1010, %v1006
  %v1355 = vpack.c.b16 %v1015, %v1011
  %v1356 = vpack.c.b16 %v1016, %v1012
  %v1357 = vpack.c.b16 %v1017, %v1013
  %v1358 = vpack.c.b16 %v1018, %v1014
  %v1359 = vpack.c.b16 %v1023, %v1019
  %v1360 = vpack.c.b16 %v1024, %v1020
  %v1361 = vpack.c.b16 %v1025, %v1021
  %v1362 = vpack.c.b16 %v1026, %v1022
  %v1363 = vpack.c.b16 %v1031, %v1027
  %v1364 = vpack.c.b16 %v1032, %v1028
  %v1365 = vpack.c.b16 %v1033, %v1029
  %v1366 = vpack.c.b16 %v1034, %v1030
  %v1367 = vpack.c.b16 %v1039, %v1035
  %v1368 = vpack.c.b16 %v1040, %v1036
  %v1369 = vpack.c.b16 %v1041, %v1037
  %v1370 = vpack.c.b16 %v1042, %v1038
  %v1371 = vpack.c.b16 %v1047, %v1043
  %v1372 = vpack.c.b16 %v1048, %v1044
  %v1373 = vpack.c.b16 %v1049, %v1045
  %v1374 = vpack.c.b16 %v1050, %v1046
  %v1375 = vpack.c.b16 %v1055, %v1051
  %v1376 = vpack.c.b16 %v1056, %v1052
  %v1377 = vpack.c.b16 %v1057, %v1053
  %v1378 = vpack.c.b16 %v1058, %v1054
  %v1379 = vpack.c.b16 %v1063, %v1059
  %v1380 = vpack.c.b16 %v1064, %v1060
  %v1381 = vpack.c.b16 %v1065, %v1061
  %v1382 = vpack.c.b16 %v1066, %v1062
  %v1383 = vpack.c.b16 %v1071, %v1067
  %v1384 = vpack.c.b16 %v1072, %v1068
  %v1385 = vpack.c.b16 %v1073, %v1069
  %v1386 = vpack.c.b16 %v1074, %v1070
  %v1387 = vpack.c.b16 %v1079, %v1075
  %v1388 = vpack.c.b16 %v1080, %v1076
  %v1389 = vpack.c.b16 %v1081, %v1077
  %v1390 = vpack.c.b16 %v1082, %v1078
  %v1391 = vpack.c.b16 %v1087, %v1083
  %v1392 = vpack.c.b16 %v1088, %v1084
  %v1393 = vpack.c.b16 %v1089, %v1085
  %v1394 = vpack.c.b16 %v1090, %v1086
  %v1395 = vpack.c.b16 %v1095, %v1091
  %v1396 = vpack.c.b16 %v1096, %v1092
  %v1397 = vpack.c.b16 %v1097, %v1093
  %v1398 = vpack.c.b16 %v1098, %v1094
  %v1399 = vpack.c.b16 %v1103, %v1099
  %v1400 = vpack.c.b16 %v1104, %v1100
  %v1401 = vpack.c.b16 %v1105, %v1101
  %v1402 = vpack.c.b16 %v1106, %v1102
  %v1403 = vpack.c.b16 %v1111, %v1107
  %v1404 = vpack.c.b16 %v1112, %v1108
  %v1405 = vpack.c.b16 %v1113, %v1109
  %v1406 = vpack.c.b16 %v1114, %v1110
  %v1407 = vpack.c.b16 %v1119, %v1115
  %v1408 = vpack.c.b16 %v1120, %v1116
  %v1409 = vpack.c.b16 %v1121, %v1117
  %v1410 = vpack.c.b16 %v1122, %v1118
  %v1411 = vpack.c.b16 %v1127, %v1123
  %v1412 = vpack.c.b16 %v1128, %v1124
  %v1413 = vpack.c.b16 %v1129, %v1125
  %v1414 = vpack.c.b16 %v1130, %v1126
  %v1415 = vpack.c.b16 %v1135, %v1131
  %v1416 = vpack.c.b16 %v1136, %v1132
  %v1417 = vpack.c.b16 %v1137, %v1133
  %v1418 = vpack.c.b16 %v1138, %v1134
  %v1419 = vpack.c.b16 %v1143, %v1139
  %v1420 = vpack.c.b16 %v1144, %v1140
  %v1421 = vpack.c.b16 %v1145, %v1141
  %v1422 = vpack.c.b16 %v1146, %v1142
  %v1423 = vpack.c.b16 %v1151, %v1147
  %v1424 = vpack.c.b16 %v1152, %v1148
  %v1425 = vpack.c.b16 %v1153, %v1149
  %v1426 = vpack.c.b16 %v1154, %v1150
  %v1427 = vpack.c.b16 %v1159, %v1155
  %v1428 = vpack.c.b16 %v1160, %v1156
  %v1429 = vpack.c.b16 %v1161, %v1157
  %v1430 = vpack.c.b16 %v1162, %v1158
  %v1431 = vpack.c.b16 %v1167, %v1163
  %v1432 = vpack.c.b16 %v1168, %v1164
  %v1433 = vpack.c.b16 %v1169, %v1165
  %v1434 = vpack.c.b16 %v1170, %v1166
  %v1435 = vpack.c.b16 %v1175, %v1171
  %v1436 = vpack.c.b16 %v1176, %v1172
  %v1437 = vpack.c.b16 %v1177, %v1173
  %v1438 = vpack.c.b16 %v1178, %v1174
  %v1439 = vpack.c.b16 %v1183, %v1179
  %v1440 = vpack.c.b16 %v1184, %v1180
  %v1441 = vpack.c.b16 %v1185, %v1181
  %v1442 = vpack.c.b16 %v1186, %v1182
  %1699 = vmatprep.subr.bf16.mxu0 %v1216
  %1700 = vmatpush1.bf16.msra.mxu0 %v1215
  %1701 = vmatprep.subr.bf16.mxu0 %v1212
  %1702 = vmatpush1.bf16.msra.mxu0 %v1211
  %1703 = vmatprep.subr.bf16.mxu0 %v1208
  %1704 = vmatpush1.bf16.msra.mxu0 %v1207
  %1705 = vmatprep.subr.bf16.mxu0 %v1204
  %1706 = vmatpush1.bf16.msra.mxu0 %v1203
  %1707 = vmatprep.subr.bf16.mxu0 %v1200
  %1708 = vmatpush1.bf16.msra.mxu0 %v1199
  %1709 = vmatprep.subr.bf16.mxu0 %v1196
  %1710 = vmatpush1.bf16.msra.mxu0 %v1195
  %1711 = vmatprep.subr.bf16.mxu0 %v1192
  %1712 = vmatpush1.bf16.msra.mxu0 %v1191
  %1713 = vmatprep.subr.bf16.mxu0 %v1188
  %1714 = vmatpush1.bf16.msra.mxu0 %v1187
  %1715 = vmatprep.subr.bf16.mxu0 %v1248
  %1716 = vmatpush2.bf16.msra.mxu0 %v1247
  %1717 = vmatprep.subr.bf16.mxu0 %v1244
  %1718 = vmatpush2.bf16.msra.mxu0 %v1243
  %1719 = vmatprep.subr.bf16.mxu0 %v1240
  %1720 = vmatpush2.bf16.msra.mxu0 %v1239
  %1721 = vmatprep.subr.bf16.mxu0 %v1236
  %1722 = vmatpush2.bf16.msra.mxu0 %v1235
  %1723 = vmatprep.subr.bf16.mxu0 %v1232
  %1724 = vmatpush2.bf16.msra.mxu0 %v1231
  %1725 = vmatprep.subr.bf16.mxu0 %v1228
  %1726 = vmatpush2.bf16.msra.mxu0 %v1227
  %1727 = vmatprep.subr.bf16.mxu0 %v1224
  %1728 = vmatpush2.bf16.msra.mxu0 %v1223
  %1729 = vmatprep.subr.bf16.mxu0 %v1220
  %1730 = vmatpush2.bf16.msra.mxu0 %v1219
  %1731 = vmatprep.mubr.bf16.mxu0 %v156
  %1732 = vmatmul.mubr.bf16.gmra.mxu0 %v155
  %v1733 = vpop.f32.mrf.mxu0
  %v1734 = vadd.f32 0.0, %v1733
  %v1735 = vpop.f32.mrf.mxu0
  %v1736 = vadd.f32 0.0, %v1735
  %v1737 = vpop.f32.mrf.mxu0
  %v1738 = vpop.f32.mrf.mxu0
  %1739 = vdwg.mxu0
  %1740 = vmatprep.subr.bf16.mxu0 %v1280
  %1741 = vmatpush1.bf16.msra.mxu0 %v1279
  %1742 = vmatprep.subr.bf16.mxu0 %v1276
  %1743 = vmatpush1.bf16.msra.mxu0 %v1275
  %1744 = vmatprep.subr.bf16.mxu0 %v1272
  %1745 = vmatpush1.bf16.msra.mxu0 %v1271
  %1746 = vmatprep.subr.bf16.mxu0 %v1268
  %1747 = vmatpush1.bf16.msra.mxu0 %v1267
  %1748 = vmatprep.subr.bf16.mxu0 %v1264
  %1749 = vmatpush1.bf16.msra.mxu0 %v1263
  %1750 = vmatprep.subr.bf16.mxu0 %v1260
  %1751 = vmatpush1.bf16.msra.mxu0 %v1259
  %1752 = vmatprep.subr.bf16.mxu0 %v1256
  %1753 = vmatpush1.bf16.msra.mxu0 %v1255
  %1754 = vmatprep.subr.bf16.mxu0 %v1252
  %1755 = vmatpush1.bf16.msra.mxu0 %v1251
  %1756 = vmatprep.subr.bf16.mxu0 %v1312
  %1757 = vmatpush2.bf16.msra.mxu0 %v1311
  %1758 = vmatprep.subr.bf16.mxu0 %v1308
  %1759 = vmatpush2.bf16.msra.mxu0 %v1307
  %1760 = vmatprep.subr.bf16.mxu0 %v1304
  %1761 = vmatpush2.bf16.msra.mxu0 %v1303
  %1762 = vmatprep.subr.bf16.mxu0 %v1300
  %1763 = vmatpush2.bf16.msra.mxu0 %v1299
  %1764 = vmatprep.subr.bf16.mxu0 %v1296
  %1765 = vmatpush2.bf16.msra.mxu0 %v1295
  %1766 = vmatprep.subr.bf16.mxu0 %v1292
  %1767 = vmatpush2.bf16.msra.mxu0 %v1291
  %1768 = vmatprep.subr.bf16.mxu0 %v1288
  %1769 = vmatpush2.bf16.msra.mxu0 %v1287
  %1770 = vmatprep.subr.bf16.mxu0 %v1284
  %1771 = vmatpush2.bf16.msra.mxu0 %v1283
  %1772 = vmatprep.mubr.bf16.mxu0 %v158
  %1773 = vmatmul.mubr.bf16.gmra.mxu0 %v157
  %v1774 = vpop.f32.mrf.mxu0
  %v1775 = vadd.f32 %v1734, %v1774
  %v1776 = vpop.f32.mrf.mxu0
  %v1777 = vadd.f32 %v1736, %v1776
  %v1778 = vpop.f32.mrf.mxu0
  %v1779 = vpop.f32.mrf.mxu0
  %1780 = vdwg.mxu0
  %1781 = vmatprep.subr.bf16.mxu0 %v1344
  %1782 = vmatpush1.bf16.msra.mxu0 %v1343
  %1783 = vmatprep.subr.bf16.mxu0 %v1340
  %1784 = vmatpush1.bf16.msra.mxu0 %v1339
  %1785 = vmatprep.subr.bf16.mxu0 %v1336
  %1786 = vmatpush1.bf16.msra.mxu0 %v1335
  %1787 = vmatprep.subr.bf16.mxu0 %v1332
  %1788 = vmatpush1.bf16.msra.mxu0 %v1331
  %1789 = vmatprep.subr.bf16.mxu0 %v1328
  %1790 = vmatpush1.bf16.msra.mxu0 %v1327
  %1791 = vmatprep.subr.bf16.mxu0 %v1324
  %1792 = vmatpush1.bf16.msra.mxu0 %v1323
  %1793 = vmatprep.subr.bf16.mxu0 %v1320
  %1794 = vmatpush1.bf16.msra.mxu0 %v1319
  %1795 = vmatprep.subr.bf16.mxu0 %v1316
  %1796 = vmatpush1.bf16.msra.mxu0 %v1315
  %1797 = vmatprep.subr.bf16.mxu0 %v1376
  %1798 = vmatpush2.bf16.msra.mxu0 %v1375
  %1799 = vmatprep.subr.bf16.mxu0 %v1372
  %1800 = vmatpush2.bf16.msra.mxu0 %v1371
  %1801 = vmatprep.subr.bf16.mxu0 %v1368
  %1802 = vmatpush2.bf16.msra.mxu0 %v1367
  %1803 = vmatprep.subr.bf16.mxu0 %v1364
  %1804 = vmatpush2.bf16.msra.mxu0 %v1363
  %1805 = vmatprep.subr.bf16.mxu0 %v1360
  %1806 = vmatpush2.bf16.msra.mxu0 %v1359
  %1807 = vmatprep.subr.bf16.mxu0 %v1356
  %1808 = vmatpush2.bf16.msra.mxu0 %v1355
  %1809 = vmatprep.subr.bf16.mxu0 %v1352
  %1810 = vmatpush2.bf16.msra.mxu0 %v1351
  %1811 = vmatprep.subr.bf16.mxu0 %v1348
  %1812 = vmatpush2.bf16.msra.mxu0 %v1347
  %1813 = vmatprep.mubr.bf16.mxu0 %v160
  %1814 = vmatmul.mubr.bf16.gmra.mxu0 %v159
  %v1815 = vpop.f32.mrf.mxu0
  %v1816 = vadd.f32 %v1775, %v1815
  %v1817 = vpop.f32.mrf.mxu0
  %v1818 = vadd.f32 %v1777, %v1817
  %v1819 = vpop.f32.mrf.mxu0
  %v1820 = vpop.f32.mrf.mxu0
  %1821 = vdwg.mxu0
  %1822 = vmatprep.subr.bf16.mxu0 %v1408
  %1823 = vmatpush1.bf16.msra.mxu0 %v1407
  %1824 = vmatprep.subr.bf16.mxu0 %v1404
  %1825 = vmatpush1.bf16.msra.mxu0 %v1403
  %1826 = vmatprep.subr.bf16.mxu0 %v1400
  %1827 = vmatpush1.bf16.msra.mxu0 %v1399
  %1828 = vmatprep.subr.bf16.mxu0 %v1396
  %1829 = vmatpush1.bf16.msra.mxu0 %v1395
  %1830 = vmatprep.subr.bf16.mxu0 %v1392
  %1831 = vmatpush1.bf16.msra.mxu0 %v1391
  %1832 = vmatprep.subr.bf16.mxu0 %v1388
  %1833 = vmatpush1.bf16.msra.mxu0 %v1387
  %1834 = vmatprep.subr.bf16.mxu0 %v1384
  %1835 = vmatpush1.bf16.msra.mxu0 %v1383
  %1836 = vmatprep.subr.bf16.mxu0 %v1380
  %1837 = vmatpush1.bf16.msra.mxu0 %v1379
  %1838 = vmatprep.subr.bf16.mxu0 %v1440
  %1839 = vmatpush2.bf16.msra.mxu0 %v1439
  %1840 = vmatprep.subr.bf16.mxu0 %v1436
  %1841 = vmatpush2.bf16.msra.mxu0 %v1435
  %1842 = vmatprep.subr.bf16.mxu0 %v1432
  %1843 = vmatpush2.bf16.msra.mxu0 %v1431
  %1844 = vmatprep.subr.bf16.mxu0 %v1428
  %1845 = vmatpush2.bf16.msra.mxu0 %v1427
  %1846 = vmatprep.subr.bf16.mxu0 %v1424
  %1847 = vmatpush2.bf16.msra.mxu0 %v1423
  %1848 = vmatprep.subr.bf16.mxu0 %v1420
  %1849 = vmatpush2.bf16.msra.mxu0 %v1419
  %1850 = vmatprep.subr.bf16.mxu0 %v1416
  %1851 = vmatpush2.bf16.msra.mxu0 %v1415
  %1852 = vmatprep.subr.bf16.mxu0 %v1412
  %1853 = vmatpush2.bf16.msra.mxu0 %v1411
  %1854 = vmatprep.mubr.bf16.mxu0 %v162
  %1855 = vmatmul.mubr.bf16.gmra.mxu0 %v161
  %v1856 = vpop.f32.mrf.mxu0
  %v1857 = vadd.f32 %v1816, %v1856
  %v1858 = vpop.f32.mrf.mxu0
  %v1859 = vadd.f32 %v1818, %v1858
  %v1860 = vpop.f32.mrf.mxu0
  %v1861 = vpop.f32.mrf.mxu0
  %1862 = vdwg.mxu0
  %1863 = vmatprep.subr.bf16.mxu0 %v1218
  %1864 = vmatpush1.bf16.msra.mxu0 %v1217
  %1865 = vmatprep.subr.bf16.mxu0 %v1214
  %1866 = vmatpush1.bf16.msra.mxu0 %v1213
  %1867 = vmatprep.subr.bf16.mxu0 %v1210
  %1868 = vmatpush1.bf16.msra.mxu0 %v1209
  %1869 = vmatprep.subr.bf16.mxu0 %v1206
  %1870 = vmatpush1.bf16.msra.mxu0 %v1205
  %1871 = vmatprep.subr.bf16.mxu0 %v1202
  %1872 = vmatpush1.bf16.msra.mxu0 %v1201
  %1873 = vmatprep.subr.bf16.mxu0 %v1198
  %1874 = vmatpush1.bf16.msra.mxu0 %v1197
  %1875 = vmatprep.subr.bf16.mxu0 %v1194
  %1876 = vmatpush1.bf16.msra.mxu0 %v1193
  %1877 = vmatprep.subr.bf16.mxu0 %v1190
  %1878 = vmatpush1.bf16.msra.mxu0 %v1189
  %1879 = vmatprep.subr.bf16.mxu0 %v1250
  %1880 = vmatpush2.bf16.msra.mxu0 %v1249
  %1881 = vmatprep.subr.bf16.mxu0 %v1246
  %1882 = vmatpush2.bf16.msra.mxu0 %v1245
  %1883 = vmatprep.subr.bf16.mxu0 %v1242
  %1884 = vmatpush2.bf16.msra.mxu0 %v1241
  %1885 = vmatprep.subr.bf16.mxu0 %v1238
  %1886 = vmatpush2.bf16.msra.mxu0 %v1237
  %1887 = vmatprep.subr.bf16.mxu0 %v1234
  %1888 = vmatpush2.bf16.msra.mxu0 %v1233
  %1889 = vmatprep.subr.bf16.mxu0 %v1230
  %1890 = vmatpush2.bf16.msra.mxu0 %v1229
  %1891 = vmatprep.subr.bf16.mxu0 %v1226
  %1892 = vmatpush2.bf16.msra.mxu0 %v1225
  %1893 = vmatprep.subr.bf16.mxu0 %v1222
  %1894 = vmatpush2.bf16.msra.mxu0 %v1221
  %1895 = vmatprep.mubr.bf16.mxu0 %v156
  %1896 = vmatmul.mubr.bf16.gmra.mxu0 %v155
  %v1897 = vpop.f32.mrf.mxu0
  %v1898 = vadd.f32 0.0, %v1897
  %v1899 = vpop.f32.mrf.mxu0
  %v1900 = vadd.f32 0.0, %v1899
  %v1901 = vpop.f32.mrf.mxu0
  %v1902 = vpop.f32.mrf.mxu0
  %1903 = vdwg.mxu0
  %1904 = vmatprep.subr.bf16.mxu0 %v1282
  %1905 = vmatpush1.bf16.msra.mxu0 %v1281
  %1906 = vmatprep.subr.bf16.mxu0 %v1278
  %1907 = vmatpush1.bf16.msra.mxu0 %v1277
  %1908 = vmatprep.subr.bf16.mxu0 %v1274
  %1909 = vmatpush1.bf16.msra.mxu0 %v1273
  %1910 = vmatprep.subr.bf16.mxu0 %v1270
  %1911 = vmatpush1.bf16.msra.mxu0 %v1269
  %1912 = vmatprep.subr.bf16.mxu0 %v1266
  %1913 = vmatpush1.bf16.msra.mxu0 %v1265
  %1914 = vmatprep.subr.bf16.mxu0 %v1262
  %1915 = vmatpush1.bf16.msra.mxu0 %v1261
  %1916 = vmatprep.subr.bf16.mxu0 %v1258
  %1917 = vmatpush1.bf16.msra.mxu0 %v1257
  %1918 = vmatprep.subr.bf16.mxu0 %v1254
  %1919 = vmatpush1.bf16.msra.mxu0 %v1253
  %1920 = vmatprep.subr.bf16.mxu0 %v1314
  %1921 = vmatpush2.bf16.msra.mxu0 %v1313
  %1922 = vmatprep.subr.bf16.mxu0 %v1310
  %1923 = vmatpush2.bf16.msra.mxu0 %v1309
  %1924 = vmatprep.subr.bf16.mxu0 %v1306
  %1925 = vmatpush2.bf16.msra.mxu0 %v1305
  %1926 = vmatprep.subr.bf16.mxu0 %v1302
  %1927 = vmatpush2.bf16.msra.mxu0 %v1301
  %1928 = vmatprep.subr.bf16.mxu0 %v1298
  %1929 = vmatpush2.bf16.msra.mxu0 %v1297
  %1930 = vmatprep.subr.bf16.mxu0 %v1294
  %1931 = vmatpush2.bf16.msra.mxu0 %v1293
  %1932 = vmatprep.subr.bf16.mxu0 %v1290
  %1933 = vmatpush2.bf16.msra.mxu0 %v1289
  %1934 = vmatprep.subr.bf16.mxu0 %v1286
  %1935 = vmatpush2.bf16.msra.mxu0 %v1285
  %1936 = vmatprep.mubr.bf16.mxu0 %v158
  %1937 = vmatmul.mubr.bf16.gmra.mxu0 %v157
  %v1938 = vpop.f32.mrf.mxu0
  %v1939 = vadd.f32 %v1898, %v1938
  %v1940 = vpop.f32.mrf.mxu0
  %v1941 = vadd.f32 %v1900, %v1940
  %v1942 = vpop.f32.mrf.mxu0
  %v1943 = vpop.f32.mrf.mxu0
  %1944 = vdwg.mxu0
  %1945 = vmatprep.subr.bf16.mxu0 %v1346
  %1946 = vmatpush1.bf16.msra.mxu0 %v1345
  %1947 = vmatprep.subr.bf16.mxu0 %v1342
  %1948 = vmatpush1.bf16.msra.mxu0 %v1341
  %1949 = vmatprep.subr.bf16.mxu0 %v1338
  %1950 = vmatpush1.bf16.msra.mxu0 %v1337
  %1951 = vmatprep.subr.bf16.mxu0 %v1334
  %1952 = vmatpush1.bf16.msra.mxu0 %v1333
  %1953 = vmatprep.subr.bf16.mxu0 %v1330
  %1954 = vmatpush1.bf16.msra.mxu0 %v1329
  %1955 = vmatprep.subr.bf16.mxu0 %v1326
  %1956 = vmatpush1.bf16.msra.mxu0 %v1325
  %1957 = vmatprep.subr.bf16.mxu0 %v1322
  %1958 = vmatpush1.bf16.msra.mxu0 %v1321
  %1959 = vmatprep.subr.bf16.mxu0 %v1318
  %1960 = vmatpush1.bf16.msra.mxu0 %v1317
  %1961 = vmatprep.subr.bf16.mxu0 %v1378
  %1962 = vmatpush2.bf16.msra.mxu0 %v1377
  %1963 = vmatprep.subr.bf16.mxu0 %v1374
  %1964 = vmatpush2.bf16.msra.mxu0 %v1373
  %1965 = vmatprep.subr.bf16.mxu0 %v1370
  %1966 = vmatpush2.bf16.msra.mxu0 %v1369
  %1967 = vmatprep.subr.bf16.mxu0 %v1366
  %1968 = vmatpush2.bf16.msra.mxu0 %v1365
  %1969 = vmatprep.subr.bf16.mxu0 %v1362
  %1970 = vmatpush2.bf16.msra.mxu0 %v1361
  %1971 = vmatprep.subr.bf16.mxu0 %v1358
  %1972 = vmatpush2.bf16.msra.mxu0 %v1357
  %1973 = vmatprep.subr.bf16.mxu0 %v1354
  %1974 = vmatpush2.bf16.msra.mxu0 %v1353
  %1975 = vmatprep.subr.bf16.mxu0 %v1350
  %1976 = vmatpush2.bf16.msra.mxu0 %v1349
  %1977 = vmatprep.mubr.bf16.mxu0 %v160
  %1978 = vmatmul.mubr.bf16.gmra.mxu0 %v159
  %v1979 = vpop.f32.mrf.mxu0
  %v1980 = vadd.f32 %v1939, %v1979
  %v1981 = vpop.f32.mrf.mxu0
  %v1982 = vadd.f32 %v1941, %v1981
  %v1983 = vpop.f32.mrf.mxu0
  %v1984 = vpop.f32.mrf.mxu0
  %1985 = vdwg.mxu0
  %1986 = vmatprep.subr.bf16.mxu0 %v1410
  %1987 = vmatpush1.bf16.msra.mxu0 %v1409
  %1988 = vmatprep.subr.bf16.mxu0 %v1406
  %1989 = vmatpush1.bf16.msra.mxu0 %v1405
  %1990 = vmatprep.subr.bf16.mxu0 %v1402
  %1991 = vmatpush1.bf16.msra.mxu0 %v1401
  %1992 = vmatprep.subr.bf16.mxu0 %v1398
  %1993 = vmatpush1.bf16.msra.mxu0 %v1397
  %1994 = vmatprep.subr.bf16.mxu0 %v1394
  %1995 = vmatpush1.bf16.msra.mxu0 %v1393
  %1996 = vmatprep.subr.bf16.mxu0 %v1390
  %1997 = vmatpush1.bf16.msra.mxu0 %v1389
  %1998 = vmatprep.subr.bf16.mxu0 %v1386
  %1999 = vmatpush1.bf16.msra.mxu0 %v1385
  %2000 = vmatprep.subr.bf16.mxu0 %v1382
  %2001 = vmatpush1.bf16.msra.mxu0 %v1381
  %2002 = vmatprep.subr.bf16.mxu0 %v1442
  %2003 = vmatpush2.bf16.msra.mxu0 %v1441
  %2004 = vmatprep.subr.bf16.mxu0 %v1438
  %2005 = vmatpush2.bf16.msra.mxu0 %v1437
  %2006 = vmatprep.subr.bf16.mxu0 %v1434
  %2007 = vmatpush2.bf16.msra.mxu0 %v1433
  %2008 = vmatprep.subr.bf16.mxu0 %v1430
  %2009 = vmatpush2.bf16.msra.mxu0 %v1429
  %2010 = vmatprep.subr.bf16.mxu0 %v1426
  %2011 = vmatpush2.bf16.msra.mxu0 %v1425
  %2012 = vmatprep.subr.bf16.mxu0 %v1422
  %2013 = vmatpush2.bf16.msra.mxu0 %v1421
  %2014 = vmatprep.subr.bf16.mxu0 %v1418
  %2015 = vmatpush2.bf16.msra.mxu0 %v1417
  %2016 = vmatprep.subr.bf16.mxu0 %v1414
  %2017 = vmatpush2.bf16.msra.mxu0 %v1413
  %2018 = vmatprep.mubr.bf16.mxu0 %v162
  %2019 = vmatmul.mubr.bf16.gmra.mxu0 %v161
  %v2020 = vpop.f32.mrf.mxu0
  %v2021 = vadd.f32 %v1980, %v2020
  %v2022 = vpop.f32.mrf.mxu0
  %v2023 = vadd.f32 %v1982, %v2022
  %v2024 = vpop.f32.mrf.mxu0
  %v2025 = vpop.f32.mrf.mxu0
  %2026 = vdwg.mxu0
  %v2027 = vpack.c.bf16 %v1857, %v1857
  %v2028 = vpack.c.bf16 %v1859, %v1859
  %v2029 = vpack.c.bf16 %v2021, %v2021
  %v2030 = vpack.c.bf16 %v2023, %v2023
  %v2035 = vunpack.c.l.b16 %v2027
  %v2036 = vunpack.c.l.b16 %v2028
  %v2037 = vunpack.c.l.b16 %v2029
  %v2038 = vunpack.c.l.b16 %v2030
  %v2039 = vpack.c.b16 %v2036, %v2035
  %v2040 = vpack.c.b16 %v2038, %v2037
  %2043 = vst [vmem:[%s4] sm:$0xff] %v2039
  %2044 = vst [vmem:[%s4 + $0x8] sm:$0xff] %v2040
  %v2045 = vlaneseq
  %v2046 = vshrl.u32 %v2045, 7
  %s2047 = smul.u32 0, 8
  %v2048 = vstv %s2047
  %v2049 = vadd.s32 %v2046, %v2048
  %vm2050 = vcmp.lt.s32.totalorder %v2049, 8
  %v2051 = vsel %vm2050, %v1857, 0.0
  %v2052 = vsel %vm2050, %v1859, 0.0
  %v2053 = vsel %vm2050, %v2021, 0.0
  %v2054 = vsel %vm2050, %v2023, 0.0
  %v2055 = vrot.slane %v2051, 4
  %v2056 = vadd.f32 %v2051, %v2055
  %v2057 = vrot.slane %v2056, 2
  %v2058 = vadd.f32 %v2056, %v2057
  %v2059 = vrot.slane %v2058, 1
  %v2060 = vadd.f32 %v2058, %v2059
  %v2061 = vrot.slane %v2052, 4
  %v2062 = vadd.f32 %v2052, %v2061
  %v2063 = vrot.slane %v2062, 2
  %v2064 = vadd.f32 %v2062, %v2063
  %v2065 = vrot.slane %v2064, 1
  %v2066 = vadd.f32 %v2064, %v2065
  %v2067 = vrot.slane %v2053, 4
  %v2068 = vadd.f32 %v2053, %v2067
  %v2069 = vrot.slane %v2068, 2
  %v2070 = vadd.f32 %v2068, %v2069
  %v2071 = vrot.slane %v2070, 1
  %v2072 = vadd.f32 %v2070, %v2071
  %v2073 = vrot.slane %v2054, 4
  %v2074 = vadd.f32 %v2054, %v2073
  %v2075 = vrot.slane %v2074, 2
  %v2076 = vadd.f32 %v2074, %v2075
  %v2077 = vrot.slane %v2076, 1
  %v2078 = vadd.f32 %v2076, %v2077
  %v2079 = vmul.f32 %v2051, %v2051
  %v2080 = vmul.f32 %v2052, %v2052
  %v2081 = vmul.f32 %v2053, %v2053
  %v2082 = vmul.f32 %v2054, %v2054
  %v2083 = vrot.slane %v2079, 4
  %v2084 = vadd.f32 %v2079, %v2083
  %v2085 = vrot.slane %v2084, 2
  %v2086 = vadd.f32 %v2084, %v2085
  %v2087 = vrot.slane %v2086, 1
  %v2088 = vadd.f32 %v2086, %v2087
  %v2089 = vrot.slane %v2080, 4
  %v2090 = vadd.f32 %v2080, %v2089
  %v2091 = vrot.slane %v2090, 2
  %v2092 = vadd.f32 %v2090, %v2091
  %v2093 = vrot.slane %v2092, 1
  %v2094 = vadd.f32 %v2092, %v2093
  %v2095 = vrot.slane %v2081, 4
  %v2096 = vadd.f32 %v2081, %v2095
  %v2097 = vrot.slane %v2096, 2
  %v2098 = vadd.f32 %v2096, %v2097
  %v2099 = vrot.slane %v2098, 1
  %v2100 = vadd.f32 %v2098, %v2099
  %v2101 = vrot.slane %v2082, 4
  %v2102 = vadd.f32 %v2082, %v2101
  %v2103 = vrot.slane %v2102, 2
  %v2104 = vadd.f32 %v2102, %v2103
  %v2105 = vrot.slane %v2104, 1
  %v2106 = vadd.f32 %v2104, %v2105
  %vm2107 = vcmask 1040384
  %v2108 = vsel %vm2107, %v2060, %v2088
  %v2109 = vsel %vm2107, %v2066, %v2094
  %v2110 = vsel %vm2107, %v2072, %v2100
  %v2111 = vsel %vm2107, %v2078, %v2106
  %v2116 = vcombine.low %v2108, %v2109
  %v2117 = vcombine.low %v2110, %v2111
  %v2119 = vunpack.c.l.s4 1983009808
  %v2120 = vunpack.c.0.s8 %v2119
  %v2121 = vlaneseq
  %v2122 = vshrl.u32 %v2121, 7
  %v2123 = vsub.s32 %v2120, %v2122
  %v2124 = vrot.slane %v2116, %v2123
  %v2126 = vunpack.c.l.s4 1983009808
  %v2127 = vunpack.c.0.s8 %v2126
  %v2128 = vlaneseq
  %v2129 = vshrl.u32 %v2128, 7
  %v2130 = vsub.s32 %v2127, %v2129
  %v2131 = vrot.slane %v2117, %v2130
  %v2132 = vcombine.low %v2124, %v2131
  %2134 = vst [vmem:[%s5] sm:$0xff] %v2132
  // Predicated region
  $region18: #{netd_patch_forward.8} parent=0 // pred_check
    _
  $region19: #{netd_patch_forward.8} parent=0 // pred_check_branch
    %2136 = sbr.rel (0) target = $region21
  $region20: #{netd_patch_forward.8} parent=0 // pred_region
    _
  $region21: #{netd_patch_forward.8} parent=0 // pred_fallthru
    _
  // Predicated region
  $region22: #{netd_patch_forward.8} parent=0 // pred_check
    _
  $region23: #{netd_patch_forward.8} parent=0 // pred_check_branch
    %2138 = sbr.rel (0) target = $region25
  $region24: #{netd_patch_forward.8} parent=0 // pred_region
    _
  $region25: #{netd_patch_forward.8} parent=0 // pred_fallthru
    _
  // Predicated region
  $region26: #{netd_patch_forward.8} parent=0 // pred_check
    _
  $region27: #{netd_patch_forward.8} parent=0 // pred_check_branch
    %2140 = sbr.rel (0) target = $region29
  $region28: #{netd_patch_forward.8} parent=0 // pred_region
    _
  $region29: #{netd_patch_forward.8} parent=0 // pred_fallthru
    _
  // Predicated region
  $region30: #{netd_patch_forward.8} parent=0 // pred_check
    _
  $region31: #{netd_patch_forward.8} parent=0 // pred_check_branch
    %2142 = sbr.rel (0) target = $region33
  $region32: #{netd_patch_forward.8} parent=0 // pred_region
    _
  $region33: #{netd_patch_forward.8} parent=0 // pred_fallthru
    _

// kernel: netd_patch_forward.10
$region0: #{netd_patch_forward.10}
  #allocation0 [shape = 'u32[]', space=smem, size = 0x4, offset = 0x4, fixed_abs, tag = 'smem constant byte address 0x4 - core index']
  #allocation1 [shape = 'u32[144,128]{1,0:T(1,128)}', space=vmem, size = 0x12000, scoped, tag = 'internal scratch']
  %s0 = inlined_call_operand.vmem [shape: f32[1,2048], index: 0, kind: input, shape index: {}]
  %s1 = inlined_call_operand.vmem [shape: f32[1,2048], index: 1, kind: input, shape index: {}]
  %s2 = inlined_call_operand.vmem [shape: bf16[8,2048], index: 2, kind: input, shape index: {}]
  %s3 = inlined_call_operand.vmem [shape: bf16[2048,256], index: 3, kind: input, shape index: {}]
  %s4 = inlined_call_operand.vmem [shape: bf16[8,256], index: 4, kind: output, shape index: {0}]
  %s5 = inlined_call_operand.vmem [shape: f32[1,2,256], index: 5, kind: output, shape index: {1}]
  %6 = xla_tuple %s4, %s5
  %s7 = sld [smem:[#allocation0]]
  $region34: #{netd_patch_forward.10} parent=0
    _
  %s9 = ssub.s32 1, %s7
  %s10 = scalar_select 0, %s9, %s7
  // Predicated region
  $region2: #{netd_patch_forward.10} parent=0 // pred_check
    _
  $region3: #{netd_patch_forward.10} parent=0 // pred_check_branch
    %12 = sbr.rel (0) target = $region5
  $region4: #{netd_patch_forward.10} parent=0 // pred_region
    _
  $region5: #{netd_patch_forward.10} parent=0 // pred_fallthru
    _
  // Predicated region
  $region6: #{netd_patch_forward.10} parent=0 // pred_check
    _
  $region7: #{netd_patch_forward.10} parent=0 // pred_check_branch
    %14 = sbr.rel (0) target = $region9
  $region8: #{netd_patch_forward.10} parent=0 // pred_region
    _
  $region9: #{netd_patch_forward.10} parent=0 // pred_fallthru
    _
  // Predicated region
  $region10: #{netd_patch_forward.10} parent=0 // pred_check
    _
  $region11: #{netd_patch_forward.10} parent=0 // pred_check_branch
    %16 = sbr.rel (0) target = $region13
  $region12: #{netd_patch_forward.10} parent=0 // pred_region
    _
  $region13: #{netd_patch_forward.10} parent=0 // pred_fallthru
    _
  // Predicated region
  $region14: #{netd_patch_forward.10} parent=0 // pred_check
    _
  $region15: #{netd_patch_forward.10} parent=0 // pred_check_branch
    %18 = sbr.rel (0) target = $region17
  $region16: #{netd_patch_forward.10} parent=0 // pred_region
    _
  $region17: #{netd_patch_forward.10} parent=0 // pred_fallthru
    _
  %v19 = vld [vmem:[%s2] sm:$0xff]
  %v20 = vld [vmem:[%s2 + $0x8] sm:$0xff]
  %v21 = vld [vmem:[%s2 + $0x10] sm:$0xff]
  %v22 = vld [vmem:[%s2 + $0x18] sm:$0xff]
  %v23 = vld [vmem:[%s2 + $0x20] sm:$0xff]
  %v24 = vld [vmem:[%s2 + $0x28] sm:$0xff]
  %v25 = vld [vmem:[%s2 + $0x30] sm:$0xff]
  %v26 = vld [vmem:[%s2 + $0x38] sm:$0xff]
  %v27 = vunpack.c.l.bf16 %v19
  %v28 = vunpack.c.h.bf16 %v19
  %v29 = vunpack.c.l.bf16 %v20
  %v30 = vunpack.c.h.bf16 %v20
  %v31 = vunpack.c.l.bf16 %v21
  %v32 = vunpack.c.h.bf16 %v21
  %v33 = vunpack.c.l.bf16 %v22
  %v34 = vunpack.c.h.bf16 %v22
  %v35 = vunpack.c.l.bf16 %v23
  %v36 = vunpack.c.h.bf16 %v23
  %v37 = vunpack.c.l.bf16 %v24
  %v38 = vunpack.c.h.bf16 %v24
  %v39 = vunpack.c.l.bf16 %v25
  %v40 = vunpack.c.h.bf16 %v25
  %v41 = vunpack.c.l.bf16 %v26
  %v42 = vunpack.c.h.bf16 %v26
  %v43 = vld [vmem:[%s0] sm:$0xff]
  %v44 = vld [vmem:[%s0 + $0x8] sm:$0xff]
  %v47 = vlaneseq
  %v48 = vshrl.u32 %v47, 7
  %v49 = vsub.s32 0, %v48
  %v50 = vrot.slane %v43, %v49
  %v51 = vlaneseq
  %v52 = vshrl.u32 %v51, 7
  %v53 = vsub.s32 1, %v52
  %v54 = vrot.slane %v43, %v53
  %v55 = vlaneseq
  %v56 = vshrl.u32 %v55, 7
  %v57 = vsub.s32 2, %v56
  %v58 = vrot.slane %v43, %v57
  %v59 = vlaneseq
  %v60 = vshrl.u32 %v59, 7
  %v61 = vsub.s32 3, %v60
  %v62 = vrot.slane %v43, %v61
  %v63 = vlaneseq
  %v64 = vshrl.u32 %v63, 7
  %v65 = vsub.s32 4, %v64
  %v66 = vrot.slane %v43, %v65
  %v67 = vlaneseq
  %v68 = vshrl.u32 %v67, 7
  %v69 = vsub.s32 5, %v68
  %v70 = vrot.slane %v43, %v69
  %v71 = vlaneseq
  %v72 = vshrl.u32 %v71, 7
  %v73 = vsub.s32 6, %v72
  %v74 = vrot.slane %v43, %v73
  %v75 = vlaneseq
  %v76 = vshrl.u32 %v75, 7
  %v77 = vsub.s32 7, %v76
  %v78 = vrot.slane %v43, %v77
  %v79 = vlaneseq
  %v80 = vshrl.u32 %v79, 7
  %v81 = vsub.s32 0, %v80
  %v82 = vrot.slane %v44, %v81
  %v83 = vlaneseq
  %v84 = vshrl.u32 %v83, 7
  %v85 = vsub.s32 1, %v84
  %v86 = vrot.slane %v44, %v85
  %v87 = vlaneseq
  %v88 = vshrl.u32 %v87, 7
  %v89 = vsub.s32 2, %v88
  %v90 = vrot.slane %v44, %v89
  %v91 = vlaneseq
  %v92 = vshrl.u32 %v91, 7
  %v93 = vsub.s32 3, %v92
  %v94 = vrot.slane %v44, %v93
  %v95 = vlaneseq
  %v96 = vshrl.u32 %v95, 7
  %v97 = vsub.s32 4, %v96
  %v98 = vrot.slane %v44, %v97
  %v99 = vlaneseq
  %v100 = vshrl.u32 %v99, 7
  %v101 = vsub.s32 5, %v100
  %v102 = vrot.slane %v44, %v101
  %v103 = vlaneseq
  %v104 = vshrl.u32 %v103, 7
  %v105 = vsub.s32 6, %v104
  %v106 = vrot.slane %v44, %v105
  %v107 = vlaneseq
  %v108 = vshrl.u32 %v107, 7
  %v109 = vsub.s32 7, %v108
  %v110 = vrot.slane %v44, %v109
  %v127 = vsub.f32 %v27, %v50
  %v128 = vsub.f32 %v28, %v54
  %v129 = vsub.f32 %v29, %v58
  %v130 = vsub.f32 %v30, %v62
  %v131 = vsub.f32 %v31, %v66
  %v132 = vsub.f32 %v32, %v70
  %v133 = vsub.f32 %v33, %v74
  %v134 = vsub.f32 %v34, %v78
  %v135 = vsub.f32 %v35, %v82
  %v136 = vsub.f32 %v36, %v86
  %v137 = vsub.f32 %v37, %v90
  %v138 = vsub.f32 %v38, %v94
  %v139 = vsub.f32 %v39, %v98
  %v140 = vsub.f32 %v40, %v102
  %v141 = vsub.f32 %v41, %v106
  %v142 = vsub.f32 %v42, %v110
  %v143 = vld [vmem:[%s1] sm:$0xff]
  %v144 = vld [vmem:[%s1 + $0x8] sm:$0xff]
  %v147 = vlaneseq
  %v148 = vshrl.u32 %v147, 7
  %v149 = vsub.s32 0, %v148
  %v150 = vrot.slane %v143, %v149
  %v151 = vlaneseq
  %v152 = vshrl.u32 %v151, 7
  %v153 = vsub.s32 1, %v152
  %v154 = vrot.slane %v143, %v153
  %v155 = vlaneseq
  %v156 = vshrl.u32 %v155, 7
  %v157 = vsub.s32 2, %v156
  %v158 = vrot.slane %v143, %v157
  %v159 = vlaneseq
  %v160 = vshrl.u32 %v159, 7
  %v161 = vsub.s32 3, %v160
  %v162 = vrot.slane %v143, %v161
  %v163 = vlaneseq
  %v164 = vshrl.u32 %v163, 7
  %v165 = vsub.s32 4, %v164
  %v166 = vrot.slane %v143, %v165
  %v167 = vlaneseq
  %v168 = vshrl.u32 %v167, 7
  %v169 = vsub.s32 5, %v168
  %v170 = vrot.slane %v143, %v169
  %v171 = vlaneseq
  %v172 = vshrl.u32 %v171, 7
  %v173 = vsub.s32 6, %v172
  %v174 = vrot.slane %v143, %v173
  %v175 = vlaneseq
  %v176 = vshrl.u32 %v175, 7
  %v177 = vsub.s32 7, %v176
  %v178 = vrot.slane %v143, %v177
  %v179 = vlaneseq
  %v180 = vshrl.u32 %v179, 7
  %v181 = vsub.s32 0, %v180
  %v182 = vrot.slane %v144, %v181
  %v183 = vlaneseq
  %v184 = vshrl.u32 %v183, 7
  %v185 = vsub.s32 1, %v184
  %v186 = vrot.slane %v144, %v185
  %v187 = vlaneseq
  %v188 = vshrl.u32 %v187, 7
  %v189 = vsub.s32 2, %v188
  %v190 = vrot.slane %v144, %v189
  %v191 = vlaneseq
  %v192 = vshrl.u32 %v191, 7
  %v193 = vsub.s32 3, %v192
  %v194 = vrot.slane %v144, %v193
  %v195 = vlaneseq
  %v196 = vshrl.u32 %v195, 7
  %v197 = vsub.s32 4, %v196
  %v198 = vrot.slane %v144, %v197
  %v199 = vlaneseq
  %v200 = vshrl.u32 %v199, 7
  %v201 = vsub.s32 5, %v200
  %v202 = vrot.slane %v144, %v201
  %v203 = vlaneseq
  %v204 = vshrl.u32 %v203, 7
  %v205 = vsub.s32 6, %v204
  %v206 = vrot.slane %v144, %v205
  %v207 = vlaneseq
  %v208 = vshrl.u32 %v207, 7
  %v209 = vsub.s32 7, %v208
  %v210 = vrot.slane %v144, %v209
  %v227 = vmul.f32 %v127, %v150
  %v228 = vmul.f32 %v128, %v154
  %v229 = vmul.f32 %v129, %v158
  %v230 = vmul.f32 %v130, %v162
  %v231 = vmul.f32 %v131, %v166
  %v232 = vmul.f32 %v132, %v170
  %v233 = vmul.f32 %v133, %v174
  %v234 = vmul.f32 %v134, %v178
  %v235 = vmul.f32 %v135, %v182
  %v236 = vmul.f32 %v136, %v186
  %v237 = vmul.f32 %v137, %v190
  %v238 = vmul.f32 %v138, %v194
  %v239 = vmul.f32 %v139, %v198
  %v240 = vmul.f32 %v140, %v202
  %v241 = vmul.f32 %v141, %v206
  %v242 = vmul.f32 %v142, %v210
  %vm243 = vcmp.gt.f32.partialorder %v227, 0.0
  %vm244 = vcmp.gt.f32.partialorder %v228, 0.0
  %vm245 = vcmp.gt.f32.partialorder %v229, 0.0
  %vm246 = vcmp.gt.f32.partialorder %v230, 0.0
  %vm247 = vcmp.gt.f32.partialorder %v231, 0.0
  %vm248 = vcmp.gt.f32.partialorder %v232, 0.0
  %vm249 = vcmp.gt.f32.partialorder %v233, 0.0
  %vm250 = vcmp.gt.f32.partialorder %v234, 0.0
  %vm251 = vcmp.gt.f32.partialorder %v235, 0.0
  %vm252 = vcmp.gt.f32.partialorder %v236, 0.0
  %vm253 = vcmp.gt.f32.partialorder %v237, 0.0
  %vm254 = vcmp.gt.f32.partialorder %v238, 0.0
  %vm255 = vcmp.gt.f32.partialorder %v239, 0.0
  %vm256 = vcmp.gt.f32.partialorder %v240, 0.0
  %vm257 = vcmp.gt.f32.partialorder %v241, 0.0
  %vm258 = vcmp.gt.f32.partialorder %v242, 0.0
  %v259 = vmul.f32 %v227, 0.2
  %v260 = vmul.f32 %v228, 0.2
  %v261 = vmul.f32 %v229, 0.2
  %v262 = vmul.f32 %v230, 0.2
  %v263 = vmul.f32 %v231, 0.2
  %v264 = vmul.f32 %v232, 0.2
  %v265 = vmul.f32 %v233, 0.2
  %v266 = vmul.f32 %v234, 0.2
  %v267 = vmul.f32 %v235, 0.2
  %v268 = vmul.f32 %v236, 0.2
  %v269 = vmul.f32 %v237, 0.2
  %v270 = vmul.f32 %v238, 0.2
  %v271 = vmul.f32 %v239, 0.2
  %v272 = vmul.f32 %v240, 0.2
  %v273 = vmul.f32 %v241, 0.2
  %v274 = vmul.f32 %v242, 0.2
  %v275 = vsel %vm243, %v227, %v259
  %v276 = vsel %vm244, %v228, %v260
  %v277 = vsel %vm245, %v229, %v261
  %v278 = vsel %vm246, %v230, %v262
  %v279 = vsel %vm247, %v231, %v263
  %v280 = vsel %vm248, %v232, %v264
  %v281 = vsel %vm249, %v233, %v265
  %v282 = vsel %vm250, %v234, %v266
  %v283 = vsel %vm251, %v235, %v267
  %v284 = vsel %vm252, %v236, %v268
  %v285 = vsel %vm253, %v237, %v269
  %v286 = vsel %vm254, %v238, %v270
  %v287 = vsel %vm255, %v239, %v271
  %v288 = vsel %vm256, %v240, %v272
  %v289 = vsel %vm257, %v241, %v273
  %v290 = vsel %vm258, %v242, %v274
  %v291 = vpack.c.bf16 %v275, %v275
  %v292 = vpack.c.bf16 %v276, %v276
  %v293 = vpack.c.bf16 %v277, %v277
  %v294 = vpack.c.bf16 %v278, %v278
  %v295 = vpack.c.bf16 %v279, %v279
  %v296 = vpack.c.bf16 %v280, %v280
  %v297 = vpack.c.bf16 %v281, %v281
  %v298 = vpack.c.bf16 %v282, %v282
  %v299 = vpack.c.bf16 %v283, %v283
  %v300 = vpack.c.bf16 %v284, %v284
  %v301 = vpack.c.bf16 %v285, %v285
  %v302 = vpack.c.bf16 %v286, %v286
  %v303 = vpack.c.bf16 %v287, %v287
  %v304 = vpack.c.bf16 %v288, %v288
  %v305 = vpack.c.bf16 %v289, %v289
  %v306 = vpack.c.bf16 %v290, %v290
  %v307 = vld [vmem:[%s3] sm:$0xff]
  %v308 = vld [vmem:[%s3 + $0x8] sm:$0xff]
  %v309 = vld [vmem:[%s3 + $0x10] sm:$0xff]
  %v310 = vld [vmem:[%s3 + $0x18] sm:$0xff]
  %v311 = vld [vmem:[%s3 + $0x20] sm:$0xff]
  %v312 = vld [vmem:[%s3 + $0x28] sm:$0xff]
  %v313 = vld [vmem:[%s3 + $0x30] sm:$0xff]
  %v314 = vld [vmem:[%s3 + $0x38] sm:$0xff]
  %v315 = vld [vmem:[%s3 + $0x40] sm:$0xff]
  %v316 = vld [vmem:[%s3 + $0x48] sm:$0xff]
  %v317 = vld [vmem:[%s3 + $0x50] sm:$0xff]
  %v318 = vld [vmem:[%s3 + $0x58] sm:$0xff]
  %v319 = vld [vmem:[%s3 + $0x60] sm:$0xff]
  %v320 = vld [vmem:[%s3 + $0x68] sm:$0xff]
  %v321 = vld [vmem:[%s3 + $0x70] sm:$0xff]
  %v322 = vld [vmem:[%s3 + $0x78] sm:$0xff]
  %v323 = vld [vmem:[%s3 + $0x80] sm:$0xff]
  %v324 = vld [vmem:[%s3 + $0x88] sm:$0xff]
  %v325 = vld [vmem:[%s3 + $0x90] sm:$0xff]
  %v326 = vld [vmem:[%s3 + $0x98] sm:$0xff]
  %v327 = vld [vmem:[%s3 + $0xa0] sm:$0xff]
  %v328 = vld [vmem:[%s3 + $0xa8] sm:$0xff]
  %v329 = vld [vmem:[%s3 + $0xb0] sm:$0xff]
  %v330 = vld [vmem:[%s3 + $0xb8] sm:$0xff]
  %v331 = vld [vmem:[%s3 + $0xc0] sm:$0xff]
  %v332 = vld [vmem:[%s3 + $0xc8] sm:$0xff]
  %v333 = vld [vmem:[%s3 + $0xd0] sm:$0xff]
  %v334 = vld [vmem:[%s3 + $0xd8] sm:$0xff]
  %v335 = vld [vmem:[%s3 + $0xe0] sm:$0xff]
  %v336 = vld [vmem:[%s3 + $0xe8] sm:$0xff]
  %v337 = vld [vmem:[%s3 + $0xf0] sm:$0xff]
  %v338 = vld [vmem:[%s3 + $0xf8] sm:$0xff]
  %v339 = vld [vmem:[%s3 + $0x100] sm:$0xff]
  %v340 = vld [vmem:[%s3 + $0x108] sm:$0xff]
  %v341 = vld [vmem:[%s3 + $0x110] sm:$0xff]
  %v342 = vld [vmem:[%s3 + $0x118] sm:$0xff]
  %v343 = vld [vmem:[%s3 + $0x120] sm:$0xff]
  %v344 = vld [vmem:[%s3 + $0x128] sm:$0xff]
  %v345 = vld [vmem:[%s3 + $0x130] sm:$0xff]
  %v346 = vld [vmem:[%s3 + $0x138] sm:$0xff]
  %v347 = vld [vmem:[%s3 + $0x140] sm:$0xff]
  %v348 = vld [vmem:[%s3 + $0x148] sm:$0xff]
  %v349 = vld [vmem:[%s3 + $0x150] sm:$0xff]
  %v350 = vld [vmem:[%s3 + $0x158] sm:$0xff]
  %v351 = vld [vmem:[%s3 + $0x160] sm:$0xff]
  %v352 = vld [vmem:[%s3 + $0x168] sm:$0xff]
  %v353 = vld [vmem:[%s3 + $0x170] sm:$0xff]
  %v354 = vld [vmem:[%s3 + $0x178] sm:$0xff]
  %v355 = vld [vmem:[%s3 + $0x180] sm:$0xff]
  %v356 = vld [vmem:[%s3 + $0x188] sm:$0xff]
  %v357 = vld [vmem:[%s3 + $0x190] sm:$0xff]
  %v358 = vld [vmem:[%s3 + $0x198] sm:$0xff]
  %v359 = vld [vmem:[%s3 + $0x1a0] sm:$0xff]
  %v360 = vld [vmem:[%s3 + $0x1a8] sm:$0xff]
  %v361 = vld [vmem:[%s3 + $0x1b0] sm:$0xff]
  %v362 = vld [vmem:[%s3 + $0x1b8] sm:$0xff]
  %v363 = vld [vmem:[%s3 + $0x1c0] sm:$0xff]
  %v364 = vld [vmem:[%s3 + $0x1c8] sm:$0xff]
  %v365 = vld [vmem:[%s3 + $0x1d0] sm:$0xff]
  %v366 = vld [vmem:[%s3 + $0x1d8] sm:$0xff]
  %v367 = vld [vmem:[%s3 + $0x1e0] sm:$0xff]
  %v368 = vld [vmem:[%s3 + $0x1e8] sm:$0xff]
  %v369 = vld [vmem:[%s3 + $0x1f0] sm:$0xff]
  %v370 = vld [vmem:[%s3 + $0x1f8] sm:$0xff]
  %v371 = vld [vmem:[%s3 + $0x200] sm:$0xff]
  %v372 = vld [vmem:[%s3 + $0x208] sm:$0xff]
  %v373 = vld [vmem:[%s3 + $0x210] sm:$0xff]
  %v374 = vld [vmem:[%s3 + $0x218] sm:$0xff]
  %v375 = vld [vmem:[%s3 + $0x220] sm:$0xff]
  %v376 = vld [vmem:[%s3 + $0x228] sm:$0xff]
  %v377 = vld [vmem:[%s3 + $0x230] sm:$0xff]
  %v378 = vld [vmem:[%s3 + $0x238] sm:$0xff]
  %v379 = vld [vmem:[%s3 + $0x240] sm:$0xff]
  %v380 = vld [vmem:[%s3 + $0x248] sm:$0xff]
  %v381 = vld [vmem:[%s3 + $0x250] sm:$0xff]
  %v382 = vld [vmem:[%s3 + $0x258] sm:$0xff]
  %v383 = vld [vmem:[%s3 + $0x260] sm:$0xff]
  %v384 = vld [vmem:[%s3 + $0x268] sm:$0xff]
  %v385 = vld [vmem:[%s3 + $0x270] sm:$0xff]
  %v386 = vld [vmem:[%s3 + $0x278] sm:$0xff]
  %v387 = vld [vmem:[%s3 + $0x280] sm:$0xff]
  %v388 = vld [vmem:[%s3 + $0x288] sm:$0xff]
  %v389 = vld [vmem:[%s3 + $0x290] sm:$0xff]
  %v390 = vld [vmem:[%s3 + $0x298] sm:$0xff]
  %v391 = vld [vmem:[%s3 + $0x2a0] sm:$0xff]
  %v392 = vld [vmem:[%s3 + $0x2a8] sm:$0xff]
  %v393 = vld [vmem:[%s3 + $0x2b0] sm:$0xff]
  %v394 = vld [vmem:[%s3 + $0x2b8] sm:$0xff]
  %v395 = vld [vmem:[%s3 + $0x2c0] sm:$0xff]
  %v396 = vld [vmem:[%s3 + $0x2c8] sm:$0xff]
  %v397 = vld [vmem:[%s3 + $0x2d0] sm:$0xff]
  %v398 = vld [vmem:[%s3 + $0x2d8] sm:$0xff]
  %v399 = vld [vmem:[%s3 + $0x2e0] sm:$0xff]
  %v400 = vld [vmem:[%s3 + $0x2e8] sm:$0xff]
  %v401 = vld [vmem:[%s3 + $0x2f0] sm:$0xff]
  %v402 = vld [vmem:[%s3 + $0x2f8] sm:$0xff]
  %v403 = vld [vmem:[%s3 + $0x300] sm:$0xff]
  %v404 = vld [vmem:[%s3 + $0x308] sm:$0xff]
  %v405 = vld [vmem:[%s3 + $0x310] sm:$0xff]
  %v406 = vld [vmem:[%s3 + $0x318] sm:$0xff]
  %v407 = vld [vmem:[%s3 + $0x320] sm:$0xff]
  %v408 = vld [vmem:[%s3 + $0x328] sm:$0xff]
  %v409 = vld [vmem:[%s3 + $0x330] sm:$0xff]
  %v410 = vld [vmem:[%s3 + $0x338] sm:$0xff]
  %v411 = vld [vmem:[%s3 + $0x340] sm:$0xff]
  %v412 = vld [vmem:[%s3 + $0x348] sm:$0xff]
  %v413 = vld [vmem:[%s3 + $0x350] sm:$0xff]
  %v414 = vld [vmem:[%s3 + $0x358] sm:$0xff]
  %v415 = vld [vmem:[%s3 + $0x360] sm:$0xff]
  %v416 = vld [vmem:[%s3 + $0x368] sm:$0xff]
  %v417 = vld [vmem:[%s3 + $0x370] sm:$0xff]
  %v418 = vld [vmem:[%s3 + $0x378] sm:$0xff]
  %v419 = vld [vmem:[%s3 + $0x380] sm:$0xff]
  %v420 = vld [vmem:[%s3 + $0x388] sm:$0xff]
  %v421 = vld [vmem:[%s3 + $0x390] sm:$0xff]
  %v422 = vld [vmem:[%s3 + $0x398] sm:$0xff]
  %v423 = vld [vmem:[%s3 + $0x3a0] sm:$0xff]
  %v424 = vld [vmem:[%s3 + $0x3a8] sm:$0xff]
  %v425 = vld [vmem:[%s3 + $0x3b0] sm:$0xff]
  %v426 = vld [vmem:[%s3 + $0x3b8] sm:$0xff]
  %v427 = vld [vmem:[%s3 + $0x3c0] sm:$0xff]
  %v428 = vld [vmem:[%s3 + $0x3c8] sm:$0xff]
  %v429 = vld [vmem:[%s3 + $0x3d0] sm:$0xff]
  %v430 = vld [vmem:[%s3 + $0x3d8] sm:$0xff]
  %v431 = vld [vmem:[%s3 + $0x3e0] sm:$0xff]
  %v432 = vld [vmem:[%s3 + $0x3e8] sm:$0xff]
  %v433 = vld [vmem:[%s3 + $0x3f0] sm:$0xff]
  %v434 = vld [vmem:[%s3 + $0x3f8] sm:$0xff]
  %v435 = vld [vmem:[%s3 + $0x400] sm:$0xff]
  %v436 = vld [vmem:[%s3 + $0x408] sm:$0xff]
  %v437 = vld [vmem:[%s3 + $0x410] sm:$0xff]
  %v438 = vld [vmem:[%s3 + $0x418] sm:$0xff]
  %v439 = vld [vmem:[%s3 + $0x420] sm:$0xff]
  %v440 = vld [vmem:[%s3 + $0x428] sm:$0xff]
  %v441 = vld [vmem:[%s3 + $0x430] sm:$0xff]
  %v442 = vld [vmem:[%s3 + $0x438] sm:$0xff]
  %v443 = vld [vmem:[%s3 + $0x440] sm:$0xff]
  %v444 = vld [vmem:[%s3 + $0x448] sm:$0xff]
  %v445 = vld [vmem:[%s3 + $0x450] sm:$0xff]
  %v446 = vld [vmem:[%s3 + $0x458] sm:$0xff]
  %v447 = vld [vmem:[%s3 + $0x460] sm:$0xff]
  %v448 = vld [vmem:[%s3 + $0x468] sm:$0xff]
  %v449 = vld [vmem:[%s3 + $0x470] sm:$0xff]
  %v450 = vld [vmem:[%s3 + $0x478] sm:$0xff]
  %v451 = vld [vmem:[%s3 + $0x480] sm:$0xff]
  %v452 = vld [vmem:[%s3 + $0x488] sm:$0xff]
  %v453 = vld [vmem:[%s3 + $0x490] sm:$0xff]
  %v454 = vld [vmem:[%s3 + $0x498] sm:$0xff]
  %v455 = vld [vmem:[%s3 + $0x4a0] sm:$0xff]
  %v456 = vld [vmem:[%s3 + $0x4a8] sm:$0xff]
  %v457 = vld [vmem:[%s3 + $0x4b0] sm:$0xff]
  %v458 = vld [vmem:[%s3 + $0x4b8] sm:$0xff]
  %v459 = vld [vmem:[%s3 + $0x4c0] sm:$0xff]
  %v460 = vld [vmem:[%s3 + $0x4c8] sm:$0xff]
  %v461 = vld [vmem:[%s3 + $0x4d0] sm:$0xff]
  %v462 = vld [vmem:[%s3 + $0x4d8] sm:$0xff]
  %v463 = vld [vmem:[%s3 + $0x4e0] sm:$0xff]
  %v464 = vld [vmem:[%s3 + $0x4e8] sm:$0xff]
  %v465 = vld [vmem:[%s3 + $0x4f0] sm:$0xff]
  %v466 = vld [vmem:[%s3 + $0x4f8] sm:$0xff]
  %v467 = vld [vmem:[%s3 + $0x500] sm:$0xff]
  %v468 = vld [vmem:[%s3 + $0x508] sm:$0xff]
  %v469 = vld [vmem:[%s3 + $0x510] sm:$0xff]
  %v470 = vld [vmem:[%s3 + $0x518] sm:$0xff]
  %v471 = vld [vmem:[%s3 + $0x520] sm:$0xff]
  %v472 = vld [vmem:[%s3 + $0x528] sm:$0xff]
  %v473 = vld [vmem:[%s3 + $0x530] sm:$0xff]
  %v474 = vld [vmem:[%s3 + $0x538] sm:$0xff]
  %v475 = vld [vmem:[%s3 + $0x540] sm:$0xff]
  %v476 = vld [vmem:[%s3 + $0x548] sm:$0xff]
  %v477 = vld [vmem:[%s3 + $0x550] sm:$0xff]
  %v478 = vld [vmem:[%s3 + $0x558] sm:$0xff]
  %v479 = vld [vmem:[%s3 + $0x560] sm:$0xff]
  %v480 = vld [vmem:[%s3 + $0x568] sm:$0xff]
  %v481 = vld [vmem:[%s3 + $0x570] sm:$0xff]
  %v482 = vld [vmem:[%s3 + $0x578] sm:$0xff]
  %v483 = vld [vmem:[%s3 + $0x580] sm:$0xff]
  %v484 = vld [vmem:[%s3 + $0x588] sm:$0xff]
  %v485 = vld [vmem:[%s3 + $0x590] sm:$0xff]
  %v486 = vld [vmem:[%s3 + $0x598] sm:$0xff]
  %v487 = vld [vmem:[%s3 + $0x5a0] sm:$0xff]
  %v488 = vld [vmem:[%s3 + $0x5a8] sm:$0xff]
  %v489 = vld [vmem:[%s3 + $0x5b0] sm:$0xff]
  %v490 = vld [vmem:[%s3 + $0x5b8] sm:$0xff]
  %v491 = vld [vmem:[%s3 + $0x5c0] sm:$0xff]
  %v492 = vld [vmem:[%s3 + $0x5c8] sm:$0xff]
  %v493 = vld [vmem:[%s3 + $0x5d0] sm:$0xff]
  %v494 = vld [vmem:[%s3 + $0x5d8] sm:$0xff]
  %v495 = vld [vmem:[%s3 + $0x5e0] sm:$0xff]
  %v496 = vld [vmem:[%s3 + $0x5e8] sm:$0xff]
  %v497 = vld [vmem:[%s3 + $0x5f0] sm:$0xff]
  %v498 = vld [vmem:[%s3 + $0x5f8] sm:$0xff]
  %v499 = vld [vmem:[%s3 + $0x600] sm:$0xff]
  %v500 = vld [vmem:[%s3 + $0x608] sm:$0xff]
  %v501 = vld [vmem:[%s3 + $0x610] sm:$0xff]
  %v502 = vld [vmem:[%s3 + $0x618] sm:$0xff]
  %v503 = vld [vmem:[%s3 + $0x620] sm:$0xff]
  %v504 = vld [vmem:[%s3 + $0x628] sm:$0xff]
  %v505 = vld [vmem:[%s3 + $0x630] sm:$0xff]
  %v506 = vld [vmem:[%s3 + $0x638] sm:$0xff]
  %v507 = vld [vmem:[%s3 + $0x640] sm:$0xff]
  %v508 = vld [vmem:[%s3 + $0x648] sm:$0xff]
  %v509 = vld [vmem:[%s3 + $0x650] sm:$0xff]
  %v510 = vld [vmem:[%s3 + $0x658] sm:$0xff]
  %v511 = vld [vmem:[%s3 + $0x660] sm:$0xff]
  %v512 = vld [vmem:[%s3 + $0x668] sm:$0xff]
  %v513 = vld [vmem:[%s3 + $0x670] sm:$0xff]
  %v514 = vld [vmem:[%s3 + $0x678] sm:$0xff]
  %v515 = vld [vmem:[%s3 + $0x680] sm:$0xff]
  %v516 = vld [vmem:[%s3 + $0x688] sm:$0xff]
  %v517 = vld [vmem:[%s3 + $0x690] sm:$0xff]
  %v518 = vld [vmem:[%s3 + $0x698] sm:$0xff]
  %v519 = vld [vmem:[%s3 + $0x6a0] sm:$0xff]
  %v520 = vld [vmem:[%s3 + $0x6a8] sm:$0xff]
  %v521 = vld [vmem:[%s3 + $0x6b0] sm:$0xff]
  %v522 = vld [vmem:[%s3 + $0x6b8] sm:$0xff]
  %v523 = vld [vmem:[%s3 + $0x6c0] sm:$0xff]
  %v524 = vld [vmem:[%s3 + $0x6c8] sm:$0xff]
  %v525 = vld [vmem:[%s3 + $0x6d0] sm:$0xff]
  %v526 = vld [vmem:[%s3 + $0x6d8] sm:$0xff]
  %v527 = vld [vmem:[%s3 + $0x6e0] sm:$0xff]
  %v528 = vld [vmem:[%s3 + $0x6e8] sm:$0xff]
  %v529 = vld [vmem:[%s3 + $0x6f0] sm:$0xff]
  %v530 = vld [vmem:[%s3 + $0x6f8] sm:$0xff]
  %v531 = vld [vmem:[%s3 + $0x700] sm:$0xff]
  %v532 = vld [vmem:[%s3 + $0x708] sm:$0xff]
  %v533 = vld [vmem:[%s3 + $0x710] sm:$0xff]
  %v534 = vld [vmem:[%s3 + $0x718] sm:$0xff]
  %v535 = vld [vmem:[%s3 + $0x720] sm:$0xff]
  %v536 = vld [vmem:[%s3 + $0x728] sm:$0xff]
  %v537 = vld [vmem:[%s3 + $0x730] sm:$0xff]
  %v538 = vld [vmem:[%s3 + $0x738] sm:$0xff]
  %v539 = vld [vmem:[%s3 + $0x740] sm:$0xff]
  %v540 = vld [vmem:[%s3 + $0x748] sm:$0xff]
  %v541 = vld [vmem:[%s3 + $0x750] sm:$0xff]
  %v542 = vld [vmem:[%s3 + $0x758] sm:$0xff]
  %v543 = vld [vmem:[%s3 + $0x760] sm:$0xff]
  %v544 = vld [vmem:[%s3 + $0x768] sm:$0xff]
  %v545 = vld [vmem:[%s3 + $0x770] sm:$0xff]
  %v546 = vld [vmem:[%s3 + $0x778] sm:$0xff]
  %v547 = vld [vmem:[%s3 + $0x780] sm:$0xff]
  %v548 = vld [vmem:[%s3 + $0x788] sm:$0xff]
  %v549 = vld [vmem:[%s3 + $0x790] sm:$0xff]
  %v550 = vld [vmem:[%s3 + $0x798] sm:$0xff]
  %v551 = vld [vmem:[%s3 + $0x7a0] sm:$0xff]
  %v552 = vld [vmem:[%s3 + $0x7a8] sm:$0xff]
  %v553 = vld [vmem:[%s3 + $0x7b0] sm:$0xff]
  %v554 = vld [vmem:[%s3 + $0x7b8] sm:$0xff]
  %v555 = vld [vmem:[%s3 + $0x7c0] sm:$0xff]
  %v556 = vld [vmem:[%s3 + $0x7c8] sm:$0xff]
  %v557 = vld [vmem:[%s3 + $0x7d0] sm:$0xff]
  %v558 = vld [vmem:[%s3 + $0x7d8] sm:$0xff]
  %v559 = vld [vmem:[%s3 + $0x7e0] sm:$0xff]
  %v560 = vld [vmem:[%s3 + $0x7e8] sm:$0xff]
  %v561 = vld [vmem:[%s3 + $0x7f0] sm:$0xff]
  %v562 = vld [vmem:[%s3 + $0x7f8] sm:$0xff]
  %v819 = vunpack.c.l.b16 %v307
  %v820 = vunpack.c.h.b16 %v307
  %v821 = vunpack.c.l.b16 %v308
  %v822 = vunpack.c.h.b16 %v308
  %v823 = vunpack.c.l.b16 %v309
  %v824 = vunpack.c.h.b16 %v309
  %v825 = vunpack.c.l.b16 %v310
  %v826 = vunpack.c.h.b16 %v310
  %v827 = vunpack.c.l.b16 %v311
  %v828 = vunpack.c.h.b16 %v311
  %v829 = vunpack.c.l.b16 %v312
  %v830 = vunpack.c.h.b16 %v312
  %v831 = vunpack.c.l.b16 %v313
  %v832 = vunpack.c.h.b16 %v313
  %v833 = vunpack.c.l.b16 %v314
  %v834 = vunpack.c.h.b16 %v314
  %v835 = vunpack.c.l.b16 %v315
  %v836 = vunpack.c.h.b16 %v315
  %v837 = vunpack.c.l.b16 %v316
  %v838 = vunpack.c.h.b16 %v316
  %v839 = vunpack.c.l.b16 %v317
  %v840 = vunpack.c.h.b16 %v317
  %v841 = vunpack.c.l.b16 %v318
  %v842 = vunpack.c.h.b16 %v318
  %v843 = vunpack.c.l.b16 %v319
  %v844 = vunpack.c.h.b16 %v319
  %v845 = vunpack.c.l.b16 %v320
  %v846 = vunpack.c.h.b16 %v320
  %v847 = vunpack.c.l.b16 %v321
  %v848 = vunpack.c.h.b16 %v321
  %v849 = vunpack.c.l.b16 %v322
  %v850 = vunpack.c.h.b16 %v322
  %v851 = vunpack.c.l.b16 %v323
  %v852 = vunpack.c.h.b16 %v323
  %v853 = vunpack.c.l.b16 %v324
  %v854 = vunpack.c.h.b16 %v324
  %v855 = vunpack.c.l.b16 %v325
  %v856 = vunpack.c.h.b16 %v325
  %v857 = vunpack.c.l.b16 %v326
  %v858 = vunpack.c.h.b16 %v326
  %v859 = vunpack.c.l.b16 %v327
  %v860 = vunpack.c.h.b16 %v327
  %v861 = vunpack.c.l.b16 %v328
  %v862 = vunpack.c.h.b16 %v328
  %v863 = vunpack.c.l.b16 %v329
  %v864 = vunpack.c.h.b16 %v329
  %v865 = vunpack.c.l.b16 %v330
  %v866 = vunpack.c.h.b16 %v330
  %v867 = vunpack.c.l.b16 %v331
  %v868 = vunpack.c.h.b16 %v331
  %v869 = vunpack.c.l.b16 %v332
  %v870 = vunpack.c.h.b16 %v332
  %v871 = vunpack.c.l.b16 %v333
  %v872 = vunpack.c.h.b16 %v333
  %v873 = vunpack.c.l.b16 %v334
  %v874 = vunpack.c.h.b16 %v334
  %v875 = vunpack.c.l.b16 %v335
  %v876 = vunpack.c.h.b16 %v335
  %v877 = vunpack.c.l.b16 %v336
  %v878 = vunpack.c.h.b16 %v336
  %v879 = vunpack.c.l.b16 %v337
  %v880 = vunpack.c.h.b16 %v337
  %v881 = vunpack.c.l.b16 %v338
  %v882 = vunpack.c.h.b16 %v338
  %v883 = vunpack.c.l.b16 %v339
  %v884 = vunpack.c.h.b16 %v339
  %v885 = vunpack.c.l.b16 %v340
  %v886 = vunpack.c.h.b16 %v340
  %v887 = vunpack.c.l.b16 %v341
  %v888 = vunpack.c.h.b16 %v341
  %v889 = vunpack.c.l.b16 %v342
  %v890 = vunpack.c.h.b16 %v342
  %v891 = vunpack.c.l.b16 %v343
  %v892 = vunpack.c.h.b16 %v343
  %v893 = vunpack.c.l.b16 %v344
  %v894 = vunpack.c.h.b16 %v344
  %v895 = vunpack.c.l.b16 %v345
  %v896 = vunpack.c.h.b16 %v345
  %v897 = vunpack.c.l.b16 %v346
  %v898 = vunpack.c.h.b16 %v346
  %v899 = vunpack.c.l.b16 %v347
  %v900 = vunpack.c.h.b16 %v347
  %v901 = vunpack.c.l.b16 %v348
  %v902 = vunpack.c.h.b16 %v348
  %v903 = vunpack.c.l.b16 %v349
  %v904 = vunpack.c.h.b16 %v349
  %v905 = vunpack.c.l.b16 %v350
  %v906 = vunpack.c.h.b16 %v350
  %v907 = vunpack.c.l.b16 %v351
  %v908 = vunpack.c.h.b16 %v351
  %v909 = vunpack.c.l.b16 %v352
  %v910 = vunpack.c.h.b16 %v352
  %v911 = vunpack.c.l.b16 %v353
  %v912 = vunpack.c.h.b16 %v353
  %v913 = vunpack.c.l.b16 %v354
  %v914 = vunpack.c.h.b16 %v354
  %v915 = vunpack.c.l.b16 %v355
  %v916 = vunpack.c.h.b16 %v355
  %v917 = vunpack.c.l.b16 %v356
  %v918 = vunpack.c.h.b16 %v356
  %v919 = vunpack.c.l.b16 %v357
  %v920 = vunpack.c.h.b16 %v357
  %v921 = vunpack.c.l.b16 %v358
  %v922 = vunpack.c.h.b16 %v358
  %v923 = vunpack.c.l.b16 %v359
  %v924 = vunpack.c.h.b16 %v359
  %v925 = vunpack.c.l.b16 %v360
  %v926 = vunpack.c.h.b16 %v360
  %v927 = vunpack.c.l.b16 %v361
  %v928 = vunpack.c.h.b16 %v361
  %v929 = vunpack.c.l.b16 %v362
  %v930 = vunpack.c.h.b16 %v362
  %v931 = vunpack.c.l.b16 %v363
  %v932 = vunpack.c.h.b16 %v363
  %v933 = vunpack.c.l.b16 %v364
  %v934 = vunpack.c.h.b16 %v364
  %v935 = vunpack.c.l.b16 %v365
  %v936 = vunpack.c.h.b16 %v365
  %v937 = vunpack.c.l.b16 %v366
  %v938 = vunpack.c.h.b16 %v366
  %v939 = vunpack.c.l.b16 %v367
  %v940 = vunpack.c.h.b16 %v367
  %v941 = vunpack.c.l.b16 %v368
  %v942 = vunpack.c.h.b16 %v368
  %v943 = vunpack.c.l.b16 %v369
  %v944 = vunpack.c.h.b16 %v369
  %v945 = vunpack.c.l.b16 %v370
  %v946 = vunpack.c.h.b16 %v370
  %v947 = vunpack.c.l.b16 %v371
  %v948 = vunpack.c.h.b16 %v371
  %v949 = vunpack.c.l.b16 %v372
  %v950 = vunpack.c.h.b16 %v372
  %v951 = vunpack.c.l.b16 %v373
  %v952 = vunpack.c.h.b16 %v373
  %v953 = vunpack.c.l.b16 %v374
  %v954 = vunpack.c.h.b16 %v374
  %v955 = vunpack.c.l.b16 %v375
  %v956 = vunpack.c.h.b16 %v375
  %v957 = vunpack.c.l.b16 %v376
  %v958 = vunpack.c.h.b16 %v376
  %v959 = vunpack.c.l.b16 %v377
  %v960 = vunpack.c.h.b16 %v377
  %v961 = vunpack.c.l.b16 %v378
  %v962 = vunpack.c.h.b16 %v378
  %v963 = vunpack.c.l.b16 %v379
  %v964 = vunpack.c.h.b16 %v379
  %v965 = vunpack.c.l.b16 %v380
  %v966 = vunpack.c.h.b16 %v380
  %v967 = vunpack.c.l.b16 %v381
  %v968 = vunpack.c.h.b16 %v381
  %v969 = vunpack.c.l.b16 %v382
  %v970 = vunpack.c.h.b16 %v382
  %v971 = vunpack.c.l.b16 %v383
  %v972 = vunpack.c.h.b16 %v383
  %v973 = vunpack.c.l.b16 %v384
  %v974 = vunpack.c.h.b16 %v384
  %v975 = vunpack.c.l.b16 %v385
  %v976 = vunpack.c.h.b16 %v385
  %v977 = vunpack.c.l.b16 %v386
  %v978 = vunpack.c.h.b16 %v386
  %v979 = vunpack.c.l.b16 %v387
  %v980 = vunpack.c.h.b16 %v387
  %v981 = vunpack.c.l.b16 %v388
  %v982 = vunpack.c.h.b16 %v388
  %v983 = vunpack.c.l.b16 %v389
  %v984 = vunpack.c.h.b16 %v389
  %v985 = vunpack.c.l.b16 %v390
  %v986 = vunpack.c.h.b16 %v390
  %v987 = vunpack.c.l.b16 %v391
  %v988 = vunpack.c.h.b16 %v391
  %v989 = vunpack.c.l.b16 %v392
  %v990 = vunpack.c.h.b16 %v392
  %v991 = vunpack.c.l.b16 %v393
  %v992 = vunpack.c.h.b16 %v393
  %v993 = vunpack.c.l.b16 %v394
  %v994 = vunpack.c.h.b16 %v394
  %v995 = vunpack.c.l.b16 %v395
  %v996 = vunpack.c.h.b16 %v395
  %v997 = vunpack.c.l.b16 %v396
  %v998 = vunpack.c.h.b16 %v396
  %v999 = vunpack.c.l.b16 %v397
  %v1000 = vunpack.c.h.b16 %v397
  %v1001 = vunpack.c.l.b16 %v398
  %v1002 = vunpack.c.h.b16 %v398
  %v1003 = vunpack.c.l.b16 %v399
  %v1004 = vunpack.c.h.b16 %v399
  %v1005 = vunpack.c.l.b16 %v400
  %v1006 = vunpack.c.h.b16 %v400
  %v1007 = vunpack.c.l.b16 %v401
  %v1008 = vunpack.c.h.b16 %v401
  %v1009 = vunpack.c.l.b16 %v402
  %v1010 = vunpack.c.h.b16 %v402
  %v1011 = vunpack.c.l.b16 %v403
  %v1012 = vunpack.c.h.b16 %v403
  %v1013 = vunpack.c.l.b16 %v404
  %v1014 = vunpack.c.h.b16 %v404
  %v1015 = vunpack.c.l.b16 %v405
  %v1016 = vunpack.c.h.b16 %v405
  %v1017 = vunpack.c.l.b16 %v406
  %v1018 = vunpack.c.h.b16 %v406
  %v1019 = vunpack.c.l.b16 %v407
  %v1020 = vunpack.c.h.b16 %v407
  %v1021 = vunpack.c.l.b16 %v408
  %v1022 = vunpack.c.h.b16 %v408
  %v1023 = vunpack.c.l.b16 %v409
  %v1024 = vunpack.c.h.b16 %v409
  %v1025 = vunpack.c.l.b16 %v410
  %v1026 = vunpack.c.h.b16 %v410
  %v1027 = vunpack.c.l.b16 %v411
  %v1028 = vunpack.c.h.b16 %v411
  %v1029 = vunpack.c.l.b16 %v412
  %v1030 = vunpack.c.h.b16 %v412
  %v1031 = vunpack.c.l.b16 %v413
  %v1032 = vunpack.c.h.b16 %v413
  %v1033 = vunpack.c.l.b16 %v414
  %v1034 = vunpack.c.h.b16 %v414
  %v1035 = vunpack.c.l.b16 %v415
  %v1036 = vunpack.c.h.b16 %v415
  %v1037 = vunpack.c.l.b16 %v416
  %v1038 = vunpack.c.h.b16 %v416
  %v1039 = vunpack.c.l.b16 %v417
  %v1040 = vunpack.c.h.b16 %v417
  %v1041 = vunpack.c.l.b16 %v418
  %v1042 = vunpack.c.h.b16 %v418
  %v1043 = vunpack.c.l.b16 %v419
  %v1044 = vunpack.c.h.b16 %v419
  %v1045 = vunpack.c.l.b16 %v420
  %v1046 = vunpack.c.h.b16 %v420
  %v1047 = vunpack.c.l.b16 %v421
  %v1048 = vunpack.c.h.b16 %v421
  %v1049 = vunpack.c.l.b16 %v422
  %v1050 = vunpack.c.h.b16 %v422
  %v1051 = vunpack.c.l.b16 %v423
  %v1052 = vunpack.c.h.b16 %v423
  %v1053 = vunpack.c.l.b16 %v424
  %v1054 = vunpack.c.h.b16 %v424
  %v1055 = vunpack.c.l.b16 %v425
  %v1056 = vunpack.c.h.b16 %v425
  %v1057 = vunpack.c.l.b16 %v426
  %v1058 = vunpack.c.h.b16 %v426
  %v1059 = vunpack.c.l.b16 %v427
  %v1060 = vunpack.c.h.b16 %v427
  %v1061 = vunpack.c.l.b16 %v428
  %v1062 = vunpack.c.h.b16 %v428
  %v1063 = vunpack.c.l.b16 %v429
  %v1064 = vunpack.c.h.b16 %v429
  %v1065 = vunpack.c.l.b16 %v430
  %v1066 = vunpack.c.h.b16 %v430
  %v1067 = vunpack.c.l.b16 %v431
  %v1068 = vunpack.c.h.b16 %v431
  %v1069 = vunpack.c.l.b16 %v432
  %v1070 = vunpack.c.h.b16 %v432
  %v1071 = vunpack.c.l.b16 %v433
  %v1072 = vunpack.c.h.b16 %v433
  %v1073 = vunpack.c.l.b16 %v434
  %v1074 = vunpack.c.h.b16 %v434
  %v1075 = vunpack.c.l.b16 %v435
  %v1076 = vunpack.c.h.b16 %v435
  %v1077 = vunpack.c.l.b16 %v436
  %v1078 = vunpack.c.h.b16 %v436
  %v1079 = vunpack.c.l.b16 %v437
  %v1080 = vunpack.c.h.b16 %v437
  %v1081 = vunpack.c.l.b16 %v438
  %v1082 = vunpack.c.h.b16 %v438
  %v1083 = vunpack.c.l.b16 %v439
  %v1084 = vunpack.c.h.b16 %v439
  %v1085 = vunpack.c.l.b16 %v440
  %v1086 = vunpack.c.h.b16 %v440
  %v1087 = vunpack.c.l.b16 %v441
  %v1088 = vunpack.c.h.b16 %v441
  %v1089 = vunpack.c.l.b16 %v442
  %v1090 = vunpack.c.h.b16 %v442
  %v1091 = vunpack.c.l.b16 %v443
  %v1092 = vunpack.c.h.b16 %v443
  %v1093 = vunpack.c.l.b16 %v444
  %v1094 = vunpack.c.h.b16 %v444
  %v1095 = vunpack.c.l.b16 %v445
  %v1096 = vunpack.c.h.b16 %v445
  %v1097 = vunpack.c.l.b16 %v446
  %v1098 = vunpack.c.h.b16 %v446
  %v1099 = vunpack.c.l.b16 %v447
  %v1100 = vunpack.c.h.b16 %v447
  %v1101 = vunpack.c.l.b16 %v448
  %v1102 = vunpack.c.h.b16 %v448
  %v1103 = vunpack.c.l.b16 %v449
  %v1104 = vunpack.c.h.b16 %v449
  %v1105 = vunpack.c.l.b16 %v450
  %v1106 = vunpack.c.h.b16 %v450
  %v1107 = vunpack.c.l.b16 %v451
  %v1108 = vunpack.c.h.b16 %v451
  %v1109 = vunpack.c.l.b16 %v452
  %v1110 = vunpack.c.h.b16 %v452
  %v1111 = vunpack.c.l.b16 %v453
  %v1112 = vunpack.c.h.b16 %v453
  %v1113 = vunpack.c.l.b16 %v454
  %v1114 = vunpack.c.h.b16 %v454
  %v1115 = vunpack.c.l.b16 %v455
  %v1116 = vunpack.c.h.b16 %v455
  %v1117 = vunpack.c.l.b16 %v456
  %v1118 = vunpack.c.h.b16 %v456
  %v1119 = vunpack.c.l.b16 %v457
  %v1120 = vunpack.c.h.b16 %v457
  %v1121 = vunpack.c.l.b16 %v458
  %v1122 = vunpack.c.h.b16 %v458
  %v1123 = vunpack.c.l.b16 %v459
  %v1124 = vunpack.c.h.b16 %v459
  %v1125 = vunpack.c.l.b16 %v460
  %v1126 = vunpack.c.h.b16 %v460
  %v1127 = vunpack.c.l.b16 %v461
  %v1128 = vunpack.c.h.b16 %v461
  %v1129 = vunpack.c.l.b16 %v462
  %v1130 = vunpack.c.h.b16 %v462
  %v1131 = vunpack.c.l.b16 %v463
  %v1132 = vunpack.c.h.b16 %v463
  %v1133 = vunpack.c.l.b16 %v464
  %v1134 = vunpack.c.h.b16 %v464
  %v1135 = vunpack.c.l.b16 %v465
  %v1136 = vunpack.c.h.b16 %v465
  %v1137 = vunpack.c.l.b16 %v466
  %v1138 = vunpack.c.h.b16 %v466
  %v1139 = vunpack.c.l.b16 %v467
  %v1140 = vunpack.c.h.b16 %v467
  %v1141 = vunpack.c.l.b16 %v468
  %v1142 = vunpack.c.h.b16 %v468
  %v1143 = vunpack.c.l.b16 %v469
  %v1144 = vunpack.c.h.b16 %v469
  %v1145 = vunpack.c.l.b16 %v470
  %v1146 = vunpack.c.h.b16 %v470
  %v1147 = vunpack.c.l.b16 %v471
  %v1148 = vunpack.c.h.b16 %v471
  %v1149 = vunpack.c.l.b16 %v472
  %v1150 = vunpack.c.h.b16 %v472
  %v1151 = vunpack.c.l.b16 %v473
  %v1152 = vunpack.c.h.b16 %v473
  %v1153 = vunpack.c.l.b16 %v474
  %v1154 = vunpack.c.h.b16 %v474
  %v1155 = vunpack.c.l.b16 %v475
  %v1156 = vunpack.c.h.b16 %v475
  %v1157 = vunpack.c.l.b16 %v476
  %v1158 = vunpack.c.h.b16 %v476
  %v1159 = vunpack.c.l.b16 %v477
  %v1160 = vunpack.c.h.b16 %v477
  %v1161 = vunpack.c.l.b16 %v478
  %v1162 = vunpack.c.h.b16 %v478
  %v1163 = vunpack.c.l.b16 %v479
  %v1164 = vunpack.c.h.b16 %v479
  %v1165 = vunpack.c.l.b16 %v480
  %v1166 = vunpack.c.h.b16 %v480
  %v1167 = vunpack.c.l.b16 %v481
  %v1168 = vunpack.c.h.b16 %v481
  %v1169 = vunpack.c.l.b16 %v482
  %v1170 = vunpack.c.h.b16 %v482
  %v1171 = vunpack.c.l.b16 %v483
  %v1172 = vunpack.c.h.b16 %v483
  %v1173 = vunpack.c.l.b16 %v484
  %v1174 = vunpack.c.h.b16 %v484
  %v1175 = vunpack.c.l.b16 %v485
  %v1176 = vunpack.c.h.b16 %v485
  %v1177 = vunpack.c.l.b16 %v486
  %v1178 = vunpack.c.h.b16 %v486
  %v1179 = vunpack.c.l.b16 %v487
  %v1180 = vunpack.c.h.b16 %v487
  %v1181 = vunpack.c.l.b16 %v488
  %v1182 = vunpack.c.h.b16 %v488
  %v1183 = vunpack.c.l.b16 %v489
  %v1184 = vunpack.c.h.b16 %v489
  %v1185 = vunpack.c.l.b16 %v490
  %v1186 = vunpack.c.h.b16 %v490
  %v1187 = vunpack.c.l.b16 %v491
  %v1188 = vunpack.c.h.b16 %v491
  %v1189 = vunpack.c.l.b16 %v492
  %v1190 = vunpack.c.h.b16 %v492
  %v1191 = vunpack.c.l.b16 %v493
  %v1192 = vunpack.c.h.b16 %v493
  %v1193 = vunpack.c.l.b16 %v494
  %v1194 = vunpack.c.h.b16 %v494
  %v1195 = vunpack.c.l.b16 %v495
  %v1196 = vunpack.c.h.b16 %v495
  %v1197 = vunpack.c.l.b16 %v496
  %v1198 = vunpack.c.h.b16 %v496
  %v1199 = vunpack.c.l.b16 %v497
  %v1200 = vunpack.c.h.b16 %v497
  %v1201 = vunpack.c.l.b16 %v498
  %v1202 = vunpack.c.h.b16 %v498
  %v1203 = vunpack.c.l.b16 %v499
  %v1204 = vunpack.c.h.b16 %v499
  %v1205 = vunpack.c.l.b16 %v500
  %v1206 = vunpack.c.h.b16 %v500
  %v1207 = vunpack.c.l.b16 %v501
  %v1208 = vunpack.c.h.b16 %v501
  %v1209 = vunpack.c.l.b16 %v502
  %v1210 = vunpack.c.h.b16 %v502
  %v1211 = vunpack.c.l.b16 %v503
  %v1212 = vunpack.c.h.b16 %v503
  %v1213 = vunpack.c.l.b16 %v504
  %v1214 = vunpack.c.h.b16 %v504
  %v1215 = vunpack.c.l.b16 %v505
  %v1216 = vunpack.c.h.b16 %v505
  %v1217 = vunpack.c.l.b16 %v506
  %v1218 = vunpack.c.h.b16 %v506
  %v1219 = vunpack.c.l.b16 %v507
  %v1220 = vunpack.c.h.b16 %v507
  %v1221 = vunpack.c.l.b16 %v508
  %v1222 = vunpack.c.h.b16 %v508
  %v1223 = vunpack.c.l.b16 %v509
  %v1224 = vunpack.c.h.b16 %v509
  %v1225 = vunpack.c.l.b16 %v510
  %v1226 = vunpack.c.h.b16 %v510
  %v1227 = vunpack.c.l.b16 %v511
  %v1228 = vunpack.c.h.b16 %v511
  %v1229 = vunpack.c.l.b16 %v512
  %v1230 = vunpack.c.h.b16 %v512
  %v1231 = vunpack.c.l.b16 %v513
  %v1232 = vunpack.c.h.b16 %v513
  %v1233 = vunpack.c.l.b16 %v514
  %v1234 = vunpack.c.h.b16 %v514
  %v1235 = vunpack.c.l.b16 %v515
  %v1236 = vunpack.c.h.b16 %v515
  %v1237 = vunpack.c.l.b16 %v516
  %v1238 = vunpack.c.h.b16 %v516
  %v1239 = vunpack.c.l.b16 %v517
  %v1240 = vunpack.c.h.b16 %v517
  %v1241 = vunpack.c.l.b16 %v518
  %v1242 = vunpack.c.h.b16 %v518
  %v1243 = vunpack.c.l.b16 %v519
  %v1244 = vunpack.c.h.b16 %v519
  %v1245 = vunpack.c.l.b16 %v520
  %v1246 = vunpack.c.h.b16 %v520
  %v1247 = vunpack.c.l.b16 %v521
  %v1248 = vunpack.c.h.b16 %v521
  %v1249 = vunpack.c.l.b16 %v522
  %v1250 = vunpack.c.h.b16 %v522
  %v1251 = vunpack.c.l.b16 %v523
  %v1252 = vunpack.c.h.b16 %v523
  %v1253 = vunpack.c.l.b16 %v524
  %v1254 = vunpack.c.h.b16 %v524
  %v1255 = vunpack.c.l.b16 %v525
  %v1256 = vunpack.c.h.b16 %v525
  %v1257 = vunpack.c.l.b16 %v526
  %v1258 = vunpack.c.h.b16 %v526
  %v1259 = vunpack.c.l.b16 %v527
  %v1260 = vunpack.c.h.b16 %v527
  %v1261 = vunpack.c.l.b16 %v528
  %v1262 = vunpack.c.h.b16 %v528
  %v1263 = vunpack.c.l.b16 %v529
  %v1264 = vunpack.c.h.b16 %v529
  %v1265 = vunpack.c.l.b16 %v530
  %v1266 = vunpack.c.h.b16 %v530
  %v1267 = vunpack.c.l.b16 %v531
  %v1268 = vunpack.c.h.b16 %v531
  %v1269 = vunpack.c.l.b16 %v532
  %v1270 = vunpack.c.h.b16 %v532
  %v1271 = vunpack.c.l.b16 %v533
  %v1272 = vunpack.c.h.b16 %v533
  %v1273 = vunpack.c.l.b16 %v534
  %v1274 = vunpack.c.h.b16 %v534
  %v1275 = vunpack.c.l.b16 %v535
  %v1276 = vunpack.c.h.b16 %v535
  %v1277 = vunpack.c.l.b16 %v536
  %v1278 = vunpack.c.h.b16 %v536
  %v1279 = vunpack.c.l.b16 %v537
  %v1280 = vunpack.c.h.b16 %v537
  %v1281 = vunpack.c.l.b16 %v538
  %v1282 = vunpack.c.h.b16 %v538
  %v1283 = vunpack.c.l.b16 %v539
  %v1284 = vunpack.c.h.b16 %v539
  %v1285 = vunpack.c.l.b16 %v540
  %v1286 = vunpack.c.h.b16 %v540
  %v1287 = vunpack.c.l.b16 %v541
  %v1288 = vunpack.c.h.b16 %v541
  %v1289 = vunpack.c.l.b16 %v542
  %v1290 = vunpack.c.h.b16 %v542
  %v1291 = vunpack.c.l.b16 %v543
  %v1292 = vunpack.c.h.b16 %v543
  %v1293 = vunpack.c.l.b16 %v544
  %v1294 = vunpack.c.h.b16 %v544
  %v1295 = vunpack.c.l.b16 %v545
  %v1296 = vunpack.c.h.b16 %v545
  %v1297 = vunpack.c.l.b16 %v546
  %v1298 = vunpack.c.h.b16 %v546
  %v1299 = vunpack.c.l.b16 %v547
  %v1300 = vunpack.c.h.b16 %v547
  %v1301 = vunpack.c.l.b16 %v548
  %v1302 = vunpack.c.h.b16 %v548
  %v1303 = vunpack.c.l.b16 %v549
  %v1304 = vunpack.c.h.b16 %v549
  %v1305 = vunpack.c.l.b16 %v550
  %v1306 = vunpack.c.h.b16 %v550
  %v1307 = vunpack.c.l.b16 %v551
  %v1308 = vunpack.c.h.b16 %v551
  %v1309 = vunpack.c.l.b16 %v552
  %v1310 = vunpack.c.h.b16 %v552
  %v1311 = vunpack.c.l.b16 %v553
  %v1312 = vunpack.c.h.b16 %v553
  %v1313 = vunpack.c.l.b16 %v554
  %v1314 = vunpack.c.h.b16 %v554
  %v1315 = vunpack.c.l.b16 %v555
  %v1316 = vunpack.c.h.b16 %v555
  %v1317 = vunpack.c.l.b16 %v556
  %v1318 = vunpack.c.h.b16 %v556
  %v1319 = vunpack.c.l.b16 %v557
  %v1320 = vunpack.c.h.b16 %v557
  %v1321 = vunpack.c.l.b16 %v558
  %v1322 = vunpack.c.h.b16 %v558
  %v1323 = vunpack.c.l.b16 %v559
  %v1324 = vunpack.c.h.b16 %v559
  %v1325 = vunpack.c.l.b16 %v560
  %v1326 = vunpack.c.h.b16 %v560
  %v1327 = vunpack.c.l.b16 %v561
  %v1328 = vunpack.c.h.b16 %v561
  %v1329 = vunpack.c.l.b16 %v562
  %v1330 = vunpack.c.h.b16 %v562
  %v1331 = vpack.c.b16 %v821, %v819
  %v1332 = vpack.c.b16 %v822, %v820
  %v1333 = vpack.c.b16 %v825, %v823
  %v1334 = vpack.c.b16 %v826, %v824
  %v1335 = vpack.c.b16 %v829, %v827
  %v1336 = vpack.c.b16 %v830, %v828
  %v1337 = vpack.c.b16 %v833, %v831
  %v1338 = vpack.c.b16 %v834, %v832
  %v1339 = vpack.c.b16 %v837, %v835
  %v1340 = vpack.c.b16 %v838, %v836
  %v1341 = vpack.c.b16 %v841, %v839
  %v1342 = vpack.c.b16 %v842, %v840
  %v1343 = vpack.c.b16 %v845, %v843
  %v1344 = vpack.c.b16 %v846, %v844
  %v1345 = vpack.c.b16 %v849, %v847
  %v1346 = vpack.c.b16 %v850, %v848
  %v1347 = vpack.c.b16 %v853, %v851
  %v1348 = vpack.c.b16 %v854, %v852
  %v1349 = vpack.c.b16 %v857, %v855
  %v1350 = vpack.c.b16 %v858, %v856
  %v1351 = vpack.c.b16 %v861, %v859
  %v1352 = vpack.c.b16 %v862, %v860
  %v1353 = vpack.c.b16 %v865, %v863
  %v1354 = vpack.c.b16 %v866, %v864
  %v1355 = vpack.c.b16 %v869, %v867
  %v1356 = vpack.c.b16 %v870, %v868
  %v1357 = vpack.c.b16 %v873, %v871
  %v1358 = vpack.c.b16 %v874, %v872
  %v1359 = vpack.c.b16 %v877, %v875
  %v1360 = vpack.c.b16 %v878, %v876
  %v1361 = vpack.c.b16 %v881, %v879
  %v1362 = vpack.c.b16 %v882, %v880
  %v1363 = vpack.c.b16 %v885, %v883
  %v1364 = vpack.c.b16 %v886, %v884
  %v1365 = vpack.c.b16 %v889, %v887
  %v1366 = vpack.c.b16 %v890, %v888
  %v1367 = vpack.c.b16 %v893, %v891
  %v1368 = vpack.c.b16 %v894, %v892
  %v1369 = vpack.c.b16 %v897, %v895
  %v1370 = vpack.c.b16 %v898, %v896
  %v1371 = vpack.c.b16 %v901, %v899
  %v1372 = vpack.c.b16 %v902, %v900
  %v1373 = vpack.c.b16 %v905, %v903
  %v1374 = vpack.c.b16 %v906, %v904
  %v1375 = vpack.c.b16 %v909, %v907
  %v1376 = vpack.c.b16 %v910, %v908
  %v1377 = vpack.c.b16 %v913, %v911
  %v1378 = vpack.c.b16 %v914, %v912
  %v1379 = vpack.c.b16 %v917, %v915
  %v1380 = vpack.c.b16 %v918, %v916
  %v1381 = vpack.c.b16 %v921, %v919
  %v1382 = vpack.c.b16 %v922, %v920
  %v1383 = vpack.c.b16 %v925, %v923
  %v1384 = vpack.c.b16 %v926, %v924
  %v1385 = vpack.c.b16 %v929, %v927
  %v1386 = vpack.c.b16 %v930, %v928
  %v1387 = vpack.c.b16 %v933, %v931
  %v1388 = vpack.c.b16 %v934, %v932
  %v1389 = vpack.c.b16 %v937, %v935
  %v1390 = vpack.c.b16 %v938, %v936
  %v1391 = vpack.c.b16 %v941, %v939
  %v1392 = vpack.c.b16 %v942, %v940
  %v1393 = vpack.c.b16 %v945, %v943
  %v1394 = vpack.c.b16 %v946, %v944
  %v1395 = vpack.c.b16 %v949, %v947
  %v1396 = vpack.c.b16 %v950, %v948
  %v1397 = vpack.c.b16 %v953, %v951
  %v1398 = vpack.c.b16 %v954, %v952
  %v1399 = vpack.c.b16 %v957, %v955
  %v1400 = vpack.c.b16 %v958, %v956
  %v1401 = vpack.c.b16 %v961, %v959
  %v1402 = vpack.c.b16 %v962, %v960
  %v1403 = vpack.c.b16 %v965, %v963
  %v1404 = vpack.c.b16 %v966, %v964
  %v1405 = vpack.c.b16 %v969, %v967
  %v1406 = vpack.c.b16 %v970, %v968
  %v1407 = vpack.c.b16 %v973, %v971
  %v1408 = vpack.c.b16 %v974, %v972
  %v1409 = vpack.c.b16 %v977, %v975
  %v1410 = vpack.c.b16 %v978, %v976
  %v1411 = vpack.c.b16 %v981, %v979
  %v1412 = vpack.c.b16 %v982, %v980
  %v1413 = vpack.c.b16 %v985, %v983
  %v1414 = vpack.c.b16 %v986, %v984
  %v1415 = vpack.c.b16 %v989, %v987
  %v1416 = vpack.c.b16 %v990, %v988
  %v1417 = vpack.c.b16 %v993, %v991
  %v1418 = vpack.c.b16 %v994, %v992
  %v1419 = vpack.c.b16 %v997, %v995
  %v1420 = vpack.c.b16 %v998, %v996
  %v1421 = vpack.c.b16 %v1001, %v999
  %v1422 = vpack.c.b16 %v1002, %v1000
  %v1423 = vpack.c.b16 %v1005, %v1003
  %v1424 = vpack.c.b16 %v1006, %v1004
  %v1425 = vpack.c.b16 %v1009, %v1007
  %v1426 = vpack.c.b16 %v1010, %v1008
  %v1427 = vpack.c.b16 %v1013, %v1011
  %v1428 = vpack.c.b16 %v1014, %v1012
  %v1429 = vpack.c.b16 %v1017, %v1015
  %v1430 = vpack.c.b16 %v1018, %v1016
  %v1431 = vpack.c.b16 %v1021, %v1019
  %v1432 = vpack.c.b16 %v1022, %v1020
  %v1433 = vpack.c.b16 %v1025, %v1023
  %v1434 = vpack.c.b16 %v1026, %v1024
  %v1435 = vpack.c.b16 %v1029, %v1027
  %v1436 = vpack.c.b16 %v1030, %v1028
  %v1437 = vpack.c.b16 %v1033, %v1031
  %v1438 = vpack.c.b16 %v1034, %v1032
  %v1439 = vpack.c.b16 %v1037, %v1035
  %v1440 = vpack.c.b16 %v1038, %v1036
  %v1441 = vpack.c.b16 %v1041, %v1039
  %v1442 = vpack.c.b16 %v1042, %v1040
  %v1443 = vpack.c.b16 %v1045, %v1043
  %v1444 = vpack.c.b16 %v1046, %v1044
  %v1445 = vpack.c.b16 %v1049, %v1047
  %v1446 = vpack.c.b16 %v1050, %v1048
  %v1447 = vpack.c.b16 %v1053, %v1051
  %v1448 = vpack.c.b16 %v1054, %v1052
  %v1449 = vpack.c.b16 %v1057, %v1055
  %v1450 = vpack.c.b16 %v1058, %v1056
  %v1451 = vpack.c.b16 %v1061, %v1059
  %v1452 = vpack.c.b16 %v1062, %v1060
  %v1453 = vpack.c.b16 %v1065, %v1063
  %v1454 = vpack.c.b16 %v1066, %v1064
  %v1455 = vpack.c.b16 %v1069, %v1067
  %v1456 = vpack.c.b16 %v1070, %v1068
  %v1457 = vpack.c.b16 %v1073, %v1071
  %v1458 = vpack.c.b16 %v1074, %v1072
  %v1459 = vpack.c.b16 %v1077, %v1075
  %v1460 = vpack.c.b16 %v1078, %v1076
  %v1461 = vpack.c.b16 %v1081, %v1079
  %v1462 = vpack.c.b16 %v1082, %v1080
  %v1463 = vpack.c.b16 %v1085, %v1083
  %v1464 = vpack.c.b16 %v1086, %v1084
  %v1465 = vpack.c.b16 %v1089, %v1087
  %v1466 = vpack.c.b16 %v1090, %v1088
  %v1467 = vpack.c.b16 %v1093, %v1091
  %v1468 = vpack.c.b16 %v1094, %v1092
  %v1469 = vpack.c.b16 %v1097, %v1095
  %v1470 = vpack.c.b16 %v1098, %v1096
  %v1471 = vpack.c.b16 %v1101, %v1099
  %v1472 = vpack.c.b16 %v1102, %v1100
  %v1473 = vpack.c.b16 %v1105, %v1103
  %v1474 = vpack.c.b16 %v1106, %v1104
  %v1475 = vpack.c.b16 %v1109, %v1107
  %v1476 = vpack.c.b16 %v1110, %v1108
  %v1477 = vpack.c.b16 %v1113, %v1111
  %v1478 = vpack.c.b16 %v1114, %v1112
  %v1479 = vpack.c.b16 %v1117, %v1115
  %v1480 = vpack.c.b16 %v1118, %v1116
  %v1481 = vpack.c.b16 %v1121, %v1119
  %v1482 = vpack.c.b16 %v1122, %v1120
  %v1483 = vpack.c.b16 %v1125, %v1123
  %v1484 = vpack.c.b16 %v1126, %v1124
  %v1485 = vpack.c.b16 %v1129, %v1127
  %v1486 = vpack.c.b16 %v1130, %v1128
  %v1487 = vpack.c.b16 %v1133, %v1131
  %v1488 = vpack.c.b16 %v1134, %v1132
  %v1489 = vpack.c.b16 %v1137, %v1135
  %v1490 = vpack.c.b16 %v1138, %v1136
  %v1491 = vpack.c.b16 %v1141, %v1139
  %v1492 = vpack.c.b16 %v1142, %v1140
  %v1493 = vpack.c.b16 %v1145, %v1143
  %v1494 = vpack.c.b16 %v1146, %v1144
  %v1495 = vpack.c.b16 %v1149, %v1147
  %v1496 = vpack.c.b16 %v1150, %v1148
  %v1497 = vpack.c.b16 %v1153, %v1151
  %v1498 = vpack.c.b16 %v1154, %v1152
  %v1499 = vpack.c.b16 %v1157, %v1155
  %v1500 = vpack.c.b16 %v1158, %v1156
  %v1501 = vpack.c.b16 %v1161, %v1159
  %v1502 = vpack.c.b16 %v1162, %v1160
  %v1503 = vpack.c.b16 %v1165, %v1163
  %v1504 = vpack.c.b16 %v1166, %v1164
  %v1505 = vpack.c.b16 %v1169, %v1167
  %v1506 = vpack.c.b16 %v1170, %v1168
  %v1507 = vpack.c.b16 %v1173, %v1171
  %v1508 = vpack.c.b16 %v1174, %v1172
  %v1509 = vpack.c.b16 %v1177, %v1175
  %v1510 = vpack.c.b16 %v1178, %v1176
  %v1511 = vpack.c.b16 %v1181, %v1179
  %v1512 = vpack.c.b16 %v1182, %v1180
  %v1513 = vpack.c.b16 %v1185, %v1183
  %v1514 = vpack.c.b16 %v1186, %v1184
  %v1515 = vpack.c.b16 %v1189, %v1187
  %v1516 = vpack.c.b16 %v1190, %v1188
  %v1517 = vpack.c.b16 %v1193, %v1191
  %v1518 = vpack.c.b16 %v1194, %v1192
  %v1519 = vpack.c.b16 %v1197, %v1195
  %v1520 = vpack.c.b16 %v1198, %v1196
  %v1521 = vpack.c.b16 %v1201, %v1199
  %v1522 = vpack.c.b16 %v1202, %v1200
  %v1523 = vpack.c.b16 %v1205, %v1203
  %v1524 = vpack.c.b16 %v1206, %v1204
  %v1525 = vpack.c.b16 %v1209, %v1207
  %v1526 = vpack.c.b16 %v1210, %v1208
  %v1527 = vpack.c.b16 %v1213, %v1211
  %v1528 = vpack.c.b16 %v1214, %v1212
  %v1529 = vpack.c.b16 %v1217, %v1215
  %v1530 = vpack.c.b16 %v1218, %v1216
  %v1531 = vpack.c.b16 %v1221, %v1219
  %v1532 = vpack.c.b16 %v1222, %v1220
  %v1533 = vpack.c.b16 %v1225, %v1223
  %v1534 = vpack.c.b16 %v1226, %v1224
  %v1535 = vpack.c.b16 %v1229, %v1227
  %v1536 = vpack.c.b16 %v1230, %v1228
  %v1537 = vpack.c.b16 %v1233, %v1231
  %v1538 = vpack.c.b16 %v1234, %v1232
  %v1539 = vpack.c.b16 %v1237, %v1235
  %v1540 = vpack.c.b16 %v1238, %v1236
  %v1541 = vpack.c.b16 %v1241, %v1239
  %v1542 = vpack.c.b16 %v1242, %v1240
  %v1543 = vpack.c.b16 %v1245, %v1243
  %v1544 = vpack.c.b16 %v1246, %v1244
  %v1545 = vpack.c.b16 %v1249, %v1247
  %v1546 = vpack.c.b16 %v1250, %v1248
  %v1547 = vpack.c.b16 %v1253, %v1251
  %v1548 = vpack.c.b16 %v1254, %v1252
  %v1549 = vpack.c.b16 %v1257, %v1255
  %v1550 = vpack.c.b16 %v1258, %v1256
  %v1551 = vpack.c.b16 %v1261, %v1259
  %v1552 = vpack.c.b16 %v1262, %v1260
  %v1553 = vpack.c.b16 %v1265, %v1263
  %v1554 = vpack.c.b16 %v1266, %v1264
  %v1555 = vpack.c.b16 %v1269, %v1267
  %v1556 = vpack.c.b16 %v1270, %v1268
  %v1557 = vpack.c.b16 %v1273, %v1271
  %v1558 = vpack.c.b16 %v1274, %v1272
  %v1559 = vpack.c.b16 %v1277, %v1275
  %v1560 = vpack.c.b16 %v1278, %v1276
  %v1561 = vpack.c.b16 %v1281, %v1279
  %v1562 = vpack.c.b16 %v1282, %v1280
  %v1563 = vpack.c.b16 %v1285, %v1283
  %v1564 = vpack.c.b16 %v1286, %v1284
  %v1565 = vpack.c.b16 %v1289, %v1287
  %v1566 = vpack.c.b16 %v1290, %v1288
  %v1567 = vpack.c.b16 %v1293, %v1291
  %v1568 = vpack.c.b16 %v1294, %v1292
  %v1569 = vpack.c.b16 %v1297, %v1295
  %v1570 = vpack.c.b16 %v1298, %v1296
  %v1571 = vpack.c.b16 %v1301, %v1299
  %v1572 = vpack.c.b16 %v1302, %v1300
  %v1573 = vpack.c.b16 %v1305, %v1303
  %v1574 = vpack.c.b16 %v1306, %v1304
  %v1575 = vpack.c.b16 %v1309, %v1307
  %v1576 = vpack.c.b16 %v1310, %v1308
  %v1577 = vpack.c.b16 %v1313, %v1311
  %v1578 = vpack.c.b16 %v1314, %v1312
  %v1579 = vpack.c.b16 %v1317, %v1315
  %v1580 = vpack.c.b16 %v1318, %v1316
  %v1581 = vpack.c.b16 %v1321, %v1319
  %v1582 = vpack.c.b16 %v1322, %v1320
  %v1583 = vpack.c.b16 %v1325, %v1323
  %v1584 = vpack.c.b16 %v1326, %v1324
  %v1585 = vpack.c.b16 %v1329, %v1327
  %v1586 = vpack.c.b16 %v1330, %v1328
  %1843 = vmatprep.subr.bf16.mxu0 %v1346
  %1844 = vmatpush1.bf16.msra.mxu0 %v1345
  %1845 = vmatprep.subr.bf16.mxu0 %v1344
  %1846 = vmatpush1.bf16.msra.mxu0 %v1343
  %1847 = vmatprep.subr.bf16.mxu0 %v1342
  %1848 = vmatpush1.bf16.msra.mxu0 %v1341
  %1849 = vmatprep.subr.bf16.mxu0 %v1340
  %1850 = vmatpush1.bf16.msra.mxu0 %v1339
  %1851 = vmatprep.subr.bf16.mxu0 %v1338
  %1852 = vmatpush1.bf16.msra.mxu0 %v1337
  %1853 = vmatprep.subr.bf16.mxu0 %v1336
  %1854 = vmatpush1.bf16.msra.mxu0 %v1335
  %1855 = vmatprep.subr.bf16.mxu0 %v1334
  %1856 = vmatpush1.bf16.msra.mxu0 %v1333
  %1857 = vmatprep.subr.bf16.mxu0 %v1332
  %1858 = vmatpush1.bf16.msra.mxu0 %v1331
  %1859 = vmatprep.subr.bf16.mxu0 %v1362
  %1860 = vmatpush2.bf16.msra.mxu0 %v1361
  %1861 = vmatprep.subr.bf16.mxu0 %v1360
  %1862 = vmatpush2.bf16.msra.mxu0 %v1359
  %1863 = vmatprep.subr.bf16.mxu0 %v1358
  %1864 = vmatpush2.bf16.msra.mxu0 %v1357
  %1865 = vmatprep.subr.bf16.mxu0 %v1356
  %1866 = vmatpush2.bf16.msra.mxu0 %v1355
  %1867 = vmatprep.subr.bf16.mxu0 %v1354
  %1868 = vmatpush2.bf16.msra.mxu0 %v1353
  %1869 = vmatprep.subr.bf16.mxu0 %v1352
  %1870 = vmatpush2.bf16.msra.mxu0 %v1351
  %1871 = vmatprep.subr.bf16.mxu0 %v1350
  %1872 = vmatpush2.bf16.msra.mxu0 %v1349
  %1873 = vmatprep.subr.bf16.mxu0 %v1348
  %1874 = vmatpush2.bf16.msra.mxu0 %v1347
  %1875 = vmatprep.mubr.bf16.mxu0 %v292
  %1876 = vmatmul.mubr.bf16.gmra.mxu0 %v291
  %v1877 = vpop.f32.mrf.mxu0
  %v1878 = vadd.f32 0.0, %v1877
  %v1879 = vpop.f32.mrf.mxu0
  %v1880 = vadd.f32 0.0, %v1879
  %v1881 = vpop.f32.mrf.mxu0
  %v1882 = vpop.f32.mrf.mxu0
  %1883 = vdwg.mxu0
  %1884 = vmatprep.subr.bf16.mxu0 %v1378
  %1885 = vmatpush1.bf16.msra.mxu0 %v1377
  %1886 = vmatprep.subr.bf16.mxu0 %v1376
  %1887 = vmatpush1.bf16.msra.mxu0 %v1375
  %1888 = vmatprep.subr.bf16.mxu0 %v1374
  %1889 = vmatpush1.bf16.msra.mxu0 %v1373
  %1890 = vmatprep.subr.bf16.mxu0 %v1372
  %1891 = vmatpush1.bf16.msra.mxu0 %v1371
  %1892 = vmatprep.subr.bf16.mxu0 %v1370
  %1893 = vmatpush1.bf16.msra.mxu0 %v1369
  %1894 = vmatprep.subr.bf16.mxu0 %v1368
  %1895 = vmatpush1.bf16.msra.mxu0 %v1367
  %1896 = vmatprep.subr.bf16.mxu0 %v1366
  %1897 = vmatpush1.bf16.msra.mxu0 %v1365
  %1898 = vmatprep.subr.bf16.mxu0 %v1364
  %1899 = vmatpush1.bf16.msra.mxu0 %v1363
  %1900 = vmatprep.subr.bf16.mxu0 %v1394
  %1901 = vmatpush2.bf16.msra.mxu0 %v1393
  %1902 = vmatprep.subr.bf16.mxu0 %v1392
  %1903 = vmatpush2.bf16.msra.mxu0 %v1391
  %1904 = vmatprep.subr.bf16.mxu0 %v1390
  %1905 = vmatpush2.bf16.msra.mxu0 %v1389
  %1906 = vmatprep.subr.bf16.mxu0 %v1388
  %1907 = vmatpush2.bf16.msra.mxu0 %v1387
  %1908 = vmatprep.subr.bf16.mxu0 %v1386
  %1909 = vmatpush2.bf16.msra.mxu0 %v1385
  %1910 = vmatprep.subr.bf16.mxu0 %v1384
  %1911 = vmatpush2.bf16.msra.mxu0 %v1383
  %1912 = vmatprep.subr.bf16.mxu0 %v1382
  %1913 = vmatpush2.bf16.msra.mxu0 %v1381
  %1914 = vmatprep.subr.bf16.mxu0 %v1380
  %1915 = vmatpush2.bf16.msra.mxu0 %v1379
  %1916 = vmatprep.mubr.bf16.mxu0 %v294
  %1917 = vmatmul.mubr.bf16.gmra.mxu0 %v293
  %v1918 = vpop.f32.mrf.mxu0
  %v1919 = vadd.f32 %v1878, %v1918
  %v1920 = vpop.f32.mrf.mxu0
  %v1921 = vadd.f32 %v1880, %v1920
  %v1922 = vpop.f32.mrf.mxu0
  %v1923 = vpop.f32.mrf.mxu0
  %1924 = vdwg.mxu0
  %1925 = vmatprep.subr.bf16.mxu0 %v1410
  %1926 = vmatpush1.bf16.msra.mxu0 %v1409
  %1927 = vmatprep.subr.bf16.mxu0 %v1408
  %1928 = vmatpush1.bf16.msra.mxu0 %v1407
  %1929 = vmatprep.subr.bf16.mxu0 %v1406
  %1930 = vmatpush1.bf16.msra.mxu0 %v1405
  %1931 = vmatprep.subr.bf16.mxu0 %v1404
  %1932 = vmatpush1.bf16.msra.mxu0 %v1403
  %1933 = vmatprep.subr.bf16.mxu0 %v1402
  %1934 = vmatpush1.bf16.msra.mxu0 %v1401
  %1935 = vmatprep.subr.bf16.mxu0 %v1400
  %1936 = vmatpush1.bf16.msra.mxu0 %v1399
  %1937 = vmatprep.subr.bf16.mxu0 %v1398
  %1938 = vmatpush1.bf16.msra.mxu0 %v1397
  %1939 = vmatprep.subr.bf16.mxu0 %v1396
  %1940 = vmatpush1.bf16.msra.mxu0 %v1395
  %1941 = vmatprep.subr.bf16.mxu0 %v1426
  %1942 = vmatpush2.bf16.msra.mxu0 %v1425
  %1943 = vmatprep.subr.bf16.mxu0 %v1424
  %1944 = vmatpush2.bf16.msra.mxu0 %v1423
  %1945 = vmatprep.subr.bf16.mxu0 %v1422
  %1946 = vmatpush2.bf16.msra.mxu0 %v1421
  %1947 = vmatprep.subr.bf16.mxu0 %v1420
  %1948 = vmatpush2.bf16.msra.mxu0 %v1419
  %1949 = vmatprep.subr.bf16.mxu0 %v1418
  %1950 = vmatpush2.bf16.msra.mxu0 %v1417
  %1951 = vmatprep.subr.bf16.mxu0 %v1416
  %1952 = vmatpush2.bf16.msra.mxu0 %v1415
  %1953 = vmatprep.subr.bf16.mxu0 %v1414
  %1954 = vmatpush2.bf16.msra.mxu0 %v1413
  %1955 = vmatprep.subr.bf16.mxu0 %v1412
  %1956 = vmatpush2.bf16.msra.mxu0 %v1411
  %1957 = vmatprep.mubr.bf16.mxu0 %v296
  %1958 = vmatmul.mubr.bf16.gmra.mxu0 %v295
  %v1959 = vpop.f32.mrf.mxu0
  %v1960 = vadd.f32 %v1919, %v1959
  %v1961 = vpop.f32.mrf.mxu0
  %v1962 = vadd.f32 %v1921, %v1961
  %v1963 = vpop.f32.mrf.mxu0
  %v1964 = vpop.f32.mrf.mxu0
  %1965 = vdwg.mxu0
  %1966 = vmatprep.subr.bf16.mxu0 %v1442
  %1967 = vmatpush1.bf16.msra.mxu0 %v1441
  %1968 = vmatprep.subr.bf16.mxu0 %v1440
  %1969 = vmatpush1.bf16.msra.mxu0 %v1439
  %1970 = vmatprep.subr.bf16.mxu0 %v1438
  %1971 = vmatpush1.bf16.msra.mxu0 %v1437
  %1972 = vmatprep.subr.bf16.mxu0 %v1436
  %1973 = vmatpush1.bf16.msra.mxu0 %v1435
  %1974 = vmatprep.subr.bf16.mxu0 %v1434
  %1975 = vmatpush1.bf16.msra.mxu0 %v1433
  %1976 = vmatprep.subr.bf16.mxu0 %v1432
  %1977 = vmatpush1.bf16.msra.mxu0 %v1431
  %1978 = vmatprep.subr.bf16.mxu0 %v1430
  %1979 = vmatpush1.bf16.msra.mxu0 %v1429
  %1980 = vmatprep.subr.bf16.mxu0 %v1428
  %1981 = vmatpush1.bf16.msra.mxu0 %v1427
  %1982 = vmatprep.subr.bf16.mxu0 %v1458
  %1983 = vmatpush2.bf16.msra.mxu0 %v1457
  %1984 = vmatprep.subr.bf16.mxu0 %v1456
  %1985 = vmatpush2.bf16.msra.mxu0 %v1455
  %1986 = vmatprep.subr.bf16.mxu0 %v1454
  %1987 = vmatpush2.bf16.msra.mxu0 %v1453
  %1988 = vmatprep.subr.bf16.mxu0 %v1452
  %1989 = vmatpush2.bf16.msra.mxu0 %v1451
  %1990 = vmatprep.subr.bf16.mxu0 %v1450
  %1991 = vmatpush2.bf16.msra.mxu0 %v1449
  %1992 = vmatprep.subr.bf16.mxu0 %v1448
  %1993 = vmatpush2.bf16.msra.mxu0 %v1447
  %1994 = vmatprep.subr.bf16.mxu0 %v1446
  %1995 = vmatpush2.bf16.msra.mxu0 %v1445
  %1996 = vmatprep.subr.bf16.mxu0 %v1444
  %1997 = vmatpush2.bf16.msra.mxu0 %v1443
  %1998 = vmatprep.mubr.bf16.mxu0 %v298
  %1999 = vmatmul.mubr.bf16.gmra.mxu0 %v297
  %v2000 = vpop.f32.mrf.mxu0
  %v2001 = vadd.f32 %v1960, %v2000
  %v2002 = vpop.f32.mrf.mxu0
  %v2003 = vadd.f32 %v1962, %v2002
  %v2004 = vpop.f32.mrf.mxu0
  %v2005 = vpop.f32.mrf.mxu0
  %2006 = vdwg.mxu0
  %2007 = vmatprep.subr.bf16.mxu0 %v1474
  %2008 = vmatpush1.bf16.msra.mxu0 %v1473
  %2009 = vmatprep.subr.bf16.mxu0 %v1472
  %2010 = vmatpush1.bf16.msra.mxu0 %v1471
  %2011 = vmatprep.subr.bf16.mxu0 %v1470
  %2012 = vmatpush1.bf16.msra.mxu0 %v1469
  %2013 = vmatprep.subr.bf16.mxu0 %v1468
  %2014 = vmatpush1.bf16.msra.mxu0 %v1467
  %2015 = vmatprep.subr.bf16.mxu0 %v1466
  %2016 = vmatpush1.bf16.msra.mxu0 %v1465
  %2017 = vmatprep.subr.bf16.mxu0 %v1464
  %2018 = vmatpush1.bf16.msra.mxu0 %v1463
  %2019 = vmatprep.subr.bf16.mxu0 %v1462
  %2020 = vmatpush1.bf16.msra.mxu0 %v1461
  %2021 = vmatprep.subr.bf16.mxu0 %v1460
  %2022 = vmatpush1.bf16.msra.mxu0 %v1459
  %2023 = vmatprep.subr.bf16.mxu0 %v1490
  %2024 = vmatpush2.bf16.msra.mxu0 %v1489
  %2025 = vmatprep.subr.bf16.mxu0 %v1488
  %2026 = vmatpush2.bf16.msra.mxu0 %v1487
  %2027 = vmatprep.subr.bf16.mxu0 %v1486
  %2028 = vmatpush2.bf16.msra.mxu0 %v1485
  %2029 = vmatprep.subr.bf16.mxu0 %v1484
  %2030 = vmatpush2.bf16.msra.mxu0 %v1483
  %2031 = vmatprep.subr.bf16.mxu0 %v1482
  %2032 = vmatpush2.bf16.msra.mxu0 %v1481
  %2033 = vmatprep.subr.bf16.mxu0 %v1480
  %2034 = vmatpush2.bf16.msra.mxu0 %v1479
  %2035 = vmatprep.subr.bf16.mxu0 %v1478
  %2036 = vmatpush2.bf16.msra.mxu0 %v1477
  %2037 = vmatprep.subr.bf16.mxu0 %v1476
  %2038 = vmatpush2.bf16.msra.mxu0 %v1475
  %2039 = vmatprep.mubr.bf16.mxu0 %v300
  %2040 = vmatmul.mubr.bf16.gmra.mxu0 %v299
  %v2041 = vpop.f32.mrf.mxu0
  %v2042 = vadd.f32 %v2001, %v2041
  %v2043 = vpop.f32.mrf.mxu0
  %v2044 = vadd.f32 %v2003, %v2043
  %v2045 = vpop.f32.mrf.mxu0
  %v2046 = vpop.f32.mrf.mxu0
  %2047 = vdwg.mxu0
  %2048 = vmatprep.subr.bf16.mxu0 %v1506
  %2049 = vmatpush1.bf16.msra.mxu0 %v1505
  %2050 = vmatprep.subr.bf16.mxu0 %v1504
  %2051 = vmatpush1.bf16.msra.mxu0 %v1503
  %2052 = vmatprep.subr.bf16.mxu0 %v1502
  %2053 = vmatpush1.bf16.msra.mxu0 %v1501
  %2054 = vmatprep.subr.bf16.mxu0 %v1500
  %2055 = vmatpush1.bf16.msra.mxu0 %v1499
  %2056 = vmatprep.subr.bf16.mxu0 %v1498
  %2057 = vmatpush1.bf16.msra.mxu0 %v1497
  %2058 = vmatprep.subr.bf16.mxu0 %v1496
  %2059 = vmatpush1.bf16.msra.mxu0 %v1495
  %2060 = vmatprep.subr.bf16.mxu0 %v1494
  %2061 = vmatpush1.bf16.msra.mxu0 %v1493
  %2062 = vmatprep.subr.bf16.mxu0 %v1492
  %2063 = vmatpush1.bf16.msra.mxu0 %v1491
  %2064 = vmatprep.subr.bf16.mxu0 %v1522
  %2065 = vmatpush2.bf16.msra.mxu0 %v1521
  %2066 = vmatprep.subr.bf16.mxu0 %v1520
  %2067 = vmatpush2.bf16.msra.mxu0 %v1519
  %2068 = vmatprep.subr.bf16.mxu0 %v1518
  %2069 = vmatpush2.bf16.msra.mxu0 %v1517
  %2070 = vmatprep.subr.bf16.mxu0 %v1516
  %2071 = vmatpush2.bf16.msra.mxu0 %v1515
  %2072 = vmatprep.subr.bf16.mxu0 %v1514
  %2073 = vmatpush2.bf16.msra.mxu0 %v1513
  %2074 = vmatprep.subr.bf16.mxu0 %v1512
  %2075 = vmatpush2.bf16.msra.mxu0 %v1511
  %2076 = vmatprep.subr.bf16.mxu0 %v1510
  %2077 = vmatpush2.bf16.msra.mxu0 %v1509
  %2078 = vmatprep.subr.bf16.mxu0 %v1508
  %2079 = vmatpush2.bf16.msra.mxu0 %v1507
  %2080 = vmatprep.mubr.bf16.mxu0 %v302
  %2081 = vmatmul.mubr.bf16.gmra.mxu0 %v301
  %v2082 = vpop.f32.mrf.mxu0
  %v2083 = vadd.f32 %v2042, %v2082
  %v2084 = vpop.f32.mrf.mxu0
  %v2085 = vadd.f32 %v2044, %v2084
  %v2086 = vpop.f32.mrf.mxu0
  %v2087 = vpop.f32.mrf.mxu0
  %2088 = vdwg.mxu0
  %2089 = vmatprep.subr.bf16.mxu0 %v1538
  %2090 = vmatpush1.bf16.msra.mxu0 %v1537
  %2091 = vmatprep.subr.bf16.mxu0 %v1536
  %2092 = vmatpush1.bf16.msra.mxu0 %v1535
  %2093 = vmatprep.subr.bf16.mxu0 %v1534
  %2094 = vmatpush1.bf16.msra.mxu0 %v1533
  %2095 = vmatprep.subr.bf16.mxu0 %v1532
  %2096 = vmatpush1.bf16.msra.mxu0 %v1531
  %2097 = vmatprep.subr.bf16.mxu0 %v1530
  %2098 = vmatpush1.bf16.msra.mxu0 %v1529
  %2099 = vmatprep.subr.bf16.mxu0 %v1528
  %2100 = vmatpush1.bf16.msra.mxu0 %v1527
  %2101 = vmatprep.subr.bf16.mxu0 %v1526
  %2102 = vmatpush1.bf16.msra.mxu0 %v1525
  %2103 = vmatprep.subr.bf16.mxu0 %v1524
  %2104 = vmatpush1.bf16.msra.mxu0 %v1523
  %2105 = vmatprep.subr.bf16.mxu0 %v1554
  %2106 = vmatpush2.bf16.msra.mxu0 %v1553
  %2107 = vmatprep.subr.bf16.mxu0 %v1552
  %2108 = vmatpush2.bf16.msra.mxu0 %v1551
  %2109 = vmatprep.subr.bf16.mxu0 %v1550
  %2110 = vmatpush2.bf16.msra.mxu0 %v1549
  %2111 = vmatprep.subr.bf16.mxu0 %v1548
  %2112 = vmatpush2.bf16.msra.mxu0 %v1547
  %2113 = vmatprep.subr.bf16.mxu0 %v1546
  %2114 = vmatpush2.bf16.msra.mxu0 %v1545
  %2115 = vmatprep.subr.bf16.mxu0 %v1544
  %2116 = vmatpush2.bf16.msra.mxu0 %v1543
  %2117 = vmatprep.subr.bf16.mxu0 %v1542
  %2118 = vmatpush2.bf16.msra.mxu0 %v1541
  %2119 = vmatprep.subr.bf16.mxu0 %v1540
  %2120 = vmatpush2.bf16.msra.mxu0 %v1539
  %2121 = vmatprep.mubr.bf16.mxu0 %v304
  %2122 = vmatmul.mubr.bf16.gmra.mxu0 %v303
  %v2123 = vpop.f32.mrf.mxu0
  %v2124 = vadd.f32 %v2083, %v2123
  %v2125 = vpop.f32.mrf.mxu0
  %v2126 = vadd.f32 %v2085, %v2125
  %v2127 = vpop.f32.mrf.mxu0
  %v2128 = vpop.f32.mrf.mxu0
  %2129 = vdwg.mxu0
  %2130 = vmatprep.subr.bf16.mxu0 %v1570
  %2131 = vmatpush1.bf16.msra.mxu0 %v1569
  %2132 = vmatprep.subr.bf16.mxu0 %v1568
  %2133 = vmatpush1.bf16.msra.mxu0 %v1567
  %2134 = vmatprep.subr.bf16.mxu0 %v1566
  %2135 = vmatpush1.bf16.msra.mxu0 %v1565
  %2136 = vmatprep.subr.bf16.mxu0 %v1564
  %2137 = vmatpush1.bf16.msra.mxu0 %v1563
  %2138 = vmatprep.subr.bf16.mxu0 %v1562
  %2139 = vmatpush1.bf16.msra.mxu0 %v1561
  %2140 = vmatprep.subr.bf16.mxu0 %v1560
  %2141 = vmatpush1.bf16.msra.mxu0 %v1559
  %2142 = vmatprep.subr.bf16.mxu0 %v1558
  %2143 = vmatpush1.bf16.msra.mxu0 %v1557
  %2144 = vmatprep.subr.bf16.mxu0 %v1556
  %2145 = vmatpush1.bf16.msra.mxu0 %v1555
  %2146 = vmatprep.subr.bf16.mxu0 %v1586
  %2147 = vmatpush2.bf16.msra.mxu0 %v1585
  %2148 = vmatprep.subr.bf16.mxu0 %v1584
  %2149 = vmatpush2.bf16.msra.mxu0 %v1583
  %2150 = vmatprep.subr.bf16.mxu0 %v1582
  %2151 = vmatpush2.bf16.msra.mxu0 %v1581
  %2152 = vmatprep.subr.bf16.mxu0 %v1580
  %2153 = vmatpush2.bf16.msra.mxu0 %v1579
  %2154 = vmatprep.subr.bf16.mxu0 %v1578
  %2155 = vmatpush2.bf16.msra.mxu0 %v1577
  %2156 = vmatprep.subr.bf16.mxu0 %v1576
  %2157 = vmatpush2.bf16.msra.mxu0 %v1575
  %2158 = vmatprep.subr.bf16.mxu0 %v1574
  %2159 = vmatpush2.bf16.msra.mxu0 %v1573
  %2160 = vmatprep.subr.bf16.mxu0 %v1572
  %2161 = vmatpush2.bf16.msra.mxu0 %v1571
  %2162 = vmatprep.mubr.bf16.mxu0 %v306
  %2163 = vmatmul.mubr.bf16.gmra.mxu0 %v305
  %v2164 = vpop.f32.mrf.mxu0
  %v2165 = vadd.f32 %v2124, %v2164
  %v2166 = vpop.f32.mrf.mxu0
  %v2167 = vadd.f32 %v2126, %v2166
  %v2168 = vpop.f32.mrf.mxu0
  %v2169 = vpop.f32.mrf.mxu0
  %2170 = vdwg.mxu0
  %v2171 = vpack.c.bf16 %v2165, %v2165
  %v2172 = vpack.c.bf16 %v2167, %v2167
  %v2175 = vunpack.c.l.b16 %v2171
  %v2176 = vunpack.c.l.b16 %v2172
  %v2177 = vpack.c.b16 %v2176, %v2175
  %2179 = vst [vmem:[%s4] sm:$0xff] %v2177
  %v2180 = vlaneseq
  %v2181 = vshrl.u32 %v2180, 7
  %s2182 = smul.u32 0, 8
  %v2183 = vstv %s2182
  %v2184 = vadd.s32 %v2181, %v2183
  %vm2185 = vcmp.lt.s32.totalorder %v2184, 2
  %v2186 = vsel %vm2185, %v2165, 0.0
  %v2187 = vsel %vm2185, %v2167, 0.0
  %v2188 = vrot.slane %v2186, 4
  %v2189 = vadd.f32 %v2186, %v2188
  %v2190 = vrot.slane %v2189, 2
  %v2191 = vadd.f32 %v2189, %v2190
  %v2192 = vrot.slane %v2191, 1
  %v2193 = vadd.f32 %v2191, %v2192
  %v2194 = vrot.slane %v2187, 4
  %v2195 = vadd.f32 %v2187, %v2194
  %v2196 = vrot.slane %v2195, 2
  %v2197 = vadd.f32 %v2195, %v2196
  %v2198 = vrot.slane %v2197, 1
  %v2199 = vadd.f32 %v2197, %v2198
  %v2200 = vmul.f32 %v2186, %v2186
  %v2201 = vmul.f32 %v2187, %v2187
  %v2202 = vrot.slane %v2200, 4
  %v2203 = vadd.f32 %v2200, %v2202
  %v2204 = vrot.slane %v2203, 2
  %v2205 = vadd.f32 %v2203, %v2204
  %v2206 = vrot.slane %v2205, 1
  %v2207 = vadd.f32 %v2205, %v2206
  %v2208 = vrot.slane %v2201, 4
  %v2209 = vadd.f32 %v2201, %v2208
  %v2210 = vrot.slane %v2209, 2
  %v2211 = vadd.f32 %v2209, %v2210
  %v2212 = vrot.slane %v2211, 1
  %v2213 = vadd.f32 %v2211, %v2212
  %vm2214 = vcmask 1040384
  %v2215 = vsel %vm2214, %v2193, %v2207
  %v2216 = vsel %vm2214, %v2199, %v2213
  %v2219 = vcombine.low %v2215, %v2216
  %v2221 = vunpack.c.l.s4 1983009808
  %v2222 = vunpack.c.0.s8 %v2221
  %v2223 = vlaneseq
  %v2224 = vshrl.u32 %v2223, 7
  %v2225 = vsub.s32 %v2222, %v2224
  %v2226 = vrot.slane %v2219, %v2225
  %2228 = vst [vmem:[%s5] sm:$0xf] %v2226
  // Predicated region
  $region18: #{netd_patch_forward.10} parent=0 // pred_check
    _
  $region19: #{netd_patch_forward.10} parent=0 // pred_check_branch
    %2230 = sbr.rel (0) target = $region21
  $region20: #{netd_patch_forward.10} parent=0 // pred_region
    _
  $region21: #{netd_patch_forward.10} parent=0 // pred_fallthru
    _
  // Predicated region
  $region22: #{netd_patch_forward.10} parent=0 // pred_check
    _
  $region23: #{netd_patch_forward.10} parent=0 // pred_check_branch
    %2232 = sbr.rel (0) target = $region25
  $region24: #{netd_patch_forward.10} parent=0 // pred_region
    _
  $region25: #{netd_patch_forward.10} parent=0 // pred_fallthru
    _
  // Predicated region
  $region26: #{netd_patch_forward.10} parent=0 // pred_check
    _
  $region27: #{netd_patch_forward.10} parent=0 // pred_check_branch
    %2234 = sbr.rel (0) target = $region29
  $region28: #{netd_patch_forward.10} parent=0 // pred_region
    _
  $region29: #{netd_patch_forward.10} parent=0 // pred_fallthru
    _
  // Predicated region
  $region30: #{netd_patch_forward.10} parent=0 // pred_check
    _
  $region31: #{netd_patch_forward.10} parent=0 // pred_check_branch
    %2236 = sbr.rel (0) target = $region33
  $region32: #{netd_patch_forward.10} parent=0 // pred_region
    _
  $region33: #{netd_patch_forward.10} parent=0 // pred_fallthru
    _

</llo_original>
